<compile_context>
chip_gen: v5e
topology: v5e:2x2
jax: 0.10.0
libtpu: 0.0.40
codegen_flags: <defaults>
</compile_context>

<pallas_src>
import functools

import numpy as np
import jax
import jax.numpy as jnp
from jax.experimental import pallas as pl
from jax.experimental.pallas import tpu as pltpu

EPS = 1e-5  # PyTorch BatchNorm default eps

BRANCH_CFG = {
    "srf": dict(k=1, s=1, pad1=(1, 1, 0), pad2=(0, 0, 0), flat=60 * 64),
    "mrf": dict(k=3, s=2, pad1=(1, 1, 1), pad2=(0, 0, 1), flat=15 * 64),
    "lrf": dict(k=5, s=4, pad1=(1, 1, 1), pad2=(0, 0, 1), flat=4 * 64),
}
BRANCH_NAMES = ("srf", "mrf", "lrf")


def _elu(y):
    return jnp.where(y > 0, y, jnp.exp(y) - 1.0)  # ELU(alpha=1)


# ---------------------------------------------------------------------------
# The fused kernel: whole network in one pallas_call, grid=(1,).
# ---------------------------------------------------------------------------
def _mb3dcnn_kernel(batch, cfgs, *refs):
    n_in = 3 + 12 * len(cfgs)
    in_refs = refs[:n_in]
    out_ref = refs[n_in]
    o2_refs = refs[n_in + 1:]                      # per-branch VMEM scratch

    patches_ref, w0_ref, shift0_ref = in_refs[0:3]

    # ---- shared Conv3d + BN + ELU -> A0: (batch*60, 64), cols = (d, h, c) ---
    a0 = jnp.dot(patches_ref[...], w0_ref[...], preferred_element_type=jnp.float32)
    a0 = _elu(a0 + shift0_ref[...]).astype(jnp.bfloat16)

    total = jnp.zeros((batch, 4), jnp.float32)

    for bi, cfg in enumerate(cfgs):
        (g1_ref, b1_ref, sh1_ref, g2_ref, b2_ref, sh2_ref,
         d1_ref, shd1_ref, d2_ref, shd2_ref, d3_ref, b3_ref) = \
            in_refs[3 + 12 * bi: 3 + 12 * (bi + 1)]
        k, w1, w2 = cfg["k"], cfg["W1"], cfg["W2"]

        # conv_1 + BN + ELU: (batch*W1, 128), rows (n, ow), cols (od, oh, co)
        acc1 = jnp.zeros((batch * w1, 128), jnp.float32)
        for kw in range(k):
            g = jnp.dot(g1_ref[kw], a0, preferred_element_type=jnp.float32)
            acc1 = acc1 + jnp.dot(g.astype(jnp.bfloat16), b1_ref[kw],
                                  preferred_element_type=jnp.float32)
        o1 = _elu(acc1 + sh1_ref[...]).astype(jnp.bfloat16)

        # conv_2 + BN + ELU: (W2*batch, 64), rows (w2, n), cols co
        acc2 = jnp.zeros((batch * w2, 64), jnp.float32)
        for kw in range(k):
            g = jnp.dot(g2_ref[kw], o1, preferred_element_type=jnp.float32)
            acc2 = acc2 + jnp.dot(g.astype(jnp.bfloat16), b2_ref[kw],
                                  preferred_element_type=jnp.float32)
        o2_refs[bi][...] = _elu(acc2 + sh2_ref[...])

        # Flatten (PyTorch c-major order, pre-folded into d1_ref) + dense_1
        # + BN + ReLU: contraction over (c, w2) as small MXU dots.
        acc = jnp.zeros((batch, 32), jnp.float32)
        for j in range(w2):
            a = o2_refs[bi][pl.ds(batch * j, batch), :].astype(jnp.bfloat16)
            m = d1_ref[pl.ds(64 * j, 64), :]
            acc = acc + jnp.dot(a, m, preferred_element_type=jnp.float32)
        h = jnp.maximum(acc + shd1_ref[...], 0.0).astype(jnp.bfloat16)

        # dense_2 + BN + ReLU
        h = jnp.dot(h, d2_ref[...], preferred_element_type=jnp.float32) + shd2_ref[...]
        h = jnp.maximum(h, 0.0).astype(jnp.bfloat16)

        # dense_3 + softmax, accumulated across branches
        logits = jnp.dot(h, d3_ref[...], preferred_element_type=jnp.float32) + b3_ref[...]
        mx = jnp.max(logits, axis=-1, keepdims=True)
        e = jnp.exp(logits - mx)
        total = total + e * pl.reciprocal(jnp.sum(e, axis=-1, keepdims=True),
                                          approx=False)

    out_ref[...] = total


# ---------------------------------------------------------------------------
# Trace-time operand packing (XLA / numpy; cheap, cached under jit).
# ---------------------------------------------------------------------------
def _bn_fold(bn, bias):
    s = bn["gamma"] / jnp.sqrt(bn["var"] + EPS)
    shift = bn["beta"] - bn["mean"] * s + bias * s
    return s, shift


def _gather_mats(batch, k, stride, pad, w_in, w_out, out_row_order):
    """0/1 row-gather matrices G[kw]: (batch*w_out, batch*w_in)."""
    G = np.zeros((k, batch * w_out, batch * w_in), np.float32)
    for kw in range(k):
        for n in range(batch):
            for ow in range(w_out):
                w = stride * ow + kw - pad
                if 0 <= w < w_in:
                    r = n * w_out + ow if out_row_order == "n" else ow * batch + n
                    G[kw, r, n * w_in + w] = 1.0
    return jnp.asarray(G, jnp.bfloat16)


def _shared_patches(x, w_out):
    """im2col of the input for the shared conv: rows (n, wo), cols (dd,hh,ww)
    over the union 5x5x5 window covering all four (do, ho) outputs."""
    batch = x.shape[0]
    xp = jnp.pad(x, ((0, 0), (0, 0), (1, 0), (0, 0), (1, 1)))
    cols = []
    for dd in range(5):
        for hh in range(5):
            for ww in range(5):
                cols.append(xp[:, 0, dd, hh, ww: ww + 4 * (w_out - 1) + 1: 4])
    p = jnp.stack(cols, axis=-1).reshape(batch * w_out, 125)
    return jnp.pad(p, ((0, 0), (0, 3))).astype(jnp.bfloat16)  # K 125 -> 128


def _shared_weight(w0, s0):
    """(128, 64): rows (dd,hh,ww) [padded], cols (do,ho,co); BN scale folded."""
    wt = jnp.transpose(w0[:, 0], (1, 2, 3, 0))                 # (3,3,5,16)
    blocks = []
    for do in (0, 1):
        for ho in (0, 1):
            placed = jnp.zeros((5, 5, 5, 16), jnp.float32)
            placed = placed.at[2 * do:2 * do + 3, 2 * ho:2 * ho + 3, :, :].set(wt)
            blocks.append(placed.reshape(125, 16))
    W = jnp.concatenate(blocks, axis=1) * jnp.tile(s0, 4)[None, :]
    return jnp.pad(W, ((0, 3), (0, 0))).astype(jnp.bfloat16)


def _conv1_weight(w1, s1, k):
    """Stack over kw of (64, 128) block-diagonal weights: (d,h,ci)->(od,oh,co).
    Output (od,oh) reads input (d,h)=(od,oh) with tap (1-od, 1-oh) because of
    the (1,1) D/H padding with kernel 2, stride 2 on a 2x2 input."""
    mats = []
    for kw in range(k):
        rows = []
        for g, (od, oh) in enumerate([(0, 0), (0, 1), (1, 0), (1, 1)]):
            blk = (w1[:, :, 1 - od, 1 - oh, kw] * s1[:, None]).T     # (16, 32)
            rows.append(jnp.pad(blk, ((0, 0), (32 * g, 96 - 32 * g))))
        mats.append(jnp.concatenate(rows, axis=0))                   # (64, 128)
    return jnp.stack(mats, axis=0).astype(jnp.bfloat16)


def _conv2_weight(w2, s2, k):
    """Stack over kw of (128, 64): rows (d,h,ci), cols co; BN scale folded."""
    mats = []
    for kw in range(k):
        rows = [w2[:, :, d, h, kw].T for d in (0, 1) for h in (0, 1)]
        mats.append(jnp.concatenate(rows, axis=0) * s2[None, :])
    return jnp.stack(mats, axis=0).astype(jnp.bfloat16)


def _dense1_weight(d1w, s, w2):
    """(w2*64, 32): rows (w2, c) -- undoes PyTorch's flatten index c*W2+w2."""
    w = (d1w * s[:, None]).reshape(32, 64, w2)
    return jnp.transpose(w, (2, 1, 0)).reshape(w2 * 64, 32).astype(jnp.bfloat16)


def multibranch_forward(x, params):
    batch, cin, d_in, h_in, w_in = x.shape
    assert (cin, d_in, h_in, w_in) == (1, 4, 6, 240), \
        "module hard-codes flatten sizes; expects input (N, 1, 4, 6, 240)"
    w0_out = (w_in + 2 - 5) // 4 + 1                          # 60

    s0, shift0 = _bn_fold(params["shared_bn"], params["shared_conv_b"])
    inputs = [
        _shared_patches(x, w0_out),
        _shared_weight(params["shared_conv_w"], s0),
        jnp.tile(shift0, 4)[None, :].astype(jnp.float32),
    ]

    cfgs = []
    for name in BRANCH_NAMES:
        cfg, p = BRANCH_CFG[name], params[name]
        k, s = cfg["k"], cfg["s"]
        pw1, pw2 = cfg["pad1"][2], cfg["pad2"][2]
        w1_out = (w0_out + 2 * pw1 - k) // s + 1
        w2_out = (w1_out + 2 * pw2 - k) // s + 1
        assert 64 * w2_out == cfg["flat"]

        s1, shift1 = _bn_fold(p["bn1"], p["conv1_b"])
        s2, shift2 = _bn_fold(p["bn2"], p["conv2_b"])
        sd1, shiftd1 = _bn_fold(p["bn1d1"], p["d1_b"])
        sd2, shiftd2 = _bn_fold(p["bn1d2"], p["d2_b"])

        inputs += [
            _gather_mats(batch, k, s, pw1, w0_out, w1_out, "n"),
            _conv1_weight(p["conv1_w"], s1, k),
            jnp.tile(shift1, 4)[None, :].astype(jnp.float32),
            _gather_mats(batch, k, s, pw2, w1_out, w2_out, "w"),
            _conv2_weight(p["conv2_w"], s2, k),
            shift2[None, :].astype(jnp.float32),
            _dense1_weight(p["d1_w"], sd1, w2_out),
            shiftd1[None, :].astype(jnp.float32),
            (p["d2_w"] * sd2[:, None]).T.astype(jnp.bfloat16),
            shiftd2[None, :].astype(jnp.float32),
            p["d3_w"].T.astype(jnp.bfloat16),
            p["d3_b"][None, :].astype(jnp.float32),
        ]
        cfgs.append(dict(k=k, W1=w1_out, W2=w2_out))

    kernel = functools.partial(_mb3dcnn_kernel, batch, tuple(cfgs))
    in_specs = [pl.BlockSpec(a.shape, lambda i, nd=a.ndim: (0,) * nd)
                for a in inputs]

    return pl.pallas_call(
        kernel,
        out_shape=jax.ShapeDtypeStruct((batch, 4), jnp.float32),
        grid=(1,),
        in_specs=in_specs,
        out_specs=pl.BlockSpec((batch, 4), lambda i: (0, 0)),
        scratch_shapes=[pltpu.VMEM((batch * c["W2"], 64), jnp.float32)
                        for c in cfgs],
        compiler_params=pltpu.CompilerParams(
            dimension_semantics=("arbitrary",)),
    )(*inputs)


# ---------------------------------------------------------------------------
# Deterministic parameter init (xavier_uniform weights, zero bias, default BN)
# ---------------------------------------------------------------------------
def _xavier(key, shape, fan_in, fan_out):
    bound = (6.0 / (fan_in + fan_out)) ** 0.5
    return jax.random.uniform(key, shape, jnp.float32, -bound, bound)


def init_conv(key, cout, cin, k):
    kD, kH, kW = k
    w = _xavier(key, (cout, cin, kD, kH, kW), cin * kD * kH * kW, cout * kD * kH * kW)
    return w, jnp.zeros((cout,), jnp.float32)


def init_linear(key, out_f, in_f):
    return _xavier(key, (out_f, in_f), in_f, out_f), jnp.zeros((out_f,), jnp.float32)


def bn_params(c):
    return dict(gamma=jnp.ones((c,), jnp.float32), beta=jnp.zeros((c,), jnp.float32),
                mean=jnp.zeros((c,), jnp.float32), var=jnp.ones((c,), jnp.float32))


def init_branch(key, cfg):
    k = cfg["k"]
    k1, k2, k3, k4, k5 = jax.random.split(key, 5)
    p = {}
    p["conv1_w"], p["conv1_b"] = init_conv(k1, 32, 16, (2, 2, k))
    p["bn1"] = bn_params(32)
    p["conv2_w"], p["conv2_b"] = init_conv(k2, 64, 32, (2, 2, k))
    p["bn2"] = bn_params(64)
    p["d1_w"], p["d1_b"] = init_linear(k3, 32, cfg["flat"])
    p["bn1d1"] = bn_params(32)
    p["d2_w"], p["d2_b"] = init_linear(k4, 32, 32)
    p["bn1d2"] = bn_params(32)
    p["d3_w"], p["d3_b"] = init_linear(k5, 4, 32)
    return p


def init_params(key):
    ks, k1, k2, k3 = jax.random.split(key, 4)
    return {
        "shared_conv_w": init_conv(ks, 16, 1, (3, 3, 5))[0],
        "shared_conv_b": jnp.zeros((16,), jnp.float32),
        "shared_bn": bn_params(16),
        "srf": init_branch(k1, BRANCH_CFG["srf"]),
        "mrf": init_branch(k2, BRANCH_CFG["mrf"]),
        "lrf": init_branch(k3, BRANCH_CFG["lrf"]),
    }


# ---------------------------------------------------------------------------
# Pure-JAX (XLA) reference of the PyTorch graph in eval mode, for self-check.
# ---------------------------------------------------------------------------
def _bn_apply(x, bn, axis):
    shape = [1] * x.ndim
    shape[axis] = -1
    s = bn["gamma"] / jnp.sqrt(bn["var"] + EPS)
    return x * s.reshape(shape) + (bn["beta"] - bn["mean"] * s).reshape(shape)


def reference_forward(x, params):
    def conv(h, w, b, stride, pad):
        y = jax.lax.conv_general_dilated(
            h, w, window_strides=stride, padding=[(p, p) for p in pad],
            dimension_numbers=("NCDHW", "OIDHW", "NCDHW"))
        return y + b.reshape(1, -1, 1, 1, 1)

    h = _elu(_bn_apply(conv(x, params["shared_conv_w"], params["shared_conv_b"],
                            (2, 2, 4), (1, 0, 1)), params["shared_bn"], 1))
    out = 0.0
    for name in BRANCH_NAMES:
        cfg, p = BRANCH_CFG[name], params[name]
        s = cfg["s"]
        y = _elu(_bn_apply(conv(h, p["conv1_w"], p["conv1_b"], (2, 2, s), cfg["pad1"]),
                           p["bn1"], 1))
        y = _elu(_bn_apply(conv(y, p["conv2_w"], p["conv2_b"], (2, 2, s), cfg["pad2"]),
                           p["bn2"], 1))
        y = y.reshape(y.shape[0], -1)
        y = jnp.maximum(_bn_apply(y @ p["d1_w"].T + p["d1_b"], p["bn1d1"], 1), 0.0)
        y = jnp.maximum(_bn_apply(y @ p["d2_w"].T + p["d2_b"], p["bn1d2"], 1), 0.0)
        out = out + jax.nn.softmax(y @ p["d3_w"].T + p["d3_b"], axis=-1)
    return out


if __name__ == "__main__":
    key = jax.random.PRNGKey(0)
    kx, kp = jax.random.split(key)
    # (N, C, D, H, W); W=240 is required by the hard-coded flatten sizes.
    x = jax.random.normal(kx, (2, 1, 4, 6, 240), jnp.float32)
    params = init_params(kp)

    out = jax.block_until_ready(jax.jit(multibranch_forward)(x, params))

    assert out.shape == (2, 4), out.shape
    assert bool(jnp.all(jnp.isfinite(out)))
    # each branch ends in softmax, so each row of the 3-branch sum totals ~3
    assert bool(jnp.allclose(jnp.sum(out, axis=-1), 3.0, atol=1e-3))

    # check against an XLA reference (bf16 MXU operands -> loose tolerance)
    ref = jax.jit(reference_forward)(x, params)
    assert bool(jnp.allclose(out, ref, atol=3e-2)), (out, ref)

    print("KERNEL_OK")
</pallas_src>

<mosaic_0001>
module attributes {stable_mosaic.version = 11 : i64} {
  func.func @_mb3dcnn_kernel(%arg0: i32, %arg1: memref<120x128xbf16, #tpu.memory_space<vmem>>, %arg2: memref<128x64xbf16, #tpu.memory_space<vmem>>, %arg3: memref<1x64xf32, #tpu.memory_space<vmem>>, %arg4: memref<1x120x120xbf16, #tpu.memory_space<vmem>>, %arg5: memref<1x64x128xbf16, #tpu.memory_space<vmem>>, %arg6: memref<1x128xf32, #tpu.memory_space<vmem>>, %arg7: memref<1x120x120xbf16, #tpu.memory_space<vmem>>, %arg8: memref<1x128x64xbf16, #tpu.memory_space<vmem>>, %arg9: memref<1x64xf32, #tpu.memory_space<vmem>>, %arg10: memref<3840x32xbf16, #tpu.memory_space<vmem>>, %arg11: memref<1x32xf32, #tpu.memory_space<vmem>>, %arg12: memref<32x32xbf16, #tpu.memory_space<vmem>>, %arg13: memref<1x32xf32, #tpu.memory_space<vmem>>, %arg14: memref<32x4xbf16, #tpu.memory_space<vmem>>, %arg15: memref<1x4xf32, #tpu.memory_space<vmem>>, %arg16: memref<3x60x120xbf16, #tpu.memory_space<vmem>>, %arg17: memref<3x64x128xbf16, #tpu.memory_space<vmem>>, %arg18: memref<1x128xf32, #tpu.memory_space<vmem>>, %arg19: memref<3x30x60xbf16, #tpu.memory_space<vmem>>, %arg20: memref<3x128x64xbf16, #tpu.memory_space<vmem>>, %arg21: memref<1x64xf32, #tpu.memory_space<vmem>>, %arg22: memref<960x32xbf16, #tpu.memory_space<vmem>>, %arg23: memref<1x32xf32, #tpu.memory_space<vmem>>, %arg24: memref<32x32xbf16, #tpu.memory_space<vmem>>, %arg25: memref<1x32xf32, #tpu.memory_space<vmem>>, %arg26: memref<32x4xbf16, #tpu.memory_space<vmem>>, %arg27: memref<1x4xf32, #tpu.memory_space<vmem>>, %arg28: memref<5x30x120xbf16, #tpu.memory_space<vmem>>, %arg29: memref<5x64x128xbf16, #tpu.memory_space<vmem>>, %arg30: memref<1x128xf32, #tpu.memory_space<vmem>>, %arg31: memref<5x8x30xbf16, #tpu.memory_space<vmem>>, %arg32: memref<5x128x64xbf16, #tpu.memory_space<vmem>>, %arg33: memref<1x64xf32, #tpu.memory_space<vmem>>, %arg34: memref<256x32xbf16, #tpu.memory_space<vmem>>, %arg35: memref<1x32xf32, #tpu.memory_space<vmem>>, %arg36: memref<32x32xbf16, #tpu.memory_space<vmem>>, %arg37: memref<1x32xf32, #tpu.memory_space<vmem>>, %arg38: memref<32x4xbf16, #tpu.memory_space<vmem>>, %arg39: memref<1x4xf32, #tpu.memory_space<vmem>>, %arg40: memref<2x4xf32, #tpu.memory_space<vmem>>, %arg41: memref<120x64xf32, #tpu.memory_space<vmem>>, %arg42: memref<30x64xf32, #tpu.memory_space<vmem>>, %arg43: memref<8x64xf32, #tpu.memory_space<vmem>>) attributes {dimension_semantics = [#tpu.dimension_semantics<arbitrary>], iteration_bounds = array<i64: 1>, scalar_prefetch = 0 : i64, scratch_operands = 3 : i64, tpu.core_type = #tpu.core_type<tc>, window_params = [{pipeline_mode = #tpu.pipeline_mode<synchronous>, transform_indices = @transform_0, window_bounds = array<i64: 120, 128>}, {pipeline_mode = #tpu.pipeline_mode<synchronous>, transform_indices = @transform_1, window_bounds = array<i64: 128, 64>}, {pipeline_mode = #tpu.pipeline_mode<synchronous>, transform_indices = @transform_2, window_bounds = array<i64: 1, 64>}, {pipeline_mode = #tpu.pipeline_mode<synchronous>, transform_indices = @transform_3, window_bounds = array<i64: 1, 120, 120>}, {pipeline_mode = #tpu.pipeline_mode<synchronous>, transform_indices = @transform_4, window_bounds = array<i64: 1, 64, 128>}, {pipeline_mode = #tpu.pipeline_mode<synchronous>, transform_indices = @transform_5, window_bounds = array<i64: 1, 128>}, {pipeline_mode = #tpu.pipeline_mode<synchronous>, transform_indices = @transform_6, window_bounds = array<i64: 1, 120, 120>}, {pipeline_mode = #tpu.pipeline_mode<synchronous>, transform_indices = @transform_7, window_bounds = array<i64: 1, 128, 64>}, {pipeline_mode = #tpu.pipeline_mode<synchronous>, transform_indices = @transform_8, window_bounds = array<i64: 1, 64>}, {pipeline_mode = #tpu.pipeline_mode<synchronous>, transform_indices = @transform_9, window_bounds = array<i64: 3840, 32>}, {pipeline_mode = #tpu.pipeline_mode<synchronous>, transform_indices = @transform_10, window_bounds = array<i64: 1, 32>}, {pipeline_mode = #tpu.pipeline_mode<synchronous>, transform_indices = @transform_11, window_bounds = array<i64: 32, 32>}, {pipeline_mode = #tpu.pipeline_mode<synchronous>, transform_indices = @transform_12, window_bounds = array<i64: 1, 32>}, {pipeline_mode = #tpu.pipeline_mode<synchronous>, transform_indices = @transform_13, window_bounds = array<i64: 32, 4>}, {pipeline_mode = #tpu.pipeline_mode<synchronous>, transform_indices = @transform_14, window_bounds = array<i64: 1, 4>}, {pipeline_mode = #tpu.pipeline_mode<synchronous>, transform_indices = @transform_15, window_bounds = array<i64: 3, 60, 120>}, {pipeline_mode = #tpu.pipeline_mode<synchronous>, transform_indices = @transform_16, window_bounds = array<i64: 3, 64, 128>}, {pipeline_mode = #tpu.pipeline_mode<synchronous>, transform_indices = @transform_17, window_bounds = array<i64: 1, 128>}, {pipeline_mode = #tpu.pipeline_mode<synchronous>, transform_indices = @transform_18, window_bounds = array<i64: 3, 30, 60>}, {pipeline_mode = #tpu.pipeline_mode<synchronous>, transform_indices = @transform_19, window_bounds = array<i64: 3, 128, 64>}, {pipeline_mode = #tpu.pipeline_mode<synchronous>, transform_indices = @transform_20, window_bounds = array<i64: 1, 64>}, {pipeline_mode = #tpu.pipeline_mode<synchronous>, transform_indices = @transform_21, window_bounds = array<i64: 960, 32>}, {pipeline_mode = #tpu.pipeline_mode<synchronous>, transform_indices = @transform_22, window_bounds = array<i64: 1, 32>}, {pipeline_mode = #tpu.pipeline_mode<synchronous>, transform_indices = @transform_23, window_bounds = array<i64: 32, 32>}, {pipeline_mode = #tpu.pipeline_mode<synchronous>, transform_indices = @transform_24, window_bounds = array<i64: 1, 32>}, {pipeline_mode = #tpu.pipeline_mode<synchronous>, transform_indices = @transform_25, window_bounds = array<i64: 32, 4>}, {pipeline_mode = #tpu.pipeline_mode<synchronous>, transform_indices = @transform_26, window_bounds = array<i64: 1, 4>}, {pipeline_mode = #tpu.pipeline_mode<synchronous>, transform_indices = @transform_27, window_bounds = array<i64: 5, 30, 120>}, {pipeline_mode = #tpu.pipeline_mode<synchronous>, transform_indices = @transform_28, window_bounds = array<i64: 5, 64, 128>}, {pipeline_mode = #tpu.pipeline_mode<synchronous>, transform_indices = @transform_29, window_bounds = array<i64: 1, 128>}, {pipeline_mode = #tpu.pipeline_mode<synchronous>, transform_indices = @transform_30, window_bounds = array<i64: 5, 8, 30>}, {pipeline_mode = #tpu.pipeline_mode<synchronous>, transform_indices = @transform_31, window_bounds = array<i64: 5, 128, 64>}, {pipeline_mode = #tpu.pipeline_mode<synchronous>, transform_indices = @transform_32, window_bounds = array<i64: 1, 64>}, {pipeline_mode = #tpu.pipeline_mode<synchronous>, transform_indices = @transform_33, window_bounds = array<i64: 256, 32>}, {pipeline_mode = #tpu.pipeline_mode<synchronous>, transform_indices = @transform_34, window_bounds = array<i64: 1, 32>}, {pipeline_mode = #tpu.pipeline_mode<synchronous>, transform_indices = @transform_35, window_bounds = array<i64: 32, 32>}, {pipeline_mode = #tpu.pipeline_mode<synchronous>, transform_indices = @transform_36, window_bounds = array<i64: 1, 32>}, {pipeline_mode = #tpu.pipeline_mode<synchronous>, transform_indices = @transform_37, window_bounds = array<i64: 32, 4>}, {pipeline_mode = #tpu.pipeline_mode<synchronous>, transform_indices = @transform_38, window_bounds = array<i64: 1, 4>}, {pipeline_mode = #tpu.pipeline_mode<synchronous>, transform_indices = @transform_39, window_bounds = array<i64: 2, 4>}]} {
    %c0 = arith.constant 0 : index
    %c0_0 = arith.constant 0 : index
    %0 = vector.load %arg1[%c0, %c0_0] : memref<120x128xbf16, #tpu.memory_space<vmem>>, vector<120x128xbf16>
    %c0_1 = arith.constant 0 : index
    %c0_2 = arith.constant 0 : index
    %1 = vector.load %arg2[%c0_1, %c0_2] : memref<128x64xbf16, #tpu.memory_space<vmem>>, vector<128x64xbf16>
    %cst = arith.constant dense<0.000000e+00> : vector<120x64xf32>
    %2 = tpu.matmul %0, %1, %cst {dimension_numbers = #tpu.dot_dimension_numbers<[1], [0], [0], [1], [0, 0, 1, 1], [], []>} : vector<120x128xbf16>, vector<128x64xbf16>, vector<120x64xf32> -> vector<120x64xf32>
    %c0_3 = arith.constant 0 : index
    %c0_4 = arith.constant 0 : index
    %3 = vector.load %arg3[%c0_3, %c0_4] : memref<1x64xf32, #tpu.memory_space<vmem>>, vector<1x64xf32>
    %4 = vector.broadcast %3 : vector<1x64xf32> to vector<120x64xf32>
    %5 = arith.addf %2, %4 : vector<120x64xf32>
    %cst_5 = arith.constant 0.000000e+00 : f32
    %6 = vector.broadcast %cst_5 : f32 to vector<120x64xf32>
    %7 = arith.cmpf ogt, %5, %6 : vector<120x64xf32>
    %8 = math.exp %5 : vector<120x64xf32>
    %cst_6 = arith.constant 1.000000e+00 : f32
    %9 = vector.broadcast %cst_6 : f32 to vector<120x64xf32>
    %10 = arith.subf %8, %9 : vector<120x64xf32>
    %11 = arith.select %7, %5, %10 : vector<120x64xi1>, vector<120x64xf32>
    %12 = arith.truncf %11 : vector<120x64xf32> to vector<120x64xbf16>
    %cst_7 = arith.constant 0.000000e+00 : f32
    %13 = vector.broadcast %cst_7 : f32 to vector<2x4xf32>
    %cst_8 = arith.constant 0.000000e+00 : f32
    %14 = vector.broadcast %cst_8 : f32 to vector<120x128xf32>
    %c0_9 = arith.constant 0 : index
    %c0_10 = arith.constant 0 : index
    %c0_11 = arith.constant 0 : index
    %15 = vector.load %arg4[%c0_9, %c0_10, %c0_11] : memref<1x120x120xbf16, #tpu.memory_space<vmem>>, vector<1x120x120xbf16>
    %16 = vector.shape_cast %15 : vector<1x120x120xbf16> to vector<120x120xbf16>
    %cst_12 = arith.constant dense<0.000000e+00> : vector<120x64xf32>
    %17 = tpu.matmul %16, %12, %cst_12 {dimension_numbers = #tpu.dot_dimension_numbers<[1], [0], [0], [1], [0, 0, 1, 1], [], []>} : vector<120x120xbf16>, vector<120x64xbf16>, vector<120x64xf32> -> vector<120x64xf32>
    %18 = arith.truncf %17 : vector<120x64xf32> to vector<120x64xbf16>
    %c0_13 = arith.constant 0 : index
    %c0_14 = arith.constant 0 : index
    %c0_15 = arith.constant 0 : index
    %19 = vector.load %arg5[%c0_13, %c0_14, %c0_15] : memref<1x64x128xbf16, #tpu.memory_space<vmem>>, vector<1x64x128xbf16>
    %20 = vector.shape_cast %19 : vector<1x64x128xbf16> to vector<64x128xbf16>
    %cst_16 = arith.constant dense<0.000000e+00> : vector<120x128xf32>
    %21 = tpu.matmul %18, %20, %cst_16 {dimension_numbers = #tpu.dot_dimension_numbers<[1], [0], [0], [1], [0, 0, 1, 1], [], []>} : vector<120x64xbf16>, vector<64x128xbf16>, vector<120x128xf32> -> vector<120x128xf32>
    %22 = arith.addf %14, %21 : vector<120x128xf32>
    %c0_17 = arith.constant 0 : index
    %c0_18 = arith.constant 0 : index
    %23 = vector.load %arg6[%c0_17, %c0_18] : memref<1x128xf32, #tpu.memory_space<vmem>>, vector<1x128xf32>
    %24 = vector.broadcast %23 : vector<1x128xf32> to vector<120x128xf32>
    %25 = arith.addf %22, %24 : vector<120x128xf32>
    %cst_19 = arith.constant 0.000000e+00 : f32
    %26 = vector.broadcast %cst_19 : f32 to vector<120x128xf32>
    %27 = arith.cmpf ogt, %25, %26 : vector<120x128xf32>
    %28 = math.exp %25 : vector<120x128xf32>
    %cst_20 = arith.constant 1.000000e+00 : f32
    %29 = vector.broadcast %cst_20 : f32 to vector<120x128xf32>
    %30 = arith.subf %28, %29 : vector<120x128xf32>
    %31 = arith.select %27, %25, %30 : vector<120x128xi1>, vector<120x128xf32>
    %32 = arith.truncf %31 : vector<120x128xf32> to vector<120x128xbf16>
    %cst_21 = arith.constant 0.000000e+00 : f32
    %33 = vector.broadcast %cst_21 : f32 to vector<120x64xf32>
    %c0_22 = arith.constant 0 : index
    %c0_23 = arith.constant 0 : index
    %c0_24 = arith.constant 0 : index
    %34 = vector.load %arg7[%c0_22, %c0_23, %c0_24] : memref<1x120x120xbf16, #tpu.memory_space<vmem>>, vector<1x120x120xbf16>
    %35 = vector.shape_cast %34 : vector<1x120x120xbf16> to vector<120x120xbf16>
    %cst_25 = arith.constant dense<0.000000e+00> : vector<120x128xf32>
    %36 = tpu.matmul %35, %32, %cst_25 {dimension_numbers = #tpu.dot_dimension_numbers<[1], [0], [0], [1], [0, 0, 1, 1], [], []>} : vector<120x120xbf16>, vector<120x128xbf16>, vector<120x128xf32> -> vector<120x128xf32>
    %37 = arith.truncf %36 : vector<120x128xf32> to vector<120x128xbf16>
    %c0_26 = arith.constant 0 : index
    %c0_27 = arith.constant 0 : index
    %c0_28 = arith.constant 0 : index
    %38 = vector.load %arg8[%c0_26, %c0_27, %c0_28] : memref<1x128x64xbf16, #tpu.memory_space<vmem>>, vector<1x128x64xbf16>
    %39 = vector.shape_cast %38 : vector<1x128x64xbf16> to vector<128x64xbf16>
    %cst_29 = arith.constant dense<0.000000e+00> : vector<120x64xf32>
    %40 = tpu.matmul %37, %39, %cst_29 {dimension_numbers = #tpu.dot_dimension_numbers<[1], [0], [0], [1], [0, 0, 1, 1], [], []>} : vector<120x128xbf16>, vector<128x64xbf16>, vector<120x64xf32> -> vector<120x64xf32>
    %41 = arith.addf %33, %40 : vector<120x64xf32>
    %c0_30 = arith.constant 0 : index
    %c0_31 = arith.constant 0 : index
    %42 = vector.load %arg9[%c0_30, %c0_31] : memref<1x64xf32, #tpu.memory_space<vmem>>, vector<1x64xf32>
    %43 = vector.broadcast %42 : vector<1x64xf32> to vector<120x64xf32>
    %44 = arith.addf %41, %43 : vector<120x64xf32>
    %cst_32 = arith.constant 0.000000e+00 : f32
    %45 = vector.broadcast %cst_32 : f32 to vector<120x64xf32>
    %46 = arith.cmpf ogt, %44, %45 : vector<120x64xf32>
    %47 = math.exp %44 : vector<120x64xf32>
    %cst_33 = arith.constant 1.000000e+00 : f32
    %48 = vector.broadcast %cst_33 : f32 to vector<120x64xf32>
    %49 = arith.subf %47, %48 : vector<120x64xf32>
    %50 = arith.select %46, %44, %49 : vector<120x64xi1>, vector<120x64xf32>
    %c0_34 = arith.constant 0 : index
    %c0_35 = arith.constant 0 : index
    %51 = vector.load %arg41[%c0_34, %c0_35] : memref<120x64xf32, #tpu.memory_space<vmem>>, vector<120x64xf32>
    tpu.vector_store %arg41[%c0_34, %c0_35], %50 {strides = array<i32>} : memref<120x64xf32, #tpu.memory_space<vmem>>, vector<120x64xf32>,
    %cst_36 = arith.constant 0.000000e+00 : f32
    %52 = vector.broadcast %cst_36 : f32 to vector<2x32xf32>
    %c0_37 = arith.constant 0 : index
    %c0_38 = arith.constant 0 : index
    %53 = vector.load %arg41[%c0_37, %c0_38] : memref<120x64xf32, #tpu.memory_space<vmem>>, vector<2x64xf32>
    %54 = arith.truncf %53 : vector<2x64xf32> to vector<2x64xbf16>
    %c0_39 = arith.constant 0 : index
    %c0_40 = arith.constant 0 : index
    %55 = vector.load %arg10[%c0_39, %c0_40] : memref<3840x32xbf16, #tpu.memory_space<vmem>>, vector<64x32xbf16>
    %cst_41 = arith.constant dense<0.000000e+00> : vector<2x32xf32>
    %56 = tpu.matmul %54, %55, %cst_41 {dimension_numbers = #tpu.dot_dimension_numbers<[1], [0], [0], [1], [0, 0, 1, 1], [], []>} : vector<2x64xbf16>, vector<64x32xbf16>, vector<2x32xf32> -> vector<2x32xf32>
    %57 = arith.addf %52, %56 : vector<2x32xf32>
    %c2 = arith.constant 2 : index
    %c0_42 = arith.constant 0 : index
    %58 = vector.load %arg41[%c2, %c0_42] : memref<120x64xf32, #tpu.memory_space<vmem>>, vector<2x64xf32>
    %59 = arith.truncf %58 : vector<2x64xf32> to vector<2x64xbf16>
    %c64 = arith.constant 64 : index
    %c0_43 = arith.constant 0 : index
    %60 = vector.load %arg10[%c64, %c0_43] : memref<3840x32xbf16, #tpu.memory_space<vmem>>, vector<64x32xbf16>
    %cst_44 = arith.constant dense<0.000000e+00> : vector<2x32xf32>
    %61 = tpu.matmul %59, %60, %cst_44 {dimension_numbers = #tpu.dot_dimension_numbers<[1], [0], [0], [1], [0, 0, 1, 1], [], []>} : vector<2x64xbf16>, vector<64x32xbf16>, vector<2x32xf32> -> vector<2x32xf32>
    %62 = arith.addf %57, %61 : vector<2x32xf32>
    %c4 = arith.constant 4 : index
    %c0_45 = arith.constant 0 : index
    %63 = vector.load %arg41[%c4, %c0_45] : memref<120x64xf32, #tpu.memory_space<vmem>>, vector<2x64xf32>
    %64 = arith.truncf %63 : vector<2x64xf32> to vector<2x64xbf16>
    %c128 = arith.constant 128 : index
    %c0_46 = arith.constant 0 : index
    %65 = vector.load %arg10[%c128, %c0_46] : memref<3840x32xbf16, #tpu.memory_space<vmem>>, vector<64x32xbf16>
    %cst_47 = arith.constant dense<0.000000e+00> : vector<2x32xf32>
    %66 = tpu.matmul %64, %65, %cst_47 {dimension_numbers = #tpu.dot_dimension_numbers<[1], [0], [0], [1], [0, 0, 1, 1], [], []>} : vector<2x64xbf16>, vector<64x32xbf16>, vector<2x32xf32> -> vector<2x32xf32>
    %67 = arith.addf %62, %66 : vector<2x32xf32>
    %c6 = arith.constant 6 : index
    %c0_48 = arith.constant 0 : index
    %68 = vector.load %arg41[%c6, %c0_48] : memref<120x64xf32, #tpu.memory_space<vmem>>, vector<2x64xf32>
    %69 = arith.truncf %68 : vector<2x64xf32> to vector<2x64xbf16>
    %c192 = arith.constant 192 : index
    %c0_49 = arith.constant 0 : index
    %70 = vector.load %arg10[%c192, %c0_49] : memref<3840x32xbf16, #tpu.memory_space<vmem>>, vector<64x32xbf16>
    %cst_50 = arith.constant dense<0.000000e+00> : vector<2x32xf32>
    %71 = tpu.matmul %69, %70, %cst_50 {dimension_numbers = #tpu.dot_dimension_numbers<[1], [0], [0], [1], [0, 0, 1, 1], [], []>} : vector<2x64xbf16>, vector<64x32xbf16>, vector<2x32xf32> -> vector<2x32xf32>
    %72 = arith.addf %67, %71 : vector<2x32xf32>
    %c8 = arith.constant 8 : index
    %c0_51 = arith.constant 0 : index
    %73 = vector.load %arg41[%c8, %c0_51] : memref<120x64xf32, #tpu.memory_space<vmem>>, vector<2x64xf32>
    %74 = arith.truncf %73 : vector<2x64xf32> to vector<2x64xbf16>
    %c256 = arith.constant 256 : index
    %c0_52 = arith.constant 0 : index
    %75 = vector.load %arg10[%c256, %c0_52] : memref<3840x32xbf16, #tpu.memory_space<vmem>>, vector<64x32xbf16>
    %cst_53 = arith.constant dense<0.000000e+00> : vector<2x32xf32>
    %76 = tpu.matmul %74, %75, %cst_53 {dimension_numbers = #tpu.dot_dimension_numbers<[1], [0], [0], [1], [0, 0, 1, 1], [], []>} : vector<2x64xbf16>, vector<64x32xbf16>, vector<2x32xf32> -> vector<2x32xf32>
    %77 = arith.addf %72, %76 : vector<2x32xf32>
    %c10 = arith.constant 10 : index
    %c0_54 = arith.constant 0 : index
    %78 = vector.load %arg41[%c10, %c0_54] : memref<120x64xf32, #tpu.memory_space<vmem>>, vector<2x64xf32>
    %79 = arith.truncf %78 : vector<2x64xf32> to vector<2x64xbf16>
    %c320 = arith.constant 320 : index
    %c0_55 = arith.constant 0 : index
    %80 = vector.load %arg10[%c320, %c0_55] : memref<3840x32xbf16, #tpu.memory_space<vmem>>, vector<64x32xbf16>
    %cst_56 = arith.constant dense<0.000000e+00> : vector<2x32xf32>
    %81 = tpu.matmul %79, %80, %cst_56 {dimension_numbers = #tpu.dot_dimension_numbers<[1], [0], [0], [1], [0, 0, 1, 1], [], []>} : vector<2x64xbf16>, vector<64x32xbf16>, vector<2x32xf32> -> vector<2x32xf32>
    %82 = arith.addf %77, %81 : vector<2x32xf32>
    %c12 = arith.constant 12 : index
    %c0_57 = arith.constant 0 : index
    %83 = vector.load %arg41[%c12, %c0_57] : memref<120x64xf32, #tpu.memory_space<vmem>>, vector<2x64xf32>
    %84 = arith.truncf %83 : vector<2x64xf32> to vector<2x64xbf16>
    %c384 = arith.constant 384 : index
    %c0_58 = arith.constant 0 : index
    %85 = vector.load %arg10[%c384, %c0_58] : memref<3840x32xbf16, #tpu.memory_space<vmem>>, vector<64x32xbf16>
    %cst_59 = arith.constant dense<0.000000e+00> : vector<2x32xf32>
    %86 = tpu.matmul %84, %85, %cst_59 {dimension_numbers = #tpu.dot_dimension_numbers<[1], [0], [0], [1], [0, 0, 1, 1], [], []>} : vector<2x64xbf16>, vector<64x32xbf16>, vector<2x32xf32> -> vector<2x32xf32>
    %87 = arith.addf %82, %86 : vector<2x32xf32>
    %c14 = arith.constant 14 : index
    %c0_60 = arith.constant 0 : index
    %88 = vector.load %arg41[%c14, %c0_60] : memref<120x64xf32, #tpu.memory_space<vmem>>, vector<2x64xf32>
    %89 = arith.truncf %88 : vector<2x64xf32> to vector<2x64xbf16>
    %c448 = arith.constant 448 : index
    %c0_61 = arith.constant 0 : index
    %90 = vector.load %arg10[%c448, %c0_61] : memref<3840x32xbf16, #tpu.memory_space<vmem>>, vector<64x32xbf16>
    %cst_62 = arith.constant dense<0.000000e+00> : vector<2x32xf32>
    %91 = tpu.matmul %89, %90, %cst_62 {dimension_numbers = #tpu.dot_dimension_numbers<[1], [0], [0], [1], [0, 0, 1, 1], [], []>} : vector<2x64xbf16>, vector<64x32xbf16>, vector<2x32xf32> -> vector<2x32xf32>
    %92 = arith.addf %87, %91 : vector<2x32xf32>
    %c16 = arith.constant 16 : index
    %c0_63 = arith.constant 0 : index
    %93 = vector.load %arg41[%c16, %c0_63] : memref<120x64xf32, #tpu.memory_space<vmem>>, vector<2x64xf32>
    %94 = arith.truncf %93 : vector<2x64xf32> to vector<2x64xbf16>
    %c512 = arith.constant 512 : index
    %c0_64 = arith.constant 0 : index
    %95 = vector.load %arg10[%c512, %c0_64] : memref<3840x32xbf16, #tpu.memory_space<vmem>>, vector<64x32xbf16>
    %cst_65 = arith.constant dense<0.000000e+00> : vector<2x32xf32>
    %96 = tpu.matmul %94, %95, %cst_65 {dimension_numbers = #tpu.dot_dimension_numbers<[1], [0], [0], [1], [0, 0, 1, 1], [], []>} : vector<2x64xbf16>, vector<64x32xbf16>, vector<2x32xf32> -> vector<2x32xf32>
    %97 = arith.addf %92, %96 : vector<2x32xf32>
    %c18 = arith.constant 18 : index
    %c0_66 = arith.constant 0 : index
    %98 = vector.load %arg41[%c18, %c0_66] : memref<120x64xf32, #tpu.memory_space<vmem>>, vector<2x64xf32>
    %99 = arith.truncf %98 : vector<2x64xf32> to vector<2x64xbf16>
    %c576 = arith.constant 576 : index
    %c0_67 = arith.constant 0 : index
    %100 = vector.load %arg10[%c576, %c0_67] : memref<3840x32xbf16, #tpu.memory_space<vmem>>, vector<64x32xbf16>
    %cst_68 = arith.constant dense<0.000000e+00> : vector<2x32xf32>
    %101 = tpu.matmul %99, %100, %cst_68 {dimension_numbers = #tpu.dot_dimension_numbers<[1], [0], [0], [1], [0, 0, 1, 1], [], []>} : vector<2x64xbf16>, vector<64x32xbf16>, vector<2x32xf32> -> vector<2x32xf32>
    %102 = arith.addf %97, %101 : vector<2x32xf32>
    %c20 = arith.constant 20 : index
    %c0_69 = arith.constant 0 : index
    %103 = vector.load %arg41[%c20, %c0_69] : memref<120x64xf32, #tpu.memory_space<vmem>>, vector<2x64xf32>
    %104 = arith.truncf %103 : vector<2x64xf32> to vector<2x64xbf16>
    %c640 = arith.constant 640 : index
    %c0_70 = arith.constant 0 : index
    %105 = vector.load %arg10[%c640, %c0_70] : memref<3840x32xbf16, #tpu.memory_space<vmem>>, vector<64x32xbf16>
    %cst_71 = arith.constant dense<0.000000e+00> : vector<2x32xf32>
    %106 = tpu.matmul %104, %105, %cst_71 {dimension_numbers = #tpu.dot_dimension_numbers<[1], [0], [0], [1], [0, 0, 1, 1], [], []>} : vector<2x64xbf16>, vector<64x32xbf16>, vector<2x32xf32> -> vector<2x32xf32>
    %107 = arith.addf %102, %106 : vector<2x32xf32>
    %c22 = arith.constant 22 : index
    %c0_72 = arith.constant 0 : index
    %108 = vector.load %arg41[%c22, %c0_72] : memref<120x64xf32, #tpu.memory_space<vmem>>, vector<2x64xf32>
    %109 = arith.truncf %108 : vector<2x64xf32> to vector<2x64xbf16>
    %c704 = arith.constant 704 : index
    %c0_73 = arith.constant 0 : index
    %110 = vector.load %arg10[%c704, %c0_73] : memref<3840x32xbf16, #tpu.memory_space<vmem>>, vector<64x32xbf16>
    %cst_74 = arith.constant dense<0.000000e+00> : vector<2x32xf32>
    %111 = tpu.matmul %109, %110, %cst_74 {dimension_numbers = #tpu.dot_dimension_numbers<[1], [0], [0], [1], [0, 0, 1, 1], [], []>} : vector<2x64xbf16>, vector<64x32xbf16>, vector<2x32xf32> -> vector<2x32xf32>
    %112 = arith.addf %107, %111 : vector<2x32xf32>
    %c24 = arith.constant 24 : index
    %c0_75 = arith.constant 0 : index
    %113 = vector.load %arg41[%c24, %c0_75] : memref<120x64xf32, #tpu.memory_space<vmem>>, vector<2x64xf32>
    %114 = arith.truncf %113 : vector<2x64xf32> to vector<2x64xbf16>
    %c768 = arith.constant 768 : index
    %c0_76 = arith.constant 0 : index
    %115 = vector.load %arg10[%c768, %c0_76] : memref<3840x32xbf16, #tpu.memory_space<vmem>>, vector<64x32xbf16>
    %cst_77 = arith.constant dense<0.000000e+00> : vector<2x32xf32>
    %116 = tpu.matmul %114, %115, %cst_77 {dimension_numbers = #tpu.dot_dimension_numbers<[1], [0], [0], [1], [0, 0, 1, 1], [], []>} : vector<2x64xbf16>, vector<64x32xbf16>, vector<2x32xf32> -> vector<2x32xf32>
    %117 = arith.addf %112, %116 : vector<2x32xf32>
    %c26 = arith.constant 26 : index
    %c0_78 = arith.constant 0 : index
    %118 = vector.load %arg41[%c26, %c0_78] : memref<120x64xf32, #tpu.memory_space<vmem>>, vector<2x64xf32>
    %119 = arith.truncf %118 : vector<2x64xf32> to vector<2x64xbf16>
    %c832 = arith.constant 832 : index
    %c0_79 = arith.constant 0 : index
    %120 = vector.load %arg10[%c832, %c0_79] : memref<3840x32xbf16, #tpu.memory_space<vmem>>, vector<64x32xbf16>
    %cst_80 = arith.constant dense<0.000000e+00> : vector<2x32xf32>
    %121 = tpu.matmul %119, %120, %cst_80 {dimension_numbers = #tpu.dot_dimension_numbers<[1], [0], [0], [1], [0, 0, 1, 1], [], []>} : vector<2x64xbf16>, vector<64x32xbf16>, vector<2x32xf32> -> vector<2x32xf32>
    %122 = arith.addf %117, %121 : vector<2x32xf32>
    %c28 = arith.constant 28 : index
    %c0_81 = arith.constant 0 : index
    %123 = vector.load %arg41[%c28, %c0_81] : memref<120x64xf32, #tpu.memory_space<vmem>>, vector<2x64xf32>
    %124 = arith.truncf %123 : vector<2x64xf32> to vector<2x64xbf16>
    %c896 = arith.constant 896 : index
    %c0_82 = arith.constant 0 : index
    %125 = vector.load %arg10[%c896, %c0_82] : memref<3840x32xbf16, #tpu.memory_space<vmem>>, vector<64x32xbf16>
    %cst_83 = arith.constant dense<0.000000e+00> : vector<2x32xf32>
    %126 = tpu.matmul %124, %125, %cst_83 {dimension_numbers = #tpu.dot_dimension_numbers<[1], [0], [0], [1], [0, 0, 1, 1], [], []>} : vector<2x64xbf16>, vector<64x32xbf16>, vector<2x32xf32> -> vector<2x32xf32>
    %127 = arith.addf %122, %126 : vector<2x32xf32>
    %c30 = arith.constant 30 : index
    %c0_84 = arith.constant 0 : index
    %128 = vector.load %arg41[%c30, %c0_84] : memref<120x64xf32, #tpu.memory_space<vmem>>, vector<2x64xf32>
    %129 = arith.truncf %128 : vector<2x64xf32> to vector<2x64xbf16>
    %c960 = arith.constant 960 : index
    %c0_85 = arith.constant 0 : index
    %130 = vector.load %arg10[%c960, %c0_85] : memref<3840x32xbf16, #tpu.memory_space<vmem>>, vector<64x32xbf16>
    %cst_86 = arith.constant dense<0.000000e+00> : vector<2x32xf32>
    %131 = tpu.matmul %129, %130, %cst_86 {dimension_numbers = #tpu.dot_dimension_numbers<[1], [0], [0], [1], [0, 0, 1, 1], [], []>} : vector<2x64xbf16>, vector<64x32xbf16>, vector<2x32xf32> -> vector<2x32xf32>
    %132 = arith.addf %127, %131 : vector<2x32xf32>
    %c32 = arith.constant 32 : index
    %c0_87 = arith.constant 0 : index
    %133 = vector.load %arg41[%c32, %c0_87] : memref<120x64xf32, #tpu.memory_space<vmem>>, vector<2x64xf32>
    %134 = arith.truncf %133 : vector<2x64xf32> to vector<2x64xbf16>
    %c1024 = arith.constant 1024 : index
    %c0_88 = arith.constant 0 : index
    %135 = vector.load %arg10[%c1024, %c0_88] : memref<3840x32xbf16, #tpu.memory_space<vmem>>, vector<64x32xbf16>
    %cst_89 = arith.constant dense<0.000000e+00> : vector<2x32xf32>
    %136 = tpu.matmul %134, %135, %cst_89 {dimension_numbers = #tpu.dot_dimension_numbers<[1], [0], [0], [1], [0, 0, 1, 1], [], []>} : vector<2x64xbf16>, vector<64x32xbf16>, vector<2x32xf32> -> vector<2x32xf32>
    %137 = arith.addf %132, %136 : vector<2x32xf32>
    %c34 = arith.constant 34 : index
    %c0_90 = arith.constant 0 : index
    %138 = vector.load %arg41[%c34, %c0_90] : memref<120x64xf32, #tpu.memory_space<vmem>>, vector<2x64xf32>
    %139 = arith.truncf %138 : vector<2x64xf32> to vector<2x64xbf16>
    %c1088 = arith.constant 1088 : index
    %c0_91 = arith.constant 0 : index
    %140 = vector.load %arg10[%c1088, %c0_91] : memref<3840x32xbf16, #tpu.memory_space<vmem>>, vector<64x32xbf16>
    %cst_92 = arith.constant dense<0.000000e+00> : vector<2x32xf32>
    %141 = tpu.matmul %139, %140, %cst_92 {dimension_numbers = #tpu.dot_dimension_numbers<[1], [0], [0], [1], [0, 0, 1, 1], [], []>} : vector<2x64xbf16>, vector<64x32xbf16>, vector<2x32xf32> -> vector<2x32xf32>
    %142 = arith.addf %137, %141 : vector<2x32xf32>
    %c36 = arith.constant 36 : index
    %c0_93 = arith.constant 0 : index
    %143 = vector.load %arg41[%c36, %c0_93] : memref<120x64xf32, #tpu.memory_space<vmem>>, vector<2x64xf32>
    %144 = arith.truncf %143 : vector<2x64xf32> to vector<2x64xbf16>
    %c1152 = arith.constant 1152 : index
    %c0_94 = arith.constant 0 : index
    %145 = vector.load %arg10[%c1152, %c0_94] : memref<3840x32xbf16, #tpu.memory_space<vmem>>, vector<64x32xbf16>
    %cst_95 = arith.constant dense<0.000000e+00> : vector<2x32xf32>
    %146 = tpu.matmul %144, %145, %cst_95 {dimension_numbers = #tpu.dot_dimension_numbers<[1], [0], [0], [1], [0, 0, 1, 1], [], []>} : vector<2x64xbf16>, vector<64x32xbf16>, vector<2x32xf32> -> vector<2x32xf32>
    %147 = arith.addf %142, %146 : vector<2x32xf32>
    %c38 = arith.constant 38 : index
    %c0_96 = arith.constant 0 : index
    %148 = vector.load %arg41[%c38, %c0_96] : memref<120x64xf32, #tpu.memory_space<vmem>>, vector<2x64xf32>
    %149 = arith.truncf %148 : vector<2x64xf32> to vector<2x64xbf16>
    %c1216 = arith.constant 1216 : index
    %c0_97 = arith.constant 0 : index
    %150 = vector.load %arg10[%c1216, %c0_97] : memref<3840x32xbf16, #tpu.memory_space<vmem>>, vector<64x32xbf16>
    %cst_98 = arith.constant dense<0.000000e+00> : vector<2x32xf32>
    %151 = tpu.matmul %149, %150, %cst_98 {dimension_numbers = #tpu.dot_dimension_numbers<[1], [0], [0], [1], [0, 0, 1, 1], [], []>} : vector<2x64xbf16>, vector<64x32xbf16>, vector<2x32xf32> -> vector<2x32xf32>
    %152 = arith.addf %147, %151 : vector<2x32xf32>
    %c40 = arith.constant 40 : index
    %c0_99 = arith.constant 0 : index
    %153 = vector.load %arg41[%c40, %c0_99] : memref<120x64xf32, #tpu.memory_space<vmem>>, vector<2x64xf32>
    %154 = arith.truncf %153 : vector<2x64xf32> to vector<2x64xbf16>
    %c1280 = arith.constant 1280 : index
    %c0_100 = arith.constant 0 : index
    %155 = vector.load %arg10[%c1280, %c0_100] : memref<3840x32xbf16, #tpu.memory_space<vmem>>, vector<64x32xbf16>
    %cst_101 = arith.constant dense<0.000000e+00> : vector<2x32xf32>
    %156 = tpu.matmul %154, %155, %cst_101 {dimension_numbers = #tpu.dot_dimension_numbers<[1], [0], [0], [1], [0, 0, 1, 1], [], []>} : vector<2x64xbf16>, vector<64x32xbf16>, vector<2x32xf32> -> vector<2x32xf32>
    %157 = arith.addf %152, %156 : vector<2x32xf32>
    %c42 = arith.constant 42 : index
    %c0_102 = arith.constant 0 : index
    %158 = vector.load %arg41[%c42, %c0_102] : memref<120x64xf32, #tpu.memory_space<vmem>>, vector<2x64xf32>
    %159 = arith.truncf %158 : vector<2x64xf32> to vector<2x64xbf16>
    %c1344 = arith.constant 1344 : index
    %c0_103 = arith.constant 0 : index
    %160 = vector.load %arg10[%c1344, %c0_103] : memref<3840x32xbf16, #tpu.memory_space<vmem>>, vector<64x32xbf16>
    %cst_104 = arith.constant dense<0.000000e+00> : vector<2x32xf32>
    %161 = tpu.matmul %159, %160, %cst_104 {dimension_numbers = #tpu.dot_dimension_numbers<[1], [0], [0], [1], [0, 0, 1, 1], [], []>} : vector<2x64xbf16>, vector<64x32xbf16>, vector<2x32xf32> -> vector<2x32xf32>
    %162 = arith.addf %157, %161 : vector<2x32xf32>
    %c44 = arith.constant 44 : index
    %c0_105 = arith.constant 0 : index
    %163 = vector.load %arg41[%c44, %c0_105] : memref<120x64xf32, #tpu.memory_space<vmem>>, vector<2x64xf32>
    %164 = arith.truncf %163 : vector<2x64xf32> to vector<2x64xbf16>
    %c1408 = arith.constant 1408 : index
    %c0_106 = arith.constant 0 : index
    %165 = vector.load %arg10[%c1408, %c0_106] : memref<3840x32xbf16, #tpu.memory_space<vmem>>, vector<64x32xbf16>
    %cst_107 = arith.constant dense<0.000000e+00> : vector<2x32xf32>
    %166 = tpu.matmul %164, %165, %cst_107 {dimension_numbers = #tpu.dot_dimension_numbers<[1], [0], [0], [1], [0, 0, 1, 1], [], []>} : vector<2x64xbf16>, vector<64x32xbf16>, vector<2x32xf32> -> vector<2x32xf32>
    %167 = arith.addf %162, %166 : vector<2x32xf32>
    %c46 = arith.constant 46 : index
    %c0_108 = arith.constant 0 : index
    %168 = vector.load %arg41[%c46, %c0_108] : memref<120x64xf32, #tpu.memory_space<vmem>>, vector<2x64xf32>
    %169 = arith.truncf %168 : vector<2x64xf32> to vector<2x64xbf16>
    %c1472 = arith.constant 1472 : index
    %c0_109 = arith.constant 0 : index
    %170 = vector.load %arg10[%c1472, %c0_109] : memref<3840x32xbf16, #tpu.memory_space<vmem>>, vector<64x32xbf16>
    %cst_110 = arith.constant dense<0.000000e+00> : vector<2x32xf32>
    %171 = tpu.matmul %169, %170, %cst_110 {dimension_numbers = #tpu.dot_dimension_numbers<[1], [0], [0], [1], [0, 0, 1, 1], [], []>} : vector<2x64xbf16>, vector<64x32xbf16>, vector<2x32xf32> -> vector<2x32xf32>
    %172 = arith.addf %167, %171 : vector<2x32xf32>
    %c48 = arith.constant 48 : index
    %c0_111 = arith.constant 0 : index
    %173 = vector.load %arg41[%c48, %c0_111] : memref<120x64xf32, #tpu.memory_space<vmem>>, vector<2x64xf32>
    %174 = arith.truncf %173 : vector<2x64xf32> to vector<2x64xbf16>
    %c1536 = arith.constant 1536 : index
    %c0_112 = arith.constant 0 : index
    %175 = vector.load %arg10[%c1536, %c0_112] : memref<3840x32xbf16, #tpu.memory_space<vmem>>, vector<64x32xbf16>
    %cst_113 = arith.constant dense<0.000000e+00> : vector<2x32xf32>
    %176 = tpu.matmul %174, %175, %cst_113 {dimension_numbers = #tpu.dot_dimension_numbers<[1], [0], [0], [1], [0, 0, 1, 1], [], []>} : vector<2x64xbf16>, vector<64x32xbf16>, vector<2x32xf32> -> vector<2x32xf32>
    %177 = arith.addf %172, %176 : vector<2x32xf32>
    %c50 = arith.constant 50 : index
    %c0_114 = arith.constant 0 : index
    %178 = vector.load %arg41[%c50, %c0_114] : memref<120x64xf32, #tpu.memory_space<vmem>>, vector<2x64xf32>
    %179 = arith.truncf %178 : vector<2x64xf32> to vector<2x64xbf16>
    %c1600 = arith.constant 1600 : index
    %c0_115 = arith.constant 0 : index
    %180 = vector.load %arg10[%c1600, %c0_115] : memref<3840x32xbf16, #tpu.memory_space<vmem>>, vector<64x32xbf16>
    %cst_116 = arith.constant dense<0.000000e+00> : vector<2x32xf32>
    %181 = tpu.matmul %179, %180, %cst_116 {dimension_numbers = #tpu.dot_dimension_numbers<[1], [0], [0], [1], [0, 0, 1, 1], [], []>} : vector<2x64xbf16>, vector<64x32xbf16>, vector<2x32xf32> -> vector<2x32xf32>
    %182 = arith.addf %177, %181 : vector<2x32xf32>
    %c52 = arith.constant 52 : index
    %c0_117 = arith.constant 0 : index
    %183 = vector.load %arg41[%c52, %c0_117] : memref<120x64xf32, #tpu.memory_space<vmem>>, vector<2x64xf32>
    %184 = arith.truncf %183 : vector<2x64xf32> to vector<2x64xbf16>
    %c1664 = arith.constant 1664 : index
    %c0_118 = arith.constant 0 : index
    %185 = vector.load %arg10[%c1664, %c0_118] : memref<3840x32xbf16, #tpu.memory_space<vmem>>, vector<64x32xbf16>
    %cst_119 = arith.constant dense<0.000000e+00> : vector<2x32xf32>
    %186 = tpu.matmul %184, %185, %cst_119 {dimension_numbers = #tpu.dot_dimension_numbers<[1], [0], [0], [1], [0, 0, 1, 1], [], []>} : vector<2x64xbf16>, vector<64x32xbf16>, vector<2x32xf32> -> vector<2x32xf32>
    %187 = arith.addf %182, %186 : vector<2x32xf32>
    %c54 = arith.constant 54 : index
    %c0_120 = arith.constant 0 : index
    %188 = vector.load %arg41[%c54, %c0_120] : memref<120x64xf32, #tpu.memory_space<vmem>>, vector<2x64xf32>
    %189 = arith.truncf %188 : vector<2x64xf32> to vector<2x64xbf16>
    %c1728 = arith.constant 1728 : index
    %c0_121 = arith.constant 0 : index
    %190 = vector.load %arg10[%c1728, %c0_121] : memref<3840x32xbf16, #tpu.memory_space<vmem>>, vector<64x32xbf16>
    %cst_122 = arith.constant dense<0.000000e+00> : vector<2x32xf32>
    %191 = tpu.matmul %189, %190, %cst_122 {dimension_numbers = #tpu.dot_dimension_numbers<[1], [0], [0], [1], [0, 0, 1, 1], [], []>} : vector<2x64xbf16>, vector<64x32xbf16>, vector<2x32xf32> -> vector<2x32xf32>
    %192 = arith.addf %187, %191 : vector<2x32xf32>
    %c56 = arith.constant 56 : index
    %c0_123 = arith.constant 0 : index
    %193 = vector.load %arg41[%c56, %c0_123] : memref<120x64xf32, #tpu.memory_space<vmem>>, vector<2x64xf32>
    %194 = arith.truncf %193 : vector<2x64xf32> to vector<2x64xbf16>
    %c1792 = arith.constant 1792 : index
    %c0_124 = arith.constant 0 : index
    %195 = vector.load %arg10[%c1792, %c0_124] : memref<3840x32xbf16, #tpu.memory_space<vmem>>, vector<64x32xbf16>
    %cst_125 = arith.constant dense<0.000000e+00> : vector<2x32xf32>
    %196 = tpu.matmul %194, %195, %cst_125 {dimension_numbers = #tpu.dot_dimension_numbers<[1], [0], [0], [1], [0, 0, 1, 1], [], []>} : vector<2x64xbf16>, vector<64x32xbf16>, vector<2x32xf32> -> vector<2x32xf32>
    %197 = arith.addf %192, %196 : vector<2x32xf32>
    %c58 = arith.constant 58 : index
    %c0_126 = arith.constant 0 : index
    %198 = vector.load %arg41[%c58, %c0_126] : memref<120x64xf32, #tpu.memory_space<vmem>>, vector<2x64xf32>
    %199 = arith.truncf %198 : vector<2x64xf32> to vector<2x64xbf16>
    %c1856 = arith.constant 1856 : index
    %c0_127 = arith.constant 0 : index
    %200 = vector.load %arg10[%c1856, %c0_127] : memref<3840x32xbf16, #tpu.memory_space<vmem>>, vector<64x32xbf16>
    %cst_128 = arith.constant dense<0.000000e+00> : vector<2x32xf32>
    %201 = tpu.matmul %199, %200, %cst_128 {dimension_numbers = #tpu.dot_dimension_numbers<[1], [0], [0], [1], [0, 0, 1, 1], [], []>} : vector<2x64xbf16>, vector<64x32xbf16>, vector<2x32xf32> -> vector<2x32xf32>
    %202 = arith.addf %197, %201 : vector<2x32xf32>
    %c60 = arith.constant 60 : index
    %c0_129 = arith.constant 0 : index
    %203 = vector.load %arg41[%c60, %c0_129] : memref<120x64xf32, #tpu.memory_space<vmem>>, vector<2x64xf32>
    %204 = arith.truncf %203 : vector<2x64xf32> to vector<2x64xbf16>
    %c1920 = arith.constant 1920 : index
    %c0_130 = arith.constant 0 : index
    %205 = vector.load %arg10[%c1920, %c0_130] : memref<3840x32xbf16, #tpu.memory_space<vmem>>, vector<64x32xbf16>
    %cst_131 = arith.constant dense<0.000000e+00> : vector<2x32xf32>
    %206 = tpu.matmul %204, %205, %cst_131 {dimension_numbers = #tpu.dot_dimension_numbers<[1], [0], [0], [1], [0, 0, 1, 1], [], []>} : vector<2x64xbf16>, vector<64x32xbf16>, vector<2x32xf32> -> vector<2x32xf32>
    %207 = arith.addf %202, %206 : vector<2x32xf32>
    %c62 = arith.constant 62 : index
    %c0_132 = arith.constant 0 : index
    %208 = vector.load %arg41[%c62, %c0_132] : memref<120x64xf32, #tpu.memory_space<vmem>>, vector<2x64xf32>
    %209 = arith.truncf %208 : vector<2x64xf32> to vector<2x64xbf16>
    %c1984 = arith.constant 1984 : index
    %c0_133 = arith.constant 0 : index
    %210 = vector.load %arg10[%c1984, %c0_133] : memref<3840x32xbf16, #tpu.memory_space<vmem>>, vector<64x32xbf16>
    %cst_134 = arith.constant dense<0.000000e+00> : vector<2x32xf32>
    %211 = tpu.matmul %209, %210, %cst_134 {dimension_numbers = #tpu.dot_dimension_numbers<[1], [0], [0], [1], [0, 0, 1, 1], [], []>} : vector<2x64xbf16>, vector<64x32xbf16>, vector<2x32xf32> -> vector<2x32xf32>
    %212 = arith.addf %207, %211 : vector<2x32xf32>
    %c64_135 = arith.constant 64 : index
    %c0_136 = arith.constant 0 : index
    %213 = vector.load %arg41[%c64_135, %c0_136] : memref<120x64xf32, #tpu.memory_space<vmem>>, vector<2x64xf32>
    %214 = arith.truncf %213 : vector<2x64xf32> to vector<2x64xbf16>
    %c2048 = arith.constant 2048 : index
    %c0_137 = arith.constant 0 : index
    %215 = vector.load %arg10[%c2048, %c0_137] : memref<3840x32xbf16, #tpu.memory_space<vmem>>, vector<64x32xbf16>
    %cst_138 = arith.constant dense<0.000000e+00> : vector<2x32xf32>
    %216 = tpu.matmul %214, %215, %cst_138 {dimension_numbers = #tpu.dot_dimension_numbers<[1], [0], [0], [1], [0, 0, 1, 1], [], []>} : vector<2x64xbf16>, vector<64x32xbf16>, vector<2x32xf32> -> vector<2x32xf32>
    %217 = arith.addf %212, %216 : vector<2x32xf32>
    %c66 = arith.constant 66 : index
    %c0_139 = arith.constant 0 : index
    %218 = vector.load %arg41[%c66, %c0_139] : memref<120x64xf32, #tpu.memory_space<vmem>>, vector<2x64xf32>
    %219 = arith.truncf %218 : vector<2x64xf32> to vector<2x64xbf16>
    %c2112 = arith.constant 2112 : index
    %c0_140 = arith.constant 0 : index
    %220 = vector.load %arg10[%c2112, %c0_140] : memref<3840x32xbf16, #tpu.memory_space<vmem>>, vector<64x32xbf16>
    %cst_141 = arith.constant dense<0.000000e+00> : vector<2x32xf32>
    %221 = tpu.matmul %219, %220, %cst_141 {dimension_numbers = #tpu.dot_dimension_numbers<[1], [0], [0], [1], [0, 0, 1, 1], [], []>} : vector<2x64xbf16>, vector<64x32xbf16>, vector<2x32xf32> -> vector<2x32xf32>
    %222 = arith.addf %217, %221 : vector<2x32xf32>
    %c68 = arith.constant 68 : index
    %c0_142 = arith.constant 0 : index
    %223 = vector.load %arg41[%c68, %c0_142] : memref<120x64xf32, #tpu.memory_space<vmem>>, vector<2x64xf32>
    %224 = arith.truncf %223 : vector<2x64xf32> to vector<2x64xbf16>
    %c2176 = arith.constant 2176 : index
    %c0_143 = arith.constant 0 : index
    %225 = vector.load %arg10[%c2176, %c0_143] : memref<3840x32xbf16, #tpu.memory_space<vmem>>, vector<64x32xbf16>
    %cst_144 = arith.constant dense<0.000000e+00> : vector<2x32xf32>
    %226 = tpu.matmul %224, %225, %cst_144 {dimension_numbers = #tpu.dot_dimension_numbers<[1], [0], [0], [1], [0, 0, 1, 1], [], []>} : vector<2x64xbf16>, vector<64x32xbf16>, vector<2x32xf32> -> vector<2x32xf32>
    %227 = arith.addf %222, %226 : vector<2x32xf32>
    %c70 = arith.constant 70 : index
    %c0_145 = arith.constant 0 : index
    %228 = vector.load %arg41[%c70, %c0_145] : memref<120x64xf32, #tpu.memory_space<vmem>>, vector<2x64xf32>
    %229 = arith.truncf %228 : vector<2x64xf32> to vector<2x64xbf16>
    %c2240 = arith.constant 2240 : index
    %c0_146 = arith.constant 0 : index
    %230 = vector.load %arg10[%c2240, %c0_146] : memref<3840x32xbf16, #tpu.memory_space<vmem>>, vector<64x32xbf16>
    %cst_147 = arith.constant dense<0.000000e+00> : vector<2x32xf32>
    %231 = tpu.matmul %229, %230, %cst_147 {dimension_numbers = #tpu.dot_dimension_numbers<[1], [0], [0], [1], [0, 0, 1, 1], [], []>} : vector<2x64xbf16>, vector<64x32xbf16>, vector<2x32xf32> -> vector<2x32xf32>
    %232 = arith.addf %227, %231 : vector<2x32xf32>
    %c72 = arith.constant 72 : index
    %c0_148 = arith.constant 0 : index
    %233 = vector.load %arg41[%c72, %c0_148] : memref<120x64xf32, #tpu.memory_space<vmem>>, vector<2x64xf32>
    %234 = arith.truncf %233 : vector<2x64xf32> to vector<2x64xbf16>
    %c2304 = arith.constant 2304 : index
    %c0_149 = arith.constant 0 : index
    %235 = vector.load %arg10[%c2304, %c0_149] : memref<3840x32xbf16, #tpu.memory_space<vmem>>, vector<64x32xbf16>
    %cst_150 = arith.constant dense<0.000000e+00> : vector<2x32xf32>
    %236 = tpu.matmul %234, %235, %cst_150 {dimension_numbers = #tpu.dot_dimension_numbers<[1], [0], [0], [1], [0, 0, 1, 1], [], []>} : vector<2x64xbf16>, vector<64x32xbf16>, vector<2x32xf32> -> vector<2x32xf32>
    %237 = arith.addf %232, %236 : vector<2x32xf32>
    %c74 = arith.constant 74 : index
    %c0_151 = arith.constant 0 : index
    %238 = vector.load %arg41[%c74, %c0_151] : memref<120x64xf32, #tpu.memory_space<vmem>>, vector<2x64xf32>
    %239 = arith.truncf %238 : vector<2x64xf32> to vector<2x64xbf16>
    %c2368 = arith.constant 2368 : index
    %c0_152 = arith.constant 0 : index
    %240 = vector.load %arg10[%c2368, %c0_152] : memref<3840x32xbf16, #tpu.memory_space<vmem>>, vector<64x32xbf16>
    %cst_153 = arith.constant dense<0.000000e+00> : vector<2x32xf32>
    %241 = tpu.matmul %239, %240, %cst_153 {dimension_numbers = #tpu.dot_dimension_numbers<[1], [0], [0], [1], [0, 0, 1, 1], [], []>} : vector<2x64xbf16>, vector<64x32xbf16>, vector<2x32xf32> -> vector<2x32xf32>
    %242 = arith.addf %237, %241 : vector<2x32xf32>
    %c76 = arith.constant 76 : index
    %c0_154 = arith.constant 0 : index
    %243 = vector.load %arg41[%c76, %c0_154] : memref<120x64xf32, #tpu.memory_space<vmem>>, vector<2x64xf32>
    %244 = arith.truncf %243 : vector<2x64xf32> to vector<2x64xbf16>
    %c2432 = arith.constant 2432 : index
    %c0_155 = arith.constant 0 : index
    %245 = vector.load %arg10[%c2432, %c0_155] : memref<3840x32xbf16, #tpu.memory_space<vmem>>, vector<64x32xbf16>
    %cst_156 = arith.constant dense<0.000000e+00> : vector<2x32xf32>
    %246 = tpu.matmul %244, %245, %cst_156 {dimension_numbers = #tpu.dot_dimension_numbers<[1], [0], [0], [1], [0, 0, 1, 1], [], []>} : vector<2x64xbf16>, vector<64x32xbf16>, vector<2x32xf32> -> vector<2x32xf32>
    %247 = arith.addf %242, %246 : vector<2x32xf32>
    %c78 = arith.constant 78 : index
    %c0_157 = arith.constant 0 : index
    %248 = vector.load %arg41[%c78, %c0_157] : memref<120x64xf32, #tpu.memory_space<vmem>>, vector<2x64xf32>
    %249 = arith.truncf %248 : vector<2x64xf32> to vector<2x64xbf16>
    %c2496 = arith.constant 2496 : index
    %c0_158 = arith.constant 0 : index
    %250 = vector.load %arg10[%c2496, %c0_158] : memref<3840x32xbf16, #tpu.memory_space<vmem>>, vector<64x32xbf16>
    %cst_159 = arith.constant dense<0.000000e+00> : vector<2x32xf32>
    %251 = tpu.matmul %249, %250, %cst_159 {dimension_numbers = #tpu.dot_dimension_numbers<[1], [0], [0], [1], [0, 0, 1, 1], [], []>} : vector<2x64xbf16>, vector<64x32xbf16>, vector<2x32xf32> -> vector<2x32xf32>
    %252 = arith.addf %247, %251 : vector<2x32xf32>
    %c80 = arith.constant 80 : index
    %c0_160 = arith.constant 0 : index
    %253 = vector.load %arg41[%c80, %c0_160] : memref<120x64xf32, #tpu.memory_space<vmem>>, vector<2x64xf32>
    %254 = arith.truncf %253 : vector<2x64xf32> to vector<2x64xbf16>
    %c2560 = arith.constant 2560 : index
    %c0_161 = arith.constant 0 : index
    %255 = vector.load %arg10[%c2560, %c0_161] : memref<3840x32xbf16, #tpu.memory_space<vmem>>, vector<64x32xbf16>
    %cst_162 = arith.constant dense<0.000000e+00> : vector<2x32xf32>
    %256 = tpu.matmul %254, %255, %cst_162 {dimension_numbers = #tpu.dot_dimension_numbers<[1], [0], [0], [1], [0, 0, 1, 1], [], []>} : vector<2x64xbf16>, vector<64x32xbf16>, vector<2x32xf32> -> vector<2x32xf32>
    %257 = arith.addf %252, %256 : vector<2x32xf32>
    %c82 = arith.constant 82 : index
    %c0_163 = arith.constant 0 : index
    %258 = vector.load %arg41[%c82, %c0_163] : memref<120x64xf32, #tpu.memory_space<vmem>>, vector<2x64xf32>
    %259 = arith.truncf %258 : vector<2x64xf32> to vector<2x64xbf16>
    %c2624 = arith.constant 2624 : index
    %c0_164 = arith.constant 0 : index
    %260 = vector.load %arg10[%c2624, %c0_164] : memref<3840x32xbf16, #tpu.memory_space<vmem>>, vector<64x32xbf16>
    %cst_165 = arith.constant dense<0.000000e+00> : vector<2x32xf32>
    %261 = tpu.matmul %259, %260, %cst_165 {dimension_numbers = #tpu.dot_dimension_numbers<[1], [0], [0], [1], [0, 0, 1, 1], [], []>} : vector<2x64xbf16>, vector<64x32xbf16>, vector<2x32xf32> -> vector<2x32xf32>
    %262 = arith.addf %257, %261 : vector<2x32xf32>
    %c84 = arith.constant 84 : index
    %c0_166 = arith.constant 0 : index
    %263 = vector.load %arg41[%c84, %c0_166] : memref<120x64xf32, #tpu.memory_space<vmem>>, vector<2x64xf32>
    %264 = arith.truncf %263 : vector<2x64xf32> to vector<2x64xbf16>
    %c2688 = arith.constant 2688 : index
    %c0_167 = arith.constant 0 : index
    %265 = vector.load %arg10[%c2688, %c0_167] : memref<3840x32xbf16, #tpu.memory_space<vmem>>, vector<64x32xbf16>
    %cst_168 = arith.constant dense<0.000000e+00> : vector<2x32xf32>
    %266 = tpu.matmul %264, %265, %cst_168 {dimension_numbers = #tpu.dot_dimension_numbers<[1], [0], [0], [1], [0, 0, 1, 1], [], []>} : vector<2x64xbf16>, vector<64x32xbf16>, vector<2x32xf32> -> vector<2x32xf32>
    %267 = arith.addf %262, %266 : vector<2x32xf32>
    %c86 = arith.constant 86 : index
    %c0_169 = arith.constant 0 : index
    %268 = vector.load %arg41[%c86, %c0_169] : memref<120x64xf32, #tpu.memory_space<vmem>>, vector<2x64xf32>
    %269 = arith.truncf %268 : vector<2x64xf32> to vector<2x64xbf16>
    %c2752 = arith.constant 2752 : index
    %c0_170 = arith.constant 0 : index
    %270 = vector.load %arg10[%c2752, %c0_170] : memref<3840x32xbf16, #tpu.memory_space<vmem>>, vector<64x32xbf16>
    %cst_171 = arith.constant dense<0.000000e+00> : vector<2x32xf32>
    %271 = tpu.matmul %269, %270, %cst_171 {dimension_numbers = #tpu.dot_dimension_numbers<[1], [0], [0], [1], [0, 0, 1, 1], [], []>} : vector<2x64xbf16>, vector<64x32xbf16>, vector<2x32xf32> -> vector<2x32xf32>
    %272 = arith.addf %267, %271 : vector<2x32xf32>
    %c88 = arith.constant 88 : index
    %c0_172 = arith.constant 0 : index
    %273 = vector.load %arg41[%c88, %c0_172] : memref<120x64xf32, #tpu.memory_space<vmem>>, vector<2x64xf32>
    %274 = arith.truncf %273 : vector<2x64xf32> to vector<2x64xbf16>
    %c2816 = arith.constant 2816 : index
    %c0_173 = arith.constant 0 : index
    %275 = vector.load %arg10[%c2816, %c0_173] : memref<3840x32xbf16, #tpu.memory_space<vmem>>, vector<64x32xbf16>
    %cst_174 = arith.constant dense<0.000000e+00> : vector<2x32xf32>
    %276 = tpu.matmul %274, %275, %cst_174 {dimension_numbers = #tpu.dot_dimension_numbers<[1], [0], [0], [1], [0, 0, 1, 1], [], []>} : vector<2x64xbf16>, vector<64x32xbf16>, vector<2x32xf32> -> vector<2x32xf32>
    %277 = arith.addf %272, %276 : vector<2x32xf32>
    %c90 = arith.constant 90 : index
    %c0_175 = arith.constant 0 : index
    %278 = vector.load %arg41[%c90, %c0_175] : memref<120x64xf32, #tpu.memory_space<vmem>>, vector<2x64xf32>
    %279 = arith.truncf %278 : vector<2x64xf32> to vector<2x64xbf16>
    %c2880 = arith.constant 2880 : index
    %c0_176 = arith.constant 0 : index
    %280 = vector.load %arg10[%c2880, %c0_176] : memref<3840x32xbf16, #tpu.memory_space<vmem>>, vector<64x32xbf16>
    %cst_177 = arith.constant dense<0.000000e+00> : vector<2x32xf32>
    %281 = tpu.matmul %279, %280, %cst_177 {dimension_numbers = #tpu.dot_dimension_numbers<[1], [0], [0], [1], [0, 0, 1, 1], [], []>} : vector<2x64xbf16>, vector<64x32xbf16>, vector<2x32xf32> -> vector<2x32xf32>
    %282 = arith.addf %277, %281 : vector<2x32xf32>
    %c92 = arith.constant 92 : index
    %c0_178 = arith.constant 0 : index
    %283 = vector.load %arg41[%c92, %c0_178] : memref<120x64xf32, #tpu.memory_space<vmem>>, vector<2x64xf32>
    %284 = arith.truncf %283 : vector<2x64xf32> to vector<2x64xbf16>
    %c2944 = arith.constant 2944 : index
    %c0_179 = arith.constant 0 : index
    %285 = vector.load %arg10[%c2944, %c0_179] : memref<3840x32xbf16, #tpu.memory_space<vmem>>, vector<64x32xbf16>
    %cst_180 = arith.constant dense<0.000000e+00> : vector<2x32xf32>
    %286 = tpu.matmul %284, %285, %cst_180 {dimension_numbers = #tpu.dot_dimension_numbers<[1], [0], [0], [1], [0, 0, 1, 1], [], []>} : vector<2x64xbf16>, vector<64x32xbf16>, vector<2x32xf32> -> vector<2x32xf32>
    %287 = arith.addf %282, %286 : vector<2x32xf32>
    %c94 = arith.constant 94 : index
    %c0_181 = arith.constant 0 : index
    %288 = vector.load %arg41[%c94, %c0_181] : memref<120x64xf32, #tpu.memory_space<vmem>>, vector<2x64xf32>
    %289 = arith.truncf %288 : vector<2x64xf32> to vector<2x64xbf16>
    %c3008 = arith.constant 3008 : index
    %c0_182 = arith.constant 0 : index
    %290 = vector.load %arg10[%c3008, %c0_182] : memref<3840x32xbf16, #tpu.memory_space<vmem>>, vector<64x32xbf16>
    %cst_183 = arith.constant dense<0.000000e+00> : vector<2x32xf32>
    %291 = tpu.matmul %289, %290, %cst_183 {dimension_numbers = #tpu.dot_dimension_numbers<[1], [0], [0], [1], [0, 0, 1, 1], [], []>} : vector<2x64xbf16>, vector<64x32xbf16>, vector<2x32xf32> -> vector<2x32xf32>
    %292 = arith.addf %287, %291 : vector<2x32xf32>
    %c96 = arith.constant 96 : index
    %c0_184 = arith.constant 0 : index
    %293 = vector.load %arg41[%c96, %c0_184] : memref<120x64xf32, #tpu.memory_space<vmem>>, vector<2x64xf32>
    %294 = arith.truncf %293 : vector<2x64xf32> to vector<2x64xbf16>
    %c3072 = arith.constant 3072 : index
    %c0_185 = arith.constant 0 : index
    %295 = vector.load %arg10[%c3072, %c0_185] : memref<3840x32xbf16, #tpu.memory_space<vmem>>, vector<64x32xbf16>
    %cst_186 = arith.constant dense<0.000000e+00> : vector<2x32xf32>
    %296 = tpu.matmul %294, %295, %cst_186 {dimension_numbers = #tpu.dot_dimension_numbers<[1], [0], [0], [1], [0, 0, 1, 1], [], []>} : vector<2x64xbf16>, vector<64x32xbf16>, vector<2x32xf32> -> vector<2x32xf32>
    %297 = arith.addf %292, %296 : vector<2x32xf32>
    %c98 = arith.constant 98 : index
    %c0_187 = arith.constant 0 : index
    %298 = vector.load %arg41[%c98, %c0_187] : memref<120x64xf32, #tpu.memory_space<vmem>>, vector<2x64xf32>
    %299 = arith.truncf %298 : vector<2x64xf32> to vector<2x64xbf16>
    %c3136 = arith.constant 3136 : index
    %c0_188 = arith.constant 0 : index
    %300 = vector.load %arg10[%c3136, %c0_188] : memref<3840x32xbf16, #tpu.memory_space<vmem>>, vector<64x32xbf16>
    %cst_189 = arith.constant dense<0.000000e+00> : vector<2x32xf32>
    %301 = tpu.matmul %299, %300, %cst_189 {dimension_numbers = #tpu.dot_dimension_numbers<[1], [0], [0], [1], [0, 0, 1, 1], [], []>} : vector<2x64xbf16>, vector<64x32xbf16>, vector<2x32xf32> -> vector<2x32xf32>
    %302 = arith.addf %297, %301 : vector<2x32xf32>
    %c100 = arith.constant 100 : index
    %c0_190 = arith.constant 0 : index
    %303 = vector.load %arg41[%c100, %c0_190] : memref<120x64xf32, #tpu.memory_space<vmem>>, vector<2x64xf32>
    %304 = arith.truncf %303 : vector<2x64xf32> to vector<2x64xbf16>
    %c3200 = arith.constant 3200 : index
    %c0_191 = arith.constant 0 : index
    %305 = vector.load %arg10[%c3200, %c0_191] : memref<3840x32xbf16, #tpu.memory_space<vmem>>, vector<64x32xbf16>
    %cst_192 = arith.constant dense<0.000000e+00> : vector<2x32xf32>
    %306 = tpu.matmul %304, %305, %cst_192 {dimension_numbers = #tpu.dot_dimension_numbers<[1], [0], [0], [1], [0, 0, 1, 1], [], []>} : vector<2x64xbf16>, vector<64x32xbf16>, vector<2x32xf32> -> vector<2x32xf32>
    %307 = arith.addf %302, %306 : vector<2x32xf32>
    %c102 = arith.constant 102 : index
    %c0_193 = arith.constant 0 : index
    %308 = vector.load %arg41[%c102, %c0_193] : memref<120x64xf32, #tpu.memory_space<vmem>>, vector<2x64xf32>
    %309 = arith.truncf %308 : vector<2x64xf32> to vector<2x64xbf16>
    %c3264 = arith.constant 3264 : index
    %c0_194 = arith.constant 0 : index
    %310 = vector.load %arg10[%c3264, %c0_194] : memref<3840x32xbf16, #tpu.memory_space<vmem>>, vector<64x32xbf16>
    %cst_195 = arith.constant dense<0.000000e+00> : vector<2x32xf32>
    %311 = tpu.matmul %309, %310, %cst_195 {dimension_numbers = #tpu.dot_dimension_numbers<[1], [0], [0], [1], [0, 0, 1, 1], [], []>} : vector<2x64xbf16>, vector<64x32xbf16>, vector<2x32xf32> -> vector<2x32xf32>
    %312 = arith.addf %307, %311 : vector<2x32xf32>
    %c104 = arith.constant 104 : index
    %c0_196 = arith.constant 0 : index
    %313 = vector.load %arg41[%c104, %c0_196] : memref<120x64xf32, #tpu.memory_space<vmem>>, vector<2x64xf32>
    %314 = arith.truncf %313 : vector<2x64xf32> to vector<2x64xbf16>
    %c3328 = arith.constant 3328 : index
    %c0_197 = arith.constant 0 : index
    %315 = vector.load %arg10[%c3328, %c0_197] : memref<3840x32xbf16, #tpu.memory_space<vmem>>, vector<64x32xbf16>
    %cst_198 = arith.constant dense<0.000000e+00> : vector<2x32xf32>
    %316 = tpu.matmul %314, %315, %cst_198 {dimension_numbers = #tpu.dot_dimension_numbers<[1], [0], [0], [1], [0, 0, 1, 1], [], []>} : vector<2x64xbf16>, vector<64x32xbf16>, vector<2x32xf32> -> vector<2x32xf32>
    %317 = arith.addf %312, %316 : vector<2x32xf32>
    %c106 = arith.constant 106 : index
    %c0_199 = arith.constant 0 : index
    %318 = vector.load %arg41[%c106, %c0_199] : memref<120x64xf32, #tpu.memory_space<vmem>>, vector<2x64xf32>
    %319 = arith.truncf %318 : vector<2x64xf32> to vector<2x64xbf16>
    %c3392 = arith.constant 3392 : index
    %c0_200 = arith.constant 0 : index
    %320 = vector.load %arg10[%c3392, %c0_200] : memref<3840x32xbf16, #tpu.memory_space<vmem>>, vector<64x32xbf16>
    %cst_201 = arith.constant dense<0.000000e+00> : vector<2x32xf32>
    %321 = tpu.matmul %319, %320, %cst_201 {dimension_numbers = #tpu.dot_dimension_numbers<[1], [0], [0], [1], [0, 0, 1, 1], [], []>} : vector<2x64xbf16>, vector<64x32xbf16>, vector<2x32xf32> -> vector<2x32xf32>
    %322 = arith.addf %317, %321 : vector<2x32xf32>
    %c108 = arith.constant 108 : index
    %c0_202 = arith.constant 0 : index
    %323 = vector.load %arg41[%c108, %c0_202] : memref<120x64xf32, #tpu.memory_space<vmem>>, vector<2x64xf32>
    %324 = arith.truncf %323 : vector<2x64xf32> to vector<2x64xbf16>
    %c3456 = arith.constant 3456 : index
    %c0_203 = arith.constant 0 : index
    %325 = vector.load %arg10[%c3456, %c0_203] : memref<3840x32xbf16, #tpu.memory_space<vmem>>, vector<64x32xbf16>
    %cst_204 = arith.constant dense<0.000000e+00> : vector<2x32xf32>
    %326 = tpu.matmul %324, %325, %cst_204 {dimension_numbers = #tpu.dot_dimension_numbers<[1], [0], [0], [1], [0, 0, 1, 1], [], []>} : vector<2x64xbf16>, vector<64x32xbf16>, vector<2x32xf32> -> vector<2x32xf32>
    %327 = arith.addf %322, %326 : vector<2x32xf32>
    %c110 = arith.constant 110 : index
    %c0_205 = arith.constant 0 : index
    %328 = vector.load %arg41[%c110, %c0_205] : memref<120x64xf32, #tpu.memory_space<vmem>>, vector<2x64xf32>
    %329 = arith.truncf %328 : vector<2x64xf32> to vector<2x64xbf16>
    %c3520 = arith.constant 3520 : index
    %c0_206 = arith.constant 0 : index
    %330 = vector.load %arg10[%c3520, %c0_206] : memref<3840x32xbf16, #tpu.memory_space<vmem>>, vector<64x32xbf16>
    %cst_207 = arith.constant dense<0.000000e+00> : vector<2x32xf32>
    %331 = tpu.matmul %329, %330, %cst_207 {dimension_numbers = #tpu.dot_dimension_numbers<[1], [0], [0], [1], [0, 0, 1, 1], [], []>} : vector<2x64xbf16>, vector<64x32xbf16>, vector<2x32xf32> -> vector<2x32xf32>
    %332 = arith.addf %327, %331 : vector<2x32xf32>
    %c112 = arith.constant 112 : index
    %c0_208 = arith.constant 0 : index
    %333 = vector.load %arg41[%c112, %c0_208] : memref<120x64xf32, #tpu.memory_space<vmem>>, vector<2x64xf32>
    %334 = arith.truncf %333 : vector<2x64xf32> to vector<2x64xbf16>
    %c3584 = arith.constant 3584 : index
    %c0_209 = arith.constant 0 : index
    %335 = vector.load %arg10[%c3584, %c0_209] : memref<3840x32xbf16, #tpu.memory_space<vmem>>, vector<64x32xbf16>
    %cst_210 = arith.constant dense<0.000000e+00> : vector<2x32xf32>
    %336 = tpu.matmul %334, %335, %cst_210 {dimension_numbers = #tpu.dot_dimension_numbers<[1], [0], [0], [1], [0, 0, 1, 1], [], []>} : vector<2x64xbf16>, vector<64x32xbf16>, vector<2x32xf32> -> vector<2x32xf32>
    %337 = arith.addf %332, %336 : vector<2x32xf32>
    %c114 = arith.constant 114 : index
    %c0_211 = arith.constant 0 : index
    %338 = vector.load %arg41[%c114, %c0_211] : memref<120x64xf32, #tpu.memory_space<vmem>>, vector<2x64xf32>
    %339 = arith.truncf %338 : vector<2x64xf32> to vector<2x64xbf16>
    %c3648 = arith.constant 3648 : index
    %c0_212 = arith.constant 0 : index
    %340 = vector.load %arg10[%c3648, %c0_212] : memref<3840x32xbf16, #tpu.memory_space<vmem>>, vector<64x32xbf16>
    %cst_213 = arith.constant dense<0.000000e+00> : vector<2x32xf32>
    %341 = tpu.matmul %339, %340, %cst_213 {dimension_numbers = #tpu.dot_dimension_numbers<[1], [0], [0], [1], [0, 0, 1, 1], [], []>} : vector<2x64xbf16>, vector<64x32xbf16>, vector<2x32xf32> -> vector<2x32xf32>
    %342 = arith.addf %337, %341 : vector<2x32xf32>
    %c116 = arith.constant 116 : index
    %c0_214 = arith.constant 0 : index
    %343 = vector.load %arg41[%c116, %c0_214] : memref<120x64xf32, #tpu.memory_space<vmem>>, vector<2x64xf32>
    %344 = arith.truncf %343 : vector<2x64xf32> to vector<2x64xbf16>
    %c3712 = arith.constant 3712 : index
    %c0_215 = arith.constant 0 : index
    %345 = vector.load %arg10[%c3712, %c0_215] : memref<3840x32xbf16, #tpu.memory_space<vmem>>, vector<64x32xbf16>
    %cst_216 = arith.constant dense<0.000000e+00> : vector<2x32xf32>
    %346 = tpu.matmul %344, %345, %cst_216 {dimension_numbers = #tpu.dot_dimension_numbers<[1], [0], [0], [1], [0, 0, 1, 1], [], []>} : vector<2x64xbf16>, vector<64x32xbf16>, vector<2x32xf32> -> vector<2x32xf32>
    %347 = arith.addf %342, %346 : vector<2x32xf32>
    %c118 = arith.constant 118 : index
    %c0_217 = arith.constant 0 : index
    %348 = vector.load %arg41[%c118, %c0_217] : memref<120x64xf32, #tpu.memory_space<vmem>>, vector<2x64xf32>
    %349 = arith.truncf %348 : vector<2x64xf32> to vector<2x64xbf16>
    %c3776 = arith.constant 3776 : index
    %c0_218 = arith.constant 0 : index
    %350 = vector.load %arg10[%c3776, %c0_218] : memref<3840x32xbf16, #tpu.memory_space<vmem>>, vector<64x32xbf16>
    %cst_219 = arith.constant dense<0.000000e+00> : vector<2x32xf32>
    %351 = tpu.matmul %349, %350, %cst_219 {dimension_numbers = #tpu.dot_dimension_numbers<[1], [0], [0], [1], [0, 0, 1, 1], [], []>} : vector<2x64xbf16>, vector<64x32xbf16>, vector<2x32xf32> -> vector<2x32xf32>
    %352 = arith.addf %347, %351 : vector<2x32xf32>
    %c0_220 = arith.constant 0 : index
    %c0_221 = arith.constant 0 : index
    %353 = vector.load %arg11[%c0_220, %c0_221] : memref<1x32xf32, #tpu.memory_space<vmem>>, vector<1x32xf32>
    %354 = vector.broadcast %353 : vector<1x32xf32> to vector<2x32xf32>
    %355 = arith.addf %352, %354 : vector<2x32xf32>
    %cst_222 = arith.constant 0.000000e+00 : f32
    %356 = vector.broadcast %cst_222 : f32 to vector<2x32xf32>
    %357 = arith.maximumf %355, %356 : vector<2x32xf32>
    %358 = arith.truncf %357 : vector<2x32xf32> to vector<2x32xbf16>
    %c0_223 = arith.constant 0 : index
    %c0_224 = arith.constant 0 : index
    %359 = vector.load %arg12[%c0_223, %c0_224] : memref<32x32xbf16, #tpu.memory_space<vmem>>, vector<32x32xbf16>
    %cst_225 = arith.constant dense<0.000000e+00> : vector<2x32xf32>
    %360 = tpu.matmul %358, %359, %cst_225 {dimension_numbers = #tpu.dot_dimension_numbers<[1], [0], [0], [1], [0, 0, 1, 1], [], []>} : vector<2x32xbf16>, vector<32x32xbf16>, vector<2x32xf32> -> vector<2x32xf32>
    %c0_226 = arith.constant 0 : index
    %c0_227 = arith.constant 0 : index
    %361 = vector.load %arg13[%c0_226, %c0_227] : memref<1x32xf32, #tpu.memory_space<vmem>>, vector<1x32xf32>
    %362 = vector.broadcast %361 : vector<1x32xf32> to vector<2x32xf32>
    %363 = arith.addf %360, %362 : vector<2x32xf32>
    %cst_228 = arith.constant 0.000000e+00 : f32
    %364 = vector.broadcast %cst_228 : f32 to vector<2x32xf32>
    %365 = arith.maximumf %363, %364 : vector<2x32xf32>
    %366 = arith.truncf %365 : vector<2x32xf32> to vector<2x32xbf16>
    %c0_229 = arith.constant 0 : index
    %c0_230 = arith.constant 0 : index
    %367 = vector.load %arg14[%c0_229, %c0_230] : memref<32x4xbf16, #tpu.memory_space<vmem>>, vector<32x4xbf16>
    %cst_231 = arith.constant dense<0.000000e+00> : vector<2x4xf32>
    %368 = tpu.matmul %366, %367, %cst_231 {dimension_numbers = #tpu.dot_dimension_numbers<[1], [0], [0], [1], [0, 0, 1, 1], [], []>} : vector<2x32xbf16>, vector<32x4xbf16>, vector<2x4xf32> -> vector<2x4xf32>
    %c0_232 = arith.constant 0 : index
    %c0_233 = arith.constant 0 : index
    %369 = vector.load %arg15[%c0_232, %c0_233] : memref<1x4xf32, #tpu.memory_space<vmem>>, vector<1x4xf32>
    %370 = vector.broadcast %369 : vector<1x4xf32> to vector<2x4xf32>
    %371 = arith.addf %368, %370 : vector<2x4xf32>
    %cst_234 = arith.constant dense<0xFF800000> : vector<2xf32>
    %372 = vector.multi_reduction <maximumf>, %371, %cst_234 [1] : vector<2x4xf32> to vector<2xf32>
    %373 = vector.shape_cast %372 : vector<2xf32> to vector<2x1xf32>
    %374 = vector.broadcast %373 : vector<2x1xf32> to vector<2x4xf32>
    %375 = arith.subf %371, %374 : vector<2x4xf32>
    %376 = math.exp %375 : vector<2x4xf32>
    %cst_235 = arith.constant dense<0.000000e+00> : vector<2xf32>
    %377 = vector.multi_reduction <add>, %376, %cst_235 [1] : vector<2x4xf32> to vector<2xf32>
    %378 = vector.shape_cast %377 : vector<2xf32> to vector<2x1xf32>
    %379 = tpu.reciprocal %378 : vector<2x1xf32> -> vector<2x1xf32>
    %380 = vector.broadcast %379 : vector<2x1xf32> to vector<2x4xf32>
    %381 = arith.mulf %376, %380 : vector<2x4xf32>
    %382 = arith.addf %13, %381 : vector<2x4xf32>
    %cst_236 = arith.constant 0.000000e+00 : f32
    %383 = vector.broadcast %cst_236 : f32 to vector<60x128xf32>
    %c0_237 = arith.constant 0 : index
    %c0_238 = arith.constant 0 : index
    %c0_239 = arith.constant 0 : index
    %384 = vector.load %arg16[%c0_237, %c0_238, %c0_239] : memref<3x60x120xbf16, #tpu.memory_space<vmem>>, vector<1x60x120xbf16>
    %385 = vector.shape_cast %384 : vector<1x60x120xbf16> to vector<60x120xbf16>
    %cst_240 = arith.constant dense<0.000000e+00> : vector<60x64xf32>
    %386 = tpu.matmul %385, %12, %cst_240 {dimension_numbers = #tpu.dot_dimension_numbers<[1], [0], [0], [1], [0, 0, 1, 1], [], []>} : vector<60x120xbf16>, vector<120x64xbf16>, vector<60x64xf32> -> vector<60x64xf32>
    %387 = arith.truncf %386 : vector<60x64xf32> to vector<60x64xbf16>
    %c0_241 = arith.constant 0 : index
    %c0_242 = arith.constant 0 : index
    %c0_243 = arith.constant 0 : index
    %388 = vector.load %arg17[%c0_241, %c0_242, %c0_243] : memref<3x64x128xbf16, #tpu.memory_space<vmem>>, vector<1x64x128xbf16>
    %389 = vector.shape_cast %388 : vector<1x64x128xbf16> to vector<64x128xbf16>
    %cst_244 = arith.constant dense<0.000000e+00> : vector<60x128xf32>
    %390 = tpu.matmul %387, %389, %cst_244 {dimension_numbers = #tpu.dot_dimension_numbers<[1], [0], [0], [1], [0, 0, 1, 1], [], []>} : vector<60x64xbf16>, vector<64x128xbf16>, vector<60x128xf32> -> vector<60x128xf32>
    %391 = arith.addf %383, %390 : vector<60x128xf32>
    %c1 = arith.constant 1 : index
    %c0_245 = arith.constant 0 : index
    %c0_246 = arith.constant 0 : index
    %392 = vector.load %arg16[%c1, %c0_245, %c0_246] : memref<3x60x120xbf16, #tpu.memory_space<vmem>>, vector<1x60x120xbf16>
    %393 = vector.shape_cast %392 : vector<1x60x120xbf16> to vector<60x120xbf16>
    %cst_247 = arith.constant dense<0.000000e+00> : vector<60x64xf32>
    %394 = tpu.matmul %393, %12, %cst_247 {dimension_numbers = #tpu.dot_dimension_numbers<[1], [0], [0], [1], [0, 0, 1, 1], [], []>} : vector<60x120xbf16>, vector<120x64xbf16>, vector<60x64xf32> -> vector<60x64xf32>
    %395 = arith.truncf %394 : vector<60x64xf32> to vector<60x64xbf16>
    %c1_248 = arith.constant 1 : index
    %c0_249 = arith.constant 0 : index
    %c0_250 = arith.constant 0 : index
    %396 = vector.load %arg17[%c1_248, %c0_249, %c0_250] : memref<3x64x128xbf16, #tpu.memory_space<vmem>>, vector<1x64x128xbf16>
    %397 = vector.shape_cast %396 : vector<1x64x128xbf16> to vector<64x128xbf16>
    %cst_251 = arith.constant dense<0.000000e+00> : vector<60x128xf32>
    %398 = tpu.matmul %395, %397, %cst_251 {dimension_numbers = #tpu.dot_dimension_numbers<[1], [0], [0], [1], [0, 0, 1, 1], [], []>} : vector<60x64xbf16>, vector<64x128xbf16>, vector<60x128xf32> -> vector<60x128xf32>
    %399 = arith.addf %391, %398 : vector<60x128xf32>
    %c2_252 = arith.constant 2 : index
    %c0_253 = arith.constant 0 : index
    %c0_254 = arith.constant 0 : index
    %400 = vector.load %arg16[%c2_252, %c0_253, %c0_254] : memref<3x60x120xbf16, #tpu.memory_space<vmem>>, vector<1x60x120xbf16>
    %401 = vector.shape_cast %400 : vector<1x60x120xbf16> to vector<60x120xbf16>
    %cst_255 = arith.constant dense<0.000000e+00> : vector<60x64xf32>
    %402 = tpu.matmul %401, %12, %cst_255 {dimension_numbers = #tpu.dot_dimension_numbers<[1], [0], [0], [1], [0, 0, 1, 1], [], []>} : vector<60x120xbf16>, vector<120x64xbf16>, vector<60x64xf32> -> vector<60x64xf32>
    %403 = arith.truncf %402 : vector<60x64xf32> to vector<60x64xbf16>
    %c2_256 = arith.constant 2 : index
    %c0_257 = arith.constant 0 : index
    %c0_258 = arith.constant 0 : index
    %404 = vector.load %arg17[%c2_256, %c0_257, %c0_258] : memref<3x64x128xbf16, #tpu.memory_space<vmem>>, vector<1x64x128xbf16>
    %405 = vector.shape_cast %404 : vector<1x64x128xbf16> to vector<64x128xbf16>
    %cst_259 = arith.constant dense<0.000000e+00> : vector<60x128xf32>
    %406 = tpu.matmul %403, %405, %cst_259 {dimension_numbers = #tpu.dot_dimension_numbers<[1], [0], [0], [1], [0, 0, 1, 1], [], []>} : vector<60x64xbf16>, vector<64x128xbf16>, vector<60x128xf32> -> vector<60x128xf32>
    %407 = arith.addf %399, %406 : vector<60x128xf32>
    %c0_260 = arith.constant 0 : index
    %c0_261 = arith.constant 0 : index
    %408 = vector.load %arg18[%c0_260, %c0_261] : memref<1x128xf32, #tpu.memory_space<vmem>>, vector<1x128xf32>
    %409 = vector.broadcast %408 : vector<1x128xf32> to vector<60x128xf32>
    %410 = arith.addf %407, %409 : vector<60x128xf32>
    %cst_262 = arith.constant 0.000000e+00 : f32
    %411 = vector.broadcast %cst_262 : f32 to vector<60x128xf32>
    %412 = arith.cmpf ogt, %410, %411 : vector<60x128xf32>
    %413 = math.exp %410 : vector<60x128xf32>
    %cst_263 = arith.constant 1.000000e+00 : f32
    %414 = vector.broadcast %cst_263 : f32 to vector<60x128xf32>
    %415 = arith.subf %413, %414 : vector<60x128xf32>
    %416 = arith.select %412, %410, %415 : vector<60x128xi1>, vector<60x128xf32>
    %417 = arith.truncf %416 : vector<60x128xf32> to vector<60x128xbf16>
    %cst_264 = arith.constant 0.000000e+00 : f32
    %418 = vector.broadcast %cst_264 : f32 to vector<30x64xf32>
    %c0_265 = arith.constant 0 : index
    %c0_266 = arith.constant 0 : index
    %c0_267 = arith.constant 0 : index
    %419 = vector.load %arg19[%c0_265, %c0_266, %c0_267] : memref<3x30x60xbf16, #tpu.memory_space<vmem>>, vector<1x30x60xbf16>
    %420 = vector.shape_cast %419 : vector<1x30x60xbf16> to vector<30x60xbf16>
    %cst_268 = arith.constant dense<0.000000e+00> : vector<30x128xf32>
    %421 = tpu.matmul %420, %417, %cst_268 {dimension_numbers = #tpu.dot_dimension_numbers<[1], [0], [0], [1], [0, 0, 1, 1], [], []>} : vector<30x60xbf16>, vector<60x128xbf16>, vector<30x128xf32> -> vector<30x128xf32>
    %422 = arith.truncf %421 : vector<30x128xf32> to vector<30x128xbf16>
    %c0_269 = arith.constant 0 : index
    %c0_270 = arith.constant 0 : index
    %c0_271 = arith.constant 0 : index
    %423 = vector.load %arg20[%c0_269, %c0_270, %c0_271] : memref<3x128x64xbf16, #tpu.memory_space<vmem>>, vector<1x128x64xbf16>
    %424 = vector.shape_cast %423 : vector<1x128x64xbf16> to vector<128x64xbf16>
    %cst_272 = arith.constant dense<0.000000e+00> : vector<30x64xf32>
    %425 = tpu.matmul %422, %424, %cst_272 {dimension_numbers = #tpu.dot_dimension_numbers<[1], [0], [0], [1], [0, 0, 1, 1], [], []>} : vector<30x128xbf16>, vector<128x64xbf16>, vector<30x64xf32> -> vector<30x64xf32>
    %426 = arith.addf %418, %425 : vector<30x64xf32>
    %c1_273 = arith.constant 1 : index
    %c0_274 = arith.constant 0 : index
    %c0_275 = arith.constant 0 : index
    %427 = vector.load %arg19[%c1_273, %c0_274, %c0_275] : memref<3x30x60xbf16, #tpu.memory_space<vmem>>, vector<1x30x60xbf16>
    %428 = vector.shape_cast %427 : vector<1x30x60xbf16> to vector<30x60xbf16>
    %cst_276 = arith.constant dense<0.000000e+00> : vector<30x128xf32>
    %429 = tpu.matmul %428, %417, %cst_276 {dimension_numbers = #tpu.dot_dimension_numbers<[1], [0], [0], [1], [0, 0, 1, 1], [], []>} : vector<30x60xbf16>, vector<60x128xbf16>, vector<30x128xf32> -> vector<30x128xf32>
    %430 = arith.truncf %429 : vector<30x128xf32> to vector<30x128xbf16>
    %c1_277 = arith.constant 1 : index
    %c0_278 = arith.constant 0 : index
    %c0_279 = arith.constant 0 : index
    %431 = vector.load %arg20[%c1_277, %c0_278, %c0_279] : memref<3x128x64xbf16, #tpu.memory_space<vmem>>, vector<1x128x64xbf16>
    %432 = vector.shape_cast %431 : vector<1x128x64xbf16> to vector<128x64xbf16>
    %cst_280 = arith.constant dense<0.000000e+00> : vector<30x64xf32>
    %433 = tpu.matmul %430, %432, %cst_280 {dimension_numbers = #tpu.dot_dimension_numbers<[1], [0], [0], [1], [0, 0, 1, 1], [], []>} : vector<30x128xbf16>, vector<128x64xbf16>, vector<30x64xf32> -> vector<30x64xf32>
    %434 = arith.addf %426, %433 : vector<30x64xf32>
    %c2_281 = arith.constant 2 : index
    %c0_282 = arith.constant 0 : index
    %c0_283 = arith.constant 0 : index
    %435 = vector.load %arg19[%c2_281, %c0_282, %c0_283] : memref<3x30x60xbf16, #tpu.memory_space<vmem>>, vector<1x30x60xbf16>
    %436 = vector.shape_cast %435 : vector<1x30x60xbf16> to vector<30x60xbf16>
    %cst_284 = arith.constant dense<0.000000e+00> : vector<30x128xf32>
    %437 = tpu.matmul %436, %417, %cst_284 {dimension_numbers = #tpu.dot_dimension_numbers<[1], [0], [0], [1], [0, 0, 1, 1], [], []>} : vector<30x60xbf16>, vector<60x128xbf16>, vector<30x128xf32> -> vector<30x128xf32>
    %438 = arith.truncf %437 : vector<30x128xf32> to vector<30x128xbf16>
    %c2_285 = arith.constant 2 : index
    %c0_286 = arith.constant 0 : index
    %c0_287 = arith.constant 0 : index
    %439 = vector.load %arg20[%c2_285, %c0_286, %c0_287] : memref<3x128x64xbf16, #tpu.memory_space<vmem>>, vector<1x128x64xbf16>
    %440 = vector.shape_cast %439 : vector<1x128x64xbf16> to vector<128x64xbf16>
    %cst_288 = arith.constant dense<0.000000e+00> : vector<30x64xf32>
    %441 = tpu.matmul %438, %440, %cst_288 {dimension_numbers = #tpu.dot_dimension_numbers<[1], [0], [0], [1], [0, 0, 1, 1], [], []>} : vector<30x128xbf16>, vector<128x64xbf16>, vector<30x64xf32> -> vector<30x64xf32>
    %442 = arith.addf %434, %441 : vector<30x64xf32>
    %c0_289 = arith.constant 0 : index
    %c0_290 = arith.constant 0 : index
    %443 = vector.load %arg21[%c0_289, %c0_290] : memref<1x64xf32, #tpu.memory_space<vmem>>, vector<1x64xf32>
    %444 = vector.broadcast %443 : vector<1x64xf32> to vector<30x64xf32>
    %445 = arith.addf %442, %444 : vector<30x64xf32>
    %cst_291 = arith.constant 0.000000e+00 : f32
    %446 = vector.broadcast %cst_291 : f32 to vector<30x64xf32>
    %447 = arith.cmpf ogt, %445, %446 : vector<30x64xf32>
    %448 = math.exp %445 : vector<30x64xf32>
    %cst_292 = arith.constant 1.000000e+00 : f32
    %449 = vector.broadcast %cst_292 : f32 to vector<30x64xf32>
    %450 = arith.subf %448, %449 : vector<30x64xf32>
    %451 = arith.select %447, %445, %450 : vector<30x64xi1>, vector<30x64xf32>
    %c0_293 = arith.constant 0 : index
    %c0_294 = arith.constant 0 : index
    %452 = vector.load %arg42[%c0_293, %c0_294] : memref<30x64xf32, #tpu.memory_space<vmem>>, vector<30x64xf32>
    tpu.vector_store %arg42[%c0_293, %c0_294], %451 {strides = array<i32>} : memref<30x64xf32, #tpu.memory_space<vmem>>, vector<30x64xf32>,
    %cst_295 = arith.constant 0.000000e+00 : f32
    %453 = vector.broadcast %cst_295 : f32 to vector<2x32xf32>
    %c0_296 = arith.constant 0 : index
    %c0_297 = arith.constant 0 : index
    %454 = vector.load %arg42[%c0_296, %c0_297] : memref<30x64xf32, #tpu.memory_space<vmem>>, vector<2x64xf32>
    %455 = arith.truncf %454 : vector<2x64xf32> to vector<2x64xbf16>
    %c0_298 = arith.constant 0 : index
    %c0_299 = arith.constant 0 : index
    %456 = vector.load %arg22[%c0_298, %c0_299] : memref<960x32xbf16, #tpu.memory_space<vmem>>, vector<64x32xbf16>
    %cst_300 = arith.constant dense<0.000000e+00> : vector<2x32xf32>
    %457 = tpu.matmul %455, %456, %cst_300 {dimension_numbers = #tpu.dot_dimension_numbers<[1], [0], [0], [1], [0, 0, 1, 1], [], []>} : vector<2x64xbf16>, vector<64x32xbf16>, vector<2x32xf32> -> vector<2x32xf32>
    %458 = arith.addf %453, %457 : vector<2x32xf32>
    %c2_301 = arith.constant 2 : index
    %c0_302 = arith.constant 0 : index
    %459 = vector.load %arg42[%c2_301, %c0_302] : memref<30x64xf32, #tpu.memory_space<vmem>>, vector<2x64xf32>
    %460 = arith.truncf %459 : vector<2x64xf32> to vector<2x64xbf16>
    %c64_303 = arith.constant 64 : index
    %c0_304 = arith.constant 0 : index
    %461 = vector.load %arg22[%c64_303, %c0_304] : memref<960x32xbf16, #tpu.memory_space<vmem>>, vector<64x32xbf16>
    %cst_305 = arith.constant dense<0.000000e+00> : vector<2x32xf32>
    %462 = tpu.matmul %460, %461, %cst_305 {dimension_numbers = #tpu.dot_dimension_numbers<[1], [0], [0], [1], [0, 0, 1, 1], [], []>} : vector<2x64xbf16>, vector<64x32xbf16>, vector<2x32xf32> -> vector<2x32xf32>
    %463 = arith.addf %458, %462 : vector<2x32xf32>
    %c4_306 = arith.constant 4 : index
    %c0_307 = arith.constant 0 : index
    %464 = vector.load %arg42[%c4_306, %c0_307] : memref<30x64xf32, #tpu.memory_space<vmem>>, vector<2x64xf32>
    %465 = arith.truncf %464 : vector<2x64xf32> to vector<2x64xbf16>
    %c128_308 = arith.constant 128 : index
    %c0_309 = arith.constant 0 : index
    %466 = vector.load %arg22[%c128_308, %c0_309] : memref<960x32xbf16, #tpu.memory_space<vmem>>, vector<64x32xbf16>
    %cst_310 = arith.constant dense<0.000000e+00> : vector<2x32xf32>
    %467 = tpu.matmul %465, %466, %cst_310 {dimension_numbers = #tpu.dot_dimension_numbers<[1], [0], [0], [1], [0, 0, 1, 1], [], []>} : vector<2x64xbf16>, vector<64x32xbf16>, vector<2x32xf32> -> vector<2x32xf32>
    %468 = arith.addf %463, %467 : vector<2x32xf32>
    %c6_311 = arith.constant 6 : index
    %c0_312 = arith.constant 0 : index
    %469 = vector.load %arg42[%c6_311, %c0_312] : memref<30x64xf32, #tpu.memory_space<vmem>>, vector<2x64xf32>
    %470 = arith.truncf %469 : vector<2x64xf32> to vector<2x64xbf16>
    %c192_313 = arith.constant 192 : index
    %c0_314 = arith.constant 0 : index
    %471 = vector.load %arg22[%c192_313, %c0_314] : memref<960x32xbf16, #tpu.memory_space<vmem>>, vector<64x32xbf16>
    %cst_315 = arith.constant dense<0.000000e+00> : vector<2x32xf32>
    %472 = tpu.matmul %470, %471, %cst_315 {dimension_numbers = #tpu.dot_dimension_numbers<[1], [0], [0], [1], [0, 0, 1, 1], [], []>} : vector<2x64xbf16>, vector<64x32xbf16>, vector<2x32xf32> -> vector<2x32xf32>
    %473 = arith.addf %468, %472 : vector<2x32xf32>
    %c8_316 = arith.constant 8 : index
    %c0_317 = arith.constant 0 : index
    %474 = vector.load %arg42[%c8_316, %c0_317] : memref<30x64xf32, #tpu.memory_space<vmem>>, vector<2x64xf32>
    %475 = arith.truncf %474 : vector<2x64xf32> to vector<2x64xbf16>
    %c256_318 = arith.constant 256 : index
    %c0_319 = arith.constant 0 : index
    %476 = vector.load %arg22[%c256_318, %c0_319] : memref<960x32xbf16, #tpu.memory_space<vmem>>, vector<64x32xbf16>
    %cst_320 = arith.constant dense<0.000000e+00> : vector<2x32xf32>
    %477 = tpu.matmul %475, %476, %cst_320 {dimension_numbers = #tpu.dot_dimension_numbers<[1], [0], [0], [1], [0, 0, 1, 1], [], []>} : vector<2x64xbf16>, vector<64x32xbf16>, vector<2x32xf32> -> vector<2x32xf32>
    %478 = arith.addf %473, %477 : vector<2x32xf32>
    %c10_321 = arith.constant 10 : index
    %c0_322 = arith.constant 0 : index
    %479 = vector.load %arg42[%c10_321, %c0_322] : memref<30x64xf32, #tpu.memory_space<vmem>>, vector<2x64xf32>
    %480 = arith.truncf %479 : vector<2x64xf32> to vector<2x64xbf16>
    %c320_323 = arith.constant 320 : index
    %c0_324 = arith.constant 0 : index
    %481 = vector.load %arg22[%c320_323, %c0_324] : memref<960x32xbf16, #tpu.memory_space<vmem>>, vector<64x32xbf16>
    %cst_325 = arith.constant dense<0.000000e+00> : vector<2x32xf32>
    %482 = tpu.matmul %480, %481, %cst_325 {dimension_numbers = #tpu.dot_dimension_numbers<[1], [0], [0], [1], [0, 0, 1, 1], [], []>} : vector<2x64xbf16>, vector<64x32xbf16>, vector<2x32xf32> -> vector<2x32xf32>
    %483 = arith.addf %478, %482 : vector<2x32xf32>
    %c12_326 = arith.constant 12 : index
    %c0_327 = arith.constant 0 : index
    %484 = vector.load %arg42[%c12_326, %c0_327] : memref<30x64xf32, #tpu.memory_space<vmem>>, vector<2x64xf32>
    %485 = arith.truncf %484 : vector<2x64xf32> to vector<2x64xbf16>
    %c384_328 = arith.constant 384 : index
    %c0_329 = arith.constant 0 : index
    %486 = vector.load %arg22[%c384_328, %c0_329] : memref<960x32xbf16, #tpu.memory_space<vmem>>, vector<64x32xbf16>
    %cst_330 = arith.constant dense<0.000000e+00> : vector<2x32xf32>
    %487 = tpu.matmul %485, %486, %cst_330 {dimension_numbers = #tpu.dot_dimension_numbers<[1], [0], [0], [1], [0, 0, 1, 1], [], []>} : vector<2x64xbf16>, vector<64x32xbf16>, vector<2x32xf32> -> vector<2x32xf32>
    %488 = arith.addf %483, %487 : vector<2x32xf32>
    %c14_331 = arith.constant 14 : index
    %c0_332 = arith.constant 0 : index
    %489 = vector.load %arg42[%c14_331, %c0_332] : memref<30x64xf32, #tpu.memory_space<vmem>>, vector<2x64xf32>
    %490 = arith.truncf %489 : vector<2x64xf32> to vector<2x64xbf16>
    %c448_333 = arith.constant 448 : index
    %c0_334 = arith.constant 0 : index
    %491 = vector.load %arg22[%c448_333, %c0_334] : memref<960x32xbf16, #tpu.memory_space<vmem>>, vector<64x32xbf16>
    %cst_335 = arith.constant dense<0.000000e+00> : vector<2x32xf32>
    %492 = tpu.matmul %490, %491, %cst_335 {dimension_numbers = #tpu.dot_dimension_numbers<[1], [0], [0], [1], [0, 0, 1, 1], [], []>} : vector<2x64xbf16>, vector<64x32xbf16>, vector<2x32xf32> -> vector<2x32xf32>
    %493 = arith.addf %488, %492 : vector<2x32xf32>
    %c16_336 = arith.constant 16 : index
    %c0_337 = arith.constant 0 : index
    %494 = vector.load %arg42[%c16_336, %c0_337] : memref<30x64xf32, #tpu.memory_space<vmem>>, vector<2x64xf32>
    %495 = arith.truncf %494 : vector<2x64xf32> to vector<2x64xbf16>
    %c512_338 = arith.constant 512 : index
    %c0_339 = arith.constant 0 : index
    %496 = vector.load %arg22[%c512_338, %c0_339] : memref<960x32xbf16, #tpu.memory_space<vmem>>, vector<64x32xbf16>
    %cst_340 = arith.constant dense<0.000000e+00> : vector<2x32xf32>
    %497 = tpu.matmul %495, %496, %cst_340 {dimension_numbers = #tpu.dot_dimension_numbers<[1], [0], [0], [1], [0, 0, 1, 1], [], []>} : vector<2x64xbf16>, vector<64x32xbf16>, vector<2x32xf32> -> vector<2x32xf32>
    %498 = arith.addf %493, %497 : vector<2x32xf32>
    %c18_341 = arith.constant 18 : index
    %c0_342 = arith.constant 0 : index
    %499 = vector.load %arg42[%c18_341, %c0_342] : memref<30x64xf32, #tpu.memory_space<vmem>>, vector<2x64xf32>
    %500 = arith.truncf %499 : vector<2x64xf32> to vector<2x64xbf16>
    %c576_343 = arith.constant 576 : index
    %c0_344 = arith.constant 0 : index
    %501 = vector.load %arg22[%c576_343, %c0_344] : memref<960x32xbf16, #tpu.memory_space<vmem>>, vector<64x32xbf16>
    %cst_345 = arith.constant dense<0.000000e+00> : vector<2x32xf32>
    %502 = tpu.matmul %500, %501, %cst_345 {dimension_numbers = #tpu.dot_dimension_numbers<[1], [0], [0], [1], [0, 0, 1, 1], [], []>} : vector<2x64xbf16>, vector<64x32xbf16>, vector<2x32xf32> -> vector<2x32xf32>
    %503 = arith.addf %498, %502 : vector<2x32xf32>
    %c20_346 = arith.constant 20 : index
    %c0_347 = arith.constant 0 : index
    %504 = vector.load %arg42[%c20_346, %c0_347] : memref<30x64xf32, #tpu.memory_space<vmem>>, vector<2x64xf32>
    %505 = arith.truncf %504 : vector<2x64xf32> to vector<2x64xbf16>
    %c640_348 = arith.constant 640 : index
    %c0_349 = arith.constant 0 : index
    %506 = vector.load %arg22[%c640_348, %c0_349] : memref<960x32xbf16, #tpu.memory_space<vmem>>, vector<64x32xbf16>
    %cst_350 = arith.constant dense<0.000000e+00> : vector<2x32xf32>
    %507 = tpu.matmul %505, %506, %cst_350 {dimension_numbers = #tpu.dot_dimension_numbers<[1], [0], [0], [1], [0, 0, 1, 1], [], []>} : vector<2x64xbf16>, vector<64x32xbf16>, vector<2x32xf32> -> vector<2x32xf32>
    %508 = arith.addf %503, %507 : vector<2x32xf32>
    %c22_351 = arith.constant 22 : index
    %c0_352 = arith.constant 0 : index
    %509 = vector.load %arg42[%c22_351, %c0_352] : memref<30x64xf32, #tpu.memory_space<vmem>>, vector<2x64xf32>
    %510 = arith.truncf %509 : vector<2x64xf32> to vector<2x64xbf16>
    %c704_353 = arith.constant 704 : index
    %c0_354 = arith.constant 0 : index
    %511 = vector.load %arg22[%c704_353, %c0_354] : memref<960x32xbf16, #tpu.memory_space<vmem>>, vector<64x32xbf16>
    %cst_355 = arith.constant dense<0.000000e+00> : vector<2x32xf32>
    %512 = tpu.matmul %510, %511, %cst_355 {dimension_numbers = #tpu.dot_dimension_numbers<[1], [0], [0], [1], [0, 0, 1, 1], [], []>} : vector<2x64xbf16>, vector<64x32xbf16>, vector<2x32xf32> -> vector<2x32xf32>
    %513 = arith.addf %508, %512 : vector<2x32xf32>
    %c24_356 = arith.constant 24 : index
    %c0_357 = arith.constant 0 : index
    %514 = vector.load %arg42[%c24_356, %c0_357] : memref<30x64xf32, #tpu.memory_space<vmem>>, vector<2x64xf32>
    %515 = arith.truncf %514 : vector<2x64xf32> to vector<2x64xbf16>
    %c768_358 = arith.constant 768 : index
    %c0_359 = arith.constant 0 : index
    %516 = vector.load %arg22[%c768_358, %c0_359] : memref<960x32xbf16, #tpu.memory_space<vmem>>, vector<64x32xbf16>
    %cst_360 = arith.constant dense<0.000000e+00> : vector<2x32xf32>
    %517 = tpu.matmul %515, %516, %cst_360 {dimension_numbers = #tpu.dot_dimension_numbers<[1], [0], [0], [1], [0, 0, 1, 1], [], []>} : vector<2x64xbf16>, vector<64x32xbf16>, vector<2x32xf32> -> vector<2x32xf32>
    %518 = arith.addf %513, %517 : vector<2x32xf32>
    %c26_361 = arith.constant 26 : index
    %c0_362 = arith.constant 0 : index
    %519 = vector.load %arg42[%c26_361, %c0_362] : memref<30x64xf32, #tpu.memory_space<vmem>>, vector<2x64xf32>
    %520 = arith.truncf %519 : vector<2x64xf32> to vector<2x64xbf16>
    %c832_363 = arith.constant 832 : index
    %c0_364 = arith.constant 0 : index
    %521 = vector.load %arg22[%c832_363, %c0_364] : memref<960x32xbf16, #tpu.memory_space<vmem>>, vector<64x32xbf16>
    %cst_365 = arith.constant dense<0.000000e+00> : vector<2x32xf32>
    %522 = tpu.matmul %520, %521, %cst_365 {dimension_numbers = #tpu.dot_dimension_numbers<[1], [0], [0], [1], [0, 0, 1, 1], [], []>} : vector<2x64xbf16>, vector<64x32xbf16>, vector<2x32xf32> -> vector<2x32xf32>
    %523 = arith.addf %518, %522 : vector<2x32xf32>
    %c28_366 = arith.constant 28 : index
    %c0_367 = arith.constant 0 : index
    %524 = vector.load %arg42[%c28_366, %c0_367] : memref<30x64xf32, #tpu.memory_space<vmem>>, vector<2x64xf32>
    %525 = arith.truncf %524 : vector<2x64xf32> to vector<2x64xbf16>
    %c896_368 = arith.constant 896 : index
    %c0_369 = arith.constant 0 : index
    %526 = vector.load %arg22[%c896_368, %c0_369] : memref<960x32xbf16, #tpu.memory_space<vmem>>, vector<64x32xbf16>
    %cst_370 = arith.constant dense<0.000000e+00> : vector<2x32xf32>
    %527 = tpu.matmul %525, %526, %cst_370 {dimension_numbers = #tpu.dot_dimension_numbers<[1], [0], [0], [1], [0, 0, 1, 1], [], []>} : vector<2x64xbf16>, vector<64x32xbf16>, vector<2x32xf32> -> vector<2x32xf32>
    %528 = arith.addf %523, %527 : vector<2x32xf32>
    %c0_371 = arith.constant 0 : index
    %c0_372 = arith.constant 0 : index
    %529 = vector.load %arg23[%c0_371, %c0_372] : memref<1x32xf32, #tpu.memory_space<vmem>>, vector<1x32xf32>
    %530 = vector.broadcast %529 : vector<1x32xf32> to vector<2x32xf32>
    %531 = arith.addf %528, %530 : vector<2x32xf32>
    %cst_373 = arith.constant 0.000000e+00 : f32
    %532 = vector.broadcast %cst_373 : f32 to vector<2x32xf32>
    %533 = arith.maximumf %531, %532 : vector<2x32xf32>
    %534 = arith.truncf %533 : vector<2x32xf32> to vector<2x32xbf16>
    %c0_374 = arith.constant 0 : index
    %c0_375 = arith.constant 0 : index
    %535 = vector.load %arg24[%c0_374, %c0_375] : memref<32x32xbf16, #tpu.memory_space<vmem>>, vector<32x32xbf16>
    %cst_376 = arith.constant dense<0.000000e+00> : vector<2x32xf32>
    %536 = tpu.matmul %534, %535, %cst_376 {dimension_numbers = #tpu.dot_dimension_numbers<[1], [0], [0], [1], [0, 0, 1, 1], [], []>} : vector<2x32xbf16>, vector<32x32xbf16>, vector<2x32xf32> -> vector<2x32xf32>
    %c0_377 = arith.constant 0 : index
    %c0_378 = arith.constant 0 : index
    %537 = vector.load %arg25[%c0_377, %c0_378] : memref<1x32xf32, #tpu.memory_space<vmem>>, vector<1x32xf32>
    %538 = vector.broadcast %537 : vector<1x32xf32> to vector<2x32xf32>
    %539 = arith.addf %536, %538 : vector<2x32xf32>
    %cst_379 = arith.constant 0.000000e+00 : f32
    %540 = vector.broadcast %cst_379 : f32 to vector<2x32xf32>
    %541 = arith.maximumf %539, %540 : vector<2x32xf32>
    %542 = arith.truncf %541 : vector<2x32xf32> to vector<2x32xbf16>
    %c0_380 = arith.constant 0 : index
    %c0_381 = arith.constant 0 : index
    %543 = vector.load %arg26[%c0_380, %c0_381] : memref<32x4xbf16, #tpu.memory_space<vmem>>, vector<32x4xbf16>
    %cst_382 = arith.constant dense<0.000000e+00> : vector<2x4xf32>
    %544 = tpu.matmul %542, %543, %cst_382 {dimension_numbers = #tpu.dot_dimension_numbers<[1], [0], [0], [1], [0, 0, 1, 1], [], []>} : vector<2x32xbf16>, vector<32x4xbf16>, vector<2x4xf32> -> vector<2x4xf32>
    %c0_383 = arith.constant 0 : index
    %c0_384 = arith.constant 0 : index
    %545 = vector.load %arg27[%c0_383, %c0_384] : memref<1x4xf32, #tpu.memory_space<vmem>>, vector<1x4xf32>
    %546 = vector.broadcast %545 : vector<1x4xf32> to vector<2x4xf32>
    %547 = arith.addf %544, %546 : vector<2x4xf32>
    %cst_385 = arith.constant dense<0xFF800000> : vector<2xf32>
    %548 = vector.multi_reduction <maximumf>, %547, %cst_385 [1] : vector<2x4xf32> to vector<2xf32>
    %549 = vector.shape_cast %548 : vector<2xf32> to vector<2x1xf32>
    %550 = vector.broadcast %549 : vector<2x1xf32> to vector<2x4xf32>
    %551 = arith.subf %547, %550 : vector<2x4xf32>
    %552 = math.exp %551 : vector<2x4xf32>
    %cst_386 = arith.constant dense<0.000000e+00> : vector<2xf32>
    %553 = vector.multi_reduction <add>, %552, %cst_386 [1] : vector<2x4xf32> to vector<2xf32>
    %554 = vector.shape_cast %553 : vector<2xf32> to vector<2x1xf32>
    %555 = tpu.reciprocal %554 : vector<2x1xf32> -> vector<2x1xf32>
    %556 = vector.broadcast %555 : vector<2x1xf32> to vector<2x4xf32>
    %557 = arith.mulf %552, %556 : vector<2x4xf32>
    %558 = arith.addf %382, %557 : vector<2x4xf32>
    %cst_387 = arith.constant 0.000000e+00 : f32
    %559 = vector.broadcast %cst_387 : f32 to vector<30x128xf32>
    %c0_388 = arith.constant 0 : index
    %c0_389 = arith.constant 0 : index
    %c0_390 = arith.constant 0 : index
    %560 = vector.load %arg28[%c0_388, %c0_389, %c0_390] : memref<5x30x120xbf16, #tpu.memory_space<vmem>>, vector<1x30x120xbf16>
    %561 = vector.shape_cast %560 : vector<1x30x120xbf16> to vector<30x120xbf16>
    %cst_391 = arith.constant dense<0.000000e+00> : vector<30x64xf32>
    %562 = tpu.matmul %561, %12, %cst_391 {dimension_numbers = #tpu.dot_dimension_numbers<[1], [0], [0], [1], [0, 0, 1, 1], [], []>} : vector<30x120xbf16>, vector<120x64xbf16>, vector<30x64xf32> -> vector<30x64xf32>
    %563 = arith.truncf %562 : vector<30x64xf32> to vector<30x64xbf16>
    %c0_392 = arith.constant 0 : index
    %c0_393 = arith.constant 0 : index
    %c0_394 = arith.constant 0 : index
    %564 = vector.load %arg29[%c0_392, %c0_393, %c0_394] : memref<5x64x128xbf16, #tpu.memory_space<vmem>>, vector<1x64x128xbf16>
    %565 = vector.shape_cast %564 : vector<1x64x128xbf16> to vector<64x128xbf16>
    %cst_395 = arith.constant dense<0.000000e+00> : vector<30x128xf32>
    %566 = tpu.matmul %563, %565, %cst_395 {dimension_numbers = #tpu.dot_dimension_numbers<[1], [0], [0], [1], [0, 0, 1, 1], [], []>} : vector<30x64xbf16>, vector<64x128xbf16>, vector<30x128xf32> -> vector<30x128xf32>
    %567 = arith.addf %559, %566 : vector<30x128xf32>
    %c1_396 = arith.constant 1 : index
    %c0_397 = arith.constant 0 : index
    %c0_398 = arith.constant 0 : index
    %568 = vector.load %arg28[%c1_396, %c0_397, %c0_398] : memref<5x30x120xbf16, #tpu.memory_space<vmem>>, vector<1x30x120xbf16>
    %569 = vector.shape_cast %568 : vector<1x30x120xbf16> to vector<30x120xbf16>
    %cst_399 = arith.constant dense<0.000000e+00> : vector<30x64xf32>
    %570 = tpu.matmul %569, %12, %cst_399 {dimension_numbers = #tpu.dot_dimension_numbers<[1], [0], [0], [1], [0, 0, 1, 1], [], []>} : vector<30x120xbf16>, vector<120x64xbf16>, vector<30x64xf32> -> vector<30x64xf32>
    %571 = arith.truncf %570 : vector<30x64xf32> to vector<30x64xbf16>
    %c1_400 = arith.constant 1 : index
    %c0_401 = arith.constant 0 : index
    %c0_402 = arith.constant 0 : index
    %572 = vector.load %arg29[%c1_400, %c0_401, %c0_402] : memref<5x64x128xbf16, #tpu.memory_space<vmem>>, vector<1x64x128xbf16>
    %573 = vector.shape_cast %572 : vector<1x64x128xbf16> to vector<64x128xbf16>
    %cst_403 = arith.constant dense<0.000000e+00> : vector<30x128xf32>
    %574 = tpu.matmul %571, %573, %cst_403 {dimension_numbers = #tpu.dot_dimension_numbers<[1], [0], [0], [1], [0, 0, 1, 1], [], []>} : vector<30x64xbf16>, vector<64x128xbf16>, vector<30x128xf32> -> vector<30x128xf32>
    %575 = arith.addf %567, %574 : vector<30x128xf32>
    %c2_404 = arith.constant 2 : index
    %c0_405 = arith.constant 0 : index
    %c0_406 = arith.constant 0 : index
    %576 = vector.load %arg28[%c2_404, %c0_405, %c0_406] : memref<5x30x120xbf16, #tpu.memory_space<vmem>>, vector<1x30x120xbf16>
    %577 = vector.shape_cast %576 : vector<1x30x120xbf16> to vector<30x120xbf16>
    %cst_407 = arith.constant dense<0.000000e+00> : vector<30x64xf32>
    %578 = tpu.matmul %577, %12, %cst_407 {dimension_numbers = #tpu.dot_dimension_numbers<[1], [0], [0], [1], [0, 0, 1, 1], [], []>} : vector<30x120xbf16>, vector<120x64xbf16>, vector<30x64xf32> -> vector<30x64xf32>
    %579 = arith.truncf %578 : vector<30x64xf32> to vector<30x64xbf16>
    %c2_408 = arith.constant 2 : index
    %c0_409 = arith.constant 0 : index
    %c0_410 = arith.constant 0 : index
    %580 = vector.load %arg29[%c2_408, %c0_409, %c0_410] : memref<5x64x128xbf16, #tpu.memory_space<vmem>>, vector<1x64x128xbf16>
    %581 = vector.shape_cast %580 : vector<1x64x128xbf16> to vector<64x128xbf16>
    %cst_411 = arith.constant dense<0.000000e+00> : vector<30x128xf32>
    %582 = tpu.matmul %579, %581, %cst_411 {dimension_numbers = #tpu.dot_dimension_numbers<[1], [0], [0], [1], [0, 0, 1, 1], [], []>} : vector<30x64xbf16>, vector<64x128xbf16>, vector<30x128xf32> -> vector<30x128xf32>
    %583 = arith.addf %575, %582 : vector<30x128xf32>
    %c3 = arith.constant 3 : index
    %c0_412 = arith.constant 0 : index
    %c0_413 = arith.constant 0 : index
    %584 = vector.load %arg28[%c3, %c0_412, %c0_413] : memref<5x30x120xbf16, #tpu.memory_space<vmem>>, vector<1x30x120xbf16>
    %585 = vector.shape_cast %584 : vector<1x30x120xbf16> to vector<30x120xbf16>
    %cst_414 = arith.constant dense<0.000000e+00> : vector<30x64xf32>
    %586 = tpu.matmul %585, %12, %cst_414 {dimension_numbers = #tpu.dot_dimension_numbers<[1], [0], [0], [1], [0, 0, 1, 1], [], []>} : vector<30x120xbf16>, vector<120x64xbf16>, vector<30x64xf32> -> vector<30x64xf32>
    %587 = arith.truncf %586 : vector<30x64xf32> to vector<30x64xbf16>
    %c3_415 = arith.constant 3 : index
    %c0_416 = arith.constant 0 : index
    %c0_417 = arith.constant 0 : index
    %588 = vector.load %arg29[%c3_415, %c0_416, %c0_417] : memref<5x64x128xbf16, #tpu.memory_space<vmem>>, vector<1x64x128xbf16>
    %589 = vector.shape_cast %588 : vector<1x64x128xbf16> to vector<64x128xbf16>
    %cst_418 = arith.constant dense<0.000000e+00> : vector<30x128xf32>
    %590 = tpu.matmul %587, %589, %cst_418 {dimension_numbers = #tpu.dot_dimension_numbers<[1], [0], [0], [1], [0, 0, 1, 1], [], []>} : vector<30x64xbf16>, vector<64x128xbf16>, vector<30x128xf32> -> vector<30x128xf32>
    %591 = arith.addf %583, %590 : vector<30x128xf32>
    %c4_419 = arith.constant 4 : index
    %c0_420 = arith.constant 0 : index
    %c0_421 = arith.constant 0 : index
    %592 = vector.load %arg28[%c4_419, %c0_420, %c0_421] : memref<5x30x120xbf16, #tpu.memory_space<vmem>>, vector<1x30x120xbf16>
    %593 = vector.shape_cast %592 : vector<1x30x120xbf16> to vector<30x120xbf16>
    %cst_422 = arith.constant dense<0.000000e+00> : vector<30x64xf32>
    %594 = tpu.matmul %593, %12, %cst_422 {dimension_numbers = #tpu.dot_dimension_numbers<[1], [0], [0], [1], [0, 0, 1, 1], [], []>} : vector<30x120xbf16>, vector<120x64xbf16>, vector<30x64xf32> -> vector<30x64xf32>
    %595 = arith.truncf %594 : vector<30x64xf32> to vector<30x64xbf16>
    %c4_423 = arith.constant 4 : index
    %c0_424 = arith.constant 0 : index
    %c0_425 = arith.constant 0 : index
    %596 = vector.load %arg29[%c4_423, %c0_424, %c0_425] : memref<5x64x128xbf16, #tpu.memory_space<vmem>>, vector<1x64x128xbf16>
    %597 = vector.shape_cast %596 : vector<1x64x128xbf16> to vector<64x128xbf16>
    %cst_426 = arith.constant dense<0.000000e+00> : vector<30x128xf32>
    %598 = tpu.matmul %595, %597, %cst_426 {dimension_numbers = #tpu.dot_dimension_numbers<[1], [0], [0], [1], [0, 0, 1, 1], [], []>} : vector<30x64xbf16>, vector<64x128xbf16>, vector<30x128xf32> -> vector<30x128xf32>
    %599 = arith.addf %591, %598 : vector<30x128xf32>
    %c0_427 = arith.constant 0 : index
    %c0_428 = arith.constant 0 : index
    %600 = vector.load %arg30[%c0_427, %c0_428] : memref<1x128xf32, #tpu.memory_space<vmem>>, vector<1x128xf32>
    %601 = vector.broadcast %600 : vector<1x128xf32> to vector<30x128xf32>
    %602 = arith.addf %599, %601 : vector<30x128xf32>
    %cst_429 = arith.constant 0.000000e+00 : f32
    %603 = vector.broadcast %cst_429 : f32 to vector<30x128xf32>
    %604 = arith.cmpf ogt, %602, %603 : vector<30x128xf32>
    %605 = math.exp %602 : vector<30x128xf32>
    %cst_430 = arith.constant 1.000000e+00 : f32
    %606 = vector.broadcast %cst_430 : f32 to vector<30x128xf32>
    %607 = arith.subf %605, %606 : vector<30x128xf32>
    %608 = arith.select %604, %602, %607 : vector<30x128xi1>, vector<30x128xf32>
    %609 = arith.truncf %608 : vector<30x128xf32> to vector<30x128xbf16>
    %cst_431 = arith.constant 0.000000e+00 : f32
    %610 = vector.broadcast %cst_431 : f32 to vector<8x64xf32>
    %c0_432 = arith.constant 0 : index
    %c0_433 = arith.constant 0 : index
    %c0_434 = arith.constant 0 : index
    %611 = vector.load %arg31[%c0_432, %c0_433, %c0_434] : memref<5x8x30xbf16, #tpu.memory_space<vmem>>, vector<1x8x30xbf16>
    %612 = vector.shape_cast %611 : vector<1x8x30xbf16> to vector<8x30xbf16>
    %cst_435 = arith.constant dense<0.000000e+00> : vector<8x128xf32>
    %613 = tpu.matmul %612, %609, %cst_435 {dimension_numbers = #tpu.dot_dimension_numbers<[1], [0], [0], [1], [0, 0, 1, 1], [], []>} : vector<8x30xbf16>, vector<30x128xbf16>, vector<8x128xf32> -> vector<8x128xf32>
    %614 = arith.truncf %613 : vector<8x128xf32> to vector<8x128xbf16>
    %c0_436 = arith.constant 0 : index
    %c0_437 = arith.constant 0 : index
    %c0_438 = arith.constant 0 : index
    %615 = vector.load %arg32[%c0_436, %c0_437, %c0_438] : memref<5x128x64xbf16, #tpu.memory_space<vmem>>, vector<1x128x64xbf16>
    %616 = vector.shape_cast %615 : vector<1x128x64xbf16> to vector<128x64xbf16>
    %cst_439 = arith.constant dense<0.000000e+00> : vector<8x64xf32>
    %617 = tpu.matmul %614, %616, %cst_439 {dimension_numbers = #tpu.dot_dimension_numbers<[1], [0], [0], [1], [0, 0, 1, 1], [], []>} : vector<8x128xbf16>, vector<128x64xbf16>, vector<8x64xf32> -> vector<8x64xf32>
    %618 = arith.addf %610, %617 : vector<8x64xf32>
    %c1_440 = arith.constant 1 : index
    %c0_441 = arith.constant 0 : index
    %c0_442 = arith.constant 0 : index
    %619 = vector.load %arg31[%c1_440, %c0_441, %c0_442] : memref<5x8x30xbf16, #tpu.memory_space<vmem>>, vector<1x8x30xbf16>
    %620 = vector.shape_cast %619 : vector<1x8x30xbf16> to vector<8x30xbf16>
    %cst_443 = arith.constant dense<0.000000e+00> : vector<8x128xf32>
    %621 = tpu.matmul %620, %609, %cst_443 {dimension_numbers = #tpu.dot_dimension_numbers<[1], [0], [0], [1], [0, 0, 1, 1], [], []>} : vector<8x30xbf16>, vector<30x128xbf16>, vector<8x128xf32> -> vector<8x128xf32>
    %622 = arith.truncf %621 : vector<8x128xf32> to vector<8x128xbf16>
    %c1_444 = arith.constant 1 : index
    %c0_445 = arith.constant 0 : index
    %c0_446 = arith.constant 0 : index
    %623 = vector.load %arg32[%c1_444, %c0_445, %c0_446] : memref<5x128x64xbf16, #tpu.memory_space<vmem>>, vector<1x128x64xbf16>
    %624 = vector.shape_cast %623 : vector<1x128x64xbf16> to vector<128x64xbf16>
    %cst_447 = arith.constant dense<0.000000e+00> : vector<8x64xf32>
    %625 = tpu.matmul %622, %624, %cst_447 {dimension_numbers = #tpu.dot_dimension_numbers<[1], [0], [0], [1], [0, 0, 1, 1], [], []>} : vector<8x128xbf16>, vector<128x64xbf16>, vector<8x64xf32> -> vector<8x64xf32>
    %626 = arith.addf %618, %625 : vector<8x64xf32>
    %c2_448 = arith.constant 2 : index
    %c0_449 = arith.constant 0 : index
    %c0_450 = arith.constant 0 : index
    %627 = vector.load %arg31[%c2_448, %c0_449, %c0_450] : memref<5x8x30xbf16, #tpu.memory_space<vmem>>, vector<1x8x30xbf16>
    %628 = vector.shape_cast %627 : vector<1x8x30xbf16> to vector<8x30xbf16>
    %cst_451 = arith.constant dense<0.000000e+00> : vector<8x128xf32>
    %629 = tpu.matmul %628, %609, %cst_451 {dimension_numbers = #tpu.dot_dimension_numbers<[1], [0], [0], [1], [0, 0, 1, 1], [], []>} : vector<8x30xbf16>, vector<30x128xbf16>, vector<8x128xf32> -> vector<8x128xf32>
    %630 = arith.truncf %629 : vector<8x128xf32> to vector<8x128xbf16>
    %c2_452 = arith.constant 2 : index
    %c0_453 = arith.constant 0 : index
    %c0_454 = arith.constant 0 : index
    %631 = vector.load %arg32[%c2_452, %c0_453, %c0_454] : memref<5x128x64xbf16, #tpu.memory_space<vmem>>, vector<1x128x64xbf16>
    %632 = vector.shape_cast %631 : vector<1x128x64xbf16> to vector<128x64xbf16>
    %cst_455 = arith.constant dense<0.000000e+00> : vector<8x64xf32>
    %633 = tpu.matmul %630, %632, %cst_455 {dimension_numbers = #tpu.dot_dimension_numbers<[1], [0], [0], [1], [0, 0, 1, 1], [], []>} : vector<8x128xbf16>, vector<128x64xbf16>, vector<8x64xf32> -> vector<8x64xf32>
    %634 = arith.addf %626, %633 : vector<8x64xf32>
    %c3_456 = arith.constant 3 : index
    %c0_457 = arith.constant 0 : index
    %c0_458 = arith.constant 0 : index
    %635 = vector.load %arg31[%c3_456, %c0_457, %c0_458] : memref<5x8x30xbf16, #tpu.memory_space<vmem>>, vector<1x8x30xbf16>
    %636 = vector.shape_cast %635 : vector<1x8x30xbf16> to vector<8x30xbf16>
    %cst_459 = arith.constant dense<0.000000e+00> : vector<8x128xf32>
    %637 = tpu.matmul %636, %609, %cst_459 {dimension_numbers = #tpu.dot_dimension_numbers<[1], [0], [0], [1], [0, 0, 1, 1], [], []>} : vector<8x30xbf16>, vector<30x128xbf16>, vector<8x128xf32> -> vector<8x128xf32>
    %638 = arith.truncf %637 : vector<8x128xf32> to vector<8x128xbf16>
    %c3_460 = arith.constant 3 : index
    %c0_461 = arith.constant 0 : index
    %c0_462 = arith.constant 0 : index
    %639 = vector.load %arg32[%c3_460, %c0_461, %c0_462] : memref<5x128x64xbf16, #tpu.memory_space<vmem>>, vector<1x128x64xbf16>
    %640 = vector.shape_cast %639 : vector<1x128x64xbf16> to vector<128x64xbf16>
    %cst_463 = arith.constant dense<0.000000e+00> : vector<8x64xf32>
    %641 = tpu.matmul %638, %640, %cst_463 {dimension_numbers = #tpu.dot_dimension_numbers<[1], [0], [0], [1], [0, 0, 1, 1], [], []>} : vector<8x128xbf16>, vector<128x64xbf16>, vector<8x64xf32> -> vector<8x64xf32>
    %642 = arith.addf %634, %641 : vector<8x64xf32>
    %c4_464 = arith.constant 4 : index
    %c0_465 = arith.constant 0 : index
    %c0_466 = arith.constant 0 : index
    %643 = vector.load %arg31[%c4_464, %c0_465, %c0_466] : memref<5x8x30xbf16, #tpu.memory_space<vmem>>, vector<1x8x30xbf16>
    %644 = vector.shape_cast %643 : vector<1x8x30xbf16> to vector<8x30xbf16>
    %cst_467 = arith.constant dense<0.000000e+00> : vector<8x128xf32>
    %645 = tpu.matmul %644, %609, %cst_467 {dimension_numbers = #tpu.dot_dimension_numbers<[1], [0], [0], [1], [0, 0, 1, 1], [], []>} : vector<8x30xbf16>, vector<30x128xbf16>, vector<8x128xf32> -> vector<8x128xf32>
    %646 = arith.truncf %645 : vector<8x128xf32> to vector<8x128xbf16>
    %c4_468 = arith.constant 4 : index
    %c0_469 = arith.constant 0 : index
    %c0_470 = arith.constant 0 : index
    %647 = vector.load %arg32[%c4_468, %c0_469, %c0_470] : memref<5x128x64xbf16, #tpu.memory_space<vmem>>, vector<1x128x64xbf16>
    %648 = vector.shape_cast %647 : vector<1x128x64xbf16> to vector<128x64xbf16>
    %cst_471 = arith.constant dense<0.000000e+00> : vector<8x64xf32>
    %649 = tpu.matmul %646, %648, %cst_471 {dimension_numbers = #tpu.dot_dimension_numbers<[1], [0], [0], [1], [0, 0, 1, 1], [], []>} : vector<8x128xbf16>, vector<128x64xbf16>, vector<8x64xf32> -> vector<8x64xf32>
    %650 = arith.addf %642, %649 : vector<8x64xf32>
    %c0_472 = arith.constant 0 : index
    %c0_473 = arith.constant 0 : index
    %651 = vector.load %arg33[%c0_472, %c0_473] : memref<1x64xf32, #tpu.memory_space<vmem>>, vector<1x64xf32>
    %652 = vector.broadcast %651 : vector<1x64xf32> to vector<8x64xf32>
    %653 = arith.addf %650, %652 : vector<8x64xf32>
    %cst_474 = arith.constant 0.000000e+00 : f32
    %654 = vector.broadcast %cst_474 : f32 to vector<8x64xf32>
    %655 = arith.cmpf ogt, %653, %654 : vector<8x64xf32>
    %656 = math.exp %653 : vector<8x64xf32>
    %cst_475 = arith.constant 1.000000e+00 : f32
    %657 = vector.broadcast %cst_475 : f32 to vector<8x64xf32>
    %658 = arith.subf %656, %657 : vector<8x64xf32>
    %659 = arith.select %655, %653, %658 : vector<8x64xi1>, vector<8x64xf32>
    %c0_476 = arith.constant 0 : index
    %c0_477 = arith.constant 0 : index
    %660 = vector.load %arg43[%c0_476, %c0_477] : memref<8x64xf32, #tpu.memory_space<vmem>>, vector<8x64xf32>
    tpu.vector_store %arg43[%c0_476, %c0_477], %659 {strides = array<i32>} : memref<8x64xf32, #tpu.memory_space<vmem>>, vector<8x64xf32>,
    %cst_478 = arith.constant 0.000000e+00 : f32
    %661 = vector.broadcast %cst_478 : f32 to vector<2x32xf32>
    %c0_479 = arith.constant 0 : index
    %c0_480 = arith.constant 0 : index
    %662 = vector.load %arg43[%c0_479, %c0_480] : memref<8x64xf32, #tpu.memory_space<vmem>>, vector<2x64xf32>
    %663 = arith.truncf %662 : vector<2x64xf32> to vector<2x64xbf16>
    %c0_481 = arith.constant 0 : index
    %c0_482 = arith.constant 0 : index
    %664 = vector.load %arg34[%c0_481, %c0_482] : memref<256x32xbf16, #tpu.memory_space<vmem>>, vector<64x32xbf16>
    %cst_483 = arith.constant dense<0.000000e+00> : vector<2x32xf32>
    %665 = tpu.matmul %663, %664, %cst_483 {dimension_numbers = #tpu.dot_dimension_numbers<[1], [0], [0], [1], [0, 0, 1, 1], [], []>} : vector<2x64xbf16>, vector<64x32xbf16>, vector<2x32xf32> -> vector<2x32xf32>
    %666 = arith.addf %661, %665 : vector<2x32xf32>
    %c2_484 = arith.constant 2 : index
    %c0_485 = arith.constant 0 : index
    %667 = vector.load %arg43[%c2_484, %c0_485] : memref<8x64xf32, #tpu.memory_space<vmem>>, vector<2x64xf32>
    %668 = arith.truncf %667 : vector<2x64xf32> to vector<2x64xbf16>
    %c64_486 = arith.constant 64 : index
    %c0_487 = arith.constant 0 : index
    %669 = vector.load %arg34[%c64_486, %c0_487] : memref<256x32xbf16, #tpu.memory_space<vmem>>, vector<64x32xbf16>
    %cst_488 = arith.constant dense<0.000000e+00> : vector<2x32xf32>
    %670 = tpu.matmul %668, %669, %cst_488 {dimension_numbers = #tpu.dot_dimension_numbers<[1], [0], [0], [1], [0, 0, 1, 1], [], []>} : vector<2x64xbf16>, vector<64x32xbf16>, vector<2x32xf32> -> vector<2x32xf32>
    %671 = arith.addf %666, %670 : vector<2x32xf32>
    %c4_489 = arith.constant 4 : index
    %c0_490 = arith.constant 0 : index
    %672 = vector.load %arg43[%c4_489, %c0_490] : memref<8x64xf32, #tpu.memory_space<vmem>>, vector<2x64xf32>
    %673 = arith.truncf %672 : vector<2x64xf32> to vector<2x64xbf16>
    %c128_491 = arith.constant 128 : index
    %c0_492 = arith.constant 0 : index
    %674 = vector.load %arg34[%c128_491, %c0_492] : memref<256x32xbf16, #tpu.memory_space<vmem>>, vector<64x32xbf16>
    %cst_493 = arith.constant dense<0.000000e+00> : vector<2x32xf32>
    %675 = tpu.matmul %673, %674, %cst_493 {dimension_numbers = #tpu.dot_dimension_numbers<[1], [0], [0], [1], [0, 0, 1, 1], [], []>} : vector<2x64xbf16>, vector<64x32xbf16>, vector<2x32xf32> -> vector<2x32xf32>
    %676 = arith.addf %671, %675 : vector<2x32xf32>
    %c6_494 = arith.constant 6 : index
    %c0_495 = arith.constant 0 : index
    %677 = vector.load %arg43[%c6_494, %c0_495] : memref<8x64xf32, #tpu.memory_space<vmem>>, vector<2x64xf32>
    %678 = arith.truncf %677 : vector<2x64xf32> to vector<2x64xbf16>
    %c192_496 = arith.constant 192 : index
    %c0_497 = arith.constant 0 : index
    %679 = vector.load %arg34[%c192_496, %c0_497] : memref<256x32xbf16, #tpu.memory_space<vmem>>, vector<64x32xbf16>
    %cst_498 = arith.constant dense<0.000000e+00> : vector<2x32xf32>
    %680 = tpu.matmul %678, %679, %cst_498 {dimension_numbers = #tpu.dot_dimension_numbers<[1], [0], [0], [1], [0, 0, 1, 1], [], []>} : vector<2x64xbf16>, vector<64x32xbf16>, vector<2x32xf32> -> vector<2x32xf32>
    %681 = arith.addf %676, %680 : vector<2x32xf32>
    %c0_499 = arith.constant 0 : index
    %c0_500 = arith.constant 0 : index
    %682 = vector.load %arg35[%c0_499, %c0_500] : memref<1x32xf32, #tpu.memory_space<vmem>>, vector<1x32xf32>
    %683 = vector.broadcast %682 : vector<1x32xf32> to vector<2x32xf32>
    %684 = arith.addf %681, %683 : vector<2x32xf32>
    %cst_501 = arith.constant 0.000000e+00 : f32
    %685 = vector.broadcast %cst_501 : f32 to vector<2x32xf32>
    %686 = arith.maximumf %684, %685 : vector<2x32xf32>
    %687 = arith.truncf %686 : vector<2x32xf32> to vector<2x32xbf16>
    %c0_502 = arith.constant 0 : index
    %c0_503 = arith.constant 0 : index
    %688 = vector.load %arg36[%c0_502, %c0_503] : memref<32x32xbf16, #tpu.memory_space<vmem>>, vector<32x32xbf16>
    %cst_504 = arith.constant dense<0.000000e+00> : vector<2x32xf32>
    %689 = tpu.matmul %687, %688, %cst_504 {dimension_numbers = #tpu.dot_dimension_numbers<[1], [0], [0], [1], [0, 0, 1, 1], [], []>} : vector<2x32xbf16>, vector<32x32xbf16>, vector<2x32xf32> -> vector<2x32xf32>
    %c0_505 = arith.constant 0 : index
    %c0_506 = arith.constant 0 : index
    %690 = vector.load %arg37[%c0_505, %c0_506] : memref<1x32xf32, #tpu.memory_space<vmem>>, vector<1x32xf32>
    %691 = vector.broadcast %690 : vector<1x32xf32> to vector<2x32xf32>
    %692 = arith.addf %689, %691 : vector<2x32xf32>
    %cst_507 = arith.constant 0.000000e+00 : f32
    %693 = vector.broadcast %cst_507 : f32 to vector<2x32xf32>
    %694 = arith.maximumf %692, %693 : vector<2x32xf32>
    %695 = arith.truncf %694 : vector<2x32xf32> to vector<2x32xbf16>
    %c0_508 = arith.constant 0 : index
    %c0_509 = arith.constant 0 : index
    %696 = vector.load %arg38[%c0_508, %c0_509] : memref<32x4xbf16, #tpu.memory_space<vmem>>, vector<32x4xbf16>
    %cst_510 = arith.constant dense<0.000000e+00> : vector<2x4xf32>
    %697 = tpu.matmul %695, %696, %cst_510 {dimension_numbers = #tpu.dot_dimension_numbers<[1], [0], [0], [1], [0, 0, 1, 1], [], []>} : vector<2x32xbf16>, vector<32x4xbf16>, vector<2x4xf32> -> vector<2x4xf32>
    %c0_511 = arith.constant 0 : index
    %c0_512 = arith.constant 0 : index
    %698 = vector.load %arg39[%c0_511, %c0_512] : memref<1x4xf32, #tpu.memory_space<vmem>>, vector<1x4xf32>
    %699 = vector.broadcast %698 : vector<1x4xf32> to vector<2x4xf32>
    %700 = arith.addf %697, %699 : vector<2x4xf32>
    %cst_513 = arith.constant dense<0xFF800000> : vector<2xf32>
    %701 = vector.multi_reduction <maximumf>, %700, %cst_513 [1] : vector<2x4xf32> to vector<2xf32>
    %702 = vector.shape_cast %701 : vector<2xf32> to vector<2x1xf32>
    %703 = vector.broadcast %702 : vector<2x1xf32> to vector<2x4xf32>
    %704 = arith.subf %700, %703 : vector<2x4xf32>
    %705 = math.exp %704 : vector<2x4xf32>
    %cst_514 = arith.constant dense<0.000000e+00> : vector<2xf32>
    %706 = vector.multi_reduction <add>, %705, %cst_514 [1] : vector<2x4xf32> to vector<2xf32>
    %707 = vector.shape_cast %706 : vector<2xf32> to vector<2x1xf32>
    %708 = tpu.reciprocal %707 : vector<2x1xf32> -> vector<2x1xf32>
    %709 = vector.broadcast %708 : vector<2x1xf32> to vector<2x4xf32>
    %710 = arith.mulf %705, %709 : vector<2x4xf32>
    %711 = arith.addf %558, %710 : vector<2x4xf32>
    %c0_515 = arith.constant 0 : index
    %c0_516 = arith.constant 0 : index
    %712 = vector.load %arg40[%c0_515, %c0_516] : memref<2x4xf32, #tpu.memory_space<vmem>>, vector<2x4xf32>
    tpu.vector_store %arg40[%c0_515, %c0_516], %711 {strides = array<i32>} : memref<2x4xf32, #tpu.memory_space<vmem>>, vector<2x4xf32>,
    return
  }
  func.func @transform_0(%arg0: i32) -> (i32, i32) {
    %c0_i32 = arith.constant 0 : i32
    %c0_i32_0 = arith.constant 0 : i32
    %c0_i32_1 = arith.constant 0 : i32
    return %c0_i32, %c0_i32_0 : i32, i32
  }
  func.func @transform_1(%arg0: i32) -> (i32, i32) {
    %c0_i32 = arith.constant 0 : i32
    %c0_i32_0 = arith.constant 0 : i32
    %c0_i32_1 = arith.constant 0 : i32
    return %c0_i32, %c0_i32_0 : i32, i32
  }
  func.func @transform_2(%arg0: i32) -> (i32, i32) {
    %c0_i32 = arith.constant 0 : i32
    %c0_i32_0 = arith.constant 0 : i32
    %c0_i32_1 = arith.constant 0 : i32
    return %c0_i32, %c0_i32_0 : i32, i32
  }
  func.func @transform_3(%arg0: i32) -> (i32, i32, i32) {
    %c0_i32 = arith.constant 0 : i32
    %c0_i32_0 = arith.constant 0 : i32
    %c0_i32_1 = arith.constant 0 : i32
    %c0_i32_2 = arith.constant 0 : i32
    return %c0_i32, %c0_i32_0, %c0_i32_1 : i32, i32, i32
  }
  func.func @transform_4(%arg0: i32) -> (i32, i32, i32) {
    %c0_i32 = arith.constant 0 : i32
    %c0_i32_0 = arith.constant 0 : i32
    %c0_i32_1 = arith.constant 0 : i32
    %c0_i32_2 = arith.constant 0 : i32
    return %c0_i32, %c0_i32_0, %c0_i32_1 : i32, i32, i32
  }
  func.func @transform_5(%arg0: i32) -> (i32, i32) {
    %c0_i32 = arith.constant 0 : i32
    %c0_i32_0 = arith.constant 0 : i32
    %c0_i32_1 = arith.constant 0 : i32
    return %c0_i32, %c0_i32_0 : i32, i32
  }
  func.func @transform_6(%arg0: i32) -> (i32, i32, i32) {
    %c0_i32 = arith.constant 0 : i32
    %c0_i32_0 = arith.constant 0 : i32
    %c0_i32_1 = arith.constant 0 : i32
    %c0_i32_2 = arith.constant 0 : i32
    return %c0_i32, %c0_i32_0, %c0_i32_1 : i32, i32, i32
  }
  func.func @transform_7(%arg0: i32) -> (i32, i32, i32) {
    %c0_i32 = arith.constant 0 : i32
    %c0_i32_0 = arith.constant 0 : i32
    %c0_i32_1 = arith.constant 0 : i32
    %c0_i32_2 = arith.constant 0 : i32
    return %c0_i32, %c0_i32_0, %c0_i32_1 : i32, i32, i32
  }
  func.func @transform_8(%arg0: i32) -> (i32, i32) {
    %c0_i32 = arith.constant 0 : i32
    %c0_i32_0 = arith.constant 0 : i32
    %c0_i32_1 = arith.constant 0 : i32
    return %c0_i32, %c0_i32_0 : i32, i32
  }
  func.func @transform_9(%arg0: i32) -> (i32, i32) {
    %c0_i32 = arith.constant 0 : i32
    %c0_i32_0 = arith.constant 0 : i32
    %c0_i32_1 = arith.constant 0 : i32
    return %c0_i32, %c0_i32_0 : i32, i32
  }
  func.func @transform_10(%arg0: i32) -> (i32, i32) {
    %c0_i32 = arith.constant 0 : i32
    %c0_i32_0 = arith.constant 0 : i32
    %c0_i32_1 = arith.constant 0 : i32
    return %c0_i32, %c0_i32_0 : i32, i32
  }
  func.func @transform_11(%arg0: i32) -> (i32, i32) {
    %c0_i32 = arith.constant 0 : i32
    %c0_i32_0 = arith.constant 0 : i32
    %c0_i32_1 = arith.constant 0 : i32
    return %c0_i32, %c0_i32_0 : i32, i32
  }
  func.func @transform_12(%arg0: i32) -> (i32, i32) {
    %c0_i32 = arith.constant 0 : i32
    %c0_i32_0 = arith.constant 0 : i32
    %c0_i32_1 = arith.constant 0 : i32
    return %c0_i32, %c0_i32_0 : i32, i32
  }
  func.func @transform_13(%arg0: i32) -> (i32, i32) {
    %c0_i32 = arith.constant 0 : i32
    %c0_i32_0 = arith.constant 0 : i32
    %c0_i32_1 = arith.constant 0 : i32
    return %c0_i32, %c0_i32_0 : i32, i32
  }
  func.func @transform_14(%arg0: i32) -> (i32, i32) {
    %c0_i32 = arith.constant 0 : i32
    %c0_i32_0 = arith.constant 0 : i32
    %c0_i32_1 = arith.constant 0 : i32
    return %c0_i32, %c0_i32_0 : i32, i32
  }
  func.func @transform_15(%arg0: i32) -> (i32, i32, i32) {
    %c0_i32 = arith.constant 0 : i32
    %c0_i32_0 = arith.constant 0 : i32
    %c0_i32_1 = arith.constant 0 : i32
    %c0_i32_2 = arith.constant 0 : i32
    return %c0_i32, %c0_i32_0, %c0_i32_1 : i32, i32, i32
  }
  func.func @transform_16(%arg0: i32) -> (i32, i32, i32) {
    %c0_i32 = arith.constant 0 : i32
    %c0_i32_0 = arith.constant 0 : i32
    %c0_i32_1 = arith.constant 0 : i32
    %c0_i32_2 = arith.constant 0 : i32
    return %c0_i32, %c0_i32_0, %c0_i32_1 : i32, i32, i32
  }
  func.func @transform_17(%arg0: i32) -> (i32, i32) {
    %c0_i32 = arith.constant 0 : i32
    %c0_i32_0 = arith.constant 0 : i32
    %c0_i32_1 = arith.constant 0 : i32
    return %c0_i32, %c0_i32_0 : i32, i32
  }
  func.func @transform_18(%arg0: i32) -> (i32, i32, i32) {
    %c0_i32 = arith.constant 0 : i32
    %c0_i32_0 = arith.constant 0 : i32
    %c0_i32_1 = arith.constant 0 : i32
    %c0_i32_2 = arith.constant 0 : i32
    return %c0_i32, %c0_i32_0, %c0_i32_1 : i32, i32, i32
  }
  func.func @transform_19(%arg0: i32) -> (i32, i32, i32) {
    %c0_i32 = arith.constant 0 : i32
    %c0_i32_0 = arith.constant 0 : i32
    %c0_i32_1 = arith.constant 0 : i32
    %c0_i32_2 = arith.constant 0 : i32
    return %c0_i32, %c0_i32_0, %c0_i32_1 : i32, i32, i32
  }
  func.func @transform_20(%arg0: i32) -> (i32, i32) {
    %c0_i32 = arith.constant 0 : i32
    %c0_i32_0 = arith.constant 0 : i32
    %c0_i32_1 = arith.constant 0 : i32
    return %c0_i32, %c0_i32_0 : i32, i32
  }
  func.func @transform_21(%arg0: i32) -> (i32, i32) {
    %c0_i32 = arith.constant 0 : i32
    %c0_i32_0 = arith.constant 0 : i32
    %c0_i32_1 = arith.constant 0 : i32
    return %c0_i32, %c0_i32_0 : i32, i32
  }
  func.func @transform_22(%arg0: i32) -> (i32, i32) {
    %c0_i32 = arith.constant 0 : i32
    %c0_i32_0 = arith.constant 0 : i32
    %c0_i32_1 = arith.constant 0 : i32
    return %c0_i32, %c0_i32_0 : i32, i32
  }
  func.func @transform_23(%arg0: i32) -> (i32, i32) {
    %c0_i32 = arith.constant 0 : i32
    %c0_i32_0 = arith.constant 0 : i32
    %c0_i32_1 = arith.constant 0 : i32
    return %c0_i32, %c0_i32_0 : i32, i32
  }
  func.func @transform_24(%arg0: i32) -> (i32, i32) {
    %c0_i32 = arith.constant 0 : i32
    %c0_i32_0 = arith.constant 0 : i32
    %c0_i32_1 = arith.constant 0 : i32
    return %c0_i32, %c0_i32_0 : i32, i32
  }
  func.func @transform_25(%arg0: i32) -> (i32, i32) {
    %c0_i32 = arith.constant 0 : i32
    %c0_i32_0 = arith.constant 0 : i32
    %c0_i32_1 = arith.constant 0 : i32
    return %c0_i32, %c0_i32_0 : i32, i32
  }
  func.func @transform_26(%arg0: i32) -> (i32, i32) {
    %c0_i32 = arith.constant 0 : i32
    %c0_i32_0 = arith.constant 0 : i32
    %c0_i32_1 = arith.constant 0 : i32
    return %c0_i32, %c0_i32_0 : i32, i32
  }
  func.func @transform_27(%arg0: i32) -> (i32, i32, i32) {
    %c0_i32 = arith.constant 0 : i32
    %c0_i32_0 = arith.constant 0 : i32
    %c0_i32_1 = arith.constant 0 : i32
    %c0_i32_2 = arith.constant 0 : i32
    return %c0_i32, %c0_i32_0, %c0_i32_1 : i32, i32, i32
  }
  func.func @transform_28(%arg0: i32) -> (i32, i32, i32) {
    %c0_i32 = arith.constant 0 : i32
    %c0_i32_0 = arith.constant 0 : i32
    %c0_i32_1 = arith.constant 0 : i32
    %c0_i32_2 = arith.constant 0 : i32
    return %c0_i32, %c0_i32_0, %c0_i32_1 : i32, i32, i32
  }
  func.func @transform_29(%arg0: i32) -> (i32, i32) {
    %c0_i32 = arith.constant 0 : i32
    %c0_i32_0 = arith.constant 0 : i32
    %c0_i32_1 = arith.constant 0 : i32
    return %c0_i32, %c0_i32_0 : i32, i32
  }
  func.func @transform_30(%arg0: i32) -> (i32, i32, i32) {
    %c0_i32 = arith.constant 0 : i32
    %c0_i32_0 = arith.constant 0 : i32
    %c0_i32_1 = arith.constant 0 : i32
    %c0_i32_2 = arith.constant 0 : i32
    return %c0_i32, %c0_i32_0, %c0_i32_1 : i32, i32, i32
  }
  func.func @transform_31(%arg0: i32) -> (i32, i32, i32) {
    %c0_i32 = arith.constant 0 : i32
    %c0_i32_0 = arith.constant 0 : i32
    %c0_i32_1 = arith.constant 0 : i32
    %c0_i32_2 = arith.constant 0 : i32
    return %c0_i32, %c0_i32_0, %c0_i32_1 : i32, i32, i32
  }
  func.func @transform_32(%arg0: i32) -> (i32, i32) {
    %c0_i32 = arith.constant 0 : i32
    %c0_i32_0 = arith.constant 0 : i32
    %c0_i32_1 = arith.constant 0 : i32
    return %c0_i32, %c0_i32_0 : i32, i32
  }
  func.func @transform_33(%arg0: i32) -> (i32, i32) {
    %c0_i32 = arith.constant 0 : i32
    %c0_i32_0 = arith.constant 0 : i32
    %c0_i32_1 = arith.constant 0 : i32
    return %c0_i32, %c0_i32_0 : i32, i32
  }
  func.func @transform_34(%arg0: i32) -> (i32, i32) {
    %c0_i32 = arith.constant 0 : i32
    %c0_i32_0 = arith.constant 0 : i32
    %c0_i32_1 = arith.constant 0 : i32
    return %c0_i32, %c0_i32_0 : i32, i32
  }
  func.func @transform_35(%arg0: i32) -> (i32, i32) {
    %c0_i32 = arith.constant 0 : i32
    %c0_i32_0 = arith.constant 0 : i32
    %c0_i32_1 = arith.constant 0 : i32
    return %c0_i32, %c0_i32_0 : i32, i32
  }
  func.func @transform_36(%arg0: i32) -> (i32, i32) {
    %c0_i32 = arith.constant 0 : i32
    %c0_i32_0 = arith.constant 0 : i32
    %c0_i32_1 = arith.constant 0 : i32
    return %c0_i32, %c0_i32_0 : i32, i32
  }
  func.func @transform_37(%arg0: i32) -> (i32, i32) {
    %c0_i32 = arith.constant 0 : i32
    %c0_i32_0 = arith.constant 0 : i32
    %c0_i32_1 = arith.constant 0 : i32
    return %c0_i32, %c0_i32_0 : i32, i32
  }
  func.func @transform_38(%arg0: i32) -> (i32, i32) {
    %c0_i32 = arith.constant 0 : i32
    %c0_i32_0 = arith.constant 0 : i32
    %c0_i32_1 = arith.constant 0 : i32
    return %c0_i32, %c0_i32_0 : i32, i32
  }
  func.func @transform_39(%arg0: i32) -> (i32, i32) {
    %c0_i32 = arith.constant 0 : i32
    %c0_i32_0 = arith.constant 0 : i32
    %c0_i32_1 = arith.constant 0 : i32
    return %c0_i32, %c0_i32_0 : i32, i32
  }
}

</mosaic_0001>

<llo_original>
// kernel: tile.28
$region0: #{tile.28}
  #allocation0 [shape = 's32[1]{0}', space=sflag, size = 0x4, scoped, tag = 'scoped memory for tile.28']
  %s0 = inlined_call_operand.vmem [shape: f32[16], index: 0, kind: input, shape index: {}]
  %s1 = inlined_call_operand.vmem [shape: f32[4,16], index: 1, kind: output, shape index: {}]
  // Predicated region
  $region2: #{tile.28} parent=0 // pred_check
    _
  $region3: #{tile.28} parent=0 // pred_check_branch
    %3 = sbr.rel (0) target = $region5
  $region4: #{tile.28} parent=0 // pred_region
    _
  $region5: #{tile.28} parent=0 // pred_fallthru
    _
  %v4 = vld [vmem:[%s0] ss:$0 sm:$0xff]
  %5 = vst [vmem:[%s1] sm:$0xf] %v4

// kernel: mul.237
$region0: #{mul.237}
  %s0 = inlined_call_operand.vmem [shape: f32[4,16], index: 0, kind: input, shape index: {}]
  %s1 = inlined_call_operand.vmem [shape: f32[64], index: 1, kind: output, shape index: {}]
  $region1: #{mul.237} parent=0
    #allocation0 [shape = 'u8[4096]{0}', space=vmem, size = 0x1000, scoped, tag = 'scoped mem for output reshape']
    #allocation1 [shape = 'u8[4096]{0}', space=vmem, size = 0x1000, scoped, tag = 'scoped mem for input reshape']
    %s3 = ssub.s32 16, 1
    %v4 = vld [vmem:[%s0] sm:%s3]
    %5 = vst [vmem:[#allocation1] sm:%s3] %v4
    %v6 = vld [vmem:[#allocation1] sm:$0x1]
    %vm7 = vcmask 130048
    %8 = vst.msk [vmem:[#allocation0] sm:$0x1] %vm7, %v6
    %s9 = scalar_lea.vmem [#allocation1], 3
    %v10 = vld [vmem:[%s9] sm:$0x1]
    %11 = vrot.lane.b32.xlu0 %v10, 48
    %v12 = vpop.permute.xlu0 %11
    %vm13 = vcmask 523648
    %14 = vst.msk [vmem:[#allocation0] sm:$0x1] %vm13, %v12
    %s15 = scalar_lea.vmem [#allocation1], 2
    %v16 = vld [vmem:[%s15] sm:$0x1]
    %17 = vrot.lane.b32.xlu0 %v16, 32
    %v18 = vpop.permute.xlu0 %17
    %vm19 = vcmask 392448
    %20 = vst.msk [vmem:[#allocation0] sm:$0x1] %vm19, %v18
    %s21 = scalar_lea.vmem [#allocation1], 1
    %v22 = vld [vmem:[%s21] sm:$0x1]
    %23 = vrot.lane.b32.xlu0 %v22, 16
    %v24 = vpop.permute.xlu0 %23
    %vm25 = vcmask 261248
    %26 = vst.msk [vmem:[#allocation0] sm:$0x1] %vm25, %v24
    %s28 = ssub.s32 2, 1
    %v29 = vld [vmem:[#allocation0] sm:%s28]
    %s31 = ssub.s32 2, 1
    %32 = vst [vmem:[%s1] sm:%s31] %v29

// kernel: tile.34
$region0: #{tile.34}
  %s0 = inlined_call_operand.vmem [shape: f32[4,16], index: 0, kind: input, shape index: {}]
  %s1 = inlined_call_operand.vmem [shape: f32[1,64], index: 1, kind: output, shape index: {}]
  $region1: #{tile.34} parent=0
    #allocation0 [shape = 'u8[4096]{0}', space=vmem, size = 0x1000, scoped, tag = 'scoped mem for output reshape']
    #allocation1 [shape = 'u8[4096]{0}', space=vmem, size = 0x1000, scoped, tag = 'scoped mem for input reshape']
    %s3 = ssub.s32 16, 1
    %v4 = vld [vmem:[%s0] sm:%s3]
    %5 = vst [vmem:[#allocation1] sm:%s3] %v4
    %v6 = vld [vmem:[#allocation1] sm:$0x1]
    %vm7 = vcmask 130048
    %8 = vst.msk [vmem:[#allocation0] sm:$0x1] %vm7, %v6
    %s9 = scalar_lea.vmem [#allocation1], 3
    %v10 = vld [vmem:[%s9] sm:$0x1]
    %11 = vrot.lane.b32.xlu0 %v10, 48
    %v12 = vpop.permute.xlu0 %11
    %vm13 = vcmask 523648
    %14 = vst.msk [vmem:[#allocation0] sm:$0x1] %vm13, %v12
    %s15 = scalar_lea.vmem [#allocation1], 2
    %v16 = vld [vmem:[%s15] sm:$0x1]
    %17 = vrot.lane.b32.xlu0 %v16, 32
    %v18 = vpop.permute.xlu0 %17
    %vm19 = vcmask 392448
    %20 = vst.msk [vmem:[#allocation0] sm:$0x1] %vm19, %v18
    %s21 = scalar_lea.vmem [#allocation1], 1
    %v22 = vld [vmem:[%s21] sm:$0x1]
    %23 = vrot.lane.b32.xlu0 %v22, 16
    %v24 = vpop.permute.xlu0 %23
    %vm25 = vcmask 261248
    %26 = vst.msk [vmem:[#allocation0] sm:$0x1] %vm25, %v24
    %s28 = ssub.s32 2, 1
    %v29 = vld [vmem:[#allocation0] sm:%s28]
    %s31 = ssub.s32 2, 1
    %32 = vst [vmem:[%s1] sm:%s31] %v29

// kernel: tile.38
$region0: #{tile.38}
  #allocation0 [shape = 's32[1]{0}', space=sflag, size = 0x4, scoped, tag = 'scoped memory for tile.38']
  %s0 = inlined_call_operand.vmem [shape: f32[32], index: 0, kind: input, shape index: {}]
  %s1 = inlined_call_operand.vmem [shape: f32[4,32], index: 1, kind: output, shape index: {}]
  // Predicated region
  $region2: #{tile.38} parent=0 // pred_check
    _
  $region3: #{tile.38} parent=0 // pred_check_branch
    %3 = sbr.rel (0) target = $region5
  $region4: #{tile.38} parent=0 // pred_region
    _
  $region5: #{tile.38} parent=0 // pred_fallthru
    _
  %v4 = vld [vmem:[%s0] ss:$0 sm:$0xff]
  %5 = vst [vmem:[%s1] sm:$0xf] %v4

// kernel: tile.39
$region0: #{tile.39}
  %s0 = inlined_call_operand.vmem [shape: f32[4,32], index: 0, kind: input, shape index: {}]
  %s1 = inlined_call_operand.vmem [shape: f32[1,128], index: 1, kind: output, shape index: {}]
  $region1: #{tile.39} parent=0
    #allocation0 [shape = 'u8[4096]{0}', space=vmem, size = 0x1000, scoped, tag = 'scoped mem for output reshape']
    #allocation1 [shape = 'u8[4096]{0}', space=vmem, size = 0x1000, scoped, tag = 'scoped mem for input reshape']
    %s3 = ssub.s32 16, 1
    %v4 = vld [vmem:[%s0] sm:%s3]
    %5 = vst [vmem:[#allocation1] sm:%s3] %v4
    %v6 = vld [vmem:[#allocation1] sm:$0x1]
    %vm7 = vcmask 261120
    %8 = vst.msk [vmem:[#allocation0] sm:$0x1] %vm7, %v6
    %s9 = scalar_lea.vmem [#allocation1], 3
    %v10 = vld [vmem:[%s9] sm:$0x1]
    %11 = vrot.lane.b32.xlu0 %v10, 96
    %v12 = vpop.permute.xlu0 %11
    %vm13 = vcmask 1048320
    %14 = vst.msk [vmem:[#allocation0] sm:$0x1] %vm13, %v12
    %s15 = scalar_lea.vmem [#allocation1], 2
    %v16 = vld [vmem:[%s15] sm:$0x1]
    %17 = vrot.lane.b32.xlu0 %v16, 64
    %v18 = vpop.permute.xlu0 %17
    %vm19 = vcmask 785920
    %20 = vst.msk [vmem:[#allocation0] sm:$0x1] %vm19, %v18
    %s21 = scalar_lea.vmem [#allocation1], 1
    %v22 = vld [vmem:[%s21] sm:$0x1]
    %23 = vrot.lane.b32.xlu0 %v22, 32
    %v24 = vpop.permute.xlu0 %23
    %vm25 = vcmask 523520
    %26 = vst.msk [vmem:[#allocation0] sm:$0x1] %vm25, %v24
    %s28 = ssub.s32 2, 1
    %v29 = vld [vmem:[#allocation0] sm:%s28]
    %s31 = ssub.s32 2, 1
    %32 = vst [vmem:[%s1] sm:%s31] %v29

// kernel: multibranch_forward.1
$region0: #{multibranch_forward.1}
  #allocation0 [shape = 'u32[]', space=smem, size = 0x4, offset = 0x4, fixed_abs, tag = 'smem constant byte address 0x4 - core index']
  #allocation1 [shape = 'u32[72,128]{1,0:T(1,128)}', space=vmem, size = 0x9000, scoped, tag = 'internal scratch']
  #allocation2 [shape = 'f32[120,64]{1,0:T(8,128)}', space=vmem, size = 0xf000, scoped, tag = 'scratch operand']
  #allocation3 [shape = 'f32[30,64]{1,0:T(8,128)}', space=vmem, size = 0x4000, scoped, tag = 'scratch operand']
  #allocation4 [shape = 'f32[8,64]{1,0:T(8,128)}', space=vmem, size = 0x1000, scoped, tag = 'scratch operand']
  %s0 = inlined_call_operand.smem [shape: u32[40], index: -1, kind: input, shape index: {}]
  %s1 = sld [smem:[%s0]]
  %s2 = scalar_lea.smem %s0, 1
  %s3 = sld [smem:[%s2]]
  %s4 = scalar_lea.smem %s0, 2
  %s5 = sld [smem:[%s4]]
  %s6 = scalar_lea.smem %s0, 3
  %s7 = sld [smem:[%s6]]
  %s8 = scalar_lea.smem %s0, 4
  %s9 = sld [smem:[%s8]]
  %s10 = scalar_lea.smem %s0, 5
  %s11 = sld [smem:[%s10]]
  %s12 = scalar_lea.smem %s0, 6
  %s13 = sld [smem:[%s12]]
  %s14 = scalar_lea.smem %s0, 7
  %s15 = sld [smem:[%s14]]
  %s16 = scalar_lea.smem %s0, 8
  %s17 = sld [smem:[%s16]]
  %s18 = scalar_lea.smem %s0, 9
  %s19 = sld [smem:[%s18]]
  %s20 = scalar_lea.smem %s0, 10
  %s21 = sld [smem:[%s20]]
  %s22 = scalar_lea.smem %s0, 11
  %s23 = sld [smem:[%s22]]
  %s24 = scalar_lea.smem %s0, 12
  %s25 = sld [smem:[%s24]]
  %s26 = scalar_lea.smem %s0, 13
  %s27 = sld [smem:[%s26]]
  %s28 = scalar_lea.smem %s0, 14
  %s29 = sld [smem:[%s28]]
  %s30 = scalar_lea.smem %s0, 15
  %s31 = sld [smem:[%s30]]
  %s32 = scalar_lea.smem %s0, 16
  %s33 = sld [smem:[%s32]]
  %s34 = scalar_lea.smem %s0, 17
  %s35 = sld [smem:[%s34]]
  %s36 = scalar_lea.smem %s0, 18
  %s37 = sld [smem:[%s36]]
  %s38 = scalar_lea.smem %s0, 19
  %s39 = sld [smem:[%s38]]
  %s40 = scalar_lea.smem %s0, 20
  %s41 = sld [smem:[%s40]]
  %s42 = scalar_lea.smem %s0, 21
  %s43 = sld [smem:[%s42]]
  %s44 = scalar_lea.smem %s0, 22
  %s45 = sld [smem:[%s44]]
  %s46 = scalar_lea.smem %s0, 23
  %s47 = sld [smem:[%s46]]
  %s48 = scalar_lea.smem %s0, 24
  %s49 = sld [smem:[%s48]]
  %s50 = scalar_lea.smem %s0, 25
  %s51 = sld [smem:[%s50]]
  %s52 = scalar_lea.smem %s0, 26
  %s53 = sld [smem:[%s52]]
  %s54 = scalar_lea.smem %s0, 27
  %s55 = sld [smem:[%s54]]
  %s56 = scalar_lea.smem %s0, 28
  %s57 = sld [smem:[%s56]]
  %s58 = scalar_lea.smem %s0, 29
  %s59 = sld [smem:[%s58]]
  %s60 = scalar_lea.smem %s0, 30
  %s61 = sld [smem:[%s60]]
  %s62 = scalar_lea.smem %s0, 31
  %s63 = sld [smem:[%s62]]
  %s64 = scalar_lea.smem %s0, 32
  %s65 = sld [smem:[%s64]]
  %s66 = scalar_lea.smem %s0, 33
  %s67 = sld [smem:[%s66]]
  %s68 = scalar_lea.smem %s0, 34
  %s69 = sld [smem:[%s68]]
  %s70 = scalar_lea.smem %s0, 35
  %s71 = sld [smem:[%s70]]
  %s72 = scalar_lea.smem %s0, 36
  %s73 = sld [smem:[%s72]]
  %s74 = scalar_lea.smem %s0, 37
  %s75 = sld [smem:[%s74]]
  %s76 = scalar_lea.smem %s0, 38
  %s77 = sld [smem:[%s76]]
  %s78 = scalar_lea.smem %s0, 39
  %s79 = sld [smem:[%s78]]
  %s80 = sld [smem:[#allocation0]]
  $region166: #{multibranch_forward.1} parent=0
    _
  %s82 = ssub.s32 1, %s80
  %s83 = scalar_select 0, %s82, %s80
  $region1: #{multibranch_forward.1} parent=0
    #allocation5 [shape = 'u8[1024]{0}', space=vmem, size = 0x400, scoped, tag = 'output window, operand 0, single buffered']
    #allocation6 [shape = 's32[1]{0}', space=sflag, size = 0x4, scoped, tag = 'scoped memory for multibranch_forward.1']
    %84 = vsyncpa [#allocation6], 0
    // Predicated region
    $region2: #{multibranch_forward.1} parent=1 // pred_check
      _
    $region3: #{multibranch_forward.1} parent=1 // pred_check_branch
      %86 = sbr.rel (0) target = $region5
    $region4: #{multibranch_forward.1} parent=1 // pred_region
      _
    $region5: #{multibranch_forward.1} parent=1 // pred_fallthru
      _
    // Predicated region
    $region6: #{multibranch_forward.1} parent=1 // pred_check
      _
    $region7: #{multibranch_forward.1} parent=1 // pred_check_branch
      %88 = sbr.rel (0) target = $region9
    $region8: #{multibranch_forward.1} parent=1 // pred_region
      _
    $region9: #{multibranch_forward.1} parent=1 // pred_fallthru
      _
    // Predicated region
    $region10: #{multibranch_forward.1} parent=1 // pred_check
      _
    $region11: #{multibranch_forward.1} parent=1 // pred_check_branch
      %90 = sbr.rel (0) target = $region13
    $region12: #{multibranch_forward.1} parent=1 // pred_region
      _
    $region13: #{multibranch_forward.1} parent=1 // pred_fallthru
      _
    // Predicated region
    $region14: #{multibranch_forward.1} parent=1 // pred_check
      _
    $region15: #{multibranch_forward.1} parent=1 // pred_check_branch
      %92 = sbr.rel (0) target = $region17
    $region16: #{multibranch_forward.1} parent=1 // pred_region
      _
    $region17: #{multibranch_forward.1} parent=1 // pred_fallthru
      _
    // Predicated region
    $region18: #{multibranch_forward.1} parent=1 // pred_check
      _
    $region19: #{multibranch_forward.1} parent=1 // pred_check_branch
      %94 = sbr.rel (0) target = $region21
    $region20: #{multibranch_forward.1} parent=1 // pred_region
      _
    $region21: #{multibranch_forward.1} parent=1 // pred_fallthru
      _
    // Predicated region
    $region22: #{multibranch_forward.1} parent=1 // pred_check
      _
    $region23: #{multibranch_forward.1} parent=1 // pred_check_branch
      %96 = sbr.rel (0) target = $region25
    $region24: #{multibranch_forward.1} parent=1 // pred_region
      _
    $region25: #{multibranch_forward.1} parent=1 // pred_fallthru
      _
    // Predicated region
    $region26: #{multibranch_forward.1} parent=1 // pred_check
      _
    $region27: #{multibranch_forward.1} parent=1 // pred_check_branch
      %98 = sbr.rel (0) target = $region29
    $region28: #{multibranch_forward.1} parent=1 // pred_region
      _
    $region29: #{multibranch_forward.1} parent=1 // pred_fallthru
      _
    // Predicated region
    $region30: #{multibranch_forward.1} parent=1 // pred_check
      _
    $region31: #{multibranch_forward.1} parent=1 // pred_check_branch
      %100 = sbr.rel (0) target = $region33
    $region32: #{multibranch_forward.1} parent=1 // pred_region
      _
    $region33: #{multibranch_forward.1} parent=1 // pred_fallthru
      _
    // Predicated region
    $region34: #{multibranch_forward.1} parent=1 // pred_check
      _
    $region35: #{multibranch_forward.1} parent=1 // pred_check_branch
      %102 = sbr.rel (0) target = $region37
    $region36: #{multibranch_forward.1} parent=1 // pred_region
      _
    $region37: #{multibranch_forward.1} parent=1 // pred_fallthru
      _
    // Predicated region
    $region38: #{multibranch_forward.1} parent=1 // pred_check
      _
    $region39: #{multibranch_forward.1} parent=1 // pred_check_branch
      %104 = sbr.rel (0) target = $region41
    $region40: #{multibranch_forward.1} parent=1 // pred_region
      _
    $region41: #{multibranch_forward.1} parent=1 // pred_fallthru
      _
    // Predicated region
    $region42: #{multibranch_forward.1} parent=1 // pred_check
      _
    $region43: #{multibranch_forward.1} parent=1 // pred_check_branch
      %106 = sbr.rel (0) target = $region45
    $region44: #{multibranch_forward.1} parent=1 // pred_region
      _
    $region45: #{multibranch_forward.1} parent=1 // pred_fallthru
      _
    // Predicated region
    $region46: #{multibranch_forward.1} parent=1 // pred_check
      _
    $region47: #{multibranch_forward.1} parent=1 // pred_check_branch
      %108 = sbr.rel (0) target = $region49
    $region48: #{multibranch_forward.1} parent=1 // pred_region
      _
    $region49: #{multibranch_forward.1} parent=1 // pred_fallthru
      _
    // Predicated region
    $region50: #{multibranch_forward.1} parent=1 // pred_check
      _
    $region51: #{multibranch_forward.1} parent=1 // pred_check_branch
      %110 = sbr.rel (0) target = $region53
    $region52: #{multibranch_forward.1} parent=1 // pred_region
      _
    $region53: #{multibranch_forward.1} parent=1 // pred_fallthru
      _
    // Predicated region
    $region54: #{multibranch_forward.1} parent=1 // pred_check
      _
    $region55: #{multibranch_forward.1} parent=1 // pred_check_branch
      %112 = sbr.rel (0) target = $region57
    $region56: #{multibranch_forward.1} parent=1 // pred_region
      _
    $region57: #{multibranch_forward.1} parent=1 // pred_fallthru
      _
    // Predicated region
    $region58: #{multibranch_forward.1} parent=1 // pred_check
      _
    $region59: #{multibranch_forward.1} parent=1 // pred_check_branch
      %114 = sbr.rel (0) target = $region61
    $region60: #{multibranch_forward.1} parent=1 // pred_region
      _
    $region61: #{multibranch_forward.1} parent=1 // pred_fallthru
      _
    // Predicated region
    $region62: #{multibranch_forward.1} parent=1 // pred_check
      _
    $region63: #{multibranch_forward.1} parent=1 // pred_check_branch
      %116 = sbr.rel (0) target = $region65
    $region64: #{multibranch_forward.1} parent=1 // pred_region
      _
    $region65: #{multibranch_forward.1} parent=1 // pred_fallthru
      _
    // Predicated region
    $region66: #{multibranch_forward.1} parent=1 // pred_check
      _
    $region67: #{multibranch_forward.1} parent=1 // pred_check_branch
      %118 = sbr.rel (0) target = $region69
    $region68: #{multibranch_forward.1} parent=1 // pred_region
      _
    $region69: #{multibranch_forward.1} parent=1 // pred_fallthru
      _
    // Predicated region
    $region70: #{multibranch_forward.1} parent=1 // pred_check
      _
    $region71: #{multibranch_forward.1} parent=1 // pred_check_branch
      %120 = sbr.rel (0) target = $region73
    $region72: #{multibranch_forward.1} parent=1 // pred_region
      _
    $region73: #{multibranch_forward.1} parent=1 // pred_fallthru
      _
    // Predicated region
    $region74: #{multibranch_forward.1} parent=1 // pred_check
      _
    $region75: #{multibranch_forward.1} parent=1 // pred_check_branch
      %122 = sbr.rel (0) target = $region77
    $region76: #{multibranch_forward.1} parent=1 // pred_region
      _
    $region77: #{multibranch_forward.1} parent=1 // pred_fallthru
      _
    // Predicated region
    $region78: #{multibranch_forward.1} parent=1 // pred_check
      _
    $region79: #{multibranch_forward.1} parent=1 // pred_check_branch
      %124 = sbr.rel (0) target = $region81
    $region80: #{multibranch_forward.1} parent=1 // pred_region
      _
    $region81: #{multibranch_forward.1} parent=1 // pred_fallthru
      _
    // Predicated region
    $region82: #{multibranch_forward.1} parent=1 // pred_check
      _
    $region83: #{multibranch_forward.1} parent=1 // pred_check_branch
      %126 = sbr.rel (0) target = $region85
    $region84: #{multibranch_forward.1} parent=1 // pred_region
      _
    $region85: #{multibranch_forward.1} parent=1 // pred_fallthru
      _
    // Predicated region
    $region86: #{multibranch_forward.1} parent=1 // pred_check
      _
    $region87: #{multibranch_forward.1} parent=1 // pred_check_branch
      %128 = sbr.rel (0) target = $region89
    $region88: #{multibranch_forward.1} parent=1 // pred_region
      _
    $region89: #{multibranch_forward.1} parent=1 // pred_fallthru
      _
    // Predicated region
    $region90: #{multibranch_forward.1} parent=1 // pred_check
      _
    $region91: #{multibranch_forward.1} parent=1 // pred_check_branch
      %130 = sbr.rel (0) target = $region93
    $region92: #{multibranch_forward.1} parent=1 // pred_region
      _
    $region93: #{multibranch_forward.1} parent=1 // pred_fallthru
      _
    // Predicated region
    $region94: #{multibranch_forward.1} parent=1 // pred_check
      _
    $region95: #{multibranch_forward.1} parent=1 // pred_check_branch
      %132 = sbr.rel (0) target = $region97
    $region96: #{multibranch_forward.1} parent=1 // pred_region
      _
    $region97: #{multibranch_forward.1} parent=1 // pred_fallthru
      _
    // Predicated region
    $region98: #{multibranch_forward.1} parent=1 // pred_check
      _
    $region99: #{multibranch_forward.1} parent=1 // pred_check_branch
      %134 = sbr.rel (0) target = $region101
    $region100: #{multibranch_forward.1} parent=1 // pred_region
      _
    $region101: #{multibranch_forward.1} parent=1 // pred_fallthru
      _
    // Predicated region
    $region102: #{multibranch_forward.1} parent=1 // pred_check
      _
    $region103: #{multibranch_forward.1} parent=1 // pred_check_branch
      %136 = sbr.rel (0) target = $region105
    $region104: #{multibranch_forward.1} parent=1 // pred_region
      _
    $region105: #{multibranch_forward.1} parent=1 // pred_fallthru
      _
    // Predicated region
    $region106: #{multibranch_forward.1} parent=1 // pred_check
      _
    $region107: #{multibranch_forward.1} parent=1 // pred_check_branch
      %138 = sbr.rel (0) target = $region109
    $region108: #{multibranch_forward.1} parent=1 // pred_region
      _
    $region109: #{multibranch_forward.1} parent=1 // pred_fallthru
      _
    // Predicated region
    $region110: #{multibranch_forward.1} parent=1 // pred_check
      _
    $region111: #{multibranch_forward.1} parent=1 // pred_check_branch
      %140 = sbr.rel (0) target = $region113
    $region112: #{multibranch_forward.1} parent=1 // pred_region
      _
    $region113: #{multibranch_forward.1} parent=1 // pred_fallthru
      _
    // Predicated region
    $region114: #{multibranch_forward.1} parent=1 // pred_check
      _
    $region115: #{multibranch_forward.1} parent=1 // pred_check_branch
      %142 = sbr.rel (0) target = $region117
    $region116: #{multibranch_forward.1} parent=1 // pred_region
      _
    $region117: #{multibranch_forward.1} parent=1 // pred_fallthru
      _
    // Predicated region
    $region118: #{multibranch_forward.1} parent=1 // pred_check
      _
    $region119: #{multibranch_forward.1} parent=1 // pred_check_branch
      %144 = sbr.rel (0) target = $region121
    $region120: #{multibranch_forward.1} parent=1 // pred_region
      _
    $region121: #{multibranch_forward.1} parent=1 // pred_fallthru
      _
    // Predicated region
    $region122: #{multibranch_forward.1} parent=1 // pred_check
      _
    $region123: #{multibranch_forward.1} parent=1 // pred_check_branch
      %146 = sbr.rel (0) target = $region125
    $region124: #{multibranch_forward.1} parent=1 // pred_region
      _
    $region125: #{multibranch_forward.1} parent=1 // pred_fallthru
      _
    // Predicated region
    $region126: #{multibranch_forward.1} parent=1 // pred_check
      _
    $region127: #{multibranch_forward.1} parent=1 // pred_check_branch
      %148 = sbr.rel (0) target = $region129
    $region128: #{multibranch_forward.1} parent=1 // pred_region
      _
    $region129: #{multibranch_forward.1} parent=1 // pred_fallthru
      _
    // Predicated region
    $region130: #{multibranch_forward.1} parent=1 // pred_check
      _
    $region131: #{multibranch_forward.1} parent=1 // pred_check_branch
      %150 = sbr.rel (0) target = $region133
    $region132: #{multibranch_forward.1} parent=1 // pred_region
      _
    $region133: #{multibranch_forward.1} parent=1 // pred_fallthru
      _
    // Predicated region
    $region134: #{multibranch_forward.1} parent=1 // pred_check
      _
    $region135: #{multibranch_forward.1} parent=1 // pred_check_branch
      %152 = sbr.rel (0) target = $region137
    $region136: #{multibranch_forward.1} parent=1 // pred_region
      _
    $region137: #{multibranch_forward.1} parent=1 // pred_fallthru
      _
    // Predicated region
    $region138: #{multibranch_forward.1} parent=1 // pred_check
      _
    $region139: #{multibranch_forward.1} parent=1 // pred_check_branch
      %154 = sbr.rel (0) target = $region141
    $region140: #{multibranch_forward.1} parent=1 // pred_region
      _
    $region141: #{multibranch_forward.1} parent=1 // pred_fallthru
      _
    // Predicated region
    $region142: #{multibranch_forward.1} parent=1 // pred_check
      _
    $region143: #{multibranch_forward.1} parent=1 // pred_check_branch
      %156 = sbr.rel (0) target = $region145
    $region144: #{multibranch_forward.1} parent=1 // pred_region
      _
    $region145: #{multibranch_forward.1} parent=1 // pred_fallthru
      _
    // Predicated region
    $region146: #{multibranch_forward.1} parent=1 // pred_check
      _
    $region147: #{multibranch_forward.1} parent=1 // pred_check_branch
      %158 = sbr.rel (0) target = $region149
    $region148: #{multibranch_forward.1} parent=1 // pred_region
      _
    $region149: #{multibranch_forward.1} parent=1 // pred_fallthru
      _
    // Predicated region
    $region150: #{multibranch_forward.1} parent=1 // pred_check
      _
    $region151: #{multibranch_forward.1} parent=1 // pred_check_branch
      %160 = sbr.rel (0) target = $region153
    $region152: #{multibranch_forward.1} parent=1 // pred_region
      _
    $region153: #{multibranch_forward.1} parent=1 // pred_fallthru
      _
    // Predicated region
    $region154: #{multibranch_forward.1} parent=1 // pred_check
      _
    $region155: #{multibranch_forward.1} parent=1 // pred_check_branch
      %162 = sbr.rel (0) target = $region157
    $region156: #{multibranch_forward.1} parent=1 // pred_region
      _
    $region157: #{multibranch_forward.1} parent=1 // pred_fallthru
      _
    %v164 = vld [vmem:[%s1] sm:$0xf]
    %v165 = vld [vmem:[%s1 + $0x4] sm:$0xf]
    %v166 = vld [vmem:[%s1 + $0x8] sm:$0xf]
    %v167 = vld [vmem:[%s1 + $0xc] sm:$0xf]
    %v168 = vld [vmem:[%s1 + $0x10] sm:$0xf]
    %v169 = vld [vmem:[%s1 + $0x14] sm:$0xf]
    %v170 = vld [vmem:[%s1 + $0x18] sm:$0xf]
    %v171 = vld [vmem:[%s1 + $0x1c] sm:$0xf]
    %v172 = vld [vmem:[%s1 + $0x20] sm:$0xf]
    %v173 = vld [vmem:[%s1 + $0x24] sm:$0xf]
    %v174 = vld [vmem:[%s1 + $0x28] sm:$0xf]
    %v175 = vld [vmem:[%s1 + $0x2c] sm:$0xf]
    %v176 = vld [vmem:[%s1 + $0x30] sm:$0xf]
    %v177 = vld [vmem:[%s1 + $0x34] sm:$0xf]
    %v178 = vld [vmem:[%s1 + $0x38] sm:$0xf]
    %v179 = vld [vmem:[%s3] sm:$0xf]
    %v180 = vld [vmem:[%s3 + $0x4] sm:$0xf]
    %v181 = vld [vmem:[%s3 + $0x8] sm:$0xf]
    %v182 = vld [vmem:[%s3 + $0xc] sm:$0xf]
    %v183 = vld [vmem:[%s3 + $0x10] sm:$0xf]
    %v184 = vld [vmem:[%s3 + $0x14] sm:$0xf]
    %v185 = vld [vmem:[%s3 + $0x18] sm:$0xf]
    %v186 = vld [vmem:[%s3 + $0x1c] sm:$0xf]
    %v187 = vld [vmem:[%s3 + $0x20] sm:$0xf]
    %v188 = vld [vmem:[%s3 + $0x24] sm:$0xf]
    %v189 = vld [vmem:[%s3 + $0x28] sm:$0xf]
    %v190 = vld [vmem:[%s3 + $0x2c] sm:$0xf]
    %v191 = vld [vmem:[%s3 + $0x30] sm:$0xf]
    %v192 = vld [vmem:[%s3 + $0x34] sm:$0xf]
    %v193 = vld [vmem:[%s3 + $0x38] sm:$0xf]
    %v194 = vld [vmem:[%s3 + $0x3c] sm:$0xf]
    %v195 = vld [vmem:[%s5] sm:$0x1]
    %v197 = vperm.slane %v195, 0
    %v214 = vunpack.c.l.b16 %v164
    %v215 = vunpack.c.l.b16 %v165
    %v216 = vunpack.c.l.b16 %v166
    %v217 = vunpack.c.l.b16 %v167
    %v218 = vunpack.c.l.b16 %v168
    %v219 = vunpack.c.l.b16 %v169
    %v220 = vunpack.c.l.b16 %v170
    %v221 = vunpack.c.l.b16 %v171
    %v222 = vunpack.c.l.b16 %v172
    %v223 = vunpack.c.l.b16 %v173
    %v224 = vunpack.c.l.b16 %v174
    %v225 = vunpack.c.l.b16 %v175
    %v226 = vunpack.c.l.b16 %v176
    %v227 = vunpack.c.l.b16 %v177
    %v228 = vunpack.c.l.b16 %v178
    %v229 = vpack.c.b16 %v215, %v214
    %v230 = vpack.c.b16 %v217, %v216
    %v231 = vpack.c.b16 %v219, %v218
    %v232 = vpack.c.b16 %v221, %v220
    %v233 = vpack.c.b16 %v223, %v222
    %v234 = vpack.c.b16 %v225, %v224
    %v235 = vpack.c.b16 %v227, %v226
    %v236 = vpack.c.b16 %v228, %v228
    %v261 = vunpack.c.l.b16 %v179
    %v262 = vunpack.c.l.b16 %v180
    %v263 = vunpack.c.l.b16 %v181
    %v264 = vunpack.c.l.b16 %v182
    %v265 = vunpack.c.l.b16 %v183
    %v266 = vunpack.c.l.b16 %v184
    %v267 = vunpack.c.l.b16 %v185
    %v268 = vunpack.c.l.b16 %v186
    %v269 = vunpack.c.l.b16 %v187
    %v270 = vunpack.c.l.b16 %v188
    %v271 = vunpack.c.l.b16 %v189
    %v272 = vunpack.c.l.b16 %v190
    %v273 = vunpack.c.l.b16 %v191
    %v274 = vunpack.c.l.b16 %v192
    %v275 = vunpack.c.l.b16 %v193
    %v276 = vunpack.c.l.b16 %v194
    %v277 = vpack.c.b16 %v262, %v261
    %v278 = vpack.c.b16 %v264, %v263
    %v279 = vpack.c.b16 %v266, %v265
    %v280 = vpack.c.b16 %v268, %v267
    %v281 = vpack.c.b16 %v270, %v269
    %v282 = vpack.c.b16 %v272, %v271
    %v283 = vpack.c.b16 %v274, %v273
    %v284 = vpack.c.b16 %v276, %v275
    %293 = vmatpush.bf16.msra.mxu0 %v284
    %294 = vmatpush.bf16.msra.mxu0 %v283
    %295 = vmatpush.bf16.msra.mxu0 %v282
    %296 = vmatpush.bf16.msra.mxu0 %v281
    %297 = vmatpush.bf16.msra.mxu0 %v280
    %298 = vmatpush.bf16.msra.mxu0 %v279
    %299 = vmatpush.bf16.msra.mxu0 %v278
    %300 = vmatpush.bf16.msra.mxu0 %v277
    %301 = vmatmul.bf16.gmra.mxu0 %v229
    %v302 = vpop.f32.mrf.mxu0
    %v303 = vadd.f32 %v197, %v302
    %v304 = vpop.f32.mrf.mxu0
    %v305 = vadd.f32 %v197, %v304
    %306 = vmatmul.bf16.gmra.mxu0 %v230
    %v307 = vpop.f32.mrf.mxu0
    %v308 = vadd.f32 %v197, %v307
    %v309 = vpop.f32.mrf.mxu0
    %v310 = vadd.f32 %v197, %v309
    %311 = vmatmul.bf16.gmra.mxu0 %v231
    %v312 = vpop.f32.mrf.mxu0
    %v313 = vadd.f32 %v197, %v312
    %v314 = vpop.f32.mrf.mxu0
    %v315 = vadd.f32 %v197, %v314
    %316 = vmatmul.bf16.gmra.mxu0 %v232
    %v317 = vpop.f32.mrf.mxu0
    %v318 = vadd.f32 %v197, %v317
    %v319 = vpop.f32.mrf.mxu0
    %v320 = vadd.f32 %v197, %v319
    %321 = vmatmul.bf16.gmra.mxu0 %v233
    %v322 = vpop.f32.mrf.mxu0
    %v323 = vadd.f32 %v197, %v322
    %v324 = vpop.f32.mrf.mxu0
    %v325 = vadd.f32 %v197, %v324
    %326 = vmatmul.bf16.gmra.mxu0 %v234
    %v327 = vpop.f32.mrf.mxu0
    %v328 = vadd.f32 %v197, %v327
    %v329 = vpop.f32.mrf.mxu0
    %v330 = vadd.f32 %v197, %v329
    %331 = vmatmul.bf16.gmra.mxu0 %v235
    %v332 = vpop.f32.mrf.mxu0
    %v333 = vadd.f32 %v197, %v332
    %v334 = vpop.f32.mrf.mxu0
    %v335 = vadd.f32 %v197, %v334
    %336 = vmatmul.bf16.gmra.mxu0 %v236
    %v337 = vpop.f32.mrf.mxu0
    %v338 = vadd.f32 %v197, %v337
    %v339 = vpop.f32.mrf.mxu0
    %340 = vdwg.mxu0
    %vm341 = vcmp.gt.f32.partialorder %v303, 0.0
    %vm342 = vcmp.gt.f32.partialorder %v305, 0.0
    %vm343 = vcmp.gt.f32.partialorder %v308, 0.0
    %vm344 = vcmp.gt.f32.partialorder %v310, 0.0
    %vm345 = vcmp.gt.f32.partialorder %v313, 0.0
    %vm346 = vcmp.gt.f32.partialorder %v315, 0.0
    %vm347 = vcmp.gt.f32.partialorder %v318, 0.0
    %vm348 = vcmp.gt.f32.partialorder %v320, 0.0
    %vm349 = vcmp.gt.f32.partialorder %v323, 0.0
    %vm350 = vcmp.gt.f32.partialorder %v325, 0.0
    %vm351 = vcmp.gt.f32.partialorder %v328, 0.0
    %vm352 = vcmp.gt.f32.partialorder %v330, 0.0
    %vm353 = vcmp.gt.f32.partialorder %v333, 0.0
    %vm354 = vcmp.gt.f32.partialorder %v335, 0.0
    %vm355 = vcmp.gt.f32.partialorder %v338, 0.0
    %v356 = vmul.f32 %v303, 1.442695
    %v357 = vpow.pop %v356
    %v358 = vmul.f32 %v305, 1.442695
    %v359 = vpow.pop %v358
    %v360 = vmul.f32 %v308, 1.442695
    %v361 = vpow.pop %v360
    %v362 = vmul.f32 %v310, 1.442695
    %v363 = vpow.pop %v362
    %v364 = vmul.f32 %v313, 1.442695
    %v365 = vpow.pop %v364
    %v366 = vmul.f32 %v315, 1.442695
    %v367 = vpow.pop %v366
    %v368 = vmul.f32 %v318, 1.442695
    %v369 = vpow.pop %v368
    %v370 = vmul.f32 %v320, 1.442695
    %v371 = vpow.pop %v370
    %v372 = vmul.f32 %v323, 1.442695
    %v373 = vpow.pop %v372
    %v374 = vmul.f32 %v325, 1.442695
    %v375 = vpow.pop %v374
    %v376 = vmul.f32 %v328, 1.442695
    %v377 = vpow.pop %v376
    %v378 = vmul.f32 %v330, 1.442695
    %v379 = vpow.pop %v378
    %v380 = vmul.f32 %v333, 1.442695
    %v381 = vpow.pop %v380
    %v382 = vmul.f32 %v335, 1.442695
    %v383 = vpow.pop %v382
    %v384 = vmul.f32 %v338, 1.442695
    %v385 = vpow.pop %v384
    %v386 = vsub.f32 %v357, 1.0
    %v387 = vsub.f32 %v359, 1.0
    %v388 = vsub.f32 %v361, 1.0
    %v389 = vsub.f32 %v363, 1.0
    %v390 = vsub.f32 %v365, 1.0
    %v391 = vsub.f32 %v367, 1.0
    %v392 = vsub.f32 %v369, 1.0
    %v393 = vsub.f32 %v371, 1.0
    %v394 = vsub.f32 %v373, 1.0
    %v395 = vsub.f32 %v375, 1.0
    %v396 = vsub.f32 %v377, 1.0
    %v397 = vsub.f32 %v379, 1.0
    %v398 = vsub.f32 %v381, 1.0
    %v399 = vsub.f32 %v383, 1.0
    %v400 = vsub.f32 %v385, 1.0
    %v401 = vsel %vm341, %v303, %v386
    %v402 = vsel %vm342, %v305, %v387
    %v403 = vsel %vm343, %v308, %v388
    %v404 = vsel %vm344, %v310, %v389
    %v405 = vsel %vm345, %v313, %v390
    %v406 = vsel %vm346, %v315, %v391
    %v407 = vsel %vm347, %v318, %v392
    %v408 = vsel %vm348, %v320, %v393
    %v409 = vsel %vm349, %v323, %v394
    %v410 = vsel %vm350, %v325, %v395
    %v411 = vsel %vm351, %v328, %v396
    %v412 = vsel %vm352, %v330, %v397
    %v413 = vsel %vm353, %v333, %v398
    %v414 = vsel %vm354, %v335, %v399
    %v415 = vsel %vm355, %v338, %v400
    %v416 = vpack.c.bf16 %v402, %v401
    %v417 = vpack.c.bf16 %v404, %v403
    %v418 = vpack.c.bf16 %v406, %v405
    %v419 = vpack.c.bf16 %v408, %v407
    %v420 = vpack.c.bf16 %v410, %v409
    %v421 = vpack.c.bf16 %v412, %v411
    %v422 = vpack.c.bf16 %v414, %v413
    %v423 = vpack.c.bf16 %v415, %v415
    %v424 = vld [vmem:[%s7] sm:$0xf]
    %v425 = vld [vmem:[%s7 + $0x4] sm:$0xf]
    %v426 = vld [vmem:[%s7 + $0x8] sm:$0xf]
    %v427 = vld [vmem:[%s7 + $0xc] sm:$0xf]
    %v428 = vld [vmem:[%s7 + $0x10] sm:$0xf]
    %v429 = vld [vmem:[%s7 + $0x14] sm:$0xf]
    %v430 = vld [vmem:[%s7 + $0x18] sm:$0xf]
    %v431 = vld [vmem:[%s7 + $0x1c] sm:$0xf]
    %v432 = vld [vmem:[%s7 + $0x20] sm:$0xf]
    %v433 = vld [vmem:[%s7 + $0x24] sm:$0xf]
    %v434 = vld [vmem:[%s7 + $0x28] sm:$0xf]
    %v435 = vld [vmem:[%s7 + $0x2c] sm:$0xf]
    %v436 = vld [vmem:[%s7 + $0x30] sm:$0xf]
    %v437 = vld [vmem:[%s7 + $0x34] sm:$0xf]
    %v438 = vld [vmem:[%s7 + $0x38] sm:$0xf]
    %v454 = vunpack.c.l.b16 %v424
    %v455 = vunpack.c.l.b16 %v425
    %v456 = vunpack.c.l.b16 %v426
    %v457 = vunpack.c.l.b16 %v427
    %v458 = vunpack.c.l.b16 %v428
    %v459 = vunpack.c.l.b16 %v429
    %v460 = vunpack.c.l.b16 %v430
    %v461 = vunpack.c.l.b16 %v431
    %v462 = vunpack.c.l.b16 %v432
    %v463 = vunpack.c.l.b16 %v433
    %v464 = vunpack.c.l.b16 %v434
    %v465 = vunpack.c.l.b16 %v435
    %v466 = vunpack.c.l.b16 %v436
    %v467 = vunpack.c.l.b16 %v437
    %v468 = vunpack.c.l.b16 %v438
    %v469 = vpack.c.b16 %v455, %v454
    %v470 = vpack.c.b16 %v457, %v456
    %v471 = vpack.c.b16 %v459, %v458
    %v472 = vpack.c.b16 %v461, %v460
    %v473 = vpack.c.b16 %v463, %v462
    %v474 = vpack.c.b16 %v465, %v464
    %v475 = vpack.c.b16 %v467, %v466
    %v476 = vpack.c.b16 %v468, %v468
    %vm477 = vcmask 982016
    %v479 = vsel %vm477, %v469, 0
    %v482 = vsel %vm477, %v470, 0
    %v485 = vsel %vm477, %v471, 0
    %v488 = vsel %vm477, %v472, 0
    %v491 = vsel %vm477, %v473, 0
    %v494 = vsel %vm477, %v474, 0
    %v497 = vsel %vm477, %v475, 0
    %v500 = vsel %vm477, %v476, 0
    %vm502 = vcmask 1043456
    %v504 = vsel %vm502, %v423, 0
    %506 = vmatpush.bf16.msra.mxu0 %v504
    %507 = vmatpush.bf16.msra.mxu0 %v422
    %508 = vmatpush.bf16.msra.mxu0 %v421
    %509 = vmatpush.bf16.msra.mxu0 %v420
    %510 = vmatpush.bf16.msra.mxu0 %v419
    %511 = vmatpush.bf16.msra.mxu0 %v418
    %512 = vmatpush.bf16.msra.mxu0 %v417
    %513 = vmatpush.bf16.msra.mxu0 %v416
    %514 = vmatmul.bf16.gmra.mxu0 %v479
    %v515 = vpop.f32.mrf.mxu0
    %v516 = vadd.f32 0.0, %v515
    %v517 = vpop.f32.mrf.mxu0
    %v518 = vadd.f32 0.0, %v517
    %519 = vmatmul.bf16.gmra.mxu0 %v482
    %v520 = vpop.f32.mrf.mxu0
    %v521 = vadd.f32 0.0, %v520
    %v522 = vpop.f32.mrf.mxu0
    %v523 = vadd.f32 0.0, %v522
    %524 = vmatmul.bf16.gmra.mxu0 %v485
    %v525 = vpop.f32.mrf.mxu0
    %v526 = vadd.f32 0.0, %v525
    %v527 = vpop.f32.mrf.mxu0
    %v528 = vadd.f32 0.0, %v527
    %529 = vmatmul.bf16.gmra.mxu0 %v488
    %v530 = vpop.f32.mrf.mxu0
    %v531 = vadd.f32 0.0, %v530
    %v532 = vpop.f32.mrf.mxu0
    %v533 = vadd.f32 0.0, %v532
    %534 = vmatmul.bf16.gmra.mxu0 %v491
    %v535 = vpop.f32.mrf.mxu0
    %v536 = vadd.f32 0.0, %v535
    %v537 = vpop.f32.mrf.mxu0
    %v538 = vadd.f32 0.0, %v537
    %539 = vmatmul.bf16.gmra.mxu0 %v494
    %v540 = vpop.f32.mrf.mxu0
    %v541 = vadd.f32 0.0, %v540
    %v542 = vpop.f32.mrf.mxu0
    %v543 = vadd.f32 0.0, %v542
    %544 = vmatmul.bf16.gmra.mxu0 %v497
    %v545 = vpop.f32.mrf.mxu0
    %v546 = vadd.f32 0.0, %v545
    %v547 = vpop.f32.mrf.mxu0
    %v548 = vadd.f32 0.0, %v547
    %549 = vmatmul.bf16.gmra.mxu0 %v500
    %v550 = vpop.f32.mrf.mxu0
    %v551 = vadd.f32 0.0, %v550
    %v552 = vpop.f32.mrf.mxu0
    %553 = vdwg.mxu0
    %v554 = vpack.c.bf16 %v518, %v516
    %v555 = vpack.c.bf16 %v523, %v521
    %v556 = vpack.c.bf16 %v528, %v526
    %v557 = vpack.c.bf16 %v533, %v531
    %v558 = vpack.c.bf16 %v538, %v536
    %v559 = vpack.c.bf16 %v543, %v541
    %v560 = vpack.c.bf16 %v548, %v546
    %v561 = vpack.c.bf16 %v551, %v551
    %v562 = vld [vmem:[%s9] sm:$0xf]
    %v563 = vld [vmem:[%s9 + $0x4] sm:$0xf]
    %v564 = vld [vmem:[%s9 + $0x8] sm:$0xf]
    %v565 = vld [vmem:[%s9 + $0xc] sm:$0xf]
    %v566 = vld [vmem:[%s9 + $0x10] sm:$0xf]
    %v567 = vld [vmem:[%s9 + $0x14] sm:$0xf]
    %v568 = vld [vmem:[%s9 + $0x18] sm:$0xf]
    %v569 = vld [vmem:[%s9 + $0x1c] sm:$0xf]
    %v570 = vld [vmem:[%s11] sm:$0x1]
    %v572 = vperm.slane %v570, 0
    %v582 = vunpack.c.l.b16 %v562
    %v583 = vunpack.c.l.b16 %v563
    %v584 = vunpack.c.l.b16 %v564
    %v585 = vunpack.c.l.b16 %v565
    %v586 = vunpack.c.l.b16 %v566
    %v587 = vunpack.c.l.b16 %v567
    %v588 = vunpack.c.l.b16 %v568
    %v589 = vunpack.c.l.b16 %v569
    %v590 = vpack.c.b16 %v583, %v582
    %v591 = vpack.c.b16 %v585, %v584
    %v592 = vpack.c.b16 %v587, %v586
    %v593 = vpack.c.b16 %v589, %v588
    %vm598 = vcmask 523264
    %v600 = vsel %vm598, %v554, 0
    %v603 = vsel %vm598, %v555, 0
    %v606 = vsel %vm598, %v556, 0
    %v609 = vsel %vm598, %v557, 0
    %v612 = vsel %vm598, %v558, 0
    %v615 = vsel %vm598, %v559, 0
    %v618 = vsel %vm598, %v560, 0
    %v621 = vsel %vm598, %v561, 0
    %623 = vmatpush.bf16.msra.mxu0 0
    %624 = vmatpush.bf16.msra.mxu0 0
    %625 = vmatpush.bf16.msra.mxu0 0
    %626 = vmatpush.bf16.msra.mxu0 0
    %627 = vmatpush.bf16.msra.mxu0 %v593
    %628 = vmatpush.bf16.msra.mxu0 %v592
    %629 = vmatpush.bf16.msra.mxu0 %v591
    %630 = vmatpush.bf16.msra.mxu0 %v590
    %631 = vmatmul.bf16.gmra.mxu0 %v600
    %v632 = vpop.f32.mrf.mxu0
    %v633 = vadd.f32 %v572, %v632
    %v634 = vpop.f32.mrf.mxu0
    %v635 = vadd.f32 %v572, %v634
    %636 = vmatmul.bf16.gmra.mxu0 %v603
    %v637 = vpop.f32.mrf.mxu0
    %v638 = vadd.f32 %v572, %v637
    %v639 = vpop.f32.mrf.mxu0
    %v640 = vadd.f32 %v572, %v639
    %641 = vmatmul.bf16.gmra.mxu0 %v606
    %v642 = vpop.f32.mrf.mxu0
    %v643 = vadd.f32 %v572, %v642
    %v644 = vpop.f32.mrf.mxu0
    %v645 = vadd.f32 %v572, %v644
    %646 = vmatmul.bf16.gmra.mxu0 %v609
    %v647 = vpop.f32.mrf.mxu0
    %v648 = vadd.f32 %v572, %v647
    %v649 = vpop.f32.mrf.mxu0
    %v650 = vadd.f32 %v572, %v649
    %651 = vmatmul.bf16.gmra.mxu0 %v612
    %v652 = vpop.f32.mrf.mxu0
    %v653 = vadd.f32 %v572, %v652
    %v654 = vpop.f32.mrf.mxu0
    %v655 = vadd.f32 %v572, %v654
    %656 = vmatmul.bf16.gmra.mxu0 %v615
    %v657 = vpop.f32.mrf.mxu0
    %v658 = vadd.f32 %v572, %v657
    %v659 = vpop.f32.mrf.mxu0
    %v660 = vadd.f32 %v572, %v659
    %661 = vmatmul.bf16.gmra.mxu0 %v618
    %v662 = vpop.f32.mrf.mxu0
    %v663 = vadd.f32 %v572, %v662
    %v664 = vpop.f32.mrf.mxu0
    %v665 = vadd.f32 %v572, %v664
    %666 = vmatmul.bf16.gmra.mxu0 %v621
    %v667 = vpop.f32.mrf.mxu0
    %v668 = vadd.f32 %v572, %v667
    %v669 = vpop.f32.mrf.mxu0
    %670 = vdwg.mxu0
    %vm671 = vcmp.gt.f32.partialorder %v633, 0.0
    %vm672 = vcmp.gt.f32.partialorder %v635, 0.0
    %vm673 = vcmp.gt.f32.partialorder %v638, 0.0
    %vm674 = vcmp.gt.f32.partialorder %v640, 0.0
    %vm675 = vcmp.gt.f32.partialorder %v643, 0.0
    %vm676 = vcmp.gt.f32.partialorder %v645, 0.0
    %vm677 = vcmp.gt.f32.partialorder %v648, 0.0
    %vm678 = vcmp.gt.f32.partialorder %v650, 0.0
    %vm679 = vcmp.gt.f32.partialorder %v653, 0.0
    %vm680 = vcmp.gt.f32.partialorder %v655, 0.0
    %vm681 = vcmp.gt.f32.partialorder %v658, 0.0
    %vm682 = vcmp.gt.f32.partialorder %v660, 0.0
    %vm683 = vcmp.gt.f32.partialorder %v663, 0.0
    %vm684 = vcmp.gt.f32.partialorder %v665, 0.0
    %vm685 = vcmp.gt.f32.partialorder %v668, 0.0
    %v686 = vmul.f32 %v633, 1.442695
    %v687 = vpow.pop %v686
    %v688 = vmul.f32 %v635, 1.442695
    %v689 = vpow.pop %v688
    %v690 = vmul.f32 %v638, 1.442695
    %v691 = vpow.pop %v690
    %v692 = vmul.f32 %v640, 1.442695
    %v693 = vpow.pop %v692
    %v694 = vmul.f32 %v643, 1.442695
    %v695 = vpow.pop %v694
    %v696 = vmul.f32 %v645, 1.442695
    %v697 = vpow.pop %v696
    %v698 = vmul.f32 %v648, 1.442695
    %v699 = vpow.pop %v698
    %v700 = vmul.f32 %v650, 1.442695
    %v701 = vpow.pop %v700
    %v702 = vmul.f32 %v653, 1.442695
    %v703 = vpow.pop %v702
    %v704 = vmul.f32 %v655, 1.442695
    %v705 = vpow.pop %v704
    %v706 = vmul.f32 %v658, 1.442695
    %v707 = vpow.pop %v706
    %v708 = vmul.f32 %v660, 1.442695
    %v709 = vpow.pop %v708
    %v710 = vmul.f32 %v663, 1.442695
    %v711 = vpow.pop %v710
    %v712 = vmul.f32 %v665, 1.442695
    %v713 = vpow.pop %v712
    %v714 = vmul.f32 %v668, 1.442695
    %v715 = vpow.pop %v714
    %v716 = vsub.f32 %v687, 1.0
    %v717 = vsub.f32 %v689, 1.0
    %v718 = vsub.f32 %v691, 1.0
    %v719 = vsub.f32 %v693, 1.0
    %v720 = vsub.f32 %v695, 1.0
    %v721 = vsub.f32 %v697, 1.0
    %v722 = vsub.f32 %v699, 1.0
    %v723 = vsub.f32 %v701, 1.0
    %v724 = vsub.f32 %v703, 1.0
    %v725 = vsub.f32 %v705, 1.0
    %v726 = vsub.f32 %v707, 1.0
    %v727 = vsub.f32 %v709, 1.0
    %v728 = vsub.f32 %v711, 1.0
    %v729 = vsub.f32 %v713, 1.0
    %v730 = vsub.f32 %v715, 1.0
    %v731 = vsel %vm671, %v633, %v716
    %v732 = vsel %vm672, %v635, %v717
    %v733 = vsel %vm673, %v638, %v718
    %v734 = vsel %vm674, %v640, %v719
    %v735 = vsel %vm675, %v643, %v720
    %v736 = vsel %vm676, %v645, %v721
    %v737 = vsel %vm677, %v648, %v722
    %v738 = vsel %vm678, %v650, %v723
    %v739 = vsel %vm679, %v653, %v724
    %v740 = vsel %vm680, %v655, %v725
    %v741 = vsel %vm681, %v658, %v726
    %v742 = vsel %vm682, %v660, %v727
    %v743 = vsel %vm683, %v663, %v728
    %v744 = vsel %vm684, %v665, %v729
    %v745 = vsel %vm685, %v668, %v730
    %v746 = vpack.c.bf16 %v732, %v731
    %v747 = vpack.c.bf16 %v734, %v733
    %v748 = vpack.c.bf16 %v736, %v735
    %v749 = vpack.c.bf16 %v738, %v737
    %v750 = vpack.c.bf16 %v740, %v739
    %v751 = vpack.c.bf16 %v742, %v741
    %v752 = vpack.c.bf16 %v744, %v743
    %v753 = vpack.c.bf16 %v745, %v745
    %v754 = vld [vmem:[%s13] sm:$0xf]
    %v755 = vld [vmem:[%s13 + $0x4] sm:$0xf]
    %v756 = vld [vmem:[%s13 + $0x8] sm:$0xf]
    %v757 = vld [vmem:[%s13 + $0xc] sm:$0xf]
    %v758 = vld [vmem:[%s13 + $0x10] sm:$0xf]
    %v759 = vld [vmem:[%s13 + $0x14] sm:$0xf]
    %v760 = vld [vmem:[%s13 + $0x18] sm:$0xf]
    %v761 = vld [vmem:[%s13 + $0x1c] sm:$0xf]
    %v762 = vld [vmem:[%s13 + $0x20] sm:$0xf]
    %v763 = vld [vmem:[%s13 + $0x24] sm:$0xf]
    %v764 = vld [vmem:[%s13 + $0x28] sm:$0xf]
    %v765 = vld [vmem:[%s13 + $0x2c] sm:$0xf]
    %v766 = vld [vmem:[%s13 + $0x30] sm:$0xf]
    %v767 = vld [vmem:[%s13 + $0x34] sm:$0xf]
    %v768 = vld [vmem:[%s13 + $0x38] sm:$0xf]
    %v784 = vunpack.c.l.b16 %v754
    %v785 = vunpack.c.l.b16 %v755
    %v786 = vunpack.c.l.b16 %v756
    %v787 = vunpack.c.l.b16 %v757
    %v788 = vunpack.c.l.b16 %v758
    %v789 = vunpack.c.l.b16 %v759
    %v790 = vunpack.c.l.b16 %v760
    %v791 = vunpack.c.l.b16 %v761
    %v792 = vunpack.c.l.b16 %v762
    %v793 = vunpack.c.l.b16 %v763
    %v794 = vunpack.c.l.b16 %v764
    %v795 = vunpack.c.l.b16 %v765
    %v796 = vunpack.c.l.b16 %v766
    %v797 = vunpack.c.l.b16 %v767
    %v798 = vunpack.c.l.b16 %v768
    %v799 = vpack.c.b16 %v785, %v784
    %v800 = vpack.c.b16 %v787, %v786
    %v801 = vpack.c.b16 %v789, %v788
    %v802 = vpack.c.b16 %v791, %v790
    %v803 = vpack.c.b16 %v793, %v792
    %v804 = vpack.c.b16 %v795, %v794
    %v805 = vpack.c.b16 %v797, %v796
    %v806 = vpack.c.b16 %v798, %v798
    %v808 = vsel %vm477, %v799, 0
    %v811 = vsel %vm477, %v800, 0
    %v814 = vsel %vm477, %v801, 0
    %v817 = vsel %vm477, %v802, 0
    %v820 = vsel %vm477, %v803, 0
    %v823 = vsel %vm477, %v804, 0
    %v826 = vsel %vm477, %v805, 0
    %v829 = vsel %vm477, %v806, 0
    %v832 = vsel %vm502, %v753, 0
    %834 = vmatpush.bf16.msra.mxu0 %v832
    %835 = vmatpush.bf16.msra.mxu0 %v752
    %836 = vmatpush.bf16.msra.mxu0 %v751
    %837 = vmatpush.bf16.msra.mxu0 %v750
    %838 = vmatpush.bf16.msra.mxu0 %v749
    %839 = vmatpush.bf16.msra.mxu0 %v748
    %840 = vmatpush.bf16.msra.mxu0 %v747
    %841 = vmatpush.bf16.msra.mxu0 %v746
    %842 = vmatmul.bf16.gmra.mxu0 %v808
    %v843 = vpop.f32.mrf.mxu0
    %v844 = vadd.f32 0.0, %v843
    %v845 = vpop.f32.mrf.mxu0
    %v846 = vadd.f32 0.0, %v845
    %847 = vmatmul.bf16.gmra.mxu0 %v811
    %v848 = vpop.f32.mrf.mxu0
    %v849 = vadd.f32 0.0, %v848
    %v850 = vpop.f32.mrf.mxu0
    %v851 = vadd.f32 0.0, %v850
    %852 = vmatmul.bf16.gmra.mxu0 %v814
    %v853 = vpop.f32.mrf.mxu0
    %v854 = vadd.f32 0.0, %v853
    %v855 = vpop.f32.mrf.mxu0
    %v856 = vadd.f32 0.0, %v855
    %857 = vmatmul.bf16.gmra.mxu0 %v817
    %v858 = vpop.f32.mrf.mxu0
    %v859 = vadd.f32 0.0, %v858
    %v860 = vpop.f32.mrf.mxu0
    %v861 = vadd.f32 0.0, %v860
    %862 = vmatmul.bf16.gmra.mxu0 %v820
    %v863 = vpop.f32.mrf.mxu0
    %v864 = vadd.f32 0.0, %v863
    %v865 = vpop.f32.mrf.mxu0
    %v866 = vadd.f32 0.0, %v865
    %867 = vmatmul.bf16.gmra.mxu0 %v823
    %v868 = vpop.f32.mrf.mxu0
    %v869 = vadd.f32 0.0, %v868
    %v870 = vpop.f32.mrf.mxu0
    %v871 = vadd.f32 0.0, %v870
    %872 = vmatmul.bf16.gmra.mxu0 %v826
    %v873 = vpop.f32.mrf.mxu0
    %v874 = vadd.f32 0.0, %v873
    %v875 = vpop.f32.mrf.mxu0
    %v876 = vadd.f32 0.0, %v875
    %877 = vmatmul.bf16.gmra.mxu0 %v829
    %v878 = vpop.f32.mrf.mxu0
    %v879 = vadd.f32 0.0, %v878
    %v880 = vpop.f32.mrf.mxu0
    %881 = vdwg.mxu0
    %v882 = vpack.c.bf16 %v846, %v844
    %v883 = vpack.c.bf16 %v851, %v849
    %v884 = vpack.c.bf16 %v856, %v854
    %v885 = vpack.c.bf16 %v861, %v859
    %v886 = vpack.c.bf16 %v866, %v864
    %v887 = vpack.c.bf16 %v871, %v869
    %v888 = vpack.c.bf16 %v876, %v874
    %v889 = vpack.c.bf16 %v879, %v879
    %v890 = vld [vmem:[%s15] sm:$0xf]
    %v891 = vld [vmem:[%s15 + $0x4] sm:$0xf]
    %v892 = vld [vmem:[%s15 + $0x8] sm:$0xf]
    %v893 = vld [vmem:[%s15 + $0xc] sm:$0xf]
    %v894 = vld [vmem:[%s15 + $0x10] sm:$0xf]
    %v895 = vld [vmem:[%s15 + $0x14] sm:$0xf]
    %v896 = vld [vmem:[%s15 + $0x18] sm:$0xf]
    %v897 = vld [vmem:[%s15 + $0x1c] sm:$0xf]
    %v898 = vld [vmem:[%s15 + $0x20] sm:$0xf]
    %v899 = vld [vmem:[%s15 + $0x24] sm:$0xf]
    %v900 = vld [vmem:[%s15 + $0x28] sm:$0xf]
    %v901 = vld [vmem:[%s15 + $0x2c] sm:$0xf]
    %v902 = vld [vmem:[%s15 + $0x30] sm:$0xf]
    %v903 = vld [vmem:[%s15 + $0x34] sm:$0xf]
    %v904 = vld [vmem:[%s15 + $0x38] sm:$0xf]
    %v905 = vld [vmem:[%s15 + $0x3c] sm:$0xf]
    %v906 = vld [vmem:[%s17] sm:$0x1]
    %v908 = vperm.slane %v906, 0
    %v926 = vunpack.c.l.b16 %v890
    %v927 = vunpack.c.l.b16 %v891
    %v928 = vunpack.c.l.b16 %v892
    %v929 = vunpack.c.l.b16 %v893
    %v930 = vunpack.c.l.b16 %v894
    %v931 = vunpack.c.l.b16 %v895
    %v932 = vunpack.c.l.b16 %v896
    %v933 = vunpack.c.l.b16 %v897
    %v934 = vunpack.c.l.b16 %v898
    %v935 = vunpack.c.l.b16 %v899
    %v936 = vunpack.c.l.b16 %v900
    %v937 = vunpack.c.l.b16 %v901
    %v938 = vunpack.c.l.b16 %v902
    %v939 = vunpack.c.l.b16 %v903
    %v940 = vunpack.c.l.b16 %v904
    %v941 = vunpack.c.l.b16 %v905
    %v942 = vpack.c.b16 %v927, %v926
    %v943 = vpack.c.b16 %v929, %v928
    %v944 = vpack.c.b16 %v931, %v930
    %v945 = vpack.c.b16 %v933, %v932
    %v946 = vpack.c.b16 %v935, %v934
    %v947 = vpack.c.b16 %v937, %v936
    %v948 = vpack.c.b16 %v939, %v938
    %v949 = vpack.c.b16 %v941, %v940
    %958 = vmatpush.bf16.msra.mxu0 %v949
    %959 = vmatpush.bf16.msra.mxu0 %v948
    %960 = vmatpush.bf16.msra.mxu0 %v947
    %961 = vmatpush.bf16.msra.mxu0 %v946
    %962 = vmatpush.bf16.msra.mxu0 %v945
    %963 = vmatpush.bf16.msra.mxu0 %v944
    %964 = vmatpush.bf16.msra.mxu0 %v943
    %965 = vmatpush.bf16.msra.mxu0 %v942
    %966 = vmatmul.bf16.gmra.mxu0 %v882
    %v967 = vpop.f32.mrf.mxu0
    %v968 = vadd.f32 %v908, %v967
    %v969 = vpop.f32.mrf.mxu0
    %v970 = vadd.f32 %v908, %v969
    %971 = vmatmul.bf16.gmra.mxu0 %v883
    %v972 = vpop.f32.mrf.mxu0
    %v973 = vadd.f32 %v908, %v972
    %v974 = vpop.f32.mrf.mxu0
    %v975 = vadd.f32 %v908, %v974
    %976 = vmatmul.bf16.gmra.mxu0 %v884
    %v977 = vpop.f32.mrf.mxu0
    %v978 = vadd.f32 %v908, %v977
    %v979 = vpop.f32.mrf.mxu0
    %v980 = vadd.f32 %v908, %v979
    %981 = vmatmul.bf16.gmra.mxu0 %v885
    %v982 = vpop.f32.mrf.mxu0
    %v983 = vadd.f32 %v908, %v982
    %v984 = vpop.f32.mrf.mxu0
    %v985 = vadd.f32 %v908, %v984
    %986 = vmatmul.bf16.gmra.mxu0 %v886
    %v987 = vpop.f32.mrf.mxu0
    %v988 = vadd.f32 %v908, %v987
    %v989 = vpop.f32.mrf.mxu0
    %v990 = vadd.f32 %v908, %v989
    %991 = vmatmul.bf16.gmra.mxu0 %v887
    %v992 = vpop.f32.mrf.mxu0
    %v993 = vadd.f32 %v908, %v992
    %v994 = vpop.f32.mrf.mxu0
    %v995 = vadd.f32 %v908, %v994
    %996 = vmatmul.bf16.gmra.mxu0 %v888
    %v997 = vpop.f32.mrf.mxu0
    %v998 = vadd.f32 %v908, %v997
    %v999 = vpop.f32.mrf.mxu0
    %v1000 = vadd.f32 %v908, %v999
    %1001 = vmatmul.bf16.gmra.mxu0 %v889
    %v1002 = vpop.f32.mrf.mxu0
    %v1003 = vadd.f32 %v908, %v1002
    %v1004 = vpop.f32.mrf.mxu0
    %1005 = vdwg.mxu0
    %vm1006 = vcmp.gt.f32.partialorder %v968, 0.0
    %vm1007 = vcmp.gt.f32.partialorder %v970, 0.0
    %vm1008 = vcmp.gt.f32.partialorder %v973, 0.0
    %vm1009 = vcmp.gt.f32.partialorder %v975, 0.0
    %vm1010 = vcmp.gt.f32.partialorder %v978, 0.0
    %vm1011 = vcmp.gt.f32.partialorder %v980, 0.0
    %vm1012 = vcmp.gt.f32.partialorder %v983, 0.0
    %vm1013 = vcmp.gt.f32.partialorder %v985, 0.0
    %vm1014 = vcmp.gt.f32.partialorder %v988, 0.0
    %vm1015 = vcmp.gt.f32.partialorder %v990, 0.0
    %vm1016 = vcmp.gt.f32.partialorder %v993, 0.0
    %vm1017 = vcmp.gt.f32.partialorder %v995, 0.0
    %vm1018 = vcmp.gt.f32.partialorder %v998, 0.0
    %vm1019 = vcmp.gt.f32.partialorder %v1000, 0.0
    %vm1020 = vcmp.gt.f32.partialorder %v1003, 0.0
    %v1021 = vmul.f32 %v968, 1.442695
    %v1022 = vpow.pop %v1021
    %v1023 = vmul.f32 %v970, 1.442695
    %v1024 = vpow.pop %v1023
    %v1025 = vmul.f32 %v973, 1.442695
    %v1026 = vpow.pop %v1025
    %v1027 = vmul.f32 %v975, 1.442695
    %v1028 = vpow.pop %v1027
    %v1029 = vmul.f32 %v978, 1.442695
    %v1030 = vpow.pop %v1029
    %v1031 = vmul.f32 %v980, 1.442695
    %v1032 = vpow.pop %v1031
    %v1033 = vmul.f32 %v983, 1.442695
    %v1034 = vpow.pop %v1033
    %v1035 = vmul.f32 %v985, 1.442695
    %v1036 = vpow.pop %v1035
    %v1037 = vmul.f32 %v988, 1.442695
    %v1038 = vpow.pop %v1037
    %v1039 = vmul.f32 %v990, 1.442695
    %v1040 = vpow.pop %v1039
    %v1041 = vmul.f32 %v993, 1.442695
    %v1042 = vpow.pop %v1041
    %v1043 = vmul.f32 %v995, 1.442695
    %v1044 = vpow.pop %v1043
    %v1045 = vmul.f32 %v998, 1.442695
    %v1046 = vpow.pop %v1045
    %v1047 = vmul.f32 %v1000, 1.442695
    %v1048 = vpow.pop %v1047
    %v1049 = vmul.f32 %v1003, 1.442695
    %v1050 = vpow.pop %v1049
    %v1051 = vsub.f32 %v1022, 1.0
    %v1052 = vsub.f32 %v1024, 1.0
    %v1053 = vsub.f32 %v1026, 1.0
    %v1054 = vsub.f32 %v1028, 1.0
    %v1055 = vsub.f32 %v1030, 1.0
    %v1056 = vsub.f32 %v1032, 1.0
    %v1057 = vsub.f32 %v1034, 1.0
    %v1058 = vsub.f32 %v1036, 1.0
    %v1059 = vsub.f32 %v1038, 1.0
    %v1060 = vsub.f32 %v1040, 1.0
    %v1061 = vsub.f32 %v1042, 1.0
    %v1062 = vsub.f32 %v1044, 1.0
    %v1063 = vsub.f32 %v1046, 1.0
    %v1064 = vsub.f32 %v1048, 1.0
    %v1065 = vsub.f32 %v1050, 1.0
    %v1066 = vsel %vm1006, %v968, %v1051
    %v1067 = vsel %vm1007, %v970, %v1052
    %v1068 = vsel %vm1008, %v973, %v1053
    %v1069 = vsel %vm1009, %v975, %v1054
    %v1070 = vsel %vm1010, %v978, %v1055
    %v1071 = vsel %vm1011, %v980, %v1056
    %v1072 = vsel %vm1012, %v983, %v1057
    %v1073 = vsel %vm1013, %v985, %v1058
    %v1074 = vsel %vm1014, %v988, %v1059
    %v1075 = vsel %vm1015, %v990, %v1060
    %v1076 = vsel %vm1016, %v993, %v1061
    %v1077 = vsel %vm1017, %v995, %v1062
    %v1078 = vsel %vm1018, %v998, %v1063
    %v1079 = vsel %vm1019, %v1000, %v1064
    %v1080 = vsel %vm1020, %v1003, %v1065
    %1081 = vst.msk [vmem:[#allocation2] sm:$0xff] %vm598, %v1066
    %1082 = vst.msk [vmem:[#allocation2 + $0x8] sm:$0xff] %vm598, %v1067
    %1083 = vst.msk [vmem:[#allocation2 + $0x10] sm:$0xff] %vm598, %v1068
    %1084 = vst.msk [vmem:[#allocation2 + $0x18] sm:$0xff] %vm598, %v1069
    %1085 = vst.msk [vmem:[#allocation2 + $0x20] sm:$0xff] %vm598, %v1070
    %1086 = vst.msk [vmem:[#allocation2 + $0x28] sm:$0xff] %vm598, %v1071
    %1087 = vst.msk [vmem:[#allocation2 + $0x30] sm:$0xff] %vm598, %v1072
    %1088 = vst.msk [vmem:[#allocation2 + $0x38] sm:$0xff] %vm598, %v1073
    %1089 = vst.msk [vmem:[#allocation2 + $0x40] sm:$0xff] %vm598, %v1074
    %1090 = vst.msk [vmem:[#allocation2 + $0x48] sm:$0xff] %vm598, %v1075
    %1091 = vst.msk [vmem:[#allocation2 + $0x50] sm:$0xff] %vm598, %v1076
    %1092 = vst.msk [vmem:[#allocation2 + $0x58] sm:$0xff] %vm598, %v1077
    %1093 = vst.msk [vmem:[#allocation2 + $0x60] sm:$0xff] %vm598, %v1078
    %1094 = vst.msk [vmem:[#allocation2 + $0x68] sm:$0xff] %vm598, %v1079
    %1095 = vst.msk [vmem:[#allocation2 + $0x70] sm:$0xff] %vm598, %v1080
    %v1096 = vld [vmem:[#allocation2] sm:$0x3]
    %v1097 = vpack.c.bf16 %v1096, %v1096
    %v1098 = vld [vmem:[%s19] sm:$0xf]
    %v1099 = vld [vmem:[%s19 + $0x4] sm:$0xf]
    %v1100 = vld [vmem:[%s19 + $0x8] sm:$0xf]
    %v1101 = vld [vmem:[%s19 + $0xc] sm:$0xf]
    %v1102 = vld [vmem:[%s19 + $0x10] sm:$0xf]
    %v1103 = vld [vmem:[%s19 + $0x14] sm:$0xf]
    %v1104 = vld [vmem:[%s19 + $0x18] sm:$0xf]
    %v1105 = vld [vmem:[%s19 + $0x1c] sm:$0xf]
    %v1106 = vld [vmem:[#allocation2 + $0x2] sm:$0x3]
    %v1107 = vpack.c.bf16 %v1106, %v1106
    %v1108 = vld [vmem:[%s19 + $0x20] sm:$0xf]
    %v1109 = vld [vmem:[%s19 + $0x24] sm:$0xf]
    %v1110 = vld [vmem:[%s19 + $0x28] sm:$0xf]
    %v1111 = vld [vmem:[%s19 + $0x2c] sm:$0xf]
    %v1112 = vld [vmem:[%s19 + $0x30] sm:$0xf]
    %v1113 = vld [vmem:[%s19 + $0x34] sm:$0xf]
    %v1114 = vld [vmem:[%s19 + $0x38] sm:$0xf]
    %v1115 = vld [vmem:[%s19 + $0x3c] sm:$0xf]
    %v1124 = vunpack.c.l.b16 %v1108
    %v1125 = vunpack.c.l.b16 %v1109
    %v1126 = vunpack.c.l.b16 %v1110
    %v1127 = vunpack.c.l.b16 %v1111
    %v1128 = vunpack.c.l.b16 %v1112
    %v1129 = vunpack.c.l.b16 %v1113
    %v1130 = vunpack.c.l.b16 %v1114
    %v1131 = vunpack.c.l.b16 %v1115
    %v1132 = vpack.c.b16 %v1125, %v1124
    %v1133 = vpack.c.b16 %v1127, %v1126
    %v1134 = vpack.c.b16 %v1129, %v1128
    %v1135 = vpack.c.b16 %v1131, %v1130
    %v1141 = vsel %vm598, %v1107, 0
    %1143 = vmatpush.bf16.msra.mxu0 0
    %1144 = vmatpush.bf16.msra.mxu0 0
    %1145 = vmatpush.bf16.msra.mxu0 0
    %1146 = vmatpush.bf16.msra.mxu0 0
    %1147 = vmatpush.bf16.msra.mxu0 %v1135
    %1148 = vmatpush.bf16.msra.mxu0 %v1134
    %1149 = vmatpush.bf16.msra.mxu0 %v1133
    %1150 = vmatpush.bf16.msra.mxu0 %v1132
    %1151 = vmatmul.bf16.gmra.mxu0 %v1141
    %v1152 = vpop.f32.mrf.mxu0
    %v1153 = vadd.f32 0.0, %v1152
    %v1154 = vpop.f32.mrf.mxu0
    %1155 = vdwg.mxu0
    %v1164 = vunpack.c.l.b16 %v1098
    %v1165 = vunpack.c.l.b16 %v1099
    %v1166 = vunpack.c.l.b16 %v1100
    %v1167 = vunpack.c.l.b16 %v1101
    %v1168 = vunpack.c.l.b16 %v1102
    %v1169 = vunpack.c.l.b16 %v1103
    %v1170 = vunpack.c.l.b16 %v1104
    %v1171 = vunpack.c.l.b16 %v1105
    %v1172 = vpack.c.b16 %v1165, %v1164
    %v1173 = vpack.c.b16 %v1167, %v1166
    %v1174 = vpack.c.b16 %v1169, %v1168
    %v1175 = vpack.c.b16 %v1171, %v1170
    %v1181 = vsel %vm598, %v1097, 0
    %1183 = vmatpush.bf16.msra.mxu0 0
    %1184 = vmatpush.bf16.msra.mxu0 0
    %1185 = vmatpush.bf16.msra.mxu0 0
    %1186 = vmatpush.bf16.msra.mxu0 0
    %1187 = vmatpush.bf16.msra.mxu0 %v1175
    %1188 = vmatpush.bf16.msra.mxu0 %v1174
    %1189 = vmatpush.bf16.msra.mxu0 %v1173
    %1190 = vmatpush.bf16.msra.mxu0 %v1172
    %1191 = vmatmul.bf16.gmra.mxu0 %v1181
    %v1192 = vpop.f32.mrf.mxu0
    %v1193 = vadd.f32 %v1153, %v1192
    %v1194 = vpop.f32.mrf.mxu0
    %1195 = vdwg.mxu0
    %v1196 = vld [vmem:[#allocation2 + $0x4] sm:$0x3]
    %v1197 = vpack.c.bf16 %v1196, %v1196
    %v1198 = vld [vmem:[%s19 + $0x40] sm:$0xf]
    %v1199 = vld [vmem:[%s19 + $0x44] sm:$0xf]
    %v1200 = vld [vmem:[%s19 + $0x48] sm:$0xf]
    %v1201 = vld [vmem:[%s19 + $0x4c] sm:$0xf]
    %v1202 = vld [vmem:[%s19 + $0x50] sm:$0xf]
    %v1203 = vld [vmem:[%s19 + $0x54] sm:$0xf]
    %v1204 = vld [vmem:[%s19 + $0x58] sm:$0xf]
    %v1205 = vld [vmem:[%s19 + $0x5c] sm:$0xf]
    %v1214 = vunpack.c.l.b16 %v1198
    %v1215 = vunpack.c.l.b16 %v1199
    %v1216 = vunpack.c.l.b16 %v1200
    %v1217 = vunpack.c.l.b16 %v1201
    %v1218 = vunpack.c.l.b16 %v1202
    %v1219 = vunpack.c.l.b16 %v1203
    %v1220 = vunpack.c.l.b16 %v1204
    %v1221 = vunpack.c.l.b16 %v1205
    %v1222 = vpack.c.b16 %v1215, %v1214
    %v1223 = vpack.c.b16 %v1217, %v1216
    %v1224 = vpack.c.b16 %v1219, %v1218
    %v1225 = vpack.c.b16 %v1221, %v1220
    %v1231 = vsel %vm598, %v1197, 0
    %1233 = vmatpush.bf16.msra.mxu0 0
    %1234 = vmatpush.bf16.msra.mxu0 0
    %1235 = vmatpush.bf16.msra.mxu0 0
    %1236 = vmatpush.bf16.msra.mxu0 0
    %1237 = vmatpush.bf16.msra.mxu0 %v1225
    %1238 = vmatpush.bf16.msra.mxu0 %v1224
    %1239 = vmatpush.bf16.msra.mxu0 %v1223
    %1240 = vmatpush.bf16.msra.mxu0 %v1222
    %1241 = vmatmul.bf16.gmra.mxu0 %v1231
    %v1242 = vpop.f32.mrf.mxu0
    %v1243 = vadd.f32 0.0, %v1242
    %v1244 = vpop.f32.mrf.mxu0
    %1245 = vdwg.mxu0
    %v1246 = vadd.f32 %v1193, %v1243
    %v1247 = vld [vmem:[#allocation2 + $0x6] sm:$0x3]
    %v1248 = vpack.c.bf16 %v1247, %v1247
    %v1249 = vld [vmem:[%s19 + $0x60] sm:$0xf]
    %v1250 = vld [vmem:[%s19 + $0x64] sm:$0xf]
    %v1251 = vld [vmem:[%s19 + $0x68] sm:$0xf]
    %v1252 = vld [vmem:[%s19 + $0x6c] sm:$0xf]
    %v1253 = vld [vmem:[%s19 + $0x70] sm:$0xf]
    %v1254 = vld [vmem:[%s19 + $0x74] sm:$0xf]
    %v1255 = vld [vmem:[%s19 + $0x78] sm:$0xf]
    %v1256 = vld [vmem:[%s19 + $0x7c] sm:$0xf]
    %v1265 = vunpack.c.l.b16 %v1249
    %v1266 = vunpack.c.l.b16 %v1250
    %v1267 = vunpack.c.l.b16 %v1251
    %v1268 = vunpack.c.l.b16 %v1252
    %v1269 = vunpack.c.l.b16 %v1253
    %v1270 = vunpack.c.l.b16 %v1254
    %v1271 = vunpack.c.l.b16 %v1255
    %v1272 = vunpack.c.l.b16 %v1256
    %v1273 = vpack.c.b16 %v1266, %v1265
    %v1274 = vpack.c.b16 %v1268, %v1267
    %v1275 = vpack.c.b16 %v1270, %v1269
    %v1276 = vpack.c.b16 %v1272, %v1271
    %v1282 = vsel %vm598, %v1248, 0
    %1284 = vmatpush.bf16.msra.mxu0 0
    %1285 = vmatpush.bf16.msra.mxu0 0
    %1286 = vmatpush.bf16.msra.mxu0 0
    %1287 = vmatpush.bf16.msra.mxu0 0
    %1288 = vmatpush.bf16.msra.mxu0 %v1276
    %1289 = vmatpush.bf16.msra.mxu0 %v1275
    %1290 = vmatpush.bf16.msra.mxu0 %v1274
    %1291 = vmatpush.bf16.msra.mxu0 %v1273
    %1292 = vmatmul.bf16.gmra.mxu0 %v1282
    %v1293 = vpop.f32.mrf.mxu0
    %v1294 = vadd.f32 0.0, %v1293
    %v1295 = vpop.f32.mrf.mxu0
    %1296 = vdwg.mxu0
    %v1297 = vadd.f32 %v1246, %v1294
    %v1298 = vld [vmem:[#allocation2 + $0x8] sm:$0x3]
    %v1299 = vpack.c.bf16 %v1298, %v1298
    %v1300 = vld [vmem:[%s19 + $0x80] sm:$0xf]
    %v1301 = vld [vmem:[%s19 + $0x84] sm:$0xf]
    %v1302 = vld [vmem:[%s19 + $0x88] sm:$0xf]
    %v1303 = vld [vmem:[%s19 + $0x8c] sm:$0xf]
    %v1304 = vld [vmem:[%s19 + $0x90] sm:$0xf]
    %v1305 = vld [vmem:[%s19 + $0x94] sm:$0xf]
    %v1306 = vld [vmem:[%s19 + $0x98] sm:$0xf]
    %v1307 = vld [vmem:[%s19 + $0x9c] sm:$0xf]
    %v1316 = vunpack.c.l.b16 %v1300
    %v1317 = vunpack.c.l.b16 %v1301
    %v1318 = vunpack.c.l.b16 %v1302
    %v1319 = vunpack.c.l.b16 %v1303
    %v1320 = vunpack.c.l.b16 %v1304
    %v1321 = vunpack.c.l.b16 %v1305
    %v1322 = vunpack.c.l.b16 %v1306
    %v1323 = vunpack.c.l.b16 %v1307
    %v1324 = vpack.c.b16 %v1317, %v1316
    %v1325 = vpack.c.b16 %v1319, %v1318
    %v1326 = vpack.c.b16 %v1321, %v1320
    %v1327 = vpack.c.b16 %v1323, %v1322
    %v1333 = vsel %vm598, %v1299, 0
    %1335 = vmatpush.bf16.msra.mxu0 0
    %1336 = vmatpush.bf16.msra.mxu0 0
    %1337 = vmatpush.bf16.msra.mxu0 0
    %1338 = vmatpush.bf16.msra.mxu0 0
    %1339 = vmatpush.bf16.msra.mxu0 %v1327
    %1340 = vmatpush.bf16.msra.mxu0 %v1326
    %1341 = vmatpush.bf16.msra.mxu0 %v1325
    %1342 = vmatpush.bf16.msra.mxu0 %v1324
    %1343 = vmatmul.bf16.gmra.mxu0 %v1333
    %v1344 = vpop.f32.mrf.mxu0
    %v1345 = vadd.f32 0.0, %v1344
    %v1346 = vpop.f32.mrf.mxu0
    %1347 = vdwg.mxu0
    %v1348 = vadd.f32 %v1297, %v1345
    %v1349 = vld [vmem:[#allocation2 + $0xa] sm:$0x3]
    %v1350 = vpack.c.bf16 %v1349, %v1349
    %v1351 = vld [vmem:[%s19 + $0xa0] sm:$0xf]
    %v1352 = vld [vmem:[%s19 + $0xa4] sm:$0xf]
    %v1353 = vld [vmem:[%s19 + $0xa8] sm:$0xf]
    %v1354 = vld [vmem:[%s19 + $0xac] sm:$0xf]
    %v1355 = vld [vmem:[%s19 + $0xb0] sm:$0xf]
    %v1356 = vld [vmem:[%s19 + $0xb4] sm:$0xf]
    %v1357 = vld [vmem:[%s19 + $0xb8] sm:$0xf]
    %v1358 = vld [vmem:[%s19 + $0xbc] sm:$0xf]
    %v1367 = vunpack.c.l.b16 %v1351
    %v1368 = vunpack.c.l.b16 %v1352
    %v1369 = vunpack.c.l.b16 %v1353
    %v1370 = vunpack.c.l.b16 %v1354
    %v1371 = vunpack.c.l.b16 %v1355
    %v1372 = vunpack.c.l.b16 %v1356
    %v1373 = vunpack.c.l.b16 %v1357
    %v1374 = vunpack.c.l.b16 %v1358
    %v1375 = vpack.c.b16 %v1368, %v1367
    %v1376 = vpack.c.b16 %v1370, %v1369
    %v1377 = vpack.c.b16 %v1372, %v1371
    %v1378 = vpack.c.b16 %v1374, %v1373
    %v1384 = vsel %vm598, %v1350, 0
    %1386 = vmatpush.bf16.msra.mxu0 0
    %1387 = vmatpush.bf16.msra.mxu0 0
    %1388 = vmatpush.bf16.msra.mxu0 0
    %1389 = vmatpush.bf16.msra.mxu0 0
    %1390 = vmatpush.bf16.msra.mxu0 %v1378
    %1391 = vmatpush.bf16.msra.mxu0 %v1377
    %1392 = vmatpush.bf16.msra.mxu0 %v1376
    %1393 = vmatpush.bf16.msra.mxu0 %v1375
    %1394 = vmatmul.bf16.gmra.mxu0 %v1384
    %v1395 = vpop.f32.mrf.mxu0
    %v1396 = vadd.f32 0.0, %v1395
    %v1397 = vpop.f32.mrf.mxu0
    %1398 = vdwg.mxu0
    %v1399 = vadd.f32 %v1348, %v1396
    %v1400 = vld [vmem:[#allocation2 + $0xc] sm:$0x3]
    %v1401 = vpack.c.bf16 %v1400, %v1400
    %v1402 = vld [vmem:[%s19 + $0xc0] sm:$0xf]
    %v1403 = vld [vmem:[%s19 + $0xc4] sm:$0xf]
    %v1404 = vld [vmem:[%s19 + $0xc8] sm:$0xf]
    %v1405 = vld [vmem:[%s19 + $0xcc] sm:$0xf]
    %v1406 = vld [vmem:[%s19 + $0xd0] sm:$0xf]
    %v1407 = vld [vmem:[%s19 + $0xd4] sm:$0xf]
    %v1408 = vld [vmem:[%s19 + $0xd8] sm:$0xf]
    %v1409 = vld [vmem:[%s19 + $0xdc] sm:$0xf]
    %v1418 = vunpack.c.l.b16 %v1402
    %v1419 = vunpack.c.l.b16 %v1403
    %v1420 = vunpack.c.l.b16 %v1404
    %v1421 = vunpack.c.l.b16 %v1405
    %v1422 = vunpack.c.l.b16 %v1406
    %v1423 = vunpack.c.l.b16 %v1407
    %v1424 = vunpack.c.l.b16 %v1408
    %v1425 = vunpack.c.l.b16 %v1409
    %v1426 = vpack.c.b16 %v1419, %v1418
    %v1427 = vpack.c.b16 %v1421, %v1420
    %v1428 = vpack.c.b16 %v1423, %v1422
    %v1429 = vpack.c.b16 %v1425, %v1424
    %v1435 = vsel %vm598, %v1401, 0
    %1437 = vmatpush.bf16.msra.mxu0 0
    %1438 = vmatpush.bf16.msra.mxu0 0
    %1439 = vmatpush.bf16.msra.mxu0 0
    %1440 = vmatpush.bf16.msra.mxu0 0
    %1441 = vmatpush.bf16.msra.mxu0 %v1429
    %1442 = vmatpush.bf16.msra.mxu0 %v1428
    %1443 = vmatpush.bf16.msra.mxu0 %v1427
    %1444 = vmatpush.bf16.msra.mxu0 %v1426
    %1445 = vmatmul.bf16.gmra.mxu0 %v1435
    %v1446 = vpop.f32.mrf.mxu0
    %v1447 = vadd.f32 0.0, %v1446
    %v1448 = vpop.f32.mrf.mxu0
    %1449 = vdwg.mxu0
    %v1450 = vadd.f32 %v1399, %v1447
    %v1451 = vld [vmem:[#allocation2 + $0xe] sm:$0x3]
    %v1452 = vpack.c.bf16 %v1451, %v1451
    %v1453 = vld [vmem:[%s19 + $0xe0] sm:$0xf]
    %v1454 = vld [vmem:[%s19 + $0xe4] sm:$0xf]
    %v1455 = vld [vmem:[%s19 + $0xe8] sm:$0xf]
    %v1456 = vld [vmem:[%s19 + $0xec] sm:$0xf]
    %v1457 = vld [vmem:[%s19 + $0xf0] sm:$0xf]
    %v1458 = vld [vmem:[%s19 + $0xf4] sm:$0xf]
    %v1459 = vld [vmem:[%s19 + $0xf8] sm:$0xf]
    %v1460 = vld [vmem:[%s19 + $0xfc] sm:$0xf]
    %v1469 = vunpack.c.l.b16 %v1453
    %v1470 = vunpack.c.l.b16 %v1454
    %v1471 = vunpack.c.l.b16 %v1455
    %v1472 = vunpack.c.l.b16 %v1456
    %v1473 = vunpack.c.l.b16 %v1457
    %v1474 = vunpack.c.l.b16 %v1458
    %v1475 = vunpack.c.l.b16 %v1459
    %v1476 = vunpack.c.l.b16 %v1460
    %v1477 = vpack.c.b16 %v1470, %v1469
    %v1478 = vpack.c.b16 %v1472, %v1471
    %v1479 = vpack.c.b16 %v1474, %v1473
    %v1480 = vpack.c.b16 %v1476, %v1475
    %v1486 = vsel %vm598, %v1452, 0
    %1488 = vmatpush.bf16.msra.mxu0 0
    %1489 = vmatpush.bf16.msra.mxu0 0
    %1490 = vmatpush.bf16.msra.mxu0 0
    %1491 = vmatpush.bf16.msra.mxu0 0
    %1492 = vmatpush.bf16.msra.mxu0 %v1480
    %1493 = vmatpush.bf16.msra.mxu0 %v1479
    %1494 = vmatpush.bf16.msra.mxu0 %v1478
    %1495 = vmatpush.bf16.msra.mxu0 %v1477
    %1496 = vmatmul.bf16.gmra.mxu0 %v1486
    %v1497 = vpop.f32.mrf.mxu0
    %v1498 = vadd.f32 0.0, %v1497
    %v1499 = vpop.f32.mrf.mxu0
    %1500 = vdwg.mxu0
    %v1501 = vadd.f32 %v1450, %v1498
    %v1502 = vld [vmem:[#allocation2 + $0x10] sm:$0x3]
    %v1503 = vpack.c.bf16 %v1502, %v1502
    %v1504 = vld [vmem:[%s19 + $0x100] sm:$0xf]
    %v1505 = vld [vmem:[%s19 + $0x104] sm:$0xf]
    %v1506 = vld [vmem:[%s19 + $0x108] sm:$0xf]
    %v1507 = vld [vmem:[%s19 + $0x10c] sm:$0xf]
    %v1508 = vld [vmem:[%s19 + $0x110] sm:$0xf]
    %v1509 = vld [vmem:[%s19 + $0x114] sm:$0xf]
    %v1510 = vld [vmem:[%s19 + $0x118] sm:$0xf]
    %v1511 = vld [vmem:[%s19 + $0x11c] sm:$0xf]
    %v1520 = vunpack.c.l.b16 %v1504
    %v1521 = vunpack.c.l.b16 %v1505
    %v1522 = vunpack.c.l.b16 %v1506
    %v1523 = vunpack.c.l.b16 %v1507
    %v1524 = vunpack.c.l.b16 %v1508
    %v1525 = vunpack.c.l.b16 %v1509
    %v1526 = vunpack.c.l.b16 %v1510
    %v1527 = vunpack.c.l.b16 %v1511
    %v1528 = vpack.c.b16 %v1521, %v1520
    %v1529 = vpack.c.b16 %v1523, %v1522
    %v1530 = vpack.c.b16 %v1525, %v1524
    %v1531 = vpack.c.b16 %v1527, %v1526
    %v1537 = vsel %vm598, %v1503, 0
    %1539 = vmatpush.bf16.msra.mxu0 0
    %1540 = vmatpush.bf16.msra.mxu0 0
    %1541 = vmatpush.bf16.msra.mxu0 0
    %1542 = vmatpush.bf16.msra.mxu0 0
    %1543 = vmatpush.bf16.msra.mxu0 %v1531
    %1544 = vmatpush.bf16.msra.mxu0 %v1530
    %1545 = vmatpush.bf16.msra.mxu0 %v1529
    %1546 = vmatpush.bf16.msra.mxu0 %v1528
    %1547 = vmatmul.bf16.gmra.mxu0 %v1537
    %v1548 = vpop.f32.mrf.mxu0
    %v1549 = vadd.f32 0.0, %v1548
    %v1550 = vpop.f32.mrf.mxu0
    %1551 = vdwg.mxu0
    %v1552 = vadd.f32 %v1501, %v1549
    %v1553 = vld [vmem:[#allocation2 + $0x12] sm:$0x3]
    %v1554 = vpack.c.bf16 %v1553, %v1553
    %v1555 = vld [vmem:[%s19 + $0x120] sm:$0xf]
    %v1556 = vld [vmem:[%s19 + $0x124] sm:$0xf]
    %v1557 = vld [vmem:[%s19 + $0x128] sm:$0xf]
    %v1558 = vld [vmem:[%s19 + $0x12c] sm:$0xf]
    %v1559 = vld [vmem:[%s19 + $0x130] sm:$0xf]
    %v1560 = vld [vmem:[%s19 + $0x134] sm:$0xf]
    %v1561 = vld [vmem:[%s19 + $0x138] sm:$0xf]
    %v1562 = vld [vmem:[%s19 + $0x13c] sm:$0xf]
    %v1571 = vunpack.c.l.b16 %v1555
    %v1572 = vunpack.c.l.b16 %v1556
    %v1573 = vunpack.c.l.b16 %v1557
    %v1574 = vunpack.c.l.b16 %v1558
    %v1575 = vunpack.c.l.b16 %v1559
    %v1576 = vunpack.c.l.b16 %v1560
    %v1577 = vunpack.c.l.b16 %v1561
    %v1578 = vunpack.c.l.b16 %v1562
    %v1579 = vpack.c.b16 %v1572, %v1571
    %v1580 = vpack.c.b16 %v1574, %v1573
    %v1581 = vpack.c.b16 %v1576, %v1575
    %v1582 = vpack.c.b16 %v1578, %v1577
    %v1588 = vsel %vm598, %v1554, 0
    %1590 = vmatpush.bf16.msra.mxu0 0
    %1591 = vmatpush.bf16.msra.mxu0 0
    %1592 = vmatpush.bf16.msra.mxu0 0
    %1593 = vmatpush.bf16.msra.mxu0 0
    %1594 = vmatpush.bf16.msra.mxu0 %v1582
    %1595 = vmatpush.bf16.msra.mxu0 %v1581
    %1596 = vmatpush.bf16.msra.mxu0 %v1580
    %1597 = vmatpush.bf16.msra.mxu0 %v1579
    %1598 = vmatmul.bf16.gmra.mxu0 %v1588
    %v1599 = vpop.f32.mrf.mxu0
    %v1600 = vadd.f32 0.0, %v1599
    %v1601 = vpop.f32.mrf.mxu0
    %1602 = vdwg.mxu0
    %v1603 = vadd.f32 %v1552, %v1600
    %v1604 = vld [vmem:[#allocation2 + $0x14] sm:$0x3]
    %v1605 = vpack.c.bf16 %v1604, %v1604
    %v1606 = vld [vmem:[%s19 + $0x140] sm:$0xf]
    %v1607 = vld [vmem:[%s19 + $0x144] sm:$0xf]
    %v1608 = vld [vmem:[%s19 + $0x148] sm:$0xf]
    %v1609 = vld [vmem:[%s19 + $0x14c] sm:$0xf]
    %v1610 = vld [vmem:[%s19 + $0x150] sm:$0xf]
    %v1611 = vld [vmem:[%s19 + $0x154] sm:$0xf]
    %v1612 = vld [vmem:[%s19 + $0x158] sm:$0xf]
    %v1613 = vld [vmem:[%s19 + $0x15c] sm:$0xf]
    %v1622 = vunpack.c.l.b16 %v1606
    %v1623 = vunpack.c.l.b16 %v1607
    %v1624 = vunpack.c.l.b16 %v1608
    %v1625 = vunpack.c.l.b16 %v1609
    %v1626 = vunpack.c.l.b16 %v1610
    %v1627 = vunpack.c.l.b16 %v1611
    %v1628 = vunpack.c.l.b16 %v1612
    %v1629 = vunpack.c.l.b16 %v1613
    %v1630 = vpack.c.b16 %v1623, %v1622
    %v1631 = vpack.c.b16 %v1625, %v1624
    %v1632 = vpack.c.b16 %v1627, %v1626
    %v1633 = vpack.c.b16 %v1629, %v1628
    %v1639 = vsel %vm598, %v1605, 0
    %1641 = vmatpush.bf16.msra.mxu0 0
    %1642 = vmatpush.bf16.msra.mxu0 0
    %1643 = vmatpush.bf16.msra.mxu0 0
    %1644 = vmatpush.bf16.msra.mxu0 0
    %1645 = vmatpush.bf16.msra.mxu0 %v1633
    %1646 = vmatpush.bf16.msra.mxu0 %v1632
    %1647 = vmatpush.bf16.msra.mxu0 %v1631
    %1648 = vmatpush.bf16.msra.mxu0 %v1630
    %1649 = vmatmul.bf16.gmra.mxu0 %v1639
    %v1650 = vpop.f32.mrf.mxu0
    %v1651 = vadd.f32 0.0, %v1650
    %v1652 = vpop.f32.mrf.mxu0
    %1653 = vdwg.mxu0
    %v1654 = vadd.f32 %v1603, %v1651
    %v1655 = vld [vmem:[#allocation2 + $0x16] sm:$0x3]
    %v1656 = vpack.c.bf16 %v1655, %v1655
    %v1657 = vld [vmem:[%s19 + $0x160] sm:$0xf]
    %v1658 = vld [vmem:[%s19 + $0x164] sm:$0xf]
    %v1659 = vld [vmem:[%s19 + $0x168] sm:$0xf]
    %v1660 = vld [vmem:[%s19 + $0x16c] sm:$0xf]
    %v1661 = vld [vmem:[%s19 + $0x170] sm:$0xf]
    %v1662 = vld [vmem:[%s19 + $0x174] sm:$0xf]
    %v1663 = vld [vmem:[%s19 + $0x178] sm:$0xf]
    %v1664 = vld [vmem:[%s19 + $0x17c] sm:$0xf]
    %v1673 = vunpack.c.l.b16 %v1657
    %v1674 = vunpack.c.l.b16 %v1658
    %v1675 = vunpack.c.l.b16 %v1659
    %v1676 = vunpack.c.l.b16 %v1660
    %v1677 = vunpack.c.l.b16 %v1661
    %v1678 = vunpack.c.l.b16 %v1662
    %v1679 = vunpack.c.l.b16 %v1663
    %v1680 = vunpack.c.l.b16 %v1664
    %v1681 = vpack.c.b16 %v1674, %v1673
    %v1682 = vpack.c.b16 %v1676, %v1675
    %v1683 = vpack.c.b16 %v1678, %v1677
    %v1684 = vpack.c.b16 %v1680, %v1679
    %v1690 = vsel %vm598, %v1656, 0
    %1692 = vmatpush.bf16.msra.mxu0 0
    %1693 = vmatpush.bf16.msra.mxu0 0
    %1694 = vmatpush.bf16.msra.mxu0 0
    %1695 = vmatpush.bf16.msra.mxu0 0
    %1696 = vmatpush.bf16.msra.mxu0 %v1684
    %1697 = vmatpush.bf16.msra.mxu0 %v1683
    %1698 = vmatpush.bf16.msra.mxu0 %v1682
    %1699 = vmatpush.bf16.msra.mxu0 %v1681
    %1700 = vmatmul.bf16.gmra.mxu0 %v1690
    %v1701 = vpop.f32.mrf.mxu0
    %v1702 = vadd.f32 0.0, %v1701
    %v1703 = vpop.f32.mrf.mxu0
    %1704 = vdwg.mxu0
    %v1705 = vadd.f32 %v1654, %v1702
    %v1706 = vld [vmem:[#allocation2 + $0x18] sm:$0x3]
    %v1707 = vpack.c.bf16 %v1706, %v1706
    %v1708 = vld [vmem:[%s19 + $0x180] sm:$0xf]
    %v1709 = vld [vmem:[%s19 + $0x184] sm:$0xf]
    %v1710 = vld [vmem:[%s19 + $0x188] sm:$0xf]
    %v1711 = vld [vmem:[%s19 + $0x18c] sm:$0xf]
    %v1712 = vld [vmem:[%s19 + $0x190] sm:$0xf]
    %v1713 = vld [vmem:[%s19 + $0x194] sm:$0xf]
    %v1714 = vld [vmem:[%s19 + $0x198] sm:$0xf]
    %v1715 = vld [vmem:[%s19 + $0x19c] sm:$0xf]
    %v1724 = vunpack.c.l.b16 %v1708
    %v1725 = vunpack.c.l.b16 %v1709
    %v1726 = vunpack.c.l.b16 %v1710
    %v1727 = vunpack.c.l.b16 %v1711
    %v1728 = vunpack.c.l.b16 %v1712
    %v1729 = vunpack.c.l.b16 %v1713
    %v1730 = vunpack.c.l.b16 %v1714
    %v1731 = vunpack.c.l.b16 %v1715
    %v1732 = vpack.c.b16 %v1725, %v1724
    %v1733 = vpack.c.b16 %v1727, %v1726
    %v1734 = vpack.c.b16 %v1729, %v1728
    %v1735 = vpack.c.b16 %v1731, %v1730
    %v1741 = vsel %vm598, %v1707, 0
    %1743 = vmatpush.bf16.msra.mxu0 0
    %1744 = vmatpush.bf16.msra.mxu0 0
    %1745 = vmatpush.bf16.msra.mxu0 0
    %1746 = vmatpush.bf16.msra.mxu0 0
    %1747 = vmatpush.bf16.msra.mxu0 %v1735
    %1748 = vmatpush.bf16.msra.mxu0 %v1734
    %1749 = vmatpush.bf16.msra.mxu0 %v1733
    %1750 = vmatpush.bf16.msra.mxu0 %v1732
    %1751 = vmatmul.bf16.gmra.mxu0 %v1741
    %v1752 = vpop.f32.mrf.mxu0
    %v1753 = vadd.f32 0.0, %v1752
    %v1754 = vpop.f32.mrf.mxu0
    %1755 = vdwg.mxu0
    %v1756 = vadd.f32 %v1705, %v1753
    %v1757 = vld [vmem:[#allocation2 + $0x1a] sm:$0x3]
    %v1758 = vpack.c.bf16 %v1757, %v1757
    %v1759 = vld [vmem:[%s19 + $0x1a0] sm:$0xf]
    %v1760 = vld [vmem:[%s19 + $0x1a4] sm:$0xf]
    %v1761 = vld [vmem:[%s19 + $0x1a8] sm:$0xf]
    %v1762 = vld [vmem:[%s19 + $0x1ac] sm:$0xf]
    %v1763 = vld [vmem:[%s19 + $0x1b0] sm:$0xf]
    %v1764 = vld [vmem:[%s19 + $0x1b4] sm:$0xf]
    %v1765 = vld [vmem:[%s19 + $0x1b8] sm:$0xf]
    %v1766 = vld [vmem:[%s19 + $0x1bc] sm:$0xf]
    %v1775 = vunpack.c.l.b16 %v1759
    %v1776 = vunpack.c.l.b16 %v1760
    %v1777 = vunpack.c.l.b16 %v1761
    %v1778 = vunpack.c.l.b16 %v1762
    %v1779 = vunpack.c.l.b16 %v1763
    %v1780 = vunpack.c.l.b16 %v1764
    %v1781 = vunpack.c.l.b16 %v1765
    %v1782 = vunpack.c.l.b16 %v1766
    %v1783 = vpack.c.b16 %v1776, %v1775
    %v1784 = vpack.c.b16 %v1778, %v1777
    %v1785 = vpack.c.b16 %v1780, %v1779
    %v1786 = vpack.c.b16 %v1782, %v1781
    %v1792 = vsel %vm598, %v1758, 0
    %1794 = vmatpush.bf16.msra.mxu0 0
    %1795 = vmatpush.bf16.msra.mxu0 0
    %1796 = vmatpush.bf16.msra.mxu0 0
    %1797 = vmatpush.bf16.msra.mxu0 0
    %1798 = vmatpush.bf16.msra.mxu0 %v1786
    %1799 = vmatpush.bf16.msra.mxu0 %v1785
    %1800 = vmatpush.bf16.msra.mxu0 %v1784
    %1801 = vmatpush.bf16.msra.mxu0 %v1783
    %1802 = vmatmul.bf16.gmra.mxu0 %v1792
    %v1803 = vpop.f32.mrf.mxu0
    %v1804 = vadd.f32 0.0, %v1803
    %v1805 = vpop.f32.mrf.mxu0
    %1806 = vdwg.mxu0
    %v1807 = vadd.f32 %v1756, %v1804
    %v1808 = vld [vmem:[#allocation2 + $0x1c] sm:$0x3]
    %v1809 = vpack.c.bf16 %v1808, %v1808
    %v1810 = vld [vmem:[%s19 + $0x1c0] sm:$0xf]
    %v1811 = vld [vmem:[%s19 + $0x1c4] sm:$0xf]
    %v1812 = vld [vmem:[%s19 + $0x1c8] sm:$0xf]
    %v1813 = vld [vmem:[%s19 + $0x1cc] sm:$0xf]
    %v1814 = vld [vmem:[%s19 + $0x1d0] sm:$0xf]
    %v1815 = vld [vmem:[%s19 + $0x1d4] sm:$0xf]
    %v1816 = vld [vmem:[%s19 + $0x1d8] sm:$0xf]
    %v1817 = vld [vmem:[%s19 + $0x1dc] sm:$0xf]
    %v1826 = vunpack.c.l.b16 %v1810
    %v1827 = vunpack.c.l.b16 %v1811
    %v1828 = vunpack.c.l.b16 %v1812
    %v1829 = vunpack.c.l.b16 %v1813
    %v1830 = vunpack.c.l.b16 %v1814
    %v1831 = vunpack.c.l.b16 %v1815
    %v1832 = vunpack.c.l.b16 %v1816
    %v1833 = vunpack.c.l.b16 %v1817
    %v1834 = vpack.c.b16 %v1827, %v1826
    %v1835 = vpack.c.b16 %v1829, %v1828
    %v1836 = vpack.c.b16 %v1831, %v1830
    %v1837 = vpack.c.b16 %v1833, %v1832
    %v1843 = vsel %vm598, %v1809, 0
    %1845 = vmatpush.bf16.msra.mxu0 0
    %1846 = vmatpush.bf16.msra.mxu0 0
    %1847 = vmatpush.bf16.msra.mxu0 0
    %1848 = vmatpush.bf16.msra.mxu0 0
    %1849 = vmatpush.bf16.msra.mxu0 %v1837
    %1850 = vmatpush.bf16.msra.mxu0 %v1836
    %1851 = vmatpush.bf16.msra.mxu0 %v1835
    %1852 = vmatpush.bf16.msra.mxu0 %v1834
    %1853 = vmatmul.bf16.gmra.mxu0 %v1843
    %v1854 = vpop.f32.mrf.mxu0
    %v1855 = vadd.f32 0.0, %v1854
    %v1856 = vpop.f32.mrf.mxu0
    %1857 = vdwg.mxu0
    %v1858 = vadd.f32 %v1807, %v1855
    %v1859 = vld [vmem:[#allocation2 + $0x1e] sm:$0x3]
    %v1860 = vpack.c.bf16 %v1859, %v1859
    %v1861 = vld [vmem:[%s19 + $0x1e0] sm:$0xf]
    %v1862 = vld [vmem:[%s19 + $0x1e4] sm:$0xf]
    %v1863 = vld [vmem:[%s19 + $0x1e8] sm:$0xf]
    %v1864 = vld [vmem:[%s19 + $0x1ec] sm:$0xf]
    %v1865 = vld [vmem:[%s19 + $0x1f0] sm:$0xf]
    %v1866 = vld [vmem:[%s19 + $0x1f4] sm:$0xf]
    %v1867 = vld [vmem:[%s19 + $0x1f8] sm:$0xf]
    %v1868 = vld [vmem:[%s19 + $0x1fc] sm:$0xf]
    %v1877 = vunpack.c.l.b16 %v1861
    %v1878 = vunpack.c.l.b16 %v1862
    %v1879 = vunpack.c.l.b16 %v1863
    %v1880 = vunpack.c.l.b16 %v1864
    %v1881 = vunpack.c.l.b16 %v1865
    %v1882 = vunpack.c.l.b16 %v1866
    %v1883 = vunpack.c.l.b16 %v1867
    %v1884 = vunpack.c.l.b16 %v1868
    %v1885 = vpack.c.b16 %v1878, %v1877
    %v1886 = vpack.c.b16 %v1880, %v1879
    %v1887 = vpack.c.b16 %v1882, %v1881
    %v1888 = vpack.c.b16 %v1884, %v1883
    %v1894 = vsel %vm598, %v1860, 0
    %1896 = vmatpush.bf16.msra.mxu0 0
    %1897 = vmatpush.bf16.msra.mxu0 0
    %1898 = vmatpush.bf16.msra.mxu0 0
    %1899 = vmatpush.bf16.msra.mxu0 0
    %1900 = vmatpush.bf16.msra.mxu0 %v1888
    %1901 = vmatpush.bf16.msra.mxu0 %v1887
    %1902 = vmatpush.bf16.msra.mxu0 %v1886
    %1903 = vmatpush.bf16.msra.mxu0 %v1885
    %1904 = vmatmul.bf16.gmra.mxu0 %v1894
    %v1905 = vpop.f32.mrf.mxu0
    %v1906 = vadd.f32 0.0, %v1905
    %v1907 = vpop.f32.mrf.mxu0
    %1908 = vdwg.mxu0
    %v1909 = vadd.f32 %v1858, %v1906
    %v1910 = vld [vmem:[#allocation2 + $0x20] sm:$0x3]
    %v1911 = vpack.c.bf16 %v1910, %v1910
    %v1912 = vld [vmem:[%s19 + $0x200] sm:$0xf]
    %v1913 = vld [vmem:[%s19 + $0x204] sm:$0xf]
    %v1914 = vld [vmem:[%s19 + $0x208] sm:$0xf]
    %v1915 = vld [vmem:[%s19 + $0x20c] sm:$0xf]
    %v1916 = vld [vmem:[%s19 + $0x210] sm:$0xf]
    %v1917 = vld [vmem:[%s19 + $0x214] sm:$0xf]
    %v1918 = vld [vmem:[%s19 + $0x218] sm:$0xf]
    %v1919 = vld [vmem:[%s19 + $0x21c] sm:$0xf]
    %v1928 = vunpack.c.l.b16 %v1912
    %v1929 = vunpack.c.l.b16 %v1913
    %v1930 = vunpack.c.l.b16 %v1914
    %v1931 = vunpack.c.l.b16 %v1915
    %v1932 = vunpack.c.l.b16 %v1916
    %v1933 = vunpack.c.l.b16 %v1917
    %v1934 = vunpack.c.l.b16 %v1918
    %v1935 = vunpack.c.l.b16 %v1919
    %v1936 = vpack.c.b16 %v1929, %v1928
    %v1937 = vpack.c.b16 %v1931, %v1930
    %v1938 = vpack.c.b16 %v1933, %v1932
    %v1939 = vpack.c.b16 %v1935, %v1934
    %v1945 = vsel %vm598, %v1911, 0
    %1947 = vmatpush.bf16.msra.mxu0 0
    %1948 = vmatpush.bf16.msra.mxu0 0
    %1949 = vmatpush.bf16.msra.mxu0 0
    %1950 = vmatpush.bf16.msra.mxu0 0
    %1951 = vmatpush.bf16.msra.mxu0 %v1939
    %1952 = vmatpush.bf16.msra.mxu0 %v1938
    %1953 = vmatpush.bf16.msra.mxu0 %v1937
    %1954 = vmatpush.bf16.msra.mxu0 %v1936
    %1955 = vmatmul.bf16.gmra.mxu0 %v1945
    %v1956 = vpop.f32.mrf.mxu0
    %v1957 = vadd.f32 0.0, %v1956
    %v1958 = vpop.f32.mrf.mxu0
    %1959 = vdwg.mxu0
    %v1960 = vadd.f32 %v1909, %v1957
    %v1961 = vld [vmem:[#allocation2 + $0x22] sm:$0x3]
    %v1962 = vpack.c.bf16 %v1961, %v1961
    %v1963 = vld [vmem:[%s19 + $0x220] sm:$0xf]
    %v1964 = vld [vmem:[%s19 + $0x224] sm:$0xf]
    %v1965 = vld [vmem:[%s19 + $0x228] sm:$0xf]
    %v1966 = vld [vmem:[%s19 + $0x22c] sm:$0xf]
    %v1967 = vld [vmem:[%s19 + $0x230] sm:$0xf]
    %v1968 = vld [vmem:[%s19 + $0x234] sm:$0xf]
    %v1969 = vld [vmem:[%s19 + $0x238] sm:$0xf]
    %v1970 = vld [vmem:[%s19 + $0x23c] sm:$0xf]
    %v1979 = vunpack.c.l.b16 %v1963
    %v1980 = vunpack.c.l.b16 %v1964
    %v1981 = vunpack.c.l.b16 %v1965
    %v1982 = vunpack.c.l.b16 %v1966
    %v1983 = vunpack.c.l.b16 %v1967
    %v1984 = vunpack.c.l.b16 %v1968
    %v1985 = vunpack.c.l.b16 %v1969
    %v1986 = vunpack.c.l.b16 %v1970
    %v1987 = vpack.c.b16 %v1980, %v1979
    %v1988 = vpack.c.b16 %v1982, %v1981
    %v1989 = vpack.c.b16 %v1984, %v1983
    %v1990 = vpack.c.b16 %v1986, %v1985
    %v1996 = vsel %vm598, %v1962, 0
    %1998 = vmatpush.bf16.msra.mxu0 0
    %1999 = vmatpush.bf16.msra.mxu0 0
    %2000 = vmatpush.bf16.msra.mxu0 0
    %2001 = vmatpush.bf16.msra.mxu0 0
    %2002 = vmatpush.bf16.msra.mxu0 %v1990
    %2003 = vmatpush.bf16.msra.mxu0 %v1989
    %2004 = vmatpush.bf16.msra.mxu0 %v1988
    %2005 = vmatpush.bf16.msra.mxu0 %v1987
    %2006 = vmatmul.bf16.gmra.mxu0 %v1996
    %v2007 = vpop.f32.mrf.mxu0
    %v2008 = vadd.f32 0.0, %v2007
    %v2009 = vpop.f32.mrf.mxu0
    %2010 = vdwg.mxu0
    %v2011 = vadd.f32 %v1960, %v2008
    %v2012 = vld [vmem:[#allocation2 + $0x24] sm:$0x3]
    %v2013 = vpack.c.bf16 %v2012, %v2012
    %v2014 = vld [vmem:[%s19 + $0x240] sm:$0xf]
    %v2015 = vld [vmem:[%s19 + $0x244] sm:$0xf]
    %v2016 = vld [vmem:[%s19 + $0x248] sm:$0xf]
    %v2017 = vld [vmem:[%s19 + $0x24c] sm:$0xf]
    %v2018 = vld [vmem:[%s19 + $0x250] sm:$0xf]
    %v2019 = vld [vmem:[%s19 + $0x254] sm:$0xf]
    %v2020 = vld [vmem:[%s19 + $0x258] sm:$0xf]
    %v2021 = vld [vmem:[%s19 + $0x25c] sm:$0xf]
    %v2030 = vunpack.c.l.b16 %v2014
    %v2031 = vunpack.c.l.b16 %v2015
    %v2032 = vunpack.c.l.b16 %v2016
    %v2033 = vunpack.c.l.b16 %v2017
    %v2034 = vunpack.c.l.b16 %v2018
    %v2035 = vunpack.c.l.b16 %v2019
    %v2036 = vunpack.c.l.b16 %v2020
    %v2037 = vunpack.c.l.b16 %v2021
    %v2038 = vpack.c.b16 %v2031, %v2030
    %v2039 = vpack.c.b16 %v2033, %v2032
    %v2040 = vpack.c.b16 %v2035, %v2034
    %v2041 = vpack.c.b16 %v2037, %v2036
    %v2047 = vsel %vm598, %v2013, 0
    %2049 = vmatpush.bf16.msra.mxu0 0
    %2050 = vmatpush.bf16.msra.mxu0 0
    %2051 = vmatpush.bf16.msra.mxu0 0
    %2052 = vmatpush.bf16.msra.mxu0 0
    %2053 = vmatpush.bf16.msra.mxu0 %v2041
    %2054 = vmatpush.bf16.msra.mxu0 %v2040
    %2055 = vmatpush.bf16.msra.mxu0 %v2039
    %2056 = vmatpush.bf16.msra.mxu0 %v2038
    %2057 = vmatmul.bf16.gmra.mxu0 %v2047
    %v2058 = vpop.f32.mrf.mxu0
    %v2059 = vadd.f32 0.0, %v2058
    %v2060 = vpop.f32.mrf.mxu0
    %2061 = vdwg.mxu0
    %v2062 = vadd.f32 %v2011, %v2059
    %v2063 = vld [vmem:[#allocation2 + $0x26] sm:$0x3]
    %v2064 = vpack.c.bf16 %v2063, %v2063
    %v2065 = vld [vmem:[%s19 + $0x260] sm:$0xf]
    %v2066 = vld [vmem:[%s19 + $0x264] sm:$0xf]
    %v2067 = vld [vmem:[%s19 + $0x268] sm:$0xf]
    %v2068 = vld [vmem:[%s19 + $0x26c] sm:$0xf]
    %v2069 = vld [vmem:[%s19 + $0x270] sm:$0xf]
    %v2070 = vld [vmem:[%s19 + $0x274] sm:$0xf]
    %v2071 = vld [vmem:[%s19 + $0x278] sm:$0xf]
    %v2072 = vld [vmem:[%s19 + $0x27c] sm:$0xf]
    %v2081 = vunpack.c.l.b16 %v2065
    %v2082 = vunpack.c.l.b16 %v2066
    %v2083 = vunpack.c.l.b16 %v2067
    %v2084 = vunpack.c.l.b16 %v2068
    %v2085 = vunpack.c.l.b16 %v2069
    %v2086 = vunpack.c.l.b16 %v2070
    %v2087 = vunpack.c.l.b16 %v2071
    %v2088 = vunpack.c.l.b16 %v2072
    %v2089 = vpack.c.b16 %v2082, %v2081
    %v2090 = vpack.c.b16 %v2084, %v2083
    %v2091 = vpack.c.b16 %v2086, %v2085
    %v2092 = vpack.c.b16 %v2088, %v2087
    %v2098 = vsel %vm598, %v2064, 0
    %2100 = vmatpush.bf16.msra.mxu0 0
    %2101 = vmatpush.bf16.msra.mxu0 0
    %2102 = vmatpush.bf16.msra.mxu0 0
    %2103 = vmatpush.bf16.msra.mxu0 0
    %2104 = vmatpush.bf16.msra.mxu0 %v2092
    %2105 = vmatpush.bf16.msra.mxu0 %v2091
    %2106 = vmatpush.bf16.msra.mxu0 %v2090
    %2107 = vmatpush.bf16.msra.mxu0 %v2089
    %2108 = vmatmul.bf16.gmra.mxu0 %v2098
    %v2109 = vpop.f32.mrf.mxu0
    %v2110 = vadd.f32 0.0, %v2109
    %v2111 = vpop.f32.mrf.mxu0
    %2112 = vdwg.mxu0
    %v2113 = vadd.f32 %v2062, %v2110
    %v2114 = vld [vmem:[#allocation2 + $0x28] sm:$0x3]
    %v2115 = vpack.c.bf16 %v2114, %v2114
    %v2116 = vld [vmem:[%s19 + $0x280] sm:$0xf]
    %v2117 = vld [vmem:[%s19 + $0x284] sm:$0xf]
    %v2118 = vld [vmem:[%s19 + $0x288] sm:$0xf]
    %v2119 = vld [vmem:[%s19 + $0x28c] sm:$0xf]
    %v2120 = vld [vmem:[%s19 + $0x290] sm:$0xf]
    %v2121 = vld [vmem:[%s19 + $0x294] sm:$0xf]
    %v2122 = vld [vmem:[%s19 + $0x298] sm:$0xf]
    %v2123 = vld [vmem:[%s19 + $0x29c] sm:$0xf]
    %v2132 = vunpack.c.l.b16 %v2116
    %v2133 = vunpack.c.l.b16 %v2117
    %v2134 = vunpack.c.l.b16 %v2118
    %v2135 = vunpack.c.l.b16 %v2119
    %v2136 = vunpack.c.l.b16 %v2120
    %v2137 = vunpack.c.l.b16 %v2121
    %v2138 = vunpack.c.l.b16 %v2122
    %v2139 = vunpack.c.l.b16 %v2123
    %v2140 = vpack.c.b16 %v2133, %v2132
    %v2141 = vpack.c.b16 %v2135, %v2134
    %v2142 = vpack.c.b16 %v2137, %v2136
    %v2143 = vpack.c.b16 %v2139, %v2138
    %v2149 = vsel %vm598, %v2115, 0
    %2151 = vmatpush.bf16.msra.mxu0 0
    %2152 = vmatpush.bf16.msra.mxu0 0
    %2153 = vmatpush.bf16.msra.mxu0 0
    %2154 = vmatpush.bf16.msra.mxu0 0
    %2155 = vmatpush.bf16.msra.mxu0 %v2143
    %2156 = vmatpush.bf16.msra.mxu0 %v2142
    %2157 = vmatpush.bf16.msra.mxu0 %v2141
    %2158 = vmatpush.bf16.msra.mxu0 %v2140
    %2159 = vmatmul.bf16.gmra.mxu0 %v2149
    %v2160 = vpop.f32.mrf.mxu0
    %v2161 = vadd.f32 0.0, %v2160
    %v2162 = vpop.f32.mrf.mxu0
    %2163 = vdwg.mxu0
    %v2164 = vadd.f32 %v2113, %v2161
    %v2165 = vld [vmem:[#allocation2 + $0x2a] sm:$0x3]
    %v2166 = vpack.c.bf16 %v2165, %v2165
    %v2167 = vld [vmem:[%s19 + $0x2a0] sm:$0xf]
    %v2168 = vld [vmem:[%s19 + $0x2a4] sm:$0xf]
    %v2169 = vld [vmem:[%s19 + $0x2a8] sm:$0xf]
    %v2170 = vld [vmem:[%s19 + $0x2ac] sm:$0xf]
    %v2171 = vld [vmem:[%s19 + $0x2b0] sm:$0xf]
    %v2172 = vld [vmem:[%s19 + $0x2b4] sm:$0xf]
    %v2173 = vld [vmem:[%s19 + $0x2b8] sm:$0xf]
    %v2174 = vld [vmem:[%s19 + $0x2bc] sm:$0xf]
    %v2183 = vunpack.c.l.b16 %v2167
    %v2184 = vunpack.c.l.b16 %v2168
    %v2185 = vunpack.c.l.b16 %v2169
    %v2186 = vunpack.c.l.b16 %v2170
    %v2187 = vunpack.c.l.b16 %v2171
    %v2188 = vunpack.c.l.b16 %v2172
    %v2189 = vunpack.c.l.b16 %v2173
    %v2190 = vunpack.c.l.b16 %v2174
    %v2191 = vpack.c.b16 %v2184, %v2183
    %v2192 = vpack.c.b16 %v2186, %v2185
    %v2193 = vpack.c.b16 %v2188, %v2187
    %v2194 = vpack.c.b16 %v2190, %v2189
    %v2200 = vsel %vm598, %v2166, 0
    %2202 = vmatpush.bf16.msra.mxu0 0
    %2203 = vmatpush.bf16.msra.mxu0 0
    %2204 = vmatpush.bf16.msra.mxu0 0
    %2205 = vmatpush.bf16.msra.mxu0 0
    %2206 = vmatpush.bf16.msra.mxu0 %v2194
    %2207 = vmatpush.bf16.msra.mxu0 %v2193
    %2208 = vmatpush.bf16.msra.mxu0 %v2192
    %2209 = vmatpush.bf16.msra.mxu0 %v2191
    %2210 = vmatmul.bf16.gmra.mxu0 %v2200
    %v2211 = vpop.f32.mrf.mxu0
    %v2212 = vadd.f32 0.0, %v2211
    %v2213 = vpop.f32.mrf.mxu0
    %2214 = vdwg.mxu0
    %v2215 = vadd.f32 %v2164, %v2212
    %v2216 = vld [vmem:[#allocation2 + $0x2c] sm:$0x3]
    %v2217 = vpack.c.bf16 %v2216, %v2216
    %v2218 = vld [vmem:[%s19 + $0x2c0] sm:$0xf]
    %v2219 = vld [vmem:[%s19 + $0x2c4] sm:$0xf]
    %v2220 = vld [vmem:[%s19 + $0x2c8] sm:$0xf]
    %v2221 = vld [vmem:[%s19 + $0x2cc] sm:$0xf]
    %v2222 = vld [vmem:[%s19 + $0x2d0] sm:$0xf]
    %v2223 = vld [vmem:[%s19 + $0x2d4] sm:$0xf]
    %v2224 = vld [vmem:[%s19 + $0x2d8] sm:$0xf]
    %v2225 = vld [vmem:[%s19 + $0x2dc] sm:$0xf]
    %v2234 = vunpack.c.l.b16 %v2218
    %v2235 = vunpack.c.l.b16 %v2219
    %v2236 = vunpack.c.l.b16 %v2220
    %v2237 = vunpack.c.l.b16 %v2221
    %v2238 = vunpack.c.l.b16 %v2222
    %v2239 = vunpack.c.l.b16 %v2223
    %v2240 = vunpack.c.l.b16 %v2224
    %v2241 = vunpack.c.l.b16 %v2225
    %v2242 = vpack.c.b16 %v2235, %v2234
    %v2243 = vpack.c.b16 %v2237, %v2236
    %v2244 = vpack.c.b16 %v2239, %v2238
    %v2245 = vpack.c.b16 %v2241, %v2240
    %v2251 = vsel %vm598, %v2217, 0
    %2253 = vmatpush.bf16.msra.mxu0 0
    %2254 = vmatpush.bf16.msra.mxu0 0
    %2255 = vmatpush.bf16.msra.mxu0 0
    %2256 = vmatpush.bf16.msra.mxu0 0
    %2257 = vmatpush.bf16.msra.mxu0 %v2245
    %2258 = vmatpush.bf16.msra.mxu0 %v2244
    %2259 = vmatpush.bf16.msra.mxu0 %v2243
    %2260 = vmatpush.bf16.msra.mxu0 %v2242
    %2261 = vmatmul.bf16.gmra.mxu0 %v2251
    %v2262 = vpop.f32.mrf.mxu0
    %v2263 = vadd.f32 0.0, %v2262
    %v2264 = vpop.f32.mrf.mxu0
    %2265 = vdwg.mxu0
    %v2266 = vadd.f32 %v2215, %v2263
    %v2267 = vld [vmem:[#allocation2 + $0x2e] sm:$0x3]
    %v2268 = vpack.c.bf16 %v2267, %v2267
    %v2269 = vld [vmem:[%s19 + $0x2e0] sm:$0xf]
    %v2270 = vld [vmem:[%s19 + $0x2e4] sm:$0xf]
    %v2271 = vld [vmem:[%s19 + $0x2e8] sm:$0xf]
    %v2272 = vld [vmem:[%s19 + $0x2ec] sm:$0xf]
    %v2273 = vld [vmem:[%s19 + $0x2f0] sm:$0xf]
    %v2274 = vld [vmem:[%s19 + $0x2f4] sm:$0xf]
    %v2275 = vld [vmem:[%s19 + $0x2f8] sm:$0xf]
    %v2276 = vld [vmem:[%s19 + $0x2fc] sm:$0xf]
    %v2285 = vunpack.c.l.b16 %v2269
    %v2286 = vunpack.c.l.b16 %v2270
    %v2287 = vunpack.c.l.b16 %v2271
    %v2288 = vunpack.c.l.b16 %v2272
    %v2289 = vunpack.c.l.b16 %v2273
    %v2290 = vunpack.c.l.b16 %v2274
    %v2291 = vunpack.c.l.b16 %v2275
    %v2292 = vunpack.c.l.b16 %v2276
    %v2293 = vpack.c.b16 %v2286, %v2285
    %v2294 = vpack.c.b16 %v2288, %v2287
    %v2295 = vpack.c.b16 %v2290, %v2289
    %v2296 = vpack.c.b16 %v2292, %v2291
    %v2302 = vsel %vm598, %v2268, 0
    %2304 = vmatpush.bf16.msra.mxu0 0
    %2305 = vmatpush.bf16.msra.mxu0 0
    %2306 = vmatpush.bf16.msra.mxu0 0
    %2307 = vmatpush.bf16.msra.mxu0 0
    %2308 = vmatpush.bf16.msra.mxu0 %v2296
    %2309 = vmatpush.bf16.msra.mxu0 %v2295
    %2310 = vmatpush.bf16.msra.mxu0 %v2294
    %2311 = vmatpush.bf16.msra.mxu0 %v2293
    %2312 = vmatmul.bf16.gmra.mxu0 %v2302
    %v2313 = vpop.f32.mrf.mxu0
    %v2314 = vadd.f32 0.0, %v2313
    %v2315 = vpop.f32.mrf.mxu0
    %2316 = vdwg.mxu0
    %v2317 = vadd.f32 %v2266, %v2314
    %v2318 = vld [vmem:[#allocation2 + $0x30] sm:$0x3]
    %v2319 = vpack.c.bf16 %v2318, %v2318
    %v2320 = vld [vmem:[%s19 + $0x300] sm:$0xf]
    %v2321 = vld [vmem:[%s19 + $0x304] sm:$0xf]
    %v2322 = vld [vmem:[%s19 + $0x308] sm:$0xf]
    %v2323 = vld [vmem:[%s19 + $0x30c] sm:$0xf]
    %v2324 = vld [vmem:[%s19 + $0x310] sm:$0xf]
    %v2325 = vld [vmem:[%s19 + $0x314] sm:$0xf]
    %v2326 = vld [vmem:[%s19 + $0x318] sm:$0xf]
    %v2327 = vld [vmem:[%s19 + $0x31c] sm:$0xf]
    %v2336 = vunpack.c.l.b16 %v2320
    %v2337 = vunpack.c.l.b16 %v2321
    %v2338 = vunpack.c.l.b16 %v2322
    %v2339 = vunpack.c.l.b16 %v2323
    %v2340 = vunpack.c.l.b16 %v2324
    %v2341 = vunpack.c.l.b16 %v2325
    %v2342 = vunpack.c.l.b16 %v2326
    %v2343 = vunpack.c.l.b16 %v2327
    %v2344 = vpack.c.b16 %v2337, %v2336
    %v2345 = vpack.c.b16 %v2339, %v2338
    %v2346 = vpack.c.b16 %v2341, %v2340
    %v2347 = vpack.c.b16 %v2343, %v2342
    %v2353 = vsel %vm598, %v2319, 0
    %2355 = vmatpush.bf16.msra.mxu0 0
    %2356 = vmatpush.bf16.msra.mxu0 0
    %2357 = vmatpush.bf16.msra.mxu0 0
    %2358 = vmatpush.bf16.msra.mxu0 0
    %2359 = vmatpush.bf16.msra.mxu0 %v2347
    %2360 = vmatpush.bf16.msra.mxu0 %v2346
    %2361 = vmatpush.bf16.msra.mxu0 %v2345
    %2362 = vmatpush.bf16.msra.mxu0 %v2344
    %2363 = vmatmul.bf16.gmra.mxu0 %v2353
    %v2364 = vpop.f32.mrf.mxu0
    %v2365 = vadd.f32 0.0, %v2364
    %v2366 = vpop.f32.mrf.mxu0
    %2367 = vdwg.mxu0
    %v2368 = vadd.f32 %v2317, %v2365
    %v2369 = vld [vmem:[#allocation2 + $0x32] sm:$0x3]
    %v2370 = vpack.c.bf16 %v2369, %v2369
    %v2371 = vld [vmem:[%s19 + $0x320] sm:$0xf]
    %v2372 = vld [vmem:[%s19 + $0x324] sm:$0xf]
    %v2373 = vld [vmem:[%s19 + $0x328] sm:$0xf]
    %v2374 = vld [vmem:[%s19 + $0x32c] sm:$0xf]
    %v2375 = vld [vmem:[%s19 + $0x330] sm:$0xf]
    %v2376 = vld [vmem:[%s19 + $0x334] sm:$0xf]
    %v2377 = vld [vmem:[%s19 + $0x338] sm:$0xf]
    %v2378 = vld [vmem:[%s19 + $0x33c] sm:$0xf]
    %v2387 = vunpack.c.l.b16 %v2371
    %v2388 = vunpack.c.l.b16 %v2372
    %v2389 = vunpack.c.l.b16 %v2373
    %v2390 = vunpack.c.l.b16 %v2374
    %v2391 = vunpack.c.l.b16 %v2375
    %v2392 = vunpack.c.l.b16 %v2376
    %v2393 = vunpack.c.l.b16 %v2377
    %v2394 = vunpack.c.l.b16 %v2378
    %v2395 = vpack.c.b16 %v2388, %v2387
    %v2396 = vpack.c.b16 %v2390, %v2389
    %v2397 = vpack.c.b16 %v2392, %v2391
    %v2398 = vpack.c.b16 %v2394, %v2393
    %v2404 = vsel %vm598, %v2370, 0
    %2406 = vmatpush.bf16.msra.mxu0 0
    %2407 = vmatpush.bf16.msra.mxu0 0
    %2408 = vmatpush.bf16.msra.mxu0 0
    %2409 = vmatpush.bf16.msra.mxu0 0
    %2410 = vmatpush.bf16.msra.mxu0 %v2398
    %2411 = vmatpush.bf16.msra.mxu0 %v2397
    %2412 = vmatpush.bf16.msra.mxu0 %v2396
    %2413 = vmatpush.bf16.msra.mxu0 %v2395
    %2414 = vmatmul.bf16.gmra.mxu0 %v2404
    %v2415 = vpop.f32.mrf.mxu0
    %v2416 = vadd.f32 0.0, %v2415
    %v2417 = vpop.f32.mrf.mxu0
    %2418 = vdwg.mxu0
    %v2419 = vadd.f32 %v2368, %v2416
    %v2420 = vld [vmem:[#allocation2 + $0x34] sm:$0x3]
    %v2421 = vpack.c.bf16 %v2420, %v2420
    %v2422 = vld [vmem:[%s19 + $0x340] sm:$0xf]
    %v2423 = vld [vmem:[%s19 + $0x344] sm:$0xf]
    %v2424 = vld [vmem:[%s19 + $0x348] sm:$0xf]
    %v2425 = vld [vmem:[%s19 + $0x34c] sm:$0xf]
    %v2426 = vld [vmem:[%s19 + $0x350] sm:$0xf]
    %v2427 = vld [vmem:[%s19 + $0x354] sm:$0xf]
    %v2428 = vld [vmem:[%s19 + $0x358] sm:$0xf]
    %v2429 = vld [vmem:[%s19 + $0x35c] sm:$0xf]
    %v2438 = vunpack.c.l.b16 %v2422
    %v2439 = vunpack.c.l.b16 %v2423
    %v2440 = vunpack.c.l.b16 %v2424
    %v2441 = vunpack.c.l.b16 %v2425
    %v2442 = vunpack.c.l.b16 %v2426
    %v2443 = vunpack.c.l.b16 %v2427
    %v2444 = vunpack.c.l.b16 %v2428
    %v2445 = vunpack.c.l.b16 %v2429
    %v2446 = vpack.c.b16 %v2439, %v2438
    %v2447 = vpack.c.b16 %v2441, %v2440
    %v2448 = vpack.c.b16 %v2443, %v2442
    %v2449 = vpack.c.b16 %v2445, %v2444
    %v2455 = vsel %vm598, %v2421, 0
    %2457 = vmatpush.bf16.msra.mxu0 0
    %2458 = vmatpush.bf16.msra.mxu0 0
    %2459 = vmatpush.bf16.msra.mxu0 0
    %2460 = vmatpush.bf16.msra.mxu0 0
    %2461 = vmatpush.bf16.msra.mxu0 %v2449
    %2462 = vmatpush.bf16.msra.mxu0 %v2448
    %2463 = vmatpush.bf16.msra.mxu0 %v2447
    %2464 = vmatpush.bf16.msra.mxu0 %v2446
    %2465 = vmatmul.bf16.gmra.mxu0 %v2455
    %v2466 = vpop.f32.mrf.mxu0
    %v2467 = vadd.f32 0.0, %v2466
    %v2468 = vpop.f32.mrf.mxu0
    %2469 = vdwg.mxu0
    %v2470 = vadd.f32 %v2419, %v2467
    %v2471 = vld [vmem:[#allocation2 + $0x36] sm:$0x3]
    %v2472 = vpack.c.bf16 %v2471, %v2471
    %v2473 = vld [vmem:[%s19 + $0x360] sm:$0xf]
    %v2474 = vld [vmem:[%s19 + $0x364] sm:$0xf]
    %v2475 = vld [vmem:[%s19 + $0x368] sm:$0xf]
    %v2476 = vld [vmem:[%s19 + $0x36c] sm:$0xf]
    %v2477 = vld [vmem:[%s19 + $0x370] sm:$0xf]
    %v2478 = vld [vmem:[%s19 + $0x374] sm:$0xf]
    %v2479 = vld [vmem:[%s19 + $0x378] sm:$0xf]
    %v2480 = vld [vmem:[%s19 + $0x37c] sm:$0xf]
    %v2489 = vunpack.c.l.b16 %v2473
    %v2490 = vunpack.c.l.b16 %v2474
    %v2491 = vunpack.c.l.b16 %v2475
    %v2492 = vunpack.c.l.b16 %v2476
    %v2493 = vunpack.c.l.b16 %v2477
    %v2494 = vunpack.c.l.b16 %v2478
    %v2495 = vunpack.c.l.b16 %v2479
    %v2496 = vunpack.c.l.b16 %v2480
    %v2497 = vpack.c.b16 %v2490, %v2489
    %v2498 = vpack.c.b16 %v2492, %v2491
    %v2499 = vpack.c.b16 %v2494, %v2493
    %v2500 = vpack.c.b16 %v2496, %v2495
    %v2506 = vsel %vm598, %v2472, 0
    %2508 = vmatpush.bf16.msra.mxu0 0
    %2509 = vmatpush.bf16.msra.mxu0 0
    %2510 = vmatpush.bf16.msra.mxu0 0
    %2511 = vmatpush.bf16.msra.mxu0 0
    %2512 = vmatpush.bf16.msra.mxu0 %v2500
    %2513 = vmatpush.bf16.msra.mxu0 %v2499
    %2514 = vmatpush.bf16.msra.mxu0 %v2498
    %2515 = vmatpush.bf16.msra.mxu0 %v2497
    %2516 = vmatmul.bf16.gmra.mxu0 %v2506
    %v2517 = vpop.f32.mrf.mxu0
    %v2518 = vadd.f32 0.0, %v2517
    %v2519 = vpop.f32.mrf.mxu0
    %2520 = vdwg.mxu0
    %v2521 = vadd.f32 %v2470, %v2518
    %v2522 = vld [vmem:[#allocation2 + $0x38] sm:$0x3]
    %v2523 = vpack.c.bf16 %v2522, %v2522
    %v2524 = vld [vmem:[%s19 + $0x380] sm:$0xf]
    %v2525 = vld [vmem:[%s19 + $0x384] sm:$0xf]
    %v2526 = vld [vmem:[%s19 + $0x388] sm:$0xf]
    %v2527 = vld [vmem:[%s19 + $0x38c] sm:$0xf]
    %v2528 = vld [vmem:[%s19 + $0x390] sm:$0xf]
    %v2529 = vld [vmem:[%s19 + $0x394] sm:$0xf]
    %v2530 = vld [vmem:[%s19 + $0x398] sm:$0xf]
    %v2531 = vld [vmem:[%s19 + $0x39c] sm:$0xf]
    %v2540 = vunpack.c.l.b16 %v2524
    %v2541 = vunpack.c.l.b16 %v2525
    %v2542 = vunpack.c.l.b16 %v2526
    %v2543 = vunpack.c.l.b16 %v2527
    %v2544 = vunpack.c.l.b16 %v2528
    %v2545 = vunpack.c.l.b16 %v2529
    %v2546 = vunpack.c.l.b16 %v2530
    %v2547 = vunpack.c.l.b16 %v2531
    %v2548 = vpack.c.b16 %v2541, %v2540
    %v2549 = vpack.c.b16 %v2543, %v2542
    %v2550 = vpack.c.b16 %v2545, %v2544
    %v2551 = vpack.c.b16 %v2547, %v2546
    %v2557 = vsel %vm598, %v2523, 0
    %2559 = vmatpush.bf16.msra.mxu0 0
    %2560 = vmatpush.bf16.msra.mxu0 0
    %2561 = vmatpush.bf16.msra.mxu0 0
    %2562 = vmatpush.bf16.msra.mxu0 0
    %2563 = vmatpush.bf16.msra.mxu0 %v2551
    %2564 = vmatpush.bf16.msra.mxu0 %v2550
    %2565 = vmatpush.bf16.msra.mxu0 %v2549
    %2566 = vmatpush.bf16.msra.mxu0 %v2548
    %2567 = vmatmul.bf16.gmra.mxu0 %v2557
    %v2568 = vpop.f32.mrf.mxu0
    %v2569 = vadd.f32 0.0, %v2568
    %v2570 = vpop.f32.mrf.mxu0
    %2571 = vdwg.mxu0
    %v2572 = vadd.f32 %v2521, %v2569
    %v2573 = vld [vmem:[#allocation2 + $0x3a] sm:$0x3]
    %v2574 = vpack.c.bf16 %v2573, %v2573
    %v2575 = vld [vmem:[%s19 + $0x3a0] sm:$0xf]
    %v2576 = vld [vmem:[%s19 + $0x3a4] sm:$0xf]
    %v2577 = vld [vmem:[%s19 + $0x3a8] sm:$0xf]
    %v2578 = vld [vmem:[%s19 + $0x3ac] sm:$0xf]
    %v2579 = vld [vmem:[%s19 + $0x3b0] sm:$0xf]
    %v2580 = vld [vmem:[%s19 + $0x3b4] sm:$0xf]
    %v2581 = vld [vmem:[%s19 + $0x3b8] sm:$0xf]
    %v2582 = vld [vmem:[%s19 + $0x3bc] sm:$0xf]
    %v2591 = vunpack.c.l.b16 %v2575
    %v2592 = vunpack.c.l.b16 %v2576
    %v2593 = vunpack.c.l.b16 %v2577
    %v2594 = vunpack.c.l.b16 %v2578
    %v2595 = vunpack.c.l.b16 %v2579
    %v2596 = vunpack.c.l.b16 %v2580
    %v2597 = vunpack.c.l.b16 %v2581
    %v2598 = vunpack.c.l.b16 %v2582
    %v2599 = vpack.c.b16 %v2592, %v2591
    %v2600 = vpack.c.b16 %v2594, %v2593
    %v2601 = vpack.c.b16 %v2596, %v2595
    %v2602 = vpack.c.b16 %v2598, %v2597
    %v2608 = vsel %vm598, %v2574, 0
    %2610 = vmatpush.bf16.msra.mxu0 0
    %2611 = vmatpush.bf16.msra.mxu0 0
    %2612 = vmatpush.bf16.msra.mxu0 0
    %2613 = vmatpush.bf16.msra.mxu0 0
    %2614 = vmatpush.bf16.msra.mxu0 %v2602
    %2615 = vmatpush.bf16.msra.mxu0 %v2601
    %2616 = vmatpush.bf16.msra.mxu0 %v2600
    %2617 = vmatpush.bf16.msra.mxu0 %v2599
    %2618 = vmatmul.bf16.gmra.mxu0 %v2608
    %v2619 = vpop.f32.mrf.mxu0
    %v2620 = vadd.f32 0.0, %v2619
    %v2621 = vpop.f32.mrf.mxu0
    %2622 = vdwg.mxu0
    %v2623 = vadd.f32 %v2572, %v2620
    %v2624 = vld [vmem:[#allocation2 + $0x3c] sm:$0x3]
    %v2625 = vpack.c.bf16 %v2624, %v2624
    %v2626 = vld [vmem:[%s19 + $0x3c0] sm:$0xf]
    %v2627 = vld [vmem:[%s19 + $0x3c4] sm:$0xf]
    %v2628 = vld [vmem:[%s19 + $0x3c8] sm:$0xf]
    %v2629 = vld [vmem:[%s19 + $0x3cc] sm:$0xf]
    %v2630 = vld [vmem:[%s19 + $0x3d0] sm:$0xf]
    %v2631 = vld [vmem:[%s19 + $0x3d4] sm:$0xf]
    %v2632 = vld [vmem:[%s19 + $0x3d8] sm:$0xf]
    %v2633 = vld [vmem:[%s19 + $0x3dc] sm:$0xf]
    %v2642 = vunpack.c.l.b16 %v2626
    %v2643 = vunpack.c.l.b16 %v2627
    %v2644 = vunpack.c.l.b16 %v2628
    %v2645 = vunpack.c.l.b16 %v2629
    %v2646 = vunpack.c.l.b16 %v2630
    %v2647 = vunpack.c.l.b16 %v2631
    %v2648 = vunpack.c.l.b16 %v2632
    %v2649 = vunpack.c.l.b16 %v2633
    %v2650 = vpack.c.b16 %v2643, %v2642
    %v2651 = vpack.c.b16 %v2645, %v2644
    %v2652 = vpack.c.b16 %v2647, %v2646
    %v2653 = vpack.c.b16 %v2649, %v2648
    %v2659 = vsel %vm598, %v2625, 0
    %2661 = vmatpush.bf16.msra.mxu0 0
    %2662 = vmatpush.bf16.msra.mxu0 0
    %2663 = vmatpush.bf16.msra.mxu0 0
    %2664 = vmatpush.bf16.msra.mxu0 0
    %2665 = vmatpush.bf16.msra.mxu0 %v2653
    %2666 = vmatpush.bf16.msra.mxu0 %v2652
    %2667 = vmatpush.bf16.msra.mxu0 %v2651
    %2668 = vmatpush.bf16.msra.mxu0 %v2650
    %2669 = vmatmul.bf16.gmra.mxu0 %v2659
    %v2670 = vpop.f32.mrf.mxu0
    %v2671 = vadd.f32 0.0, %v2670
    %v2672 = vpop.f32.mrf.mxu0
    %2673 = vdwg.mxu0
    %v2674 = vadd.f32 %v2623, %v2671
    %v2675 = vld [vmem:[#allocation2 + $0x3e] sm:$0x3]
    %v2676 = vpack.c.bf16 %v2675, %v2675
    %v2677 = vld [vmem:[%s19 + $0x3e0] sm:$0xf]
    %v2678 = vld [vmem:[%s19 + $0x3e4] sm:$0xf]
    %v2679 = vld [vmem:[%s19 + $0x3e8] sm:$0xf]
    %v2680 = vld [vmem:[%s19 + $0x3ec] sm:$0xf]
    %v2681 = vld [vmem:[%s19 + $0x3f0] sm:$0xf]
    %v2682 = vld [vmem:[%s19 + $0x3f4] sm:$0xf]
    %v2683 = vld [vmem:[%s19 + $0x3f8] sm:$0xf]
    %v2684 = vld [vmem:[%s19 + $0x3fc] sm:$0xf]
    %v2693 = vunpack.c.l.b16 %v2677
    %v2694 = vunpack.c.l.b16 %v2678
    %v2695 = vunpack.c.l.b16 %v2679
    %v2696 = vunpack.c.l.b16 %v2680
    %v2697 = vunpack.c.l.b16 %v2681
    %v2698 = vunpack.c.l.b16 %v2682
    %v2699 = vunpack.c.l.b16 %v2683
    %v2700 = vunpack.c.l.b16 %v2684
    %v2701 = vpack.c.b16 %v2694, %v2693
    %v2702 = vpack.c.b16 %v2696, %v2695
    %v2703 = vpack.c.b16 %v2698, %v2697
    %v2704 = vpack.c.b16 %v2700, %v2699
    %v2710 = vsel %vm598, %v2676, 0
    %2712 = vmatpush.bf16.msra.mxu0 0
    %2713 = vmatpush.bf16.msra.mxu0 0
    %2714 = vmatpush.bf16.msra.mxu0 0
    %2715 = vmatpush.bf16.msra.mxu0 0
    %2716 = vmatpush.bf16.msra.mxu0 %v2704
    %2717 = vmatpush.bf16.msra.mxu0 %v2703
    %2718 = vmatpush.bf16.msra.mxu0 %v2702
    %2719 = vmatpush.bf16.msra.mxu0 %v2701
    %2720 = vmatmul.bf16.gmra.mxu0 %v2710
    %v2721 = vpop.f32.mrf.mxu0
    %v2722 = vadd.f32 0.0, %v2721
    %v2723 = vpop.f32.mrf.mxu0
    %2724 = vdwg.mxu0
    %v2725 = vadd.f32 %v2674, %v2722
    %v2726 = vld [vmem:[#allocation2 + $0x40] sm:$0x3]
    %v2727 = vpack.c.bf16 %v2726, %v2726
    %v2728 = vld [vmem:[%s19 + $0x400] sm:$0xf]
    %v2729 = vld [vmem:[%s19 + $0x404] sm:$0xf]
    %v2730 = vld [vmem:[%s19 + $0x408] sm:$0xf]
    %v2731 = vld [vmem:[%s19 + $0x40c] sm:$0xf]
    %v2732 = vld [vmem:[%s19 + $0x410] sm:$0xf]
    %v2733 = vld [vmem:[%s19 + $0x414] sm:$0xf]
    %v2734 = vld [vmem:[%s19 + $0x418] sm:$0xf]
    %v2735 = vld [vmem:[%s19 + $0x41c] sm:$0xf]
    %v2744 = vunpack.c.l.b16 %v2728
    %v2745 = vunpack.c.l.b16 %v2729
    %v2746 = vunpack.c.l.b16 %v2730
    %v2747 = vunpack.c.l.b16 %v2731
    %v2748 = vunpack.c.l.b16 %v2732
    %v2749 = vunpack.c.l.b16 %v2733
    %v2750 = vunpack.c.l.b16 %v2734
    %v2751 = vunpack.c.l.b16 %v2735
    %v2752 = vpack.c.b16 %v2745, %v2744
    %v2753 = vpack.c.b16 %v2747, %v2746
    %v2754 = vpack.c.b16 %v2749, %v2748
    %v2755 = vpack.c.b16 %v2751, %v2750
    %v2761 = vsel %vm598, %v2727, 0
    %2763 = vmatpush.bf16.msra.mxu0 0
    %2764 = vmatpush.bf16.msra.mxu0 0
    %2765 = vmatpush.bf16.msra.mxu0 0
    %2766 = vmatpush.bf16.msra.mxu0 0
    %2767 = vmatpush.bf16.msra.mxu0 %v2755
    %2768 = vmatpush.bf16.msra.mxu0 %v2754
    %2769 = vmatpush.bf16.msra.mxu0 %v2753
    %2770 = vmatpush.bf16.msra.mxu0 %v2752
    %2771 = vmatmul.bf16.gmra.mxu0 %v2761
    %v2772 = vpop.f32.mrf.mxu0
    %v2773 = vadd.f32 0.0, %v2772
    %v2774 = vpop.f32.mrf.mxu0
    %2775 = vdwg.mxu0
    %v2776 = vadd.f32 %v2725, %v2773
    %v2777 = vld [vmem:[#allocation2 + $0x42] sm:$0x3]
    %v2778 = vpack.c.bf16 %v2777, %v2777
    %v2779 = vld [vmem:[%s19 + $0x420] sm:$0xf]
    %v2780 = vld [vmem:[%s19 + $0x424] sm:$0xf]
    %v2781 = vld [vmem:[%s19 + $0x428] sm:$0xf]
    %v2782 = vld [vmem:[%s19 + $0x42c] sm:$0xf]
    %v2783 = vld [vmem:[%s19 + $0x430] sm:$0xf]
    %v2784 = vld [vmem:[%s19 + $0x434] sm:$0xf]
    %v2785 = vld [vmem:[%s19 + $0x438] sm:$0xf]
    %v2786 = vld [vmem:[%s19 + $0x43c] sm:$0xf]
    %v2795 = vunpack.c.l.b16 %v2779
    %v2796 = vunpack.c.l.b16 %v2780
    %v2797 = vunpack.c.l.b16 %v2781
    %v2798 = vunpack.c.l.b16 %v2782
    %v2799 = vunpack.c.l.b16 %v2783
    %v2800 = vunpack.c.l.b16 %v2784
    %v2801 = vunpack.c.l.b16 %v2785
    %v2802 = vunpack.c.l.b16 %v2786
    %v2803 = vpack.c.b16 %v2796, %v2795
    %v2804 = vpack.c.b16 %v2798, %v2797
    %v2805 = vpack.c.b16 %v2800, %v2799
    %v2806 = vpack.c.b16 %v2802, %v2801
    %v2812 = vsel %vm598, %v2778, 0
    %2814 = vmatpush.bf16.msra.mxu0 0
    %2815 = vmatpush.bf16.msra.mxu0 0
    %2816 = vmatpush.bf16.msra.mxu0 0
    %2817 = vmatpush.bf16.msra.mxu0 0
    %2818 = vmatpush.bf16.msra.mxu0 %v2806
    %2819 = vmatpush.bf16.msra.mxu0 %v2805
    %2820 = vmatpush.bf16.msra.mxu0 %v2804
    %2821 = vmatpush.bf16.msra.mxu0 %v2803
    %2822 = vmatmul.bf16.gmra.mxu0 %v2812
    %v2823 = vpop.f32.mrf.mxu0
    %v2824 = vadd.f32 0.0, %v2823
    %v2825 = vpop.f32.mrf.mxu0
    %2826 = vdwg.mxu0
    %v2827 = vadd.f32 %v2776, %v2824
    %v2828 = vld [vmem:[#allocation2 + $0x44] sm:$0x3]
    %v2829 = vpack.c.bf16 %v2828, %v2828
    %v2830 = vld [vmem:[%s19 + $0x440] sm:$0xf]
    %v2831 = vld [vmem:[%s19 + $0x444] sm:$0xf]
    %v2832 = vld [vmem:[%s19 + $0x448] sm:$0xf]
    %v2833 = vld [vmem:[%s19 + $0x44c] sm:$0xf]
    %v2834 = vld [vmem:[%s19 + $0x450] sm:$0xf]
    %v2835 = vld [vmem:[%s19 + $0x454] sm:$0xf]
    %v2836 = vld [vmem:[%s19 + $0x458] sm:$0xf]
    %v2837 = vld [vmem:[%s19 + $0x45c] sm:$0xf]
    %v2846 = vunpack.c.l.b16 %v2830
    %v2847 = vunpack.c.l.b16 %v2831
    %v2848 = vunpack.c.l.b16 %v2832
    %v2849 = vunpack.c.l.b16 %v2833
    %v2850 = vunpack.c.l.b16 %v2834
    %v2851 = vunpack.c.l.b16 %v2835
    %v2852 = vunpack.c.l.b16 %v2836
    %v2853 = vunpack.c.l.b16 %v2837
    %v2854 = vpack.c.b16 %v2847, %v2846
    %v2855 = vpack.c.b16 %v2849, %v2848
    %v2856 = vpack.c.b16 %v2851, %v2850
    %v2857 = vpack.c.b16 %v2853, %v2852
    %v2863 = vsel %vm598, %v2829, 0
    %2865 = vmatpush.bf16.msra.mxu0 0
    %2866 = vmatpush.bf16.msra.mxu0 0
    %2867 = vmatpush.bf16.msra.mxu0 0
    %2868 = vmatpush.bf16.msra.mxu0 0
    %2869 = vmatpush.bf16.msra.mxu0 %v2857
    %2870 = vmatpush.bf16.msra.mxu0 %v2856
    %2871 = vmatpush.bf16.msra.mxu0 %v2855
    %2872 = vmatpush.bf16.msra.mxu0 %v2854
    %2873 = vmatmul.bf16.gmra.mxu0 %v2863
    %v2874 = vpop.f32.mrf.mxu0
    %v2875 = vadd.f32 0.0, %v2874
    %v2876 = vpop.f32.mrf.mxu0
    %2877 = vdwg.mxu0
    %v2878 = vadd.f32 %v2827, %v2875
    %v2879 = vld [vmem:[#allocation2 + $0x46] sm:$0x3]
    %v2880 = vpack.c.bf16 %v2879, %v2879
    %v2881 = vld [vmem:[%s19 + $0x460] sm:$0xf]
    %v2882 = vld [vmem:[%s19 + $0x464] sm:$0xf]
    %v2883 = vld [vmem:[%s19 + $0x468] sm:$0xf]
    %v2884 = vld [vmem:[%s19 + $0x46c] sm:$0xf]
    %v2885 = vld [vmem:[%s19 + $0x470] sm:$0xf]
    %v2886 = vld [vmem:[%s19 + $0x474] sm:$0xf]
    %v2887 = vld [vmem:[%s19 + $0x478] sm:$0xf]
    %v2888 = vld [vmem:[%s19 + $0x47c] sm:$0xf]
    %v2897 = vunpack.c.l.b16 %v2881
    %v2898 = vunpack.c.l.b16 %v2882
    %v2899 = vunpack.c.l.b16 %v2883
    %v2900 = vunpack.c.l.b16 %v2884
    %v2901 = vunpack.c.l.b16 %v2885
    %v2902 = vunpack.c.l.b16 %v2886
    %v2903 = vunpack.c.l.b16 %v2887
    %v2904 = vunpack.c.l.b16 %v2888
    %v2905 = vpack.c.b16 %v2898, %v2897
    %v2906 = vpack.c.b16 %v2900, %v2899
    %v2907 = vpack.c.b16 %v2902, %v2901
    %v2908 = vpack.c.b16 %v2904, %v2903
    %v2914 = vsel %vm598, %v2880, 0
    %2916 = vmatpush.bf16.msra.mxu0 0
    %2917 = vmatpush.bf16.msra.mxu0 0
    %2918 = vmatpush.bf16.msra.mxu0 0
    %2919 = vmatpush.bf16.msra.mxu0 0
    %2920 = vmatpush.bf16.msra.mxu0 %v2908
    %2921 = vmatpush.bf16.msra.mxu0 %v2907
    %2922 = vmatpush.bf16.msra.mxu0 %v2906
    %2923 = vmatpush.bf16.msra.mxu0 %v2905
    %2924 = vmatmul.bf16.gmra.mxu0 %v2914
    %v2925 = vpop.f32.mrf.mxu0
    %v2926 = vadd.f32 0.0, %v2925
    %v2927 = vpop.f32.mrf.mxu0
    %2928 = vdwg.mxu0
    %v2929 = vadd.f32 %v2878, %v2926
    %v2930 = vld [vmem:[#allocation2 + $0x48] sm:$0x3]
    %v2931 = vpack.c.bf16 %v2930, %v2930
    %v2932 = vld [vmem:[%s19 + $0x480] sm:$0xf]
    %v2933 = vld [vmem:[%s19 + $0x484] sm:$0xf]
    %v2934 = vld [vmem:[%s19 + $0x488] sm:$0xf]
    %v2935 = vld [vmem:[%s19 + $0x48c] sm:$0xf]
    %v2936 = vld [vmem:[%s19 + $0x490] sm:$0xf]
    %v2937 = vld [vmem:[%s19 + $0x494] sm:$0xf]
    %v2938 = vld [vmem:[%s19 + $0x498] sm:$0xf]
    %v2939 = vld [vmem:[%s19 + $0x49c] sm:$0xf]
    %v2948 = vunpack.c.l.b16 %v2932
    %v2949 = vunpack.c.l.b16 %v2933
    %v2950 = vunpack.c.l.b16 %v2934
    %v2951 = vunpack.c.l.b16 %v2935
    %v2952 = vunpack.c.l.b16 %v2936
    %v2953 = vunpack.c.l.b16 %v2937
    %v2954 = vunpack.c.l.b16 %v2938
    %v2955 = vunpack.c.l.b16 %v2939
    %v2956 = vpack.c.b16 %v2949, %v2948
    %v2957 = vpack.c.b16 %v2951, %v2950
    %v2958 = vpack.c.b16 %v2953, %v2952
    %v2959 = vpack.c.b16 %v2955, %v2954
    %v2965 = vsel %vm598, %v2931, 0
    %2967 = vmatpush.bf16.msra.mxu0 0
    %2968 = vmatpush.bf16.msra.mxu0 0
    %2969 = vmatpush.bf16.msra.mxu0 0
    %2970 = vmatpush.bf16.msra.mxu0 0
    %2971 = vmatpush.bf16.msra.mxu0 %v2959
    %2972 = vmatpush.bf16.msra.mxu0 %v2958
    %2973 = vmatpush.bf16.msra.mxu0 %v2957
    %2974 = vmatpush.bf16.msra.mxu0 %v2956
    %2975 = vmatmul.bf16.gmra.mxu0 %v2965
    %v2976 = vpop.f32.mrf.mxu0
    %v2977 = vadd.f32 0.0, %v2976
    %v2978 = vpop.f32.mrf.mxu0
    %2979 = vdwg.mxu0
    %v2980 = vadd.f32 %v2929, %v2977
    %v2981 = vld [vmem:[#allocation2 + $0x4a] sm:$0x3]
    %v2982 = vpack.c.bf16 %v2981, %v2981
    %v2983 = vld [vmem:[%s19 + $0x4a0] sm:$0xf]
    %v2984 = vld [vmem:[%s19 + $0x4a4] sm:$0xf]
    %v2985 = vld [vmem:[%s19 + $0x4a8] sm:$0xf]
    %v2986 = vld [vmem:[%s19 + $0x4ac] sm:$0xf]
    %v2987 = vld [vmem:[%s19 + $0x4b0] sm:$0xf]
    %v2988 = vld [vmem:[%s19 + $0x4b4] sm:$0xf]
    %v2989 = vld [vmem:[%s19 + $0x4b8] sm:$0xf]
    %v2990 = vld [vmem:[%s19 + $0x4bc] sm:$0xf]
    %v2999 = vunpack.c.l.b16 %v2983
    %v3000 = vunpack.c.l.b16 %v2984
    %v3001 = vunpack.c.l.b16 %v2985
    %v3002 = vunpack.c.l.b16 %v2986
    %v3003 = vunpack.c.l.b16 %v2987
    %v3004 = vunpack.c.l.b16 %v2988
    %v3005 = vunpack.c.l.b16 %v2989
    %v3006 = vunpack.c.l.b16 %v2990
    %v3007 = vpack.c.b16 %v3000, %v2999
    %v3008 = vpack.c.b16 %v3002, %v3001
    %v3009 = vpack.c.b16 %v3004, %v3003
    %v3010 = vpack.c.b16 %v3006, %v3005
    %v3016 = vsel %vm598, %v2982, 0
    %3018 = vmatpush.bf16.msra.mxu0 0
    %3019 = vmatpush.bf16.msra.mxu0 0
    %3020 = vmatpush.bf16.msra.mxu0 0
    %3021 = vmatpush.bf16.msra.mxu0 0
    %3022 = vmatpush.bf16.msra.mxu0 %v3010
    %3023 = vmatpush.bf16.msra.mxu0 %v3009
    %3024 = vmatpush.bf16.msra.mxu0 %v3008
    %3025 = vmatpush.bf16.msra.mxu0 %v3007
    %3026 = vmatmul.bf16.gmra.mxu0 %v3016
    %v3027 = vpop.f32.mrf.mxu0
    %v3028 = vadd.f32 0.0, %v3027
    %v3029 = vpop.f32.mrf.mxu0
    %3030 = vdwg.mxu0
    %v3031 = vadd.f32 %v2980, %v3028
    %v3032 = vld [vmem:[#allocation2 + $0x4c] sm:$0x3]
    %v3033 = vpack.c.bf16 %v3032, %v3032
    %v3034 = vld [vmem:[%s19 + $0x4c0] sm:$0xf]
    %v3035 = vld [vmem:[%s19 + $0x4c4] sm:$0xf]
    %v3036 = vld [vmem:[%s19 + $0x4c8] sm:$0xf]
    %v3037 = vld [vmem:[%s19 + $0x4cc] sm:$0xf]
    %v3038 = vld [vmem:[%s19 + $0x4d0] sm:$0xf]
    %v3039 = vld [vmem:[%s19 + $0x4d4] sm:$0xf]
    %v3040 = vld [vmem:[%s19 + $0x4d8] sm:$0xf]
    %v3041 = vld [vmem:[%s19 + $0x4dc] sm:$0xf]
    %v3050 = vunpack.c.l.b16 %v3034
    %v3051 = vunpack.c.l.b16 %v3035
    %v3052 = vunpack.c.l.b16 %v3036
    %v3053 = vunpack.c.l.b16 %v3037
    %v3054 = vunpack.c.l.b16 %v3038
    %v3055 = vunpack.c.l.b16 %v3039
    %v3056 = vunpack.c.l.b16 %v3040
    %v3057 = vunpack.c.l.b16 %v3041
    %v3058 = vpack.c.b16 %v3051, %v3050
    %v3059 = vpack.c.b16 %v3053, %v3052
    %v3060 = vpack.c.b16 %v3055, %v3054
    %v3061 = vpack.c.b16 %v3057, %v3056
    %v3067 = vsel %vm598, %v3033, 0
    %3069 = vmatpush.bf16.msra.mxu0 0
    %3070 = vmatpush.bf16.msra.mxu0 0
    %3071 = vmatpush.bf16.msra.mxu0 0
    %3072 = vmatpush.bf16.msra.mxu0 0
    %3073 = vmatpush.bf16.msra.mxu0 %v3061
    %3074 = vmatpush.bf16.msra.mxu0 %v3060
    %3075 = vmatpush.bf16.msra.mxu0 %v3059
    %3076 = vmatpush.bf16.msra.mxu0 %v3058
    %3077 = vmatmul.bf16.gmra.mxu0 %v3067
    %v3078 = vpop.f32.mrf.mxu0
    %v3079 = vadd.f32 0.0, %v3078
    %v3080 = vpop.f32.mrf.mxu0
    %3081 = vdwg.mxu0
    %v3082 = vadd.f32 %v3031, %v3079
    %v3083 = vld [vmem:[#allocation2 + $0x4e] sm:$0x3]
    %v3084 = vpack.c.bf16 %v3083, %v3083
    %v3085 = vld [vmem:[%s19 + $0x4e0] sm:$0xf]
    %v3086 = vld [vmem:[%s19 + $0x4e4] sm:$0xf]
    %v3087 = vld [vmem:[%s19 + $0x4e8] sm:$0xf]
    %v3088 = vld [vmem:[%s19 + $0x4ec] sm:$0xf]
    %v3089 = vld [vmem:[%s19 + $0x4f0] sm:$0xf]
    %v3090 = vld [vmem:[%s19 + $0x4f4] sm:$0xf]
    %v3091 = vld [vmem:[%s19 + $0x4f8] sm:$0xf]
    %v3092 = vld [vmem:[%s19 + $0x4fc] sm:$0xf]
    %v3101 = vunpack.c.l.b16 %v3085
    %v3102 = vunpack.c.l.b16 %v3086
    %v3103 = vunpack.c.l.b16 %v3087
    %v3104 = vunpack.c.l.b16 %v3088
    %v3105 = vunpack.c.l.b16 %v3089
    %v3106 = vunpack.c.l.b16 %v3090
    %v3107 = vunpack.c.l.b16 %v3091
    %v3108 = vunpack.c.l.b16 %v3092
    %v3109 = vpack.c.b16 %v3102, %v3101
    %v3110 = vpack.c.b16 %v3104, %v3103
    %v3111 = vpack.c.b16 %v3106, %v3105
    %v3112 = vpack.c.b16 %v3108, %v3107
    %v3118 = vsel %vm598, %v3084, 0
    %3120 = vmatpush.bf16.msra.mxu0 0
    %3121 = vmatpush.bf16.msra.mxu0 0
    %3122 = vmatpush.bf16.msra.mxu0 0
    %3123 = vmatpush.bf16.msra.mxu0 0
    %3124 = vmatpush.bf16.msra.mxu0 %v3112
    %3125 = vmatpush.bf16.msra.mxu0 %v3111
    %3126 = vmatpush.bf16.msra.mxu0 %v3110
    %3127 = vmatpush.bf16.msra.mxu0 %v3109
    %3128 = vmatmul.bf16.gmra.mxu0 %v3118
    %v3129 = vpop.f32.mrf.mxu0
    %v3130 = vadd.f32 0.0, %v3129
    %v3131 = vpop.f32.mrf.mxu0
    %3132 = vdwg.mxu0
    %v3133 = vadd.f32 %v3082, %v3130
    %v3134 = vld [vmem:[#allocation2 + $0x50] sm:$0x3]
    %v3135 = vpack.c.bf16 %v3134, %v3134
    %v3136 = vld [vmem:[%s19 + $0x500] sm:$0xf]
    %v3137 = vld [vmem:[%s19 + $0x504] sm:$0xf]
    %v3138 = vld [vmem:[%s19 + $0x508] sm:$0xf]
    %v3139 = vld [vmem:[%s19 + $0x50c] sm:$0xf]
    %v3140 = vld [vmem:[%s19 + $0x510] sm:$0xf]
    %v3141 = vld [vmem:[%s19 + $0x514] sm:$0xf]
    %v3142 = vld [vmem:[%s19 + $0x518] sm:$0xf]
    %v3143 = vld [vmem:[%s19 + $0x51c] sm:$0xf]
    %v3152 = vunpack.c.l.b16 %v3136
    %v3153 = vunpack.c.l.b16 %v3137
    %v3154 = vunpack.c.l.b16 %v3138
    %v3155 = vunpack.c.l.b16 %v3139
    %v3156 = vunpack.c.l.b16 %v3140
    %v3157 = vunpack.c.l.b16 %v3141
    %v3158 = vunpack.c.l.b16 %v3142
    %v3159 = vunpack.c.l.b16 %v3143
    %v3160 = vpack.c.b16 %v3153, %v3152
    %v3161 = vpack.c.b16 %v3155, %v3154
    %v3162 = vpack.c.b16 %v3157, %v3156
    %v3163 = vpack.c.b16 %v3159, %v3158
    %v3169 = vsel %vm598, %v3135, 0
    %3171 = vmatpush.bf16.msra.mxu0 0
    %3172 = vmatpush.bf16.msra.mxu0 0
    %3173 = vmatpush.bf16.msra.mxu0 0
    %3174 = vmatpush.bf16.msra.mxu0 0
    %3175 = vmatpush.bf16.msra.mxu0 %v3163
    %3176 = vmatpush.bf16.msra.mxu0 %v3162
    %3177 = vmatpush.bf16.msra.mxu0 %v3161
    %3178 = vmatpush.bf16.msra.mxu0 %v3160
    %3179 = vmatmul.bf16.gmra.mxu0 %v3169
    %v3180 = vpop.f32.mrf.mxu0
    %v3181 = vadd.f32 0.0, %v3180
    %v3182 = vpop.f32.mrf.mxu0
    %3183 = vdwg.mxu0
    %v3184 = vadd.f32 %v3133, %v3181
    %v3185 = vld [vmem:[#allocation2 + $0x52] sm:$0x3]
    %v3186 = vpack.c.bf16 %v3185, %v3185
    %v3187 = vld [vmem:[%s19 + $0x520] sm:$0xf]
    %v3188 = vld [vmem:[%s19 + $0x524] sm:$0xf]
    %v3189 = vld [vmem:[%s19 + $0x528] sm:$0xf]
    %v3190 = vld [vmem:[%s19 + $0x52c] sm:$0xf]
    %v3191 = vld [vmem:[%s19 + $0x530] sm:$0xf]
    %v3192 = vld [vmem:[%s19 + $0x534] sm:$0xf]
    %v3193 = vld [vmem:[%s19 + $0x538] sm:$0xf]
    %v3194 = vld [vmem:[%s19 + $0x53c] sm:$0xf]
    %v3203 = vunpack.c.l.b16 %v3187
    %v3204 = vunpack.c.l.b16 %v3188
    %v3205 = vunpack.c.l.b16 %v3189
    %v3206 = vunpack.c.l.b16 %v3190
    %v3207 = vunpack.c.l.b16 %v3191
    %v3208 = vunpack.c.l.b16 %v3192
    %v3209 = vunpack.c.l.b16 %v3193
    %v3210 = vunpack.c.l.b16 %v3194
    %v3211 = vpack.c.b16 %v3204, %v3203
    %v3212 = vpack.c.b16 %v3206, %v3205
    %v3213 = vpack.c.b16 %v3208, %v3207
    %v3214 = vpack.c.b16 %v3210, %v3209
    %v3220 = vsel %vm598, %v3186, 0
    %3222 = vmatpush.bf16.msra.mxu0 0
    %3223 = vmatpush.bf16.msra.mxu0 0
    %3224 = vmatpush.bf16.msra.mxu0 0
    %3225 = vmatpush.bf16.msra.mxu0 0
    %3226 = vmatpush.bf16.msra.mxu0 %v3214
    %3227 = vmatpush.bf16.msra.mxu0 %v3213
    %3228 = vmatpush.bf16.msra.mxu0 %v3212
    %3229 = vmatpush.bf16.msra.mxu0 %v3211
    %3230 = vmatmul.bf16.gmra.mxu0 %v3220
    %v3231 = vpop.f32.mrf.mxu0
    %v3232 = vadd.f32 0.0, %v3231
    %v3233 = vpop.f32.mrf.mxu0
    %3234 = vdwg.mxu0
    %v3235 = vadd.f32 %v3184, %v3232
    %v3236 = vld [vmem:[#allocation2 + $0x54] sm:$0x3]
    %v3237 = vpack.c.bf16 %v3236, %v3236
    %v3238 = vld [vmem:[%s19 + $0x540] sm:$0xf]
    %v3239 = vld [vmem:[%s19 + $0x544] sm:$0xf]
    %v3240 = vld [vmem:[%s19 + $0x548] sm:$0xf]
    %v3241 = vld [vmem:[%s19 + $0x54c] sm:$0xf]
    %v3242 = vld [vmem:[%s19 + $0x550] sm:$0xf]
    %v3243 = vld [vmem:[%s19 + $0x554] sm:$0xf]
    %v3244 = vld [vmem:[%s19 + $0x558] sm:$0xf]
    %v3245 = vld [vmem:[%s19 + $0x55c] sm:$0xf]
    %v3254 = vunpack.c.l.b16 %v3238
    %v3255 = vunpack.c.l.b16 %v3239
    %v3256 = vunpack.c.l.b16 %v3240
    %v3257 = vunpack.c.l.b16 %v3241
    %v3258 = vunpack.c.l.b16 %v3242
    %v3259 = vunpack.c.l.b16 %v3243
    %v3260 = vunpack.c.l.b16 %v3244
    %v3261 = vunpack.c.l.b16 %v3245
    %v3262 = vpack.c.b16 %v3255, %v3254
    %v3263 = vpack.c.b16 %v3257, %v3256
    %v3264 = vpack.c.b16 %v3259, %v3258
    %v3265 = vpack.c.b16 %v3261, %v3260
    %v3271 = vsel %vm598, %v3237, 0
    %3273 = vmatpush.bf16.msra.mxu0 0
    %3274 = vmatpush.bf16.msra.mxu0 0
    %3275 = vmatpush.bf16.msra.mxu0 0
    %3276 = vmatpush.bf16.msra.mxu0 0
    %3277 = vmatpush.bf16.msra.mxu0 %v3265
    %3278 = vmatpush.bf16.msra.mxu0 %v3264
    %3279 = vmatpush.bf16.msra.mxu0 %v3263
    %3280 = vmatpush.bf16.msra.mxu0 %v3262
    %3281 = vmatmul.bf16.gmra.mxu0 %v3271
    %v3282 = vpop.f32.mrf.mxu0
    %v3283 = vadd.f32 0.0, %v3282
    %v3284 = vpop.f32.mrf.mxu0
    %3285 = vdwg.mxu0
    %v3286 = vadd.f32 %v3235, %v3283
    %v3287 = vld [vmem:[#allocation2 + $0x56] sm:$0x3]
    %v3288 = vpack.c.bf16 %v3287, %v3287
    %v3289 = vld [vmem:[%s19 + $0x560] sm:$0xf]
    %v3290 = vld [vmem:[%s19 + $0x564] sm:$0xf]
    %v3291 = vld [vmem:[%s19 + $0x568] sm:$0xf]
    %v3292 = vld [vmem:[%s19 + $0x56c] sm:$0xf]
    %v3293 = vld [vmem:[%s19 + $0x570] sm:$0xf]
    %v3294 = vld [vmem:[%s19 + $0x574] sm:$0xf]
    %v3295 = vld [vmem:[%s19 + $0x578] sm:$0xf]
    %v3296 = vld [vmem:[%s19 + $0x57c] sm:$0xf]
    %v3305 = vunpack.c.l.b16 %v3289
    %v3306 = vunpack.c.l.b16 %v3290
    %v3307 = vunpack.c.l.b16 %v3291
    %v3308 = vunpack.c.l.b16 %v3292
    %v3309 = vunpack.c.l.b16 %v3293
    %v3310 = vunpack.c.l.b16 %v3294
    %v3311 = vunpack.c.l.b16 %v3295
    %v3312 = vunpack.c.l.b16 %v3296
    %v3313 = vpack.c.b16 %v3306, %v3305
    %v3314 = vpack.c.b16 %v3308, %v3307
    %v3315 = vpack.c.b16 %v3310, %v3309
    %v3316 = vpack.c.b16 %v3312, %v3311
    %v3322 = vsel %vm598, %v3288, 0
    %3324 = vmatpush.bf16.msra.mxu0 0
    %3325 = vmatpush.bf16.msra.mxu0 0
    %3326 = vmatpush.bf16.msra.mxu0 0
    %3327 = vmatpush.bf16.msra.mxu0 0
    %3328 = vmatpush.bf16.msra.mxu0 %v3316
    %3329 = vmatpush.bf16.msra.mxu0 %v3315
    %3330 = vmatpush.bf16.msra.mxu0 %v3314
    %3331 = vmatpush.bf16.msra.mxu0 %v3313
    %3332 = vmatmul.bf16.gmra.mxu0 %v3322
    %v3333 = vpop.f32.mrf.mxu0
    %v3334 = vadd.f32 0.0, %v3333
    %v3335 = vpop.f32.mrf.mxu0
    %3336 = vdwg.mxu0
    %v3337 = vadd.f32 %v3286, %v3334
    %v3338 = vld [vmem:[#allocation2 + $0x58] sm:$0x3]
    %v3339 = vpack.c.bf16 %v3338, %v3338
    %v3340 = vld [vmem:[%s19 + $0x580] sm:$0xf]
    %v3341 = vld [vmem:[%s19 + $0x584] sm:$0xf]
    %v3342 = vld [vmem:[%s19 + $0x588] sm:$0xf]
    %v3343 = vld [vmem:[%s19 + $0x58c] sm:$0xf]
    %v3344 = vld [vmem:[%s19 + $0x590] sm:$0xf]
    %v3345 = vld [vmem:[%s19 + $0x594] sm:$0xf]
    %v3346 = vld [vmem:[%s19 + $0x598] sm:$0xf]
    %v3347 = vld [vmem:[%s19 + $0x59c] sm:$0xf]
    %v3356 = vunpack.c.l.b16 %v3340
    %v3357 = vunpack.c.l.b16 %v3341
    %v3358 = vunpack.c.l.b16 %v3342
    %v3359 = vunpack.c.l.b16 %v3343
    %v3360 = vunpack.c.l.b16 %v3344
    %v3361 = vunpack.c.l.b16 %v3345
    %v3362 = vunpack.c.l.b16 %v3346
    %v3363 = vunpack.c.l.b16 %v3347
    %v3364 = vpack.c.b16 %v3357, %v3356
    %v3365 = vpack.c.b16 %v3359, %v3358
    %v3366 = vpack.c.b16 %v3361, %v3360
    %v3367 = vpack.c.b16 %v3363, %v3362
    %v3373 = vsel %vm598, %v3339, 0
    %3375 = vmatpush.bf16.msra.mxu0 0
    %3376 = vmatpush.bf16.msra.mxu0 0
    %3377 = vmatpush.bf16.msra.mxu0 0
    %3378 = vmatpush.bf16.msra.mxu0 0
    %3379 = vmatpush.bf16.msra.mxu0 %v3367
    %3380 = vmatpush.bf16.msra.mxu0 %v3366
    %3381 = vmatpush.bf16.msra.mxu0 %v3365
    %3382 = vmatpush.bf16.msra.mxu0 %v3364
    %3383 = vmatmul.bf16.gmra.mxu0 %v3373
    %v3384 = vpop.f32.mrf.mxu0
    %v3385 = vadd.f32 0.0, %v3384
    %v3386 = vpop.f32.mrf.mxu0
    %3387 = vdwg.mxu0
    %v3388 = vadd.f32 %v3337, %v3385
    %v3389 = vld [vmem:[#allocation2 + $0x5a] sm:$0x3]
    %v3390 = vpack.c.bf16 %v3389, %v3389
    %v3391 = vld [vmem:[%s19 + $0x5a0] sm:$0xf]
    %v3392 = vld [vmem:[%s19 + $0x5a4] sm:$0xf]
    %v3393 = vld [vmem:[%s19 + $0x5a8] sm:$0xf]
    %v3394 = vld [vmem:[%s19 + $0x5ac] sm:$0xf]
    %v3395 = vld [vmem:[%s19 + $0x5b0] sm:$0xf]
    %v3396 = vld [vmem:[%s19 + $0x5b4] sm:$0xf]
    %v3397 = vld [vmem:[%s19 + $0x5b8] sm:$0xf]
    %v3398 = vld [vmem:[%s19 + $0x5bc] sm:$0xf]
    %v3407 = vunpack.c.l.b16 %v3391
    %v3408 = vunpack.c.l.b16 %v3392
    %v3409 = vunpack.c.l.b16 %v3393
    %v3410 = vunpack.c.l.b16 %v3394
    %v3411 = vunpack.c.l.b16 %v3395
    %v3412 = vunpack.c.l.b16 %v3396
    %v3413 = vunpack.c.l.b16 %v3397
    %v3414 = vunpack.c.l.b16 %v3398
    %v3415 = vpack.c.b16 %v3408, %v3407
    %v3416 = vpack.c.b16 %v3410, %v3409
    %v3417 = vpack.c.b16 %v3412, %v3411
    %v3418 = vpack.c.b16 %v3414, %v3413
    %v3424 = vsel %vm598, %v3390, 0
    %3426 = vmatpush.bf16.msra.mxu0 0
    %3427 = vmatpush.bf16.msra.mxu0 0
    %3428 = vmatpush.bf16.msra.mxu0 0
    %3429 = vmatpush.bf16.msra.mxu0 0
    %3430 = vmatpush.bf16.msra.mxu0 %v3418
    %3431 = vmatpush.bf16.msra.mxu0 %v3417
    %3432 = vmatpush.bf16.msra.mxu0 %v3416
    %3433 = vmatpush.bf16.msra.mxu0 %v3415
    %3434 = vmatmul.bf16.gmra.mxu0 %v3424
    %v3435 = vpop.f32.mrf.mxu0
    %v3436 = vadd.f32 0.0, %v3435
    %v3437 = vpop.f32.mrf.mxu0
    %3438 = vdwg.mxu0
    %v3439 = vadd.f32 %v3388, %v3436
    %v3440 = vld [vmem:[#allocation2 + $0x5c] sm:$0x3]
    %v3441 = vpack.c.bf16 %v3440, %v3440
    %v3442 = vld [vmem:[%s19 + $0x5c0] sm:$0xf]
    %v3443 = vld [vmem:[%s19 + $0x5c4] sm:$0xf]
    %v3444 = vld [vmem:[%s19 + $0x5c8] sm:$0xf]
    %v3445 = vld [vmem:[%s19 + $0x5cc] sm:$0xf]
    %v3446 = vld [vmem:[%s19 + $0x5d0] sm:$0xf]
    %v3447 = vld [vmem:[%s19 + $0x5d4] sm:$0xf]
    %v3448 = vld [vmem:[%s19 + $0x5d8] sm:$0xf]
    %v3449 = vld [vmem:[%s19 + $0x5dc] sm:$0xf]
    %v3458 = vunpack.c.l.b16 %v3442
    %v3459 = vunpack.c.l.b16 %v3443
    %v3460 = vunpack.c.l.b16 %v3444
    %v3461 = vunpack.c.l.b16 %v3445
    %v3462 = vunpack.c.l.b16 %v3446
    %v3463 = vunpack.c.l.b16 %v3447
    %v3464 = vunpack.c.l.b16 %v3448
    %v3465 = vunpack.c.l.b16 %v3449
    %v3466 = vpack.c.b16 %v3459, %v3458
    %v3467 = vpack.c.b16 %v3461, %v3460
    %v3468 = vpack.c.b16 %v3463, %v3462
    %v3469 = vpack.c.b16 %v3465, %v3464
    %v3475 = vsel %vm598, %v3441, 0
    %3477 = vmatpush.bf16.msra.mxu0 0
    %3478 = vmatpush.bf16.msra.mxu0 0
    %3479 = vmatpush.bf16.msra.mxu0 0
    %3480 = vmatpush.bf16.msra.mxu0 0
    %3481 = vmatpush.bf16.msra.mxu0 %v3469
    %3482 = vmatpush.bf16.msra.mxu0 %v3468
    %3483 = vmatpush.bf16.msra.mxu0 %v3467
    %3484 = vmatpush.bf16.msra.mxu0 %v3466
    %3485 = vmatmul.bf16.gmra.mxu0 %v3475
    %v3486 = vpop.f32.mrf.mxu0
    %v3487 = vadd.f32 0.0, %v3486
    %v3488 = vpop.f32.mrf.mxu0
    %3489 = vdwg.mxu0
    %v3490 = vadd.f32 %v3439, %v3487
    %v3491 = vld [vmem:[#allocation2 + $0x5e] sm:$0x3]
    %v3492 = vpack.c.bf16 %v3491, %v3491
    %v3493 = vld [vmem:[%s19 + $0x5e0] sm:$0xf]
    %v3494 = vld [vmem:[%s19 + $0x5e4] sm:$0xf]
    %v3495 = vld [vmem:[%s19 + $0x5e8] sm:$0xf]
    %v3496 = vld [vmem:[%s19 + $0x5ec] sm:$0xf]
    %v3497 = vld [vmem:[%s19 + $0x5f0] sm:$0xf]
    %v3498 = vld [vmem:[%s19 + $0x5f4] sm:$0xf]
    %v3499 = vld [vmem:[%s19 + $0x5f8] sm:$0xf]
    %v3500 = vld [vmem:[%s19 + $0x5fc] sm:$0xf]
    %v3509 = vunpack.c.l.b16 %v3493
    %v3510 = vunpack.c.l.b16 %v3494
    %v3511 = vunpack.c.l.b16 %v3495
    %v3512 = vunpack.c.l.b16 %v3496
    %v3513 = vunpack.c.l.b16 %v3497
    %v3514 = vunpack.c.l.b16 %v3498
    %v3515 = vunpack.c.l.b16 %v3499
    %v3516 = vunpack.c.l.b16 %v3500
    %v3517 = vpack.c.b16 %v3510, %v3509
    %v3518 = vpack.c.b16 %v3512, %v3511
    %v3519 = vpack.c.b16 %v3514, %v3513
    %v3520 = vpack.c.b16 %v3516, %v3515
    %v3526 = vsel %vm598, %v3492, 0
    %3528 = vmatpush.bf16.msra.mxu0 0
    %3529 = vmatpush.bf16.msra.mxu0 0
    %3530 = vmatpush.bf16.msra.mxu0 0
    %3531 = vmatpush.bf16.msra.mxu0 0
    %3532 = vmatpush.bf16.msra.mxu0 %v3520
    %3533 = vmatpush.bf16.msra.mxu0 %v3519
    %3534 = vmatpush.bf16.msra.mxu0 %v3518
    %3535 = vmatpush.bf16.msra.mxu0 %v3517
    %3536 = vmatmul.bf16.gmra.mxu0 %v3526
    %v3537 = vpop.f32.mrf.mxu0
    %v3538 = vadd.f32 0.0, %v3537
    %v3539 = vpop.f32.mrf.mxu0
    %3540 = vdwg.mxu0
    %v3541 = vadd.f32 %v3490, %v3538
    %v3542 = vld [vmem:[#allocation2 + $0x60] sm:$0x3]
    %v3543 = vpack.c.bf16 %v3542, %v3542
    %v3544 = vld [vmem:[%s19 + $0x600] sm:$0xf]
    %v3545 = vld [vmem:[%s19 + $0x604] sm:$0xf]
    %v3546 = vld [vmem:[%s19 + $0x608] sm:$0xf]
    %v3547 = vld [vmem:[%s19 + $0x60c] sm:$0xf]
    %v3548 = vld [vmem:[%s19 + $0x610] sm:$0xf]
    %v3549 = vld [vmem:[%s19 + $0x614] sm:$0xf]
    %v3550 = vld [vmem:[%s19 + $0x618] sm:$0xf]
    %v3551 = vld [vmem:[%s19 + $0x61c] sm:$0xf]
    %v3560 = vunpack.c.l.b16 %v3544
    %v3561 = vunpack.c.l.b16 %v3545
    %v3562 = vunpack.c.l.b16 %v3546
    %v3563 = vunpack.c.l.b16 %v3547
    %v3564 = vunpack.c.l.b16 %v3548
    %v3565 = vunpack.c.l.b16 %v3549
    %v3566 = vunpack.c.l.b16 %v3550
    %v3567 = vunpack.c.l.b16 %v3551
    %v3568 = vpack.c.b16 %v3561, %v3560
    %v3569 = vpack.c.b16 %v3563, %v3562
    %v3570 = vpack.c.b16 %v3565, %v3564
    %v3571 = vpack.c.b16 %v3567, %v3566
    %v3577 = vsel %vm598, %v3543, 0
    %3579 = vmatpush.bf16.msra.mxu0 0
    %3580 = vmatpush.bf16.msra.mxu0 0
    %3581 = vmatpush.bf16.msra.mxu0 0
    %3582 = vmatpush.bf16.msra.mxu0 0
    %3583 = vmatpush.bf16.msra.mxu0 %v3571
    %3584 = vmatpush.bf16.msra.mxu0 %v3570
    %3585 = vmatpush.bf16.msra.mxu0 %v3569
    %3586 = vmatpush.bf16.msra.mxu0 %v3568
    %3587 = vmatmul.bf16.gmra.mxu0 %v3577
    %v3588 = vpop.f32.mrf.mxu0
    %v3589 = vadd.f32 0.0, %v3588
    %v3590 = vpop.f32.mrf.mxu0
    %3591 = vdwg.mxu0
    %v3592 = vadd.f32 %v3541, %v3589
    %v3593 = vld [vmem:[#allocation2 + $0x62] sm:$0x3]
    %v3594 = vpack.c.bf16 %v3593, %v3593
    %v3595 = vld [vmem:[%s19 + $0x620] sm:$0xf]
    %v3596 = vld [vmem:[%s19 + $0x624] sm:$0xf]
    %v3597 = vld [vmem:[%s19 + $0x628] sm:$0xf]
    %v3598 = vld [vmem:[%s19 + $0x62c] sm:$0xf]
    %v3599 = vld [vmem:[%s19 + $0x630] sm:$0xf]
    %v3600 = vld [vmem:[%s19 + $0x634] sm:$0xf]
    %v3601 = vld [vmem:[%s19 + $0x638] sm:$0xf]
    %v3602 = vld [vmem:[%s19 + $0x63c] sm:$0xf]
    %v3611 = vunpack.c.l.b16 %v3595
    %v3612 = vunpack.c.l.b16 %v3596
    %v3613 = vunpack.c.l.b16 %v3597
    %v3614 = vunpack.c.l.b16 %v3598
    %v3615 = vunpack.c.l.b16 %v3599
    %v3616 = vunpack.c.l.b16 %v3600
    %v3617 = vunpack.c.l.b16 %v3601
    %v3618 = vunpack.c.l.b16 %v3602
    %v3619 = vpack.c.b16 %v3612, %v3611
    %v3620 = vpack.c.b16 %v3614, %v3613
    %v3621 = vpack.c.b16 %v3616, %v3615
    %v3622 = vpack.c.b16 %v3618, %v3617
    %v3628 = vsel %vm598, %v3594, 0
    %3630 = vmatpush.bf16.msra.mxu0 0
    %3631 = vmatpush.bf16.msra.mxu0 0
    %3632 = vmatpush.bf16.msra.mxu0 0
    %3633 = vmatpush.bf16.msra.mxu0 0
    %3634 = vmatpush.bf16.msra.mxu0 %v3622
    %3635 = vmatpush.bf16.msra.mxu0 %v3621
    %3636 = vmatpush.bf16.msra.mxu0 %v3620
    %3637 = vmatpush.bf16.msra.mxu0 %v3619
    %3638 = vmatmul.bf16.gmra.mxu0 %v3628
    %v3639 = vpop.f32.mrf.mxu0
    %v3640 = vadd.f32 0.0, %v3639
    %v3641 = vpop.f32.mrf.mxu0
    %3642 = vdwg.mxu0
    %v3643 = vadd.f32 %v3592, %v3640
    %v3644 = vld [vmem:[#allocation2 + $0x64] sm:$0x3]
    %v3645 = vpack.c.bf16 %v3644, %v3644
    %v3646 = vld [vmem:[%s19 + $0x640] sm:$0xf]
    %v3647 = vld [vmem:[%s19 + $0x644] sm:$0xf]
    %v3648 = vld [vmem:[%s19 + $0x648] sm:$0xf]
    %v3649 = vld [vmem:[%s19 + $0x64c] sm:$0xf]
    %v3650 = vld [vmem:[%s19 + $0x650] sm:$0xf]
    %v3651 = vld [vmem:[%s19 + $0x654] sm:$0xf]
    %v3652 = vld [vmem:[%s19 + $0x658] sm:$0xf]
    %v3653 = vld [vmem:[%s19 + $0x65c] sm:$0xf]
    %v3662 = vunpack.c.l.b16 %v3646
    %v3663 = vunpack.c.l.b16 %v3647
    %v3664 = vunpack.c.l.b16 %v3648
    %v3665 = vunpack.c.l.b16 %v3649
    %v3666 = vunpack.c.l.b16 %v3650
    %v3667 = vunpack.c.l.b16 %v3651
    %v3668 = vunpack.c.l.b16 %v3652
    %v3669 = vunpack.c.l.b16 %v3653
    %v3670 = vpack.c.b16 %v3663, %v3662
    %v3671 = vpack.c.b16 %v3665, %v3664
    %v3672 = vpack.c.b16 %v3667, %v3666
    %v3673 = vpack.c.b16 %v3669, %v3668
    %v3679 = vsel %vm598, %v3645, 0
    %3681 = vmatpush.bf16.msra.mxu0 0
    %3682 = vmatpush.bf16.msra.mxu0 0
    %3683 = vmatpush.bf16.msra.mxu0 0
    %3684 = vmatpush.bf16.msra.mxu0 0
    %3685 = vmatpush.bf16.msra.mxu0 %v3673
    %3686 = vmatpush.bf16.msra.mxu0 %v3672
    %3687 = vmatpush.bf16.msra.mxu0 %v3671
    %3688 = vmatpush.bf16.msra.mxu0 %v3670
    %3689 = vmatmul.bf16.gmra.mxu0 %v3679
    %v3690 = vpop.f32.mrf.mxu0
    %v3691 = vadd.f32 0.0, %v3690
    %v3692 = vpop.f32.mrf.mxu0
    %3693 = vdwg.mxu0
    %v3694 = vadd.f32 %v3643, %v3691
    %v3695 = vld [vmem:[#allocation2 + $0x66] sm:$0x3]
    %v3696 = vpack.c.bf16 %v3695, %v3695
    %v3697 = vld [vmem:[%s19 + $0x660] sm:$0xf]
    %v3698 = vld [vmem:[%s19 + $0x664] sm:$0xf]
    %v3699 = vld [vmem:[%s19 + $0x668] sm:$0xf]
    %v3700 = vld [vmem:[%s19 + $0x66c] sm:$0xf]
    %v3701 = vld [vmem:[%s19 + $0x670] sm:$0xf]
    %v3702 = vld [vmem:[%s19 + $0x674] sm:$0xf]
    %v3703 = vld [vmem:[%s19 + $0x678] sm:$0xf]
    %v3704 = vld [vmem:[%s19 + $0x67c] sm:$0xf]
    %v3713 = vunpack.c.l.b16 %v3697
    %v3714 = vunpack.c.l.b16 %v3698
    %v3715 = vunpack.c.l.b16 %v3699
    %v3716 = vunpack.c.l.b16 %v3700
    %v3717 = vunpack.c.l.b16 %v3701
    %v3718 = vunpack.c.l.b16 %v3702
    %v3719 = vunpack.c.l.b16 %v3703
    %v3720 = vunpack.c.l.b16 %v3704
    %v3721 = vpack.c.b16 %v3714, %v3713
    %v3722 = vpack.c.b16 %v3716, %v3715
    %v3723 = vpack.c.b16 %v3718, %v3717
    %v3724 = vpack.c.b16 %v3720, %v3719
    %v3730 = vsel %vm598, %v3696, 0
    %3732 = vmatpush.bf16.msra.mxu0 0
    %3733 = vmatpush.bf16.msra.mxu0 0
    %3734 = vmatpush.bf16.msra.mxu0 0
    %3735 = vmatpush.bf16.msra.mxu0 0
    %3736 = vmatpush.bf16.msra.mxu0 %v3724
    %3737 = vmatpush.bf16.msra.mxu0 %v3723
    %3738 = vmatpush.bf16.msra.mxu0 %v3722
    %3739 = vmatpush.bf16.msra.mxu0 %v3721
    %3740 = vmatmul.bf16.gmra.mxu0 %v3730
    %v3741 = vpop.f32.mrf.mxu0
    %v3742 = vadd.f32 0.0, %v3741
    %v3743 = vpop.f32.mrf.mxu0
    %3744 = vdwg.mxu0
    %v3745 = vadd.f32 %v3694, %v3742
    %v3746 = vld [vmem:[#allocation2 + $0x68] sm:$0x3]
    %v3747 = vpack.c.bf16 %v3746, %v3746
    %v3748 = vld [vmem:[%s19 + $0x680] sm:$0xf]
    %v3749 = vld [vmem:[%s19 + $0x684] sm:$0xf]
    %v3750 = vld [vmem:[%s19 + $0x688] sm:$0xf]
    %v3751 = vld [vmem:[%s19 + $0x68c] sm:$0xf]
    %v3752 = vld [vmem:[%s19 + $0x690] sm:$0xf]
    %v3753 = vld [vmem:[%s19 + $0x694] sm:$0xf]
    %v3754 = vld [vmem:[%s19 + $0x698] sm:$0xf]
    %v3755 = vld [vmem:[%s19 + $0x69c] sm:$0xf]
    %v3764 = vunpack.c.l.b16 %v3748
    %v3765 = vunpack.c.l.b16 %v3749
    %v3766 = vunpack.c.l.b16 %v3750
    %v3767 = vunpack.c.l.b16 %v3751
    %v3768 = vunpack.c.l.b16 %v3752
    %v3769 = vunpack.c.l.b16 %v3753
    %v3770 = vunpack.c.l.b16 %v3754
    %v3771 = vunpack.c.l.b16 %v3755
    %v3772 = vpack.c.b16 %v3765, %v3764
    %v3773 = vpack.c.b16 %v3767, %v3766
    %v3774 = vpack.c.b16 %v3769, %v3768
    %v3775 = vpack.c.b16 %v3771, %v3770
    %v3781 = vsel %vm598, %v3747, 0
    %3783 = vmatpush.bf16.msra.mxu0 0
    %3784 = vmatpush.bf16.msra.mxu0 0
    %3785 = vmatpush.bf16.msra.mxu0 0
    %3786 = vmatpush.bf16.msra.mxu0 0
    %3787 = vmatpush.bf16.msra.mxu0 %v3775
    %3788 = vmatpush.bf16.msra.mxu0 %v3774
    %3789 = vmatpush.bf16.msra.mxu0 %v3773
    %3790 = vmatpush.bf16.msra.mxu0 %v3772
    %3791 = vmatmul.bf16.gmra.mxu0 %v3781
    %v3792 = vpop.f32.mrf.mxu0
    %v3793 = vadd.f32 0.0, %v3792
    %v3794 = vpop.f32.mrf.mxu0
    %3795 = vdwg.mxu0
    %v3796 = vadd.f32 %v3745, %v3793
    %v3797 = vld [vmem:[#allocation2 + $0x6a] sm:$0x3]
    %v3798 = vpack.c.bf16 %v3797, %v3797
    %v3799 = vld [vmem:[%s19 + $0x6a0] sm:$0xf]
    %v3800 = vld [vmem:[%s19 + $0x6a4] sm:$0xf]
    %v3801 = vld [vmem:[%s19 + $0x6a8] sm:$0xf]
    %v3802 = vld [vmem:[%s19 + $0x6ac] sm:$0xf]
    %v3803 = vld [vmem:[%s19 + $0x6b0] sm:$0xf]
    %v3804 = vld [vmem:[%s19 + $0x6b4] sm:$0xf]
    %v3805 = vld [vmem:[%s19 + $0x6b8] sm:$0xf]
    %v3806 = vld [vmem:[%s19 + $0x6bc] sm:$0xf]
    %v3815 = vunpack.c.l.b16 %v3799
    %v3816 = vunpack.c.l.b16 %v3800
    %v3817 = vunpack.c.l.b16 %v3801
    %v3818 = vunpack.c.l.b16 %v3802
    %v3819 = vunpack.c.l.b16 %v3803
    %v3820 = vunpack.c.l.b16 %v3804
    %v3821 = vunpack.c.l.b16 %v3805
    %v3822 = vunpack.c.l.b16 %v3806
    %v3823 = vpack.c.b16 %v3816, %v3815
    %v3824 = vpack.c.b16 %v3818, %v3817
    %v3825 = vpack.c.b16 %v3820, %v3819
    %v3826 = vpack.c.b16 %v3822, %v3821
    %v3832 = vsel %vm598, %v3798, 0
    %3834 = vmatpush.bf16.msra.mxu0 0
    %3835 = vmatpush.bf16.msra.mxu0 0
    %3836 = vmatpush.bf16.msra.mxu0 0
    %3837 = vmatpush.bf16.msra.mxu0 0
    %3838 = vmatpush.bf16.msra.mxu0 %v3826
    %3839 = vmatpush.bf16.msra.mxu0 %v3825
    %3840 = vmatpush.bf16.msra.mxu0 %v3824
    %3841 = vmatpush.bf16.msra.mxu0 %v3823
    %3842 = vmatmul.bf16.gmra.mxu0 %v3832
    %v3843 = vpop.f32.mrf.mxu0
    %v3844 = vadd.f32 0.0, %v3843
    %v3845 = vpop.f32.mrf.mxu0
    %3846 = vdwg.mxu0
    %v3847 = vadd.f32 %v3796, %v3844
    %v3848 = vld [vmem:[#allocation2 + $0x6c] sm:$0x3]
    %v3849 = vpack.c.bf16 %v3848, %v3848
    %v3850 = vld [vmem:[%s19 + $0x6c0] sm:$0xf]
    %v3851 = vld [vmem:[%s19 + $0x6c4] sm:$0xf]
    %v3852 = vld [vmem:[%s19 + $0x6c8] sm:$0xf]
    %v3853 = vld [vmem:[%s19 + $0x6cc] sm:$0xf]
    %v3854 = vld [vmem:[%s19 + $0x6d0] sm:$0xf]
    %v3855 = vld [vmem:[%s19 + $0x6d4] sm:$0xf]
    %v3856 = vld [vmem:[%s19 + $0x6d8] sm:$0xf]
    %v3857 = vld [vmem:[%s19 + $0x6dc] sm:$0xf]
    %v3866 = vunpack.c.l.b16 %v3850
    %v3867 = vunpack.c.l.b16 %v3851
    %v3868 = vunpack.c.l.b16 %v3852
    %v3869 = vunpack.c.l.b16 %v3853
    %v3870 = vunpack.c.l.b16 %v3854
    %v3871 = vunpack.c.l.b16 %v3855
    %v3872 = vunpack.c.l.b16 %v3856
    %v3873 = vunpack.c.l.b16 %v3857
    %v3874 = vpack.c.b16 %v3867, %v3866
    %v3875 = vpack.c.b16 %v3869, %v3868
    %v3876 = vpack.c.b16 %v3871, %v3870
    %v3877 = vpack.c.b16 %v3873, %v3872
    %v3883 = vsel %vm598, %v3849, 0
    %3885 = vmatpush.bf16.msra.mxu0 0
    %3886 = vmatpush.bf16.msra.mxu0 0
    %3887 = vmatpush.bf16.msra.mxu0 0
    %3888 = vmatpush.bf16.msra.mxu0 0
    %3889 = vmatpush.bf16.msra.mxu0 %v3877
    %3890 = vmatpush.bf16.msra.mxu0 %v3876
    %3891 = vmatpush.bf16.msra.mxu0 %v3875
    %3892 = vmatpush.bf16.msra.mxu0 %v3874
    %3893 = vmatmul.bf16.gmra.mxu0 %v3883
    %v3894 = vpop.f32.mrf.mxu0
    %v3895 = vadd.f32 0.0, %v3894
    %v3896 = vpop.f32.mrf.mxu0
    %3897 = vdwg.mxu0
    %v3898 = vadd.f32 %v3847, %v3895
    %v3899 = vld [vmem:[#allocation2 + $0x6e] sm:$0x3]
    %v3900 = vpack.c.bf16 %v3899, %v3899
    %v3901 = vld [vmem:[%s19 + $0x6e0] sm:$0xf]
    %v3902 = vld [vmem:[%s19 + $0x6e4] sm:$0xf]
    %v3903 = vld [vmem:[%s19 + $0x6e8] sm:$0xf]
    %v3904 = vld [vmem:[%s19 + $0x6ec] sm:$0xf]
    %v3905 = vld [vmem:[%s19 + $0x6f0] sm:$0xf]
    %v3906 = vld [vmem:[%s19 + $0x6f4] sm:$0xf]
    %v3907 = vld [vmem:[%s19 + $0x6f8] sm:$0xf]
    %v3908 = vld [vmem:[%s19 + $0x6fc] sm:$0xf]
    %v3917 = vunpack.c.l.b16 %v3901
    %v3918 = vunpack.c.l.b16 %v3902
    %v3919 = vunpack.c.l.b16 %v3903
    %v3920 = vunpack.c.l.b16 %v3904
    %v3921 = vunpack.c.l.b16 %v3905
    %v3922 = vunpack.c.l.b16 %v3906
    %v3923 = vunpack.c.l.b16 %v3907
    %v3924 = vunpack.c.l.b16 %v3908
    %v3925 = vpack.c.b16 %v3918, %v3917
    %v3926 = vpack.c.b16 %v3920, %v3919
    %v3927 = vpack.c.b16 %v3922, %v3921
    %v3928 = vpack.c.b16 %v3924, %v3923
    %v3934 = vsel %vm598, %v3900, 0
    %3936 = vmatpush.bf16.msra.mxu0 0
    %3937 = vmatpush.bf16.msra.mxu0 0
    %3938 = vmatpush.bf16.msra.mxu0 0
    %3939 = vmatpush.bf16.msra.mxu0 0
    %3940 = vmatpush.bf16.msra.mxu0 %v3928
    %3941 = vmatpush.bf16.msra.mxu0 %v3927
    %3942 = vmatpush.bf16.msra.mxu0 %v3926
    %3943 = vmatpush.bf16.msra.mxu0 %v3925
    %3944 = vmatmul.bf16.gmra.mxu0 %v3934
    %v3945 = vpop.f32.mrf.mxu0
    %v3946 = vadd.f32 0.0, %v3945
    %v3947 = vpop.f32.mrf.mxu0
    %3948 = vdwg.mxu0
    %v3949 = vadd.f32 %v3898, %v3946
    %v3950 = vld [vmem:[#allocation2 + $0x70] sm:$0x3]
    %v3951 = vpack.c.bf16 %v3950, %v3950
    %v3952 = vld [vmem:[%s19 + $0x700] sm:$0xf]
    %v3953 = vld [vmem:[%s19 + $0x704] sm:$0xf]
    %v3954 = vld [vmem:[%s19 + $0x708] sm:$0xf]
    %v3955 = vld [vmem:[%s19 + $0x70c] sm:$0xf]
    %v3956 = vld [vmem:[%s19 + $0x710] sm:$0xf]
    %v3957 = vld [vmem:[%s19 + $0x714] sm:$0xf]
    %v3958 = vld [vmem:[%s19 + $0x718] sm:$0xf]
    %v3959 = vld [vmem:[%s19 + $0x71c] sm:$0xf]
    %v3968 = vunpack.c.l.b16 %v3952
    %v3969 = vunpack.c.l.b16 %v3953
    %v3970 = vunpack.c.l.b16 %v3954
    %v3971 = vunpack.c.l.b16 %v3955
    %v3972 = vunpack.c.l.b16 %v3956
    %v3973 = vunpack.c.l.b16 %v3957
    %v3974 = vunpack.c.l.b16 %v3958
    %v3975 = vunpack.c.l.b16 %v3959
    %v3976 = vpack.c.b16 %v3969, %v3968
    %v3977 = vpack.c.b16 %v3971, %v3970
    %v3978 = vpack.c.b16 %v3973, %v3972
    %v3979 = vpack.c.b16 %v3975, %v3974
    %v3985 = vsel %vm598, %v3951, 0
    %3987 = vmatpush.bf16.msra.mxu0 0
    %3988 = vmatpush.bf16.msra.mxu0 0
    %3989 = vmatpush.bf16.msra.mxu0 0
    %3990 = vmatpush.bf16.msra.mxu0 0
    %3991 = vmatpush.bf16.msra.mxu0 %v3979
    %3992 = vmatpush.bf16.msra.mxu0 %v3978
    %3993 = vmatpush.bf16.msra.mxu0 %v3977
    %3994 = vmatpush.bf16.msra.mxu0 %v3976
    %3995 = vmatmul.bf16.gmra.mxu0 %v3985
    %v3996 = vpop.f32.mrf.mxu0
    %v3997 = vadd.f32 0.0, %v3996
    %v3998 = vpop.f32.mrf.mxu0
    %3999 = vdwg.mxu0
    %v4000 = vadd.f32 %v3949, %v3997
    %v4001 = vld [vmem:[#allocation2 + $0x72] sm:$0x3]
    %v4002 = vpack.c.bf16 %v4001, %v4001
    %v4003 = vld [vmem:[%s19 + $0x720] sm:$0xf]
    %v4004 = vld [vmem:[%s19 + $0x724] sm:$0xf]
    %v4005 = vld [vmem:[%s19 + $0x728] sm:$0xf]
    %v4006 = vld [vmem:[%s19 + $0x72c] sm:$0xf]
    %v4007 = vld [vmem:[%s19 + $0x730] sm:$0xf]
    %v4008 = vld [vmem:[%s19 + $0x734] sm:$0xf]
    %v4009 = vld [vmem:[%s19 + $0x738] sm:$0xf]
    %v4010 = vld [vmem:[%s19 + $0x73c] sm:$0xf]
    %v4019 = vunpack.c.l.b16 %v4003
    %v4020 = vunpack.c.l.b16 %v4004
    %v4021 = vunpack.c.l.b16 %v4005
    %v4022 = vunpack.c.l.b16 %v4006
    %v4023 = vunpack.c.l.b16 %v4007
    %v4024 = vunpack.c.l.b16 %v4008
    %v4025 = vunpack.c.l.b16 %v4009
    %v4026 = vunpack.c.l.b16 %v4010
    %v4027 = vpack.c.b16 %v4020, %v4019
    %v4028 = vpack.c.b16 %v4022, %v4021
    %v4029 = vpack.c.b16 %v4024, %v4023
    %v4030 = vpack.c.b16 %v4026, %v4025
    %v4036 = vsel %vm598, %v4002, 0
    %4038 = vmatpush.bf16.msra.mxu0 0
    %4039 = vmatpush.bf16.msra.mxu0 0
    %4040 = vmatpush.bf16.msra.mxu0 0
    %4041 = vmatpush.bf16.msra.mxu0 0
    %4042 = vmatpush.bf16.msra.mxu0 %v4030
    %4043 = vmatpush.bf16.msra.mxu0 %v4029
    %4044 = vmatpush.bf16.msra.mxu0 %v4028
    %4045 = vmatpush.bf16.msra.mxu0 %v4027
    %4046 = vmatmul.bf16.gmra.mxu0 %v4036
    %v4047 = vpop.f32.mrf.mxu0
    %v4048 = vadd.f32 0.0, %v4047
    %v4049 = vpop.f32.mrf.mxu0
    %4050 = vdwg.mxu0
    %v4051 = vadd.f32 %v4000, %v4048
    %v4052 = vld [vmem:[#allocation2 + $0x74] sm:$0x3]
    %v4053 = vpack.c.bf16 %v4052, %v4052
    %v4054 = vld [vmem:[%s19 + $0x740] sm:$0xf]
    %v4055 = vld [vmem:[%s19 + $0x744] sm:$0xf]
    %v4056 = vld [vmem:[%s19 + $0x748] sm:$0xf]
    %v4057 = vld [vmem:[%s19 + $0x74c] sm:$0xf]
    %v4058 = vld [vmem:[%s19 + $0x750] sm:$0xf]
    %v4059 = vld [vmem:[%s19 + $0x754] sm:$0xf]
    %v4060 = vld [vmem:[%s19 + $0x758] sm:$0xf]
    %v4061 = vld [vmem:[%s19 + $0x75c] sm:$0xf]
    %v4070 = vunpack.c.l.b16 %v4054
    %v4071 = vunpack.c.l.b16 %v4055
    %v4072 = vunpack.c.l.b16 %v4056
    %v4073 = vunpack.c.l.b16 %v4057
    %v4074 = vunpack.c.l.b16 %v4058
    %v4075 = vunpack.c.l.b16 %v4059
    %v4076 = vunpack.c.l.b16 %v4060
    %v4077 = vunpack.c.l.b16 %v4061
    %v4078 = vpack.c.b16 %v4071, %v4070
    %v4079 = vpack.c.b16 %v4073, %v4072
    %v4080 = vpack.c.b16 %v4075, %v4074
    %v4081 = vpack.c.b16 %v4077, %v4076
    %v4087 = vsel %vm598, %v4053, 0
    %4089 = vmatpush.bf16.msra.mxu0 0
    %4090 = vmatpush.bf16.msra.mxu0 0
    %4091 = vmatpush.bf16.msra.mxu0 0
    %4092 = vmatpush.bf16.msra.mxu0 0
    %4093 = vmatpush.bf16.msra.mxu0 %v4081
    %4094 = vmatpush.bf16.msra.mxu0 %v4080
    %4095 = vmatpush.bf16.msra.mxu0 %v4079
    %4096 = vmatpush.bf16.msra.mxu0 %v4078
    %4097 = vmatmul.bf16.gmra.mxu0 %v4087
    %v4098 = vpop.f32.mrf.mxu0
    %v4099 = vadd.f32 0.0, %v4098
    %v4100 = vpop.f32.mrf.mxu0
    %4101 = vdwg.mxu0
    %v4102 = vadd.f32 %v4051, %v4099
    %v4103 = vld [vmem:[#allocation2 + $0x76] sm:$0x3]
    %v4104 = vpack.c.bf16 %v4103, %v4103
    %v4105 = vld [vmem:[%s19 + $0x760] sm:$0xf]
    %v4106 = vld [vmem:[%s19 + $0x764] sm:$0xf]
    %v4107 = vld [vmem:[%s19 + $0x768] sm:$0xf]
    %v4108 = vld [vmem:[%s19 + $0x76c] sm:$0xf]
    %v4109 = vld [vmem:[%s19 + $0x770] sm:$0xf]
    %v4110 = vld [vmem:[%s19 + $0x774] sm:$0xf]
    %v4111 = vld [vmem:[%s19 + $0x778] sm:$0xf]
    %v4112 = vld [vmem:[%s19 + $0x77c] sm:$0xf]
    %v4121 = vunpack.c.l.b16 %v4105
    %v4122 = vunpack.c.l.b16 %v4106
    %v4123 = vunpack.c.l.b16 %v4107
    %v4124 = vunpack.c.l.b16 %v4108
    %v4125 = vunpack.c.l.b16 %v4109
    %v4126 = vunpack.c.l.b16 %v4110
    %v4127 = vunpack.c.l.b16 %v4111
    %v4128 = vunpack.c.l.b16 %v4112
    %v4129 = vpack.c.b16 %v4122, %v4121
    %v4130 = vpack.c.b16 %v4124, %v4123
    %v4131 = vpack.c.b16 %v4126, %v4125
    %v4132 = vpack.c.b16 %v4128, %v4127
    %v4138 = vsel %vm598, %v4104, 0
    %4140 = vmatpush.bf16.msra.mxu0 0
    %4141 = vmatpush.bf16.msra.mxu0 0
    %4142 = vmatpush.bf16.msra.mxu0 0
    %4143 = vmatpush.bf16.msra.mxu0 0
    %4144 = vmatpush.bf16.msra.mxu0 %v4132
    %4145 = vmatpush.bf16.msra.mxu0 %v4131
    %4146 = vmatpush.bf16.msra.mxu0 %v4130
    %4147 = vmatpush.bf16.msra.mxu0 %v4129
    %4148 = vmatmul.bf16.gmra.mxu0 %v4138
    %v4149 = vpop.f32.mrf.mxu0
    %v4150 = vadd.f32 0.0, %v4149
    %v4151 = vpop.f32.mrf.mxu0
    %4152 = vdwg.mxu0
    %v4153 = vadd.f32 %v4102, %v4150
    %v4154 = vld [vmem:[%s21] sm:$0x1]
    %v4156 = vperm.slane %v4154, 0
    %v4158 = vadd.f32 %v4153, %v4156
    %v4159 = vmax.f32 %v4158, 0.0
    %v4160 = vpack.c.bf16 %v4159, %v4159
    %v4161 = vld [vmem:[%s23] sm:$0xf]
    %v4162 = vld [vmem:[%s23 + $0x4] sm:$0xf]
    %v4163 = vld [vmem:[%s23 + $0x8] sm:$0xf]
    %v4164 = vld [vmem:[%s23 + $0xc] sm:$0xf]
    %v4165 = vld [vmem:[%s25] sm:$0x1]
    %v4167 = vperm.slane %v4165, 0
    %v4173 = vunpack.c.l.b16 %v4161
    %v4174 = vunpack.c.l.b16 %v4162
    %v4175 = vunpack.c.l.b16 %v4163
    %v4176 = vunpack.c.l.b16 %v4164
    %v4177 = vpack.c.b16 %v4174, %v4173
    %v4178 = vpack.c.b16 %v4176, %v4175
    %vm4181 = vcmask 261120
    %v4183 = vsel %vm4181, %v4160, 0
    %4185 = vmatpush.bf16.msra.mxu0 0
    %4186 = vmatpush.bf16.msra.mxu0 0
    %4187 = vmatpush.bf16.msra.mxu0 0
    %4188 = vmatpush.bf16.msra.mxu0 0
    %4189 = vmatpush.bf16.msra.mxu0 0
    %4190 = vmatpush.bf16.msra.mxu0 0
    %4191 = vmatpush.bf16.msra.mxu0 %v4178
    %4192 = vmatpush.bf16.msra.mxu0 %v4177
    %4193 = vmatmul.bf16.gmra.mxu0 %v4183
    %v4194 = vpop.f32.mrf.mxu0
    %v4195 = vadd.f32 %v4167, %v4194
    %v4196 = vpop.f32.mrf.mxu0
    %4197 = vdwg.mxu0
    %v4198 = vmax.f32 %v4195, 0.0
    %v4199 = vpack.c.bf16 %v4198, %v4198
    %v4200 = vld [vmem:[%s27] sm:$0xf]
    %v4201 = vld [vmem:[%s27 + $0x4] sm:$0xf]
    %v4202 = vld [vmem:[%s27 + $0x8] sm:$0xf]
    %v4203 = vld [vmem:[%s27 + $0xc] sm:$0xf]
    %v4204 = vld [vmem:[%s29] sm:$0x1]
    %v4206 = vperm.slane %v4204, 0
    %v4212 = vunpack.c.l.b16 %v4200
    %v4213 = vunpack.c.l.b16 %v4201
    %v4214 = vunpack.c.l.b16 %v4202
    %v4215 = vunpack.c.l.b16 %v4203
    %v4216 = vpack.c.b16 %v4213, %v4212
    %v4217 = vpack.c.b16 %v4215, %v4214
    %v4221 = vsel %vm4181, %v4199, 0
    %4223 = vmatpush.bf16.msra.mxu0 0
    %4224 = vmatpush.bf16.msra.mxu0 0
    %4225 = vmatpush.bf16.msra.mxu0 0
    %4226 = vmatpush.bf16.msra.mxu0 0
    %4227 = vmatpush.bf16.msra.mxu0 0
    %4228 = vmatpush.bf16.msra.mxu0 0
    %4229 = vmatpush.bf16.msra.mxu0 %v4217
    %4230 = vmatpush.bf16.msra.mxu0 %v4216
    %4231 = vmatmul.bf16.gmra.mxu0 %v4221
    %v4232 = vpop.f32.mrf.mxu0
    %v4233 = vadd.f32 %v4206, %v4232
    %v4234 = vpop.f32.mrf.mxu0
    %4235 = vdwg.mxu0
    %vm4236 = vcmask 25600
    %v4237 = vsel %vm4236, %v4233, -inf
    %4238 = vmax.xlane.f32.xlu0 %v4237
    %v4239 = vpop.xlane.xlu0 %4238
    %v4240 = vsub.f32 %v4233, %v4239
    %v4241 = vmul.f32 %v4240, 1.442695
    %v4242 = vpow.pop %v4241
    %v4243 = vsel %vm4236, %v4242, 0.0
    %4244 = vadd.xlane.f32.xlu0 %v4243
    %v4245 = vpop.xlane.xlu0 %4244
    %v4246 = vrcp.pop %v4245
    %v4247 = vmul.f32 %v4245, %v4246
    %v4248 = vsub.f32 1.0, %v4247
    %v4249 = vmul.f32 %v4246, %v4248
    %v4250 = vadd.f32 %v4246, %v4249
    %vm4251 = vweird.f32 %v4245
    %vm4252 = vweird.f32 %v4246
    %vm4253 = vmor %vm4251, %vm4252
    %v4254 = vsel %vm4253, %v4246, %v4250
    %v4255 = vand.u32 2147483647, %v4245
    %vm4256 = vcmp.eq.f32.partialorder %v4255, 8.507059e+37
    %v4257 = vand.u32 %v4245, 2147483648
    %v4258 = vor.u32 1.1754944e-38, %v4257
    %v4259 = vsel %vm4256, %v4258, %v4254
    %v4260 = vmul.f32 %v4242, %v4259
    %v4261 = vadd.f32 %v4260, 0.0
    %v4262 = vld [vmem:[%s31] sm:$0xf]
    %v4263 = vld [vmem:[%s31 + $0x4] sm:$0xf]
    %v4264 = vld [vmem:[%s31 + $0x8] sm:$0xf]
    %v4265 = vld [vmem:[%s31 + $0xc] sm:$0xf]
    %v4266 = vld [vmem:[%s31 + $0x10] sm:$0xf]
    %v4267 = vld [vmem:[%s31 + $0x14] sm:$0xf]
    %v4268 = vld [vmem:[%s31 + $0x18] sm:$0xf]
    %v4269 = vld [vmem:[%s31 + $0x1c] sm:$0x3]
    %v4278 = vunpack.c.l.b16 %v4262
    %v4279 = vunpack.c.l.b16 %v4263
    %v4280 = vunpack.c.l.b16 %v4264
    %v4281 = vunpack.c.l.b16 %v4265
    %v4282 = vunpack.c.l.b16 %v4266
    %v4283 = vunpack.c.l.b16 %v4267
    %v4284 = vunpack.c.l.b16 %v4268
    %v4285 = vunpack.c.l.b16 %v4269
    %v4286 = vpack.c.b16 %v4279, %v4278
    %v4287 = vpack.c.b16 %v4281, %v4280
    %v4288 = vpack.c.b16 %v4283, %v4282
    %v4289 = vpack.c.b16 %v4285, %v4284
    %v4291 = vsel %vm477, %v4286, 0
    %v4294 = vsel %vm477, %v4287, 0
    %v4297 = vsel %vm477, %v4288, 0
    %v4300 = vsel %vm477, %v4289, 0
    %4302 = vmatpush.bf16.msra.mxu0 %v504
    %4303 = vmatpush.bf16.msra.mxu0 %v422
    %4304 = vmatpush.bf16.msra.mxu0 %v421
    %4305 = vmatpush.bf16.msra.mxu0 %v420
    %4306 = vmatpush.bf16.msra.mxu0 %v419
    %4307 = vmatpush.bf16.msra.mxu0 %v418
    %4308 = vmatpush.bf16.msra.mxu0 %v417
    %4309 = vmatpush.bf16.msra.mxu0 %v416
    %4310 = vmatmul.bf16.gmra.mxu0 %v4291
    %v4311 = vpop.f32.mrf.mxu0
    %v4312 = vadd.f32 0.0, %v4311
    %v4313 = vpop.f32.mrf.mxu0
    %v4314 = vadd.f32 0.0, %v4313
    %4315 = vmatmul.bf16.gmra.mxu0 %v4294
    %v4316 = vpop.f32.mrf.mxu0
    %v4317 = vadd.f32 0.0, %v4316
    %v4318 = vpop.f32.mrf.mxu0
    %v4319 = vadd.f32 0.0, %v4318
    %4320 = vmatmul.bf16.gmra.mxu0 %v4297
    %v4321 = vpop.f32.mrf.mxu0
    %v4322 = vadd.f32 0.0, %v4321
    %v4323 = vpop.f32.mrf.mxu0
    %v4324 = vadd.f32 0.0, %v4323
    %4325 = vmatmul.bf16.gmra.mxu0 %v4300
    %v4326 = vpop.f32.mrf.mxu0
    %v4327 = vadd.f32 0.0, %v4326
    %v4328 = vpop.f32.mrf.mxu0
    %v4329 = vadd.f32 0.0, %v4328
    %4330 = vdwg.mxu0
    %v4331 = vpack.c.bf16 %v4314, %v4312
    %v4332 = vpack.c.bf16 %v4319, %v4317
    %v4333 = vpack.c.bf16 %v4324, %v4322
    %v4334 = vpack.c.bf16 %v4329, %v4327
    %v4335 = vld [vmem:[%s33] sm:$0xf]
    %v4336 = vld [vmem:[%s33 + $0x4] sm:$0xf]
    %v4337 = vld [vmem:[%s33 + $0x8] sm:$0xf]
    %v4338 = vld [vmem:[%s33 + $0xc] sm:$0xf]
    %v4339 = vld [vmem:[%s33 + $0x10] sm:$0xf]
    %v4340 = vld [vmem:[%s33 + $0x14] sm:$0xf]
    %v4341 = vld [vmem:[%s33 + $0x18] sm:$0xf]
    %v4342 = vld [vmem:[%s33 + $0x1c] sm:$0xf]
    %s4343 = scalar_lea.vmem %s31, 32
    %v4344 = vld [vmem:[%s4343] sm:$0xf]
    %v4345 = vld [vmem:[%s4343 + $0x4] sm:$0xf]
    %v4346 = vld [vmem:[%s4343 + $0x8] sm:$0xf]
    %v4347 = vld [vmem:[%s4343 + $0xc] sm:$0xf]
    %v4348 = vld [vmem:[%s4343 + $0x10] sm:$0xf]
    %v4349 = vld [vmem:[%s4343 + $0x14] sm:$0xf]
    %v4350 = vld [vmem:[%s4343 + $0x18] sm:$0xf]
    %v4351 = vld [vmem:[%s4343 + $0x1c] sm:$0x3]
    %v4360 = vunpack.c.l.b16 %v4344
    %v4361 = vunpack.c.l.b16 %v4345
    %v4362 = vunpack.c.l.b16 %v4346
    %v4363 = vunpack.c.l.b16 %v4347
    %v4364 = vunpack.c.l.b16 %v4348
    %v4365 = vunpack.c.l.b16 %v4349
    %v4366 = vunpack.c.l.b16 %v4350
    %v4367 = vunpack.c.l.b16 %v4351
    %v4368 = vpack.c.b16 %v4361, %v4360
    %v4369 = vpack.c.b16 %v4363, %v4362
    %v4370 = vpack.c.b16 %v4365, %v4364
    %v4371 = vpack.c.b16 %v4367, %v4366
    %v4373 = vsel %vm477, %v4368, 0
    %v4376 = vsel %vm477, %v4369, 0
    %v4379 = vsel %vm477, %v4370, 0
    %v4382 = vsel %vm477, %v4371, 0
    %4384 = vmatpush.bf16.msra.mxu0 %v504
    %4385 = vmatpush.bf16.msra.mxu0 %v422
    %4386 = vmatpush.bf16.msra.mxu0 %v421
    %4387 = vmatpush.bf16.msra.mxu0 %v420
    %4388 = vmatpush.bf16.msra.mxu0 %v419
    %4389 = vmatpush.bf16.msra.mxu0 %v418
    %4390 = vmatpush.bf16.msra.mxu0 %v417
    %4391 = vmatpush.bf16.msra.mxu0 %v416
    %4392 = vmatmul.bf16.gmra.mxu0 %v4373
    %v4393 = vpop.f32.mrf.mxu0
    %v4394 = vadd.f32 0.0, %v4393
    %v4395 = vpop.f32.mrf.mxu0
    %v4396 = vadd.f32 0.0, %v4395
    %4397 = vmatmul.bf16.gmra.mxu0 %v4376
    %v4398 = vpop.f32.mrf.mxu0
    %v4399 = vadd.f32 0.0, %v4398
    %v4400 = vpop.f32.mrf.mxu0
    %v4401 = vadd.f32 0.0, %v4400
    %4402 = vmatmul.bf16.gmra.mxu0 %v4379
    %v4403 = vpop.f32.mrf.mxu0
    %v4404 = vadd.f32 0.0, %v4403
    %v4405 = vpop.f32.mrf.mxu0
    %v4406 = vadd.f32 0.0, %v4405
    %4407 = vmatmul.bf16.gmra.mxu0 %v4382
    %v4408 = vpop.f32.mrf.mxu0
    %v4409 = vadd.f32 0.0, %v4408
    %v4410 = vpop.f32.mrf.mxu0
    %v4411 = vadd.f32 0.0, %v4410
    %4412 = vdwg.mxu0
    %v4413 = vpack.c.bf16 %v4396, %v4394
    %v4414 = vpack.c.bf16 %v4401, %v4399
    %v4415 = vpack.c.bf16 %v4406, %v4404
    %v4416 = vpack.c.bf16 %v4411, %v4409
    %s4417 = scalar_lea.vmem %s33, 32
    %v4418 = vld [vmem:[%s4417] sm:$0xf]
    %v4419 = vld [vmem:[%s4417 + $0x4] sm:$0xf]
    %v4420 = vld [vmem:[%s4417 + $0x8] sm:$0xf]
    %v4421 = vld [vmem:[%s4417 + $0xc] sm:$0xf]
    %v4422 = vld [vmem:[%s4417 + $0x10] sm:$0xf]
    %v4423 = vld [vmem:[%s4417 + $0x14] sm:$0xf]
    %v4424 = vld [vmem:[%s4417 + $0x18] sm:$0xf]
    %v4425 = vld [vmem:[%s4417 + $0x1c] sm:$0xf]
    %v4434 = vunpack.c.l.b16 %v4418
    %v4435 = vunpack.c.l.b16 %v4419
    %v4436 = vunpack.c.l.b16 %v4420
    %v4437 = vunpack.c.l.b16 %v4421
    %v4438 = vunpack.c.l.b16 %v4422
    %v4439 = vunpack.c.l.b16 %v4423
    %v4440 = vunpack.c.l.b16 %v4424
    %v4441 = vunpack.c.l.b16 %v4425
    %v4442 = vpack.c.b16 %v4435, %v4434
    %v4443 = vpack.c.b16 %v4437, %v4436
    %v4444 = vpack.c.b16 %v4439, %v4438
    %v4445 = vpack.c.b16 %v4441, %v4440
    %v4451 = vsel %vm598, %v4413, 0
    %v4454 = vsel %vm598, %v4414, 0
    %v4457 = vsel %vm598, %v4415, 0
    %v4460 = vsel %vm598, %v4416, 0
    %4462 = vmatpush.bf16.msra.mxu0 0
    %4463 = vmatpush.bf16.msra.mxu0 0
    %4464 = vmatpush.bf16.msra.mxu0 0
    %4465 = vmatpush.bf16.msra.mxu0 0
    %4466 = vmatpush.bf16.msra.mxu0 %v4445
    %4467 = vmatpush.bf16.msra.mxu0 %v4444
    %4468 = vmatpush.bf16.msra.mxu0 %v4443
    %4469 = vmatpush.bf16.msra.mxu0 %v4442
    %4470 = vmatmul.bf16.gmra.mxu0 %v4451
    %v4471 = vpop.f32.mrf.mxu0
    %v4472 = vadd.f32 0.0, %v4471
    %v4473 = vpop.f32.mrf.mxu0
    %v4474 = vadd.f32 0.0, %v4473
    %4475 = vmatmul.bf16.gmra.mxu0 %v4454
    %v4476 = vpop.f32.mrf.mxu0
    %v4477 = vadd.f32 0.0, %v4476
    %v4478 = vpop.f32.mrf.mxu0
    %v4479 = vadd.f32 0.0, %v4478
    %4480 = vmatmul.bf16.gmra.mxu0 %v4457
    %v4481 = vpop.f32.mrf.mxu0
    %v4482 = vadd.f32 0.0, %v4481
    %v4483 = vpop.f32.mrf.mxu0
    %v4484 = vadd.f32 0.0, %v4483
    %4485 = vmatmul.bf16.gmra.mxu0 %v4460
    %v4486 = vpop.f32.mrf.mxu0
    %v4487 = vadd.f32 0.0, %v4486
    %v4488 = vpop.f32.mrf.mxu0
    %v4489 = vadd.f32 0.0, %v4488
    %4490 = vdwg.mxu0
    %v4499 = vunpack.c.l.b16 %v4335
    %v4500 = vunpack.c.l.b16 %v4336
    %v4501 = vunpack.c.l.b16 %v4337
    %v4502 = vunpack.c.l.b16 %v4338
    %v4503 = vunpack.c.l.b16 %v4339
    %v4504 = vunpack.c.l.b16 %v4340
    %v4505 = vunpack.c.l.b16 %v4341
    %v4506 = vunpack.c.l.b16 %v4342
    %v4507 = vpack.c.b16 %v4500, %v4499
    %v4508 = vpack.c.b16 %v4502, %v4501
    %v4509 = vpack.c.b16 %v4504, %v4503
    %v4510 = vpack.c.b16 %v4506, %v4505
    %v4516 = vsel %vm598, %v4331, 0
    %v4519 = vsel %vm598, %v4332, 0
    %v4522 = vsel %vm598, %v4333, 0
    %v4525 = vsel %vm598, %v4334, 0
    %4527 = vmatpush.bf16.msra.mxu0 0
    %4528 = vmatpush.bf16.msra.mxu0 0
    %4529 = vmatpush.bf16.msra.mxu0 0
    %4530 = vmatpush.bf16.msra.mxu0 0
    %4531 = vmatpush.bf16.msra.mxu0 %v4510
    %4532 = vmatpush.bf16.msra.mxu0 %v4509
    %4533 = vmatpush.bf16.msra.mxu0 %v4508
    %4534 = vmatpush.bf16.msra.mxu0 %v4507
    %4535 = vmatmul.bf16.gmra.mxu0 %v4516
    %v4536 = vpop.f32.mrf.mxu0
    %v4537 = vadd.f32 %v4472, %v4536
    %v4538 = vpop.f32.mrf.mxu0
    %v4539 = vadd.f32 %v4474, %v4538
    %4540 = vmatmul.bf16.gmra.mxu0 %v4519
    %v4541 = vpop.f32.mrf.mxu0
    %v4542 = vadd.f32 %v4477, %v4541
    %v4543 = vpop.f32.mrf.mxu0
    %v4544 = vadd.f32 %v4479, %v4543
    %4545 = vmatmul.bf16.gmra.mxu0 %v4522
    %v4546 = vpop.f32.mrf.mxu0
    %v4547 = vadd.f32 %v4482, %v4546
    %v4548 = vpop.f32.mrf.mxu0
    %v4549 = vadd.f32 %v4484, %v4548
    %4550 = vmatmul.bf16.gmra.mxu0 %v4525
    %v4551 = vpop.f32.mrf.mxu0
    %v4552 = vadd.f32 %v4487, %v4551
    %v4553 = vpop.f32.mrf.mxu0
    %v4554 = vadd.f32 %v4489, %v4553
    %4555 = vdwg.mxu0
    %s4556 = scalar_lea.vmem %s31, 64
    %v4557 = vld [vmem:[%s4556] sm:$0xf]
    %v4558 = vld [vmem:[%s4556 + $0x4] sm:$0xf]
    %v4559 = vld [vmem:[%s4556 + $0x8] sm:$0xf]
    %v4560 = vld [vmem:[%s4556 + $0xc] sm:$0xf]
    %v4561 = vld [vmem:[%s4556 + $0x10] sm:$0xf]
    %v4562 = vld [vmem:[%s4556 + $0x14] sm:$0xf]
    %v4563 = vld [vmem:[%s4556 + $0x18] sm:$0xf]
    %v4564 = vld [vmem:[%s4556 + $0x1c] sm:$0x3]
    %v4573 = vunpack.c.l.b16 %v4557
    %v4574 = vunpack.c.l.b16 %v4558
    %v4575 = vunpack.c.l.b16 %v4559
    %v4576 = vunpack.c.l.b16 %v4560
    %v4577 = vunpack.c.l.b16 %v4561
    %v4578 = vunpack.c.l.b16 %v4562
    %v4579 = vunpack.c.l.b16 %v4563
    %v4580 = vunpack.c.l.b16 %v4564
    %v4581 = vpack.c.b16 %v4574, %v4573
    %v4582 = vpack.c.b16 %v4576, %v4575
    %v4583 = vpack.c.b16 %v4578, %v4577
    %v4584 = vpack.c.b16 %v4580, %v4579
    %v4586 = vsel %vm477, %v4581, 0
    %v4589 = vsel %vm477, %v4582, 0
    %v4592 = vsel %vm477, %v4583, 0
    %v4595 = vsel %vm477, %v4584, 0
    %4597 = vmatpush.bf16.msra.mxu0 %v504
    %4598 = vmatpush.bf16.msra.mxu0 %v422
    %4599 = vmatpush.bf16.msra.mxu0 %v421
    %4600 = vmatpush.bf16.msra.mxu0 %v420
    %4601 = vmatpush.bf16.msra.mxu0 %v419
    %4602 = vmatpush.bf16.msra.mxu0 %v418
    %4603 = vmatpush.bf16.msra.mxu0 %v417
    %4604 = vmatpush.bf16.msra.mxu0 %v416
    %4605 = vmatmul.bf16.gmra.mxu0 %v4586
    %v4606 = vpop.f32.mrf.mxu0
    %v4607 = vadd.f32 0.0, %v4606
    %v4608 = vpop.f32.mrf.mxu0
    %v4609 = vadd.f32 0.0, %v4608
    %4610 = vmatmul.bf16.gmra.mxu0 %v4589
    %v4611 = vpop.f32.mrf.mxu0
    %v4612 = vadd.f32 0.0, %v4611
    %v4613 = vpop.f32.mrf.mxu0
    %v4614 = vadd.f32 0.0, %v4613
    %4615 = vmatmul.bf16.gmra.mxu0 %v4592
    %v4616 = vpop.f32.mrf.mxu0
    %v4617 = vadd.f32 0.0, %v4616
    %v4618 = vpop.f32.mrf.mxu0
    %v4619 = vadd.f32 0.0, %v4618
    %4620 = vmatmul.bf16.gmra.mxu0 %v4595
    %v4621 = vpop.f32.mrf.mxu0
    %v4622 = vadd.f32 0.0, %v4621
    %v4623 = vpop.f32.mrf.mxu0
    %v4624 = vadd.f32 0.0, %v4623
    %4625 = vdwg.mxu0
    %v4626 = vpack.c.bf16 %v4609, %v4607
    %v4627 = vpack.c.bf16 %v4614, %v4612
    %v4628 = vpack.c.bf16 %v4619, %v4617
    %v4629 = vpack.c.bf16 %v4624, %v4622
    %s4630 = scalar_lea.vmem %s33, 64
    %v4631 = vld [vmem:[%s4630] sm:$0xf]
    %v4632 = vld [vmem:[%s4630 + $0x4] sm:$0xf]
    %v4633 = vld [vmem:[%s4630 + $0x8] sm:$0xf]
    %v4634 = vld [vmem:[%s4630 + $0xc] sm:$0xf]
    %v4635 = vld [vmem:[%s4630 + $0x10] sm:$0xf]
    %v4636 = vld [vmem:[%s4630 + $0x14] sm:$0xf]
    %v4637 = vld [vmem:[%s4630 + $0x18] sm:$0xf]
    %v4638 = vld [vmem:[%s4630 + $0x1c] sm:$0xf]
    %v4647 = vunpack.c.l.b16 %v4631
    %v4648 = vunpack.c.l.b16 %v4632
    %v4649 = vunpack.c.l.b16 %v4633
    %v4650 = vunpack.c.l.b16 %v4634
    %v4651 = vunpack.c.l.b16 %v4635
    %v4652 = vunpack.c.l.b16 %v4636
    %v4653 = vunpack.c.l.b16 %v4637
    %v4654 = vunpack.c.l.b16 %v4638
    %v4655 = vpack.c.b16 %v4648, %v4647
    %v4656 = vpack.c.b16 %v4650, %v4649
    %v4657 = vpack.c.b16 %v4652, %v4651
    %v4658 = vpack.c.b16 %v4654, %v4653
    %v4664 = vsel %vm598, %v4626, 0
    %v4667 = vsel %vm598, %v4627, 0
    %v4670 = vsel %vm598, %v4628, 0
    %v4673 = vsel %vm598, %v4629, 0
    %4675 = vmatpush.bf16.msra.mxu0 0
    %4676 = vmatpush.bf16.msra.mxu0 0
    %4677 = vmatpush.bf16.msra.mxu0 0
    %4678 = vmatpush.bf16.msra.mxu0 0
    %4679 = vmatpush.bf16.msra.mxu0 %v4658
    %4680 = vmatpush.bf16.msra.mxu0 %v4657
    %4681 = vmatpush.bf16.msra.mxu0 %v4656
    %4682 = vmatpush.bf16.msra.mxu0 %v4655
    %4683 = vmatmul.bf16.gmra.mxu0 %v4664
    %v4684 = vpop.f32.mrf.mxu0
    %v4685 = vadd.f32 0.0, %v4684
    %v4686 = vpop.f32.mrf.mxu0
    %v4687 = vadd.f32 0.0, %v4686
    %4688 = vmatmul.bf16.gmra.mxu0 %v4667
    %v4689 = vpop.f32.mrf.mxu0
    %v4690 = vadd.f32 0.0, %v4689
    %v4691 = vpop.f32.mrf.mxu0
    %v4692 = vadd.f32 0.0, %v4691
    %4693 = vmatmul.bf16.gmra.mxu0 %v4670
    %v4694 = vpop.f32.mrf.mxu0
    %v4695 = vadd.f32 0.0, %v4694
    %v4696 = vpop.f32.mrf.mxu0
    %v4697 = vadd.f32 0.0, %v4696
    %4698 = vmatmul.bf16.gmra.mxu0 %v4673
    %v4699 = vpop.f32.mrf.mxu0
    %v4700 = vadd.f32 0.0, %v4699
    %v4701 = vpop.f32.mrf.mxu0
    %v4702 = vadd.f32 0.0, %v4701
    %4703 = vdwg.mxu0
    %v4704 = vadd.f32 %v4537, %v4685
    %v4705 = vadd.f32 %v4539, %v4687
    %v4706 = vadd.f32 %v4542, %v4690
    %v4707 = vadd.f32 %v4544, %v4692
    %v4708 = vadd.f32 %v4547, %v4695
    %v4709 = vadd.f32 %v4549, %v4697
    %v4710 = vadd.f32 %v4552, %v4700
    %v4711 = vadd.f32 %v4554, %v4702
    %v4712 = vld [vmem:[%s35] sm:$0x1]
    %v4714 = vperm.slane %v4712, 0
    %v4716 = vadd.f32 %v4704, %v4714
    %v4717 = vadd.f32 %v4705, %v4714
    %v4718 = vadd.f32 %v4706, %v4714
    %v4719 = vadd.f32 %v4707, %v4714
    %v4720 = vadd.f32 %v4708, %v4714
    %v4721 = vadd.f32 %v4709, %v4714
    %v4722 = vadd.f32 %v4710, %v4714
    %v4723 = vadd.f32 %v4711, %v4714
    %vm4724 = vcmp.gt.f32.partialorder %v4716, 0.0
    %vm4725 = vcmp.gt.f32.partialorder %v4717, 0.0
    %vm4726 = vcmp.gt.f32.partialorder %v4718, 0.0
    %vm4727 = vcmp.gt.f32.partialorder %v4719, 0.0
    %vm4728 = vcmp.gt.f32.partialorder %v4720, 0.0
    %vm4729 = vcmp.gt.f32.partialorder %v4721, 0.0
    %vm4730 = vcmp.gt.f32.partialorder %v4722, 0.0
    %vm4731 = vcmp.gt.f32.partialorder %v4723, 0.0
    %v4732 = vmul.f32 %v4716, 1.442695
    %v4733 = vpow.pop %v4732
    %v4734 = vmul.f32 %v4717, 1.442695
    %v4735 = vpow.pop %v4734
    %v4736 = vmul.f32 %v4718, 1.442695
    %v4737 = vpow.pop %v4736
    %v4738 = vmul.f32 %v4719, 1.442695
    %v4739 = vpow.pop %v4738
    %v4740 = vmul.f32 %v4720, 1.442695
    %v4741 = vpow.pop %v4740
    %v4742 = vmul.f32 %v4721, 1.442695
    %v4743 = vpow.pop %v4742
    %v4744 = vmul.f32 %v4722, 1.442695
    %v4745 = vpow.pop %v4744
    %v4746 = vmul.f32 %v4723, 1.442695
    %v4747 = vpow.pop %v4746
    %v4748 = vsub.f32 %v4733, 1.0
    %v4749 = vsub.f32 %v4735, 1.0
    %v4750 = vsub.f32 %v4737, 1.0
    %v4751 = vsub.f32 %v4739, 1.0
    %v4752 = vsub.f32 %v4741, 1.0
    %v4753 = vsub.f32 %v4743, 1.0
    %v4754 = vsub.f32 %v4745, 1.0
    %v4755 = vsub.f32 %v4747, 1.0
    %v4756 = vsel %vm4724, %v4716, %v4748
    %v4757 = vsel %vm4725, %v4717, %v4749
    %v4758 = vsel %vm4726, %v4718, %v4750
    %v4759 = vsel %vm4727, %v4719, %v4751
    %v4760 = vsel %vm4728, %v4720, %v4752
    %v4761 = vsel %vm4729, %v4721, %v4753
    %v4762 = vsel %vm4730, %v4722, %v4754
    %v4763 = vsel %vm4731, %v4723, %v4755
    %v4764 = vpack.c.bf16 %v4757, %v4756
    %v4765 = vpack.c.bf16 %v4759, %v4758
    %v4766 = vpack.c.bf16 %v4761, %v4760
    %v4767 = vpack.c.bf16 %v4763, %v4762
    %v4768 = vld [vmem:[%s37] sm:$0xf]
    %v4769 = vld [vmem:[%s37 + $0x4] sm:$0xf]
    %v4770 = vld [vmem:[%s37 + $0x8] sm:$0xf]
    %v4771 = vld [vmem:[%s37 + $0xc] sm:$0x7]
    %v4776 = vunpack.c.l.b16 %v4768
    %v4777 = vunpack.c.l.b16 %v4769
    %v4778 = vunpack.c.l.b16 %v4770
    %v4779 = vunpack.c.l.b16 %v4771
    %v4780 = vpack.c.b16 %v4777, %v4776
    %v4781 = vpack.c.b16 %v4779, %v4778
    %vm4782 = vcmask 490496
    %v4784 = vsel %vm4782, %v4780, 0
    %v4787 = vsel %vm4782, %v4781, 0
    %vm4789 = vcmask 1045504
    %v4791 = vsel %vm4789, %v4767, 0
    %4793 = vmatpush.bf16.msra.mxu0 0
    %4794 = vmatpush.bf16.msra.mxu0 0
    %4795 = vmatpush.bf16.msra.mxu0 0
    %4796 = vmatpush.bf16.msra.mxu0 0
    %4797 = vmatpush.bf16.msra.mxu0 %v4791
    %4798 = vmatpush.bf16.msra.mxu0 %v4766
    %4799 = vmatpush.bf16.msra.mxu0 %v4765
    %4800 = vmatpush.bf16.msra.mxu0 %v4764
    %4801 = vmatmul.bf16.gmra.mxu0 %v4784
    %v4802 = vpop.f32.mrf.mxu0
    %v4803 = vadd.f32 0.0, %v4802
    %v4804 = vpop.f32.mrf.mxu0
    %v4805 = vadd.f32 0.0, %v4804
    %4806 = vmatmul.bf16.gmra.mxu0 %v4787
    %v4807 = vpop.f32.mrf.mxu0
    %v4808 = vadd.f32 0.0, %v4807
    %v4809 = vpop.f32.mrf.mxu0
    %v4810 = vadd.f32 0.0, %v4809
    %4811 = vdwg.mxu0
    %v4812 = vpack.c.bf16 %v4805, %v4803
    %v4813 = vpack.c.bf16 %v4810, %v4808
    %v4814 = vld [vmem:[%s39] sm:$0xf]
    %v4815 = vld [vmem:[%s39 + $0x4] sm:$0xf]
    %v4816 = vld [vmem:[%s39 + $0x8] sm:$0xf]
    %v4817 = vld [vmem:[%s39 + $0xc] sm:$0xf]
    %v4818 = vld [vmem:[%s39 + $0x10] sm:$0xf]
    %v4819 = vld [vmem:[%s39 + $0x14] sm:$0xf]
    %v4820 = vld [vmem:[%s39 + $0x18] sm:$0xf]
    %v4821 = vld [vmem:[%s39 + $0x1c] sm:$0xf]
    %v4822 = vld [vmem:[%s39 + $0x20] sm:$0xf]
    %v4823 = vld [vmem:[%s39 + $0x24] sm:$0xf]
    %v4824 = vld [vmem:[%s39 + $0x28] sm:$0xf]
    %v4825 = vld [vmem:[%s39 + $0x2c] sm:$0xf]
    %v4826 = vld [vmem:[%s39 + $0x30] sm:$0xf]
    %v4827 = vld [vmem:[%s39 + $0x34] sm:$0xf]
    %v4828 = vld [vmem:[%s39 + $0x38] sm:$0xf]
    %v4829 = vld [vmem:[%s39 + $0x3c] sm:$0xf]
    %s4830 = scalar_lea.vmem %s37, 16
    %v4831 = vld [vmem:[%s4830] sm:$0xf]
    %v4832 = vld [vmem:[%s4830 + $0x4] sm:$0xf]
    %v4833 = vld [vmem:[%s4830 + $0x8] sm:$0xf]
    %v4834 = vld [vmem:[%s4830 + $0xc] sm:$0x7]
    %v4839 = vunpack.c.l.b16 %v4831
    %v4840 = vunpack.c.l.b16 %v4832
    %v4841 = vunpack.c.l.b16 %v4833
    %v4842 = vunpack.c.l.b16 %v4834
    %v4843 = vpack.c.b16 %v4840, %v4839
    %v4844 = vpack.c.b16 %v4842, %v4841
    %v4846 = vsel %vm4782, %v4843, 0
    %v4849 = vsel %vm4782, %v4844, 0
    %4851 = vmatpush.bf16.msra.mxu0 0
    %4852 = vmatpush.bf16.msra.mxu0 0
    %4853 = vmatpush.bf16.msra.mxu0 0
    %4854 = vmatpush.bf16.msra.mxu0 0
    %4855 = vmatpush.bf16.msra.mxu0 %v4791
    %4856 = vmatpush.bf16.msra.mxu0 %v4766
    %4857 = vmatpush.bf16.msra.mxu0 %v4765
    %4858 = vmatpush.bf16.msra.mxu0 %v4764
    %4859 = vmatmul.bf16.gmra.mxu0 %v4846
    %v4860 = vpop.f32.mrf.mxu0
    %v4861 = vadd.f32 0.0, %v4860
    %v4862 = vpop.f32.mrf.mxu0
    %v4863 = vadd.f32 0.0, %v4862
    %4864 = vmatmul.bf16.gmra.mxu0 %v4849
    %v4865 = vpop.f32.mrf.mxu0
    %v4866 = vadd.f32 0.0, %v4865
    %v4867 = vpop.f32.mrf.mxu0
    %v4868 = vadd.f32 0.0, %v4867
    %4869 = vdwg.mxu0
    %v4870 = vpack.c.bf16 %v4863, %v4861
    %v4871 = vpack.c.bf16 %v4868, %v4866
    %s4872 = scalar_lea.vmem %s39, 64
    %v4873 = vld [vmem:[%s4872] sm:$0xf]
    %v4874 = vld [vmem:[%s4872 + $0x4] sm:$0xf]
    %v4875 = vld [vmem:[%s4872 + $0x8] sm:$0xf]
    %v4876 = vld [vmem:[%s4872 + $0xc] sm:$0xf]
    %v4877 = vld [vmem:[%s4872 + $0x10] sm:$0xf]
    %v4878 = vld [vmem:[%s4872 + $0x14] sm:$0xf]
    %v4879 = vld [vmem:[%s4872 + $0x18] sm:$0xf]
    %v4880 = vld [vmem:[%s4872 + $0x1c] sm:$0xf]
    %v4881 = vld [vmem:[%s4872 + $0x20] sm:$0xf]
    %v4882 = vld [vmem:[%s4872 + $0x24] sm:$0xf]
    %v4883 = vld [vmem:[%s4872 + $0x28] sm:$0xf]
    %v4884 = vld [vmem:[%s4872 + $0x2c] sm:$0xf]
    %v4885 = vld [vmem:[%s4872 + $0x30] sm:$0xf]
    %v4886 = vld [vmem:[%s4872 + $0x34] sm:$0xf]
    %v4887 = vld [vmem:[%s4872 + $0x38] sm:$0xf]
    %v4888 = vld [vmem:[%s4872 + $0x3c] sm:$0xf]
    %v4905 = vunpack.c.l.b16 %v4873
    %v4906 = vunpack.c.l.b16 %v4874
    %v4907 = vunpack.c.l.b16 %v4875
    %v4908 = vunpack.c.l.b16 %v4876
    %v4909 = vunpack.c.l.b16 %v4877
    %v4910 = vunpack.c.l.b16 %v4878
    %v4911 = vunpack.c.l.b16 %v4879
    %v4912 = vunpack.c.l.b16 %v4880
    %v4913 = vunpack.c.l.b16 %v4881
    %v4914 = vunpack.c.l.b16 %v4882
    %v4915 = vunpack.c.l.b16 %v4883
    %v4916 = vunpack.c.l.b16 %v4884
    %v4917 = vunpack.c.l.b16 %v4885
    %v4918 = vunpack.c.l.b16 %v4886
    %v4919 = vunpack.c.l.b16 %v4887
    %v4920 = vunpack.c.l.b16 %v4888
    %v4921 = vpack.c.b16 %v4906, %v4905
    %v4922 = vpack.c.b16 %v4908, %v4907
    %v4923 = vpack.c.b16 %v4910, %v4909
    %v4924 = vpack.c.b16 %v4912, %v4911
    %v4925 = vpack.c.b16 %v4914, %v4913
    %v4926 = vpack.c.b16 %v4916, %v4915
    %v4927 = vpack.c.b16 %v4918, %v4917
    %v4928 = vpack.c.b16 %v4920, %v4919
    %4937 = vmatpush.bf16.msra.mxu0 %v4928
    %4938 = vmatpush.bf16.msra.mxu0 %v4927
    %4939 = vmatpush.bf16.msra.mxu0 %v4926
    %4940 = vmatpush.bf16.msra.mxu0 %v4925
    %4941 = vmatpush.bf16.msra.mxu0 %v4924
    %4942 = vmatpush.bf16.msra.mxu0 %v4923
    %4943 = vmatpush.bf16.msra.mxu0 %v4922
    %4944 = vmatpush.bf16.msra.mxu0 %v4921
    %4945 = vmatmul.bf16.gmra.mxu0 %v4870
    %v4946 = vpop.f32.mrf.mxu0
    %v4947 = vadd.f32 0.0, %v4946
    %v4948 = vpop.f32.mrf.mxu0
    %v4949 = vadd.f32 0.0, %v4948
    %4950 = vmatmul.bf16.gmra.mxu0 %v4871
    %v4951 = vpop.f32.mrf.mxu0
    %v4952 = vadd.f32 0.0, %v4951
    %v4953 = vpop.f32.mrf.mxu0
    %v4954 = vadd.f32 0.0, %v4953
    %4955 = vdwg.mxu0
    %v4972 = vunpack.c.l.b16 %v4814
    %v4973 = vunpack.c.l.b16 %v4815
    %v4974 = vunpack.c.l.b16 %v4816
    %v4975 = vunpack.c.l.b16 %v4817
    %v4976 = vunpack.c.l.b16 %v4818
    %v4977 = vunpack.c.l.b16 %v4819
    %v4978 = vunpack.c.l.b16 %v4820
    %v4979 = vunpack.c.l.b16 %v4821
    %v4980 = vunpack.c.l.b16 %v4822
    %v4981 = vunpack.c.l.b16 %v4823
    %v4982 = vunpack.c.l.b16 %v4824
    %v4983 = vunpack.c.l.b16 %v4825
    %v4984 = vunpack.c.l.b16 %v4826
    %v4985 = vunpack.c.l.b16 %v4827
    %v4986 = vunpack.c.l.b16 %v4828
    %v4987 = vunpack.c.l.b16 %v4829
    %v4988 = vpack.c.b16 %v4973, %v4972
    %v4989 = vpack.c.b16 %v4975, %v4974
    %v4990 = vpack.c.b16 %v4977, %v4976
    %v4991 = vpack.c.b16 %v4979, %v4978
    %v4992 = vpack.c.b16 %v4981, %v4980
    %v4993 = vpack.c.b16 %v4983, %v4982
    %v4994 = vpack.c.b16 %v4985, %v4984
    %v4995 = vpack.c.b16 %v4987, %v4986
    %5004 = vmatpush.bf16.msra.mxu0 %v4995
    %5005 = vmatpush.bf16.msra.mxu0 %v4994
    %5006 = vmatpush.bf16.msra.mxu0 %v4993
    %5007 = vmatpush.bf16.msra.mxu0 %v4992
    %5008 = vmatpush.bf16.msra.mxu0 %v4991
    %5009 = vmatpush.bf16.msra.mxu0 %v4990
    %5010 = vmatpush.bf16.msra.mxu0 %v4989
    %5011 = vmatpush.bf16.msra.mxu0 %v4988
    %5012 = vmatmul.bf16.gmra.mxu0 %v4812
    %v5013 = vpop.f32.mrf.mxu0
    %v5014 = vadd.f32 %v4947, %v5013
    %v5015 = vpop.f32.mrf.mxu0
    %v5016 = vadd.f32 %v4949, %v5015
    %5017 = vmatmul.bf16.gmra.mxu0 %v4813
    %v5018 = vpop.f32.mrf.mxu0
    %v5019 = vadd.f32 %v4952, %v5018
    %v5020 = vpop.f32.mrf.mxu0
    %v5021 = vadd.f32 %v4954, %v5020
    %5022 = vdwg.mxu0
    %s5023 = scalar_lea.vmem %s37, 32
    %v5024 = vld [vmem:[%s5023] sm:$0xf]
    %v5025 = vld [vmem:[%s5023 + $0x4] sm:$0xf]
    %v5026 = vld [vmem:[%s5023 + $0x8] sm:$0xf]
    %v5027 = vld [vmem:[%s5023 + $0xc] sm:$0x7]
    %v5032 = vunpack.c.l.b16 %v5024
    %v5033 = vunpack.c.l.b16 %v5025
    %v5034 = vunpack.c.l.b16 %v5026
    %v5035 = vunpack.c.l.b16 %v5027
    %v5036 = vpack.c.b16 %v5033, %v5032
    %v5037 = vpack.c.b16 %v5035, %v5034
    %v5039 = vsel %vm4782, %v5036, 0
    %v5042 = vsel %vm4782, %v5037, 0
    %5044 = vmatpush.bf16.msra.mxu0 0
    %5045 = vmatpush.bf16.msra.mxu0 0
    %5046 = vmatpush.bf16.msra.mxu0 0
    %5047 = vmatpush.bf16.msra.mxu0 0
    %5048 = vmatpush.bf16.msra.mxu0 %v4791
    %5049 = vmatpush.bf16.msra.mxu0 %v4766
    %5050 = vmatpush.bf16.msra.mxu0 %v4765
    %5051 = vmatpush.bf16.msra.mxu0 %v4764
    %5052 = vmatmul.bf16.gmra.mxu0 %v5039
    %v5053 = vpop.f32.mrf.mxu0
    %v5054 = vadd.f32 0.0, %v5053
    %v5055 = vpop.f32.mrf.mxu0
    %v5056 = vadd.f32 0.0, %v5055
    %5057 = vmatmul.bf16.gmra.mxu0 %v5042
    %v5058 = vpop.f32.mrf.mxu0
    %v5059 = vadd.f32 0.0, %v5058
    %v5060 = vpop.f32.mrf.mxu0
    %v5061 = vadd.f32 0.0, %v5060
    %5062 = vdwg.mxu0
    %v5063 = vpack.c.bf16 %v5056, %v5054
    %v5064 = vpack.c.bf16 %v5061, %v5059
    %s5065 = scalar_lea.vmem %s39, 128
    %v5066 = vld [vmem:[%s5065] sm:$0xf]
    %v5067 = vld [vmem:[%s5065 + $0x4] sm:$0xf]
    %v5068 = vld [vmem:[%s5065 + $0x8] sm:$0xf]
    %v5069 = vld [vmem:[%s5065 + $0xc] sm:$0xf]
    %v5070 = vld [vmem:[%s5065 + $0x10] sm:$0xf]
    %v5071 = vld [vmem:[%s5065 + $0x14] sm:$0xf]
    %v5072 = vld [vmem:[%s5065 + $0x18] sm:$0xf]
    %v5073 = vld [vmem:[%s5065 + $0x1c] sm:$0xf]
    %v5074 = vld [vmem:[%s5065 + $0x20] sm:$0xf]
    %v5075 = vld [vmem:[%s5065 + $0x24] sm:$0xf]
    %v5076 = vld [vmem:[%s5065 + $0x28] sm:$0xf]
    %v5077 = vld [vmem:[%s5065 + $0x2c] sm:$0xf]
    %v5078 = vld [vmem:[%s5065 + $0x30] sm:$0xf]
    %v5079 = vld [vmem:[%s5065 + $0x34] sm:$0xf]
    %v5080 = vld [vmem:[%s5065 + $0x38] sm:$0xf]
    %v5081 = vld [vmem:[%s5065 + $0x3c] sm:$0xf]
    %v5098 = vunpack.c.l.b16 %v5066
    %v5099 = vunpack.c.l.b16 %v5067
    %v5100 = vunpack.c.l.b16 %v5068
    %v5101 = vunpack.c.l.b16 %v5069
    %v5102 = vunpack.c.l.b16 %v5070
    %v5103 = vunpack.c.l.b16 %v5071
    %v5104 = vunpack.c.l.b16 %v5072
    %v5105 = vunpack.c.l.b16 %v5073
    %v5106 = vunpack.c.l.b16 %v5074
    %v5107 = vunpack.c.l.b16 %v5075
    %v5108 = vunpack.c.l.b16 %v5076
    %v5109 = vunpack.c.l.b16 %v5077
    %v5110 = vunpack.c.l.b16 %v5078
    %v5111 = vunpack.c.l.b16 %v5079
    %v5112 = vunpack.c.l.b16 %v5080
    %v5113 = vunpack.c.l.b16 %v5081
    %v5114 = vpack.c.b16 %v5099, %v5098
    %v5115 = vpack.c.b16 %v5101, %v5100
    %v5116 = vpack.c.b16 %v5103, %v5102
    %v5117 = vpack.c.b16 %v5105, %v5104
    %v5118 = vpack.c.b16 %v5107, %v5106
    %v5119 = vpack.c.b16 %v5109, %v5108
    %v5120 = vpack.c.b16 %v5111, %v5110
    %v5121 = vpack.c.b16 %v5113, %v5112
    %5130 = vmatpush.bf16.msra.mxu0 %v5121
    %5131 = vmatpush.bf16.msra.mxu0 %v5120
    %5132 = vmatpush.bf16.msra.mxu0 %v5119
    %5133 = vmatpush.bf16.msra.mxu0 %v5118
    %5134 = vmatpush.bf16.msra.mxu0 %v5117
    %5135 = vmatpush.bf16.msra.mxu0 %v5116
    %5136 = vmatpush.bf16.msra.mxu0 %v5115
    %5137 = vmatpush.bf16.msra.mxu0 %v5114
    %5138 = vmatmul.bf16.gmra.mxu0 %v5063
    %v5139 = vpop.f32.mrf.mxu0
    %v5140 = vadd.f32 0.0, %v5139
    %v5141 = vpop.f32.mrf.mxu0
    %v5142 = vadd.f32 0.0, %v5141
    %5143 = vmatmul.bf16.gmra.mxu0 %v5064
    %v5144 = vpop.f32.mrf.mxu0
    %v5145 = vadd.f32 0.0, %v5144
    %v5146 = vpop.f32.mrf.mxu0
    %v5147 = vadd.f32 0.0, %v5146
    %5148 = vdwg.mxu0
    %v5149 = vadd.f32 %v5014, %v5140
    %v5150 = vadd.f32 %v5016, %v5142
    %v5151 = vadd.f32 %v5019, %v5145
    %v5152 = vadd.f32 %v5021, %v5147
    %v5153 = vld [vmem:[%s41] sm:$0x1]
    %v5155 = vperm.slane %v5153, 0
    %v5157 = vadd.f32 %v5149, %v5155
    %v5158 = vadd.f32 %v5150, %v5155
    %v5159 = vadd.f32 %v5151, %v5155
    %v5160 = vadd.f32 %v5152, %v5155
    %vm5161 = vcmp.gt.f32.partialorder %v5157, 0.0
    %vm5162 = vcmp.gt.f32.partialorder %v5158, 0.0
    %vm5163 = vcmp.gt.f32.partialorder %v5159, 0.0
    %vm5164 = vcmp.gt.f32.partialorder %v5160, 0.0
    %v5165 = vmul.f32 %v5157, 1.442695
    %v5166 = vpow.pop %v5165
    %v5167 = vmul.f32 %v5158, 1.442695
    %v5168 = vpow.pop %v5167
    %v5169 = vmul.f32 %v5159, 1.442695
    %v5170 = vpow.pop %v5169
    %v5171 = vmul.f32 %v5160, 1.442695
    %v5172 = vpow.pop %v5171
    %v5173 = vsub.f32 %v5166, 1.0
    %v5174 = vsub.f32 %v5168, 1.0
    %v5175 = vsub.f32 %v5170, 1.0
    %v5176 = vsub.f32 %v5172, 1.0
    %v5177 = vsel %vm5161, %v5157, %v5173
    %v5178 = vsel %vm5162, %v5158, %v5174
    %v5179 = vsel %vm5163, %v5159, %v5175
    %v5180 = vsel %vm5164, %v5160, %v5176
    %5181 = vst.msk [vmem:[#allocation3] sm:$0xff] %vm598, %v5177
    %5182 = vst.msk [vmem:[#allocation3 + $0x8] sm:$0xff] %vm598, %v5178
    %5183 = vst.msk [vmem:[#allocation3 + $0x10] sm:$0xff] %vm598, %v5179
    %vm5184 = vcmask 521216
    %5185 = vst.msk [vmem:[#allocation3 + $0x18] sm:$0x3f] %vm5184, %v5180
    %v5186 = vld [vmem:[#allocation3] sm:$0x3]
    %v5187 = vpack.c.bf16 %v5186, %v5186
    %v5188 = vld [vmem:[%s43] sm:$0xf]
    %v5189 = vld [vmem:[%s43 + $0x4] sm:$0xf]
    %v5190 = vld [vmem:[%s43 + $0x8] sm:$0xf]
    %v5191 = vld [vmem:[%s43 + $0xc] sm:$0xf]
    %v5192 = vld [vmem:[%s43 + $0x10] sm:$0xf]
    %v5193 = vld [vmem:[%s43 + $0x14] sm:$0xf]
    %v5194 = vld [vmem:[%s43 + $0x18] sm:$0xf]
    %v5195 = vld [vmem:[%s43 + $0x1c] sm:$0xf]
    %v5196 = vld [vmem:[#allocation3 + $0x2] sm:$0x3]
    %v5197 = vpack.c.bf16 %v5196, %v5196
    %v5198 = vld [vmem:[%s43 + $0x20] sm:$0xf]
    %v5199 = vld [vmem:[%s43 + $0x24] sm:$0xf]
    %v5200 = vld [vmem:[%s43 + $0x28] sm:$0xf]
    %v5201 = vld [vmem:[%s43 + $0x2c] sm:$0xf]
    %v5202 = vld [vmem:[%s43 + $0x30] sm:$0xf]
    %v5203 = vld [vmem:[%s43 + $0x34] sm:$0xf]
    %v5204 = vld [vmem:[%s43 + $0x38] sm:$0xf]
    %v5205 = vld [vmem:[%s43 + $0x3c] sm:$0xf]
    %v5214 = vunpack.c.l.b16 %v5198
    %v5215 = vunpack.c.l.b16 %v5199
    %v5216 = vunpack.c.l.b16 %v5200
    %v5217 = vunpack.c.l.b16 %v5201
    %v5218 = vunpack.c.l.b16 %v5202
    %v5219 = vunpack.c.l.b16 %v5203
    %v5220 = vunpack.c.l.b16 %v5204
    %v5221 = vunpack.c.l.b16 %v5205
    %v5222 = vpack.c.b16 %v5215, %v5214
    %v5223 = vpack.c.b16 %v5217, %v5216
    %v5224 = vpack.c.b16 %v5219, %v5218
    %v5225 = vpack.c.b16 %v5221, %v5220
    %v5231 = vsel %vm598, %v5197, 0
    %5233 = vmatpush.bf16.msra.mxu0 0
    %5234 = vmatpush.bf16.msra.mxu0 0
    %5235 = vmatpush.bf16.msra.mxu0 0
    %5236 = vmatpush.bf16.msra.mxu0 0
    %5237 = vmatpush.bf16.msra.mxu0 %v5225
    %5238 = vmatpush.bf16.msra.mxu0 %v5224
    %5239 = vmatpush.bf16.msra.mxu0 %v5223
    %5240 = vmatpush.bf16.msra.mxu0 %v5222
    %5241 = vmatmul.bf16.gmra.mxu0 %v5231
    %v5242 = vpop.f32.mrf.mxu0
    %v5243 = vadd.f32 0.0, %v5242
    %v5244 = vpop.f32.mrf.mxu0
    %5245 = vdwg.mxu0
    %v5254 = vunpack.c.l.b16 %v5188
    %v5255 = vunpack.c.l.b16 %v5189
    %v5256 = vunpack.c.l.b16 %v5190
    %v5257 = vunpack.c.l.b16 %v5191
    %v5258 = vunpack.c.l.b16 %v5192
    %v5259 = vunpack.c.l.b16 %v5193
    %v5260 = vunpack.c.l.b16 %v5194
    %v5261 = vunpack.c.l.b16 %v5195
    %v5262 = vpack.c.b16 %v5255, %v5254
    %v5263 = vpack.c.b16 %v5257, %v5256
    %v5264 = vpack.c.b16 %v5259, %v5258
    %v5265 = vpack.c.b16 %v5261, %v5260
    %v5271 = vsel %vm598, %v5187, 0
    %5273 = vmatpush.bf16.msra.mxu0 0
    %5274 = vmatpush.bf16.msra.mxu0 0
    %5275 = vmatpush.bf16.msra.mxu0 0
    %5276 = vmatpush.bf16.msra.mxu0 0
    %5277 = vmatpush.bf16.msra.mxu0 %v5265
    %5278 = vmatpush.bf16.msra.mxu0 %v5264
    %5279 = vmatpush.bf16.msra.mxu0 %v5263
    %5280 = vmatpush.bf16.msra.mxu0 %v5262
    %5281 = vmatmul.bf16.gmra.mxu0 %v5271
    %v5282 = vpop.f32.mrf.mxu0
    %v5283 = vadd.f32 %v5243, %v5282
    %v5284 = vpop.f32.mrf.mxu0
    %5285 = vdwg.mxu0
    %v5286 = vld [vmem:[#allocation3 + $0x4] sm:$0x3]
    %v5287 = vpack.c.bf16 %v5286, %v5286
    %v5288 = vld [vmem:[%s43 + $0x40] sm:$0xf]
    %v5289 = vld [vmem:[%s43 + $0x44] sm:$0xf]
    %v5290 = vld [vmem:[%s43 + $0x48] sm:$0xf]
    %v5291 = vld [vmem:[%s43 + $0x4c] sm:$0xf]
    %v5292 = vld [vmem:[%s43 + $0x50] sm:$0xf]
    %v5293 = vld [vmem:[%s43 + $0x54] sm:$0xf]
    %v5294 = vld [vmem:[%s43 + $0x58] sm:$0xf]
    %v5295 = vld [vmem:[%s43 + $0x5c] sm:$0xf]
    %v5304 = vunpack.c.l.b16 %v5288
    %v5305 = vunpack.c.l.b16 %v5289
    %v5306 = vunpack.c.l.b16 %v5290
    %v5307 = vunpack.c.l.b16 %v5291
    %v5308 = vunpack.c.l.b16 %v5292
    %v5309 = vunpack.c.l.b16 %v5293
    %v5310 = vunpack.c.l.b16 %v5294
    %v5311 = vunpack.c.l.b16 %v5295
    %v5312 = vpack.c.b16 %v5305, %v5304
    %v5313 = vpack.c.b16 %v5307, %v5306
    %v5314 = vpack.c.b16 %v5309, %v5308
    %v5315 = vpack.c.b16 %v5311, %v5310
    %v5321 = vsel %vm598, %v5287, 0
    %5323 = vmatpush.bf16.msra.mxu0 0
    %5324 = vmatpush.bf16.msra.mxu0 0
    %5325 = vmatpush.bf16.msra.mxu0 0
    %5326 = vmatpush.bf16.msra.mxu0 0
    %5327 = vmatpush.bf16.msra.mxu0 %v5315
    %5328 = vmatpush.bf16.msra.mxu0 %v5314
    %5329 = vmatpush.bf16.msra.mxu0 %v5313
    %5330 = vmatpush.bf16.msra.mxu0 %v5312
    %5331 = vmatmul.bf16.gmra.mxu0 %v5321
    %v5332 = vpop.f32.mrf.mxu0
    %v5333 = vadd.f32 0.0, %v5332
    %v5334 = vpop.f32.mrf.mxu0
    %5335 = vdwg.mxu0
    %v5336 = vadd.f32 %v5283, %v5333
    %v5337 = vld [vmem:[#allocation3 + $0x6] sm:$0x3]
    %v5338 = vpack.c.bf16 %v5337, %v5337
    %v5339 = vld [vmem:[%s43 + $0x60] sm:$0xf]
    %v5340 = vld [vmem:[%s43 + $0x64] sm:$0xf]
    %v5341 = vld [vmem:[%s43 + $0x68] sm:$0xf]
    %v5342 = vld [vmem:[%s43 + $0x6c] sm:$0xf]
    %v5343 = vld [vmem:[%s43 + $0x70] sm:$0xf]
    %v5344 = vld [vmem:[%s43 + $0x74] sm:$0xf]
    %v5345 = vld [vmem:[%s43 + $0x78] sm:$0xf]
    %v5346 = vld [vmem:[%s43 + $0x7c] sm:$0xf]
    %v5355 = vunpack.c.l.b16 %v5339
    %v5356 = vunpack.c.l.b16 %v5340
    %v5357 = vunpack.c.l.b16 %v5341
    %v5358 = vunpack.c.l.b16 %v5342
    %v5359 = vunpack.c.l.b16 %v5343
    %v5360 = vunpack.c.l.b16 %v5344
    %v5361 = vunpack.c.l.b16 %v5345
    %v5362 = vunpack.c.l.b16 %v5346
    %v5363 = vpack.c.b16 %v5356, %v5355
    %v5364 = vpack.c.b16 %v5358, %v5357
    %v5365 = vpack.c.b16 %v5360, %v5359
    %v5366 = vpack.c.b16 %v5362, %v5361
    %v5372 = vsel %vm598, %v5338, 0
    %5374 = vmatpush.bf16.msra.mxu0 0
    %5375 = vmatpush.bf16.msra.mxu0 0
    %5376 = vmatpush.bf16.msra.mxu0 0
    %5377 = vmatpush.bf16.msra.mxu0 0
    %5378 = vmatpush.bf16.msra.mxu0 %v5366
    %5379 = vmatpush.bf16.msra.mxu0 %v5365
    %5380 = vmatpush.bf16.msra.mxu0 %v5364
    %5381 = vmatpush.bf16.msra.mxu0 %v5363
    %5382 = vmatmul.bf16.gmra.mxu0 %v5372
    %v5383 = vpop.f32.mrf.mxu0
    %v5384 = vadd.f32 0.0, %v5383
    %v5385 = vpop.f32.mrf.mxu0
    %5386 = vdwg.mxu0
    %v5387 = vadd.f32 %v5336, %v5384
    %v5388 = vld [vmem:[#allocation3 + $0x8] sm:$0x3]
    %v5389 = vpack.c.bf16 %v5388, %v5388
    %v5390 = vld [vmem:[%s43 + $0x80] sm:$0xf]
    %v5391 = vld [vmem:[%s43 + $0x84] sm:$0xf]
    %v5392 = vld [vmem:[%s43 + $0x88] sm:$0xf]
    %v5393 = vld [vmem:[%s43 + $0x8c] sm:$0xf]
    %v5394 = vld [vmem:[%s43 + $0x90] sm:$0xf]
    %v5395 = vld [vmem:[%s43 + $0x94] sm:$0xf]
    %v5396 = vld [vmem:[%s43 + $0x98] sm:$0xf]
    %v5397 = vld [vmem:[%s43 + $0x9c] sm:$0xf]
    %v5406 = vunpack.c.l.b16 %v5390
    %v5407 = vunpack.c.l.b16 %v5391
    %v5408 = vunpack.c.l.b16 %v5392
    %v5409 = vunpack.c.l.b16 %v5393
    %v5410 = vunpack.c.l.b16 %v5394
    %v5411 = vunpack.c.l.b16 %v5395
    %v5412 = vunpack.c.l.b16 %v5396
    %v5413 = vunpack.c.l.b16 %v5397
    %v5414 = vpack.c.b16 %v5407, %v5406
    %v5415 = vpack.c.b16 %v5409, %v5408
    %v5416 = vpack.c.b16 %v5411, %v5410
    %v5417 = vpack.c.b16 %v5413, %v5412
    %v5423 = vsel %vm598, %v5389, 0
    %5425 = vmatpush.bf16.msra.mxu0 0
    %5426 = vmatpush.bf16.msra.mxu0 0
    %5427 = vmatpush.bf16.msra.mxu0 0
    %5428 = vmatpush.bf16.msra.mxu0 0
    %5429 = vmatpush.bf16.msra.mxu0 %v5417
    %5430 = vmatpush.bf16.msra.mxu0 %v5416
    %5431 = vmatpush.bf16.msra.mxu0 %v5415
    %5432 = vmatpush.bf16.msra.mxu0 %v5414
    %5433 = vmatmul.bf16.gmra.mxu0 %v5423
    %v5434 = vpop.f32.mrf.mxu0
    %v5435 = vadd.f32 0.0, %v5434
    %v5436 = vpop.f32.mrf.mxu0
    %5437 = vdwg.mxu0
    %v5438 = vadd.f32 %v5387, %v5435
    %v5439 = vld [vmem:[#allocation3 + $0xa] sm:$0x3]
    %v5440 = vpack.c.bf16 %v5439, %v5439
    %v5441 = vld [vmem:[%s43 + $0xa0] sm:$0xf]
    %v5442 = vld [vmem:[%s43 + $0xa4] sm:$0xf]
    %v5443 = vld [vmem:[%s43 + $0xa8] sm:$0xf]
    %v5444 = vld [vmem:[%s43 + $0xac] sm:$0xf]
    %v5445 = vld [vmem:[%s43 + $0xb0] sm:$0xf]
    %v5446 = vld [vmem:[%s43 + $0xb4] sm:$0xf]
    %v5447 = vld [vmem:[%s43 + $0xb8] sm:$0xf]
    %v5448 = vld [vmem:[%s43 + $0xbc] sm:$0xf]
    %v5457 = vunpack.c.l.b16 %v5441
    %v5458 = vunpack.c.l.b16 %v5442
    %v5459 = vunpack.c.l.b16 %v5443
    %v5460 = vunpack.c.l.b16 %v5444
    %v5461 = vunpack.c.l.b16 %v5445
    %v5462 = vunpack.c.l.b16 %v5446
    %v5463 = vunpack.c.l.b16 %v5447
    %v5464 = vunpack.c.l.b16 %v5448
    %v5465 = vpack.c.b16 %v5458, %v5457
    %v5466 = vpack.c.b16 %v5460, %v5459
    %v5467 = vpack.c.b16 %v5462, %v5461
    %v5468 = vpack.c.b16 %v5464, %v5463
    %v5474 = vsel %vm598, %v5440, 0
    %5476 = vmatpush.bf16.msra.mxu0 0
    %5477 = vmatpush.bf16.msra.mxu0 0
    %5478 = vmatpush.bf16.msra.mxu0 0
    %5479 = vmatpush.bf16.msra.mxu0 0
    %5480 = vmatpush.bf16.msra.mxu0 %v5468
    %5481 = vmatpush.bf16.msra.mxu0 %v5467
    %5482 = vmatpush.bf16.msra.mxu0 %v5466
    %5483 = vmatpush.bf16.msra.mxu0 %v5465
    %5484 = vmatmul.bf16.gmra.mxu0 %v5474
    %v5485 = vpop.f32.mrf.mxu0
    %v5486 = vadd.f32 0.0, %v5485
    %v5487 = vpop.f32.mrf.mxu0
    %5488 = vdwg.mxu0
    %v5489 = vadd.f32 %v5438, %v5486
    %v5490 = vld [vmem:[#allocation3 + $0xc] sm:$0x3]
    %v5491 = vpack.c.bf16 %v5490, %v5490
    %v5492 = vld [vmem:[%s43 + $0xc0] sm:$0xf]
    %v5493 = vld [vmem:[%s43 + $0xc4] sm:$0xf]
    %v5494 = vld [vmem:[%s43 + $0xc8] sm:$0xf]
    %v5495 = vld [vmem:[%s43 + $0xcc] sm:$0xf]
    %v5496 = vld [vmem:[%s43 + $0xd0] sm:$0xf]
    %v5497 = vld [vmem:[%s43 + $0xd4] sm:$0xf]
    %v5498 = vld [vmem:[%s43 + $0xd8] sm:$0xf]
    %v5499 = vld [vmem:[%s43 + $0xdc] sm:$0xf]
    %v5508 = vunpack.c.l.b16 %v5492
    %v5509 = vunpack.c.l.b16 %v5493
    %v5510 = vunpack.c.l.b16 %v5494
    %v5511 = vunpack.c.l.b16 %v5495
    %v5512 = vunpack.c.l.b16 %v5496
    %v5513 = vunpack.c.l.b16 %v5497
    %v5514 = vunpack.c.l.b16 %v5498
    %v5515 = vunpack.c.l.b16 %v5499
    %v5516 = vpack.c.b16 %v5509, %v5508
    %v5517 = vpack.c.b16 %v5511, %v5510
    %v5518 = vpack.c.b16 %v5513, %v5512
    %v5519 = vpack.c.b16 %v5515, %v5514
    %v5525 = vsel %vm598, %v5491, 0
    %5527 = vmatpush.bf16.msra.mxu0 0
    %5528 = vmatpush.bf16.msra.mxu0 0
    %5529 = vmatpush.bf16.msra.mxu0 0
    %5530 = vmatpush.bf16.msra.mxu0 0
    %5531 = vmatpush.bf16.msra.mxu0 %v5519
    %5532 = vmatpush.bf16.msra.mxu0 %v5518
    %5533 = vmatpush.bf16.msra.mxu0 %v5517
    %5534 = vmatpush.bf16.msra.mxu0 %v5516
    %5535 = vmatmul.bf16.gmra.mxu0 %v5525
    %v5536 = vpop.f32.mrf.mxu0
    %v5537 = vadd.f32 0.0, %v5536
    %v5538 = vpop.f32.mrf.mxu0
    %5539 = vdwg.mxu0
    %v5540 = vadd.f32 %v5489, %v5537
    %v5541 = vld [vmem:[#allocation3 + $0xe] sm:$0x3]
    %v5542 = vpack.c.bf16 %v5541, %v5541
    %v5543 = vld [vmem:[%s43 + $0xe0] sm:$0xf]
    %v5544 = vld [vmem:[%s43 + $0xe4] sm:$0xf]
    %v5545 = vld [vmem:[%s43 + $0xe8] sm:$0xf]
    %v5546 = vld [vmem:[%s43 + $0xec] sm:$0xf]
    %v5547 = vld [vmem:[%s43 + $0xf0] sm:$0xf]
    %v5548 = vld [vmem:[%s43 + $0xf4] sm:$0xf]
    %v5549 = vld [vmem:[%s43 + $0xf8] sm:$0xf]
    %v5550 = vld [vmem:[%s43 + $0xfc] sm:$0xf]
    %v5559 = vunpack.c.l.b16 %v5543
    %v5560 = vunpack.c.l.b16 %v5544
    %v5561 = vunpack.c.l.b16 %v5545
    %v5562 = vunpack.c.l.b16 %v5546
    %v5563 = vunpack.c.l.b16 %v5547
    %v5564 = vunpack.c.l.b16 %v5548
    %v5565 = vunpack.c.l.b16 %v5549
    %v5566 = vunpack.c.l.b16 %v5550
    %v5567 = vpack.c.b16 %v5560, %v5559
    %v5568 = vpack.c.b16 %v5562, %v5561
    %v5569 = vpack.c.b16 %v5564, %v5563
    %v5570 = vpack.c.b16 %v5566, %v5565
    %v5576 = vsel %vm598, %v5542, 0
    %5578 = vmatpush.bf16.msra.mxu0 0
    %5579 = vmatpush.bf16.msra.mxu0 0
    %5580 = vmatpush.bf16.msra.mxu0 0
    %5581 = vmatpush.bf16.msra.mxu0 0
    %5582 = vmatpush.bf16.msra.mxu0 %v5570
    %5583 = vmatpush.bf16.msra.mxu0 %v5569
    %5584 = vmatpush.bf16.msra.mxu0 %v5568
    %5585 = vmatpush.bf16.msra.mxu0 %v5567
    %5586 = vmatmul.bf16.gmra.mxu0 %v5576
    %v5587 = vpop.f32.mrf.mxu0
    %v5588 = vadd.f32 0.0, %v5587
    %v5589 = vpop.f32.mrf.mxu0
    %5590 = vdwg.mxu0
    %v5591 = vadd.f32 %v5540, %v5588
    %v5592 = vld [vmem:[#allocation3 + $0x10] sm:$0x3]
    %v5593 = vpack.c.bf16 %v5592, %v5592
    %v5594 = vld [vmem:[%s43 + $0x100] sm:$0xf]
    %v5595 = vld [vmem:[%s43 + $0x104] sm:$0xf]
    %v5596 = vld [vmem:[%s43 + $0x108] sm:$0xf]
    %v5597 = vld [vmem:[%s43 + $0x10c] sm:$0xf]
    %v5598 = vld [vmem:[%s43 + $0x110] sm:$0xf]
    %v5599 = vld [vmem:[%s43 + $0x114] sm:$0xf]
    %v5600 = vld [vmem:[%s43 + $0x118] sm:$0xf]
    %v5601 = vld [vmem:[%s43 + $0x11c] sm:$0xf]
    %v5610 = vunpack.c.l.b16 %v5594
    %v5611 = vunpack.c.l.b16 %v5595
    %v5612 = vunpack.c.l.b16 %v5596
    %v5613 = vunpack.c.l.b16 %v5597
    %v5614 = vunpack.c.l.b16 %v5598
    %v5615 = vunpack.c.l.b16 %v5599
    %v5616 = vunpack.c.l.b16 %v5600
    %v5617 = vunpack.c.l.b16 %v5601
    %v5618 = vpack.c.b16 %v5611, %v5610
    %v5619 = vpack.c.b16 %v5613, %v5612
    %v5620 = vpack.c.b16 %v5615, %v5614
    %v5621 = vpack.c.b16 %v5617, %v5616
    %v5627 = vsel %vm598, %v5593, 0
    %5629 = vmatpush.bf16.msra.mxu0 0
    %5630 = vmatpush.bf16.msra.mxu0 0
    %5631 = vmatpush.bf16.msra.mxu0 0
    %5632 = vmatpush.bf16.msra.mxu0 0
    %5633 = vmatpush.bf16.msra.mxu0 %v5621
    %5634 = vmatpush.bf16.msra.mxu0 %v5620
    %5635 = vmatpush.bf16.msra.mxu0 %v5619
    %5636 = vmatpush.bf16.msra.mxu0 %v5618
    %5637 = vmatmul.bf16.gmra.mxu0 %v5627
    %v5638 = vpop.f32.mrf.mxu0
    %v5639 = vadd.f32 0.0, %v5638
    %v5640 = vpop.f32.mrf.mxu0
    %5641 = vdwg.mxu0
    %v5642 = vadd.f32 %v5591, %v5639
    %v5643 = vld [vmem:[#allocation3 + $0x12] sm:$0x3]
    %v5644 = vpack.c.bf16 %v5643, %v5643
    %v5645 = vld [vmem:[%s43 + $0x120] sm:$0xf]
    %v5646 = vld [vmem:[%s43 + $0x124] sm:$0xf]
    %v5647 = vld [vmem:[%s43 + $0x128] sm:$0xf]
    %v5648 = vld [vmem:[%s43 + $0x12c] sm:$0xf]
    %v5649 = vld [vmem:[%s43 + $0x130] sm:$0xf]
    %v5650 = vld [vmem:[%s43 + $0x134] sm:$0xf]
    %v5651 = vld [vmem:[%s43 + $0x138] sm:$0xf]
    %v5652 = vld [vmem:[%s43 + $0x13c] sm:$0xf]
    %v5661 = vunpack.c.l.b16 %v5645
    %v5662 = vunpack.c.l.b16 %v5646
    %v5663 = vunpack.c.l.b16 %v5647
    %v5664 = vunpack.c.l.b16 %v5648
    %v5665 = vunpack.c.l.b16 %v5649
    %v5666 = vunpack.c.l.b16 %v5650
    %v5667 = vunpack.c.l.b16 %v5651
    %v5668 = vunpack.c.l.b16 %v5652
    %v5669 = vpack.c.b16 %v5662, %v5661
    %v5670 = vpack.c.b16 %v5664, %v5663
    %v5671 = vpack.c.b16 %v5666, %v5665
    %v5672 = vpack.c.b16 %v5668, %v5667
    %v5678 = vsel %vm598, %v5644, 0
    %5680 = vmatpush.bf16.msra.mxu0 0
    %5681 = vmatpush.bf16.msra.mxu0 0
    %5682 = vmatpush.bf16.msra.mxu0 0
    %5683 = vmatpush.bf16.msra.mxu0 0
    %5684 = vmatpush.bf16.msra.mxu0 %v5672
    %5685 = vmatpush.bf16.msra.mxu0 %v5671
    %5686 = vmatpush.bf16.msra.mxu0 %v5670
    %5687 = vmatpush.bf16.msra.mxu0 %v5669
    %5688 = vmatmul.bf16.gmra.mxu0 %v5678
    %v5689 = vpop.f32.mrf.mxu0
    %v5690 = vadd.f32 0.0, %v5689
    %v5691 = vpop.f32.mrf.mxu0
    %5692 = vdwg.mxu0
    %v5693 = vadd.f32 %v5642, %v5690
    %v5694 = vld [vmem:[#allocation3 + $0x14] sm:$0x3]
    %v5695 = vpack.c.bf16 %v5694, %v5694
    %v5696 = vld [vmem:[%s43 + $0x140] sm:$0xf]
    %v5697 = vld [vmem:[%s43 + $0x144] sm:$0xf]
    %v5698 = vld [vmem:[%s43 + $0x148] sm:$0xf]
    %v5699 = vld [vmem:[%s43 + $0x14c] sm:$0xf]
    %v5700 = vld [vmem:[%s43 + $0x150] sm:$0xf]
    %v5701 = vld [vmem:[%s43 + $0x154] sm:$0xf]
    %v5702 = vld [vmem:[%s43 + $0x158] sm:$0xf]
    %v5703 = vld [vmem:[%s43 + $0x15c] sm:$0xf]
    %v5712 = vunpack.c.l.b16 %v5696
    %v5713 = vunpack.c.l.b16 %v5697
    %v5714 = vunpack.c.l.b16 %v5698
    %v5715 = vunpack.c.l.b16 %v5699
    %v5716 = vunpack.c.l.b16 %v5700
    %v5717 = vunpack.c.l.b16 %v5701
    %v5718 = vunpack.c.l.b16 %v5702
    %v5719 = vunpack.c.l.b16 %v5703
    %v5720 = vpack.c.b16 %v5713, %v5712
    %v5721 = vpack.c.b16 %v5715, %v5714
    %v5722 = vpack.c.b16 %v5717, %v5716
    %v5723 = vpack.c.b16 %v5719, %v5718
    %v5729 = vsel %vm598, %v5695, 0
    %5731 = vmatpush.bf16.msra.mxu0 0
    %5732 = vmatpush.bf16.msra.mxu0 0
    %5733 = vmatpush.bf16.msra.mxu0 0
    %5734 = vmatpush.bf16.msra.mxu0 0
    %5735 = vmatpush.bf16.msra.mxu0 %v5723
    %5736 = vmatpush.bf16.msra.mxu0 %v5722
    %5737 = vmatpush.bf16.msra.mxu0 %v5721
    %5738 = vmatpush.bf16.msra.mxu0 %v5720
    %5739 = vmatmul.bf16.gmra.mxu0 %v5729
    %v5740 = vpop.f32.mrf.mxu0
    %v5741 = vadd.f32 0.0, %v5740
    %v5742 = vpop.f32.mrf.mxu0
    %5743 = vdwg.mxu0
    %v5744 = vadd.f32 %v5693, %v5741
    %v5745 = vld [vmem:[#allocation3 + $0x16] sm:$0x3]
    %v5746 = vpack.c.bf16 %v5745, %v5745
    %v5747 = vld [vmem:[%s43 + $0x160] sm:$0xf]
    %v5748 = vld [vmem:[%s43 + $0x164] sm:$0xf]
    %v5749 = vld [vmem:[%s43 + $0x168] sm:$0xf]
    %v5750 = vld [vmem:[%s43 + $0x16c] sm:$0xf]
    %v5751 = vld [vmem:[%s43 + $0x170] sm:$0xf]
    %v5752 = vld [vmem:[%s43 + $0x174] sm:$0xf]
    %v5753 = vld [vmem:[%s43 + $0x178] sm:$0xf]
    %v5754 = vld [vmem:[%s43 + $0x17c] sm:$0xf]
    %v5763 = vunpack.c.l.b16 %v5747
    %v5764 = vunpack.c.l.b16 %v5748
    %v5765 = vunpack.c.l.b16 %v5749
    %v5766 = vunpack.c.l.b16 %v5750
    %v5767 = vunpack.c.l.b16 %v5751
    %v5768 = vunpack.c.l.b16 %v5752
    %v5769 = vunpack.c.l.b16 %v5753
    %v5770 = vunpack.c.l.b16 %v5754
    %v5771 = vpack.c.b16 %v5764, %v5763
    %v5772 = vpack.c.b16 %v5766, %v5765
    %v5773 = vpack.c.b16 %v5768, %v5767
    %v5774 = vpack.c.b16 %v5770, %v5769
    %v5780 = vsel %vm598, %v5746, 0
    %5782 = vmatpush.bf16.msra.mxu0 0
    %5783 = vmatpush.bf16.msra.mxu0 0
    %5784 = vmatpush.bf16.msra.mxu0 0
    %5785 = vmatpush.bf16.msra.mxu0 0
    %5786 = vmatpush.bf16.msra.mxu0 %v5774
    %5787 = vmatpush.bf16.msra.mxu0 %v5773
    %5788 = vmatpush.bf16.msra.mxu0 %v5772
    %5789 = vmatpush.bf16.msra.mxu0 %v5771
    %5790 = vmatmul.bf16.gmra.mxu0 %v5780
    %v5791 = vpop.f32.mrf.mxu0
    %v5792 = vadd.f32 0.0, %v5791
    %v5793 = vpop.f32.mrf.mxu0
    %5794 = vdwg.mxu0
    %v5795 = vadd.f32 %v5744, %v5792
    %v5796 = vld [vmem:[#allocation3 + $0x18] sm:$0x3]
    %v5797 = vpack.c.bf16 %v5796, %v5796
    %v5798 = vld [vmem:[%s43 + $0x180] sm:$0xf]
    %v5799 = vld [vmem:[%s43 + $0x184] sm:$0xf]
    %v5800 = vld [vmem:[%s43 + $0x188] sm:$0xf]
    %v5801 = vld [vmem:[%s43 + $0x18c] sm:$0xf]
    %v5802 = vld [vmem:[%s43 + $0x190] sm:$0xf]
    %v5803 = vld [vmem:[%s43 + $0x194] sm:$0xf]
    %v5804 = vld [vmem:[%s43 + $0x198] sm:$0xf]
    %v5805 = vld [vmem:[%s43 + $0x19c] sm:$0xf]
    %v5814 = vunpack.c.l.b16 %v5798
    %v5815 = vunpack.c.l.b16 %v5799
    %v5816 = vunpack.c.l.b16 %v5800
    %v5817 = vunpack.c.l.b16 %v5801
    %v5818 = vunpack.c.l.b16 %v5802
    %v5819 = vunpack.c.l.b16 %v5803
    %v5820 = vunpack.c.l.b16 %v5804
    %v5821 = vunpack.c.l.b16 %v5805
    %v5822 = vpack.c.b16 %v5815, %v5814
    %v5823 = vpack.c.b16 %v5817, %v5816
    %v5824 = vpack.c.b16 %v5819, %v5818
    %v5825 = vpack.c.b16 %v5821, %v5820
    %v5831 = vsel %vm598, %v5797, 0
    %5833 = vmatpush.bf16.msra.mxu0 0
    %5834 = vmatpush.bf16.msra.mxu0 0
    %5835 = vmatpush.bf16.msra.mxu0 0
    %5836 = vmatpush.bf16.msra.mxu0 0
    %5837 = vmatpush.bf16.msra.mxu0 %v5825
    %5838 = vmatpush.bf16.msra.mxu0 %v5824
    %5839 = vmatpush.bf16.msra.mxu0 %v5823
    %5840 = vmatpush.bf16.msra.mxu0 %v5822
    %5841 = vmatmul.bf16.gmra.mxu0 %v5831
    %v5842 = vpop.f32.mrf.mxu0
    %v5843 = vadd.f32 0.0, %v5842
    %v5844 = vpop.f32.mrf.mxu0
    %5845 = vdwg.mxu0
    %v5846 = vadd.f32 %v5795, %v5843
    %v5847 = vld [vmem:[#allocation3 + $0x1a] sm:$0x3]
    %v5848 = vpack.c.bf16 %v5847, %v5847
    %v5849 = vld [vmem:[%s43 + $0x1a0] sm:$0xf]
    %v5850 = vld [vmem:[%s43 + $0x1a4] sm:$0xf]
    %v5851 = vld [vmem:[%s43 + $0x1a8] sm:$0xf]
    %v5852 = vld [vmem:[%s43 + $0x1ac] sm:$0xf]
    %v5853 = vld [vmem:[%s43 + $0x1b0] sm:$0xf]
    %v5854 = vld [vmem:[%s43 + $0x1b4] sm:$0xf]
    %v5855 = vld [vmem:[%s43 + $0x1b8] sm:$0xf]
    %v5856 = vld [vmem:[%s43 + $0x1bc] sm:$0xf]
    %v5865 = vunpack.c.l.b16 %v5849
    %v5866 = vunpack.c.l.b16 %v5850
    %v5867 = vunpack.c.l.b16 %v5851
    %v5868 = vunpack.c.l.b16 %v5852
    %v5869 = vunpack.c.l.b16 %v5853
    %v5870 = vunpack.c.l.b16 %v5854
    %v5871 = vunpack.c.l.b16 %v5855
    %v5872 = vunpack.c.l.b16 %v5856
    %v5873 = vpack.c.b16 %v5866, %v5865
    %v5874 = vpack.c.b16 %v5868, %v5867
    %v5875 = vpack.c.b16 %v5870, %v5869
    %v5876 = vpack.c.b16 %v5872, %v5871
    %v5882 = vsel %vm598, %v5848, 0
    %5884 = vmatpush.bf16.msra.mxu0 0
    %5885 = vmatpush.bf16.msra.mxu0 0
    %5886 = vmatpush.bf16.msra.mxu0 0
    %5887 = vmatpush.bf16.msra.mxu0 0
    %5888 = vmatpush.bf16.msra.mxu0 %v5876
    %5889 = vmatpush.bf16.msra.mxu0 %v5875
    %5890 = vmatpush.bf16.msra.mxu0 %v5874
    %5891 = vmatpush.bf16.msra.mxu0 %v5873
    %5892 = vmatmul.bf16.gmra.mxu0 %v5882
    %v5893 = vpop.f32.mrf.mxu0
    %v5894 = vadd.f32 0.0, %v5893
    %v5895 = vpop.f32.mrf.mxu0
    %5896 = vdwg.mxu0
    %v5897 = vadd.f32 %v5846, %v5894
    %v5898 = vld [vmem:[#allocation3 + $0x1c] sm:$0x3]
    %v5899 = vpack.c.bf16 %v5898, %v5898
    %v5900 = vld [vmem:[%s43 + $0x1c0] sm:$0xf]
    %v5901 = vld [vmem:[%s43 + $0x1c4] sm:$0xf]
    %v5902 = vld [vmem:[%s43 + $0x1c8] sm:$0xf]
    %v5903 = vld [vmem:[%s43 + $0x1cc] sm:$0xf]
    %v5904 = vld [vmem:[%s43 + $0x1d0] sm:$0xf]
    %v5905 = vld [vmem:[%s43 + $0x1d4] sm:$0xf]
    %v5906 = vld [vmem:[%s43 + $0x1d8] sm:$0xf]
    %v5907 = vld [vmem:[%s43 + $0x1dc] sm:$0xf]
    %v5916 = vunpack.c.l.b16 %v5900
    %v5917 = vunpack.c.l.b16 %v5901
    %v5918 = vunpack.c.l.b16 %v5902
    %v5919 = vunpack.c.l.b16 %v5903
    %v5920 = vunpack.c.l.b16 %v5904
    %v5921 = vunpack.c.l.b16 %v5905
    %v5922 = vunpack.c.l.b16 %v5906
    %v5923 = vunpack.c.l.b16 %v5907
    %v5924 = vpack.c.b16 %v5917, %v5916
    %v5925 = vpack.c.b16 %v5919, %v5918
    %v5926 = vpack.c.b16 %v5921, %v5920
    %v5927 = vpack.c.b16 %v5923, %v5922
    %v5933 = vsel %vm598, %v5899, 0
    %5935 = vmatpush.bf16.msra.mxu0 0
    %5936 = vmatpush.bf16.msra.mxu0 0
    %5937 = vmatpush.bf16.msra.mxu0 0
    %5938 = vmatpush.bf16.msra.mxu0 0
    %5939 = vmatpush.bf16.msra.mxu0 %v5927
    %5940 = vmatpush.bf16.msra.mxu0 %v5926
    %5941 = vmatpush.bf16.msra.mxu0 %v5925
    %5942 = vmatpush.bf16.msra.mxu0 %v5924
    %5943 = vmatmul.bf16.gmra.mxu0 %v5933
    %v5944 = vpop.f32.mrf.mxu0
    %v5945 = vadd.f32 0.0, %v5944
    %v5946 = vpop.f32.mrf.mxu0
    %5947 = vdwg.mxu0
    %v5948 = vadd.f32 %v5897, %v5945
    %v5949 = vld [vmem:[%s45] sm:$0x1]
    %v5951 = vperm.slane %v5949, 0
    %v5953 = vadd.f32 %v5948, %v5951
    %v5954 = vmax.f32 %v5953, 0.0
    %v5955 = vpack.c.bf16 %v5954, %v5954
    %v5956 = vld [vmem:[%s47] sm:$0xf]
    %v5957 = vld [vmem:[%s47 + $0x4] sm:$0xf]
    %v5958 = vld [vmem:[%s47 + $0x8] sm:$0xf]
    %v5959 = vld [vmem:[%s47 + $0xc] sm:$0xf]
    %v5960 = vld [vmem:[%s49] sm:$0x1]
    %v5962 = vperm.slane %v5960, 0
    %v5968 = vunpack.c.l.b16 %v5956
    %v5969 = vunpack.c.l.b16 %v5957
    %v5970 = vunpack.c.l.b16 %v5958
    %v5971 = vunpack.c.l.b16 %v5959
    %v5972 = vpack.c.b16 %v5969, %v5968
    %v5973 = vpack.c.b16 %v5971, %v5970
    %v5977 = vsel %vm4181, %v5955, 0
    %5979 = vmatpush.bf16.msra.mxu0 0
    %5980 = vmatpush.bf16.msra.mxu0 0
    %5981 = vmatpush.bf16.msra.mxu0 0
    %5982 = vmatpush.bf16.msra.mxu0 0
    %5983 = vmatpush.bf16.msra.mxu0 0
    %5984 = vmatpush.bf16.msra.mxu0 0
    %5985 = vmatpush.bf16.msra.mxu0 %v5973
    %5986 = vmatpush.bf16.msra.mxu0 %v5972
    %5987 = vmatmul.bf16.gmra.mxu0 %v5977
    %v5988 = vpop.f32.mrf.mxu0
    %v5989 = vadd.f32 %v5962, %v5988
    %v5990 = vpop.f32.mrf.mxu0
    %5991 = vdwg.mxu0
    %v5992 = vmax.f32 %v5989, 0.0
    %v5993 = vpack.c.bf16 %v5992, %v5992
    %v5994 = vld [vmem:[%s51] sm:$0xf]
    %v5995 = vld [vmem:[%s51 + $0x4] sm:$0xf]
    %v5996 = vld [vmem:[%s51 + $0x8] sm:$0xf]
    %v5997 = vld [vmem:[%s51 + $0xc] sm:$0xf]
    %v5998 = vld [vmem:[%s53] sm:$0x1]
    %v6000 = vperm.slane %v5998, 0
    %v6006 = vunpack.c.l.b16 %v5994
    %v6007 = vunpack.c.l.b16 %v5995
    %v6008 = vunpack.c.l.b16 %v5996
    %v6009 = vunpack.c.l.b16 %v5997
    %v6010 = vpack.c.b16 %v6007, %v6006
    %v6011 = vpack.c.b16 %v6009, %v6008
    %v6015 = vsel %vm4181, %v5993, 0
    %6017 = vmatpush.bf16.msra.mxu0 0
    %6018 = vmatpush.bf16.msra.mxu0 0
    %6019 = vmatpush.bf16.msra.mxu0 0
    %6020 = vmatpush.bf16.msra.mxu0 0
    %6021 = vmatpush.bf16.msra.mxu0 0
    %6022 = vmatpush.bf16.msra.mxu0 0
    %6023 = vmatpush.bf16.msra.mxu0 %v6011
    %6024 = vmatpush.bf16.msra.mxu0 %v6010
    %6025 = vmatmul.bf16.gmra.mxu0 %v6015
    %v6026 = vpop.f32.mrf.mxu0
    %v6027 = vadd.f32 %v6000, %v6026
    %v6028 = vpop.f32.mrf.mxu0
    %6029 = vdwg.mxu0
    %v6030 = vsel %vm4236, %v6027, -inf
    %6031 = vmax.xlane.f32.xlu0 %v6030
    %v6032 = vpop.xlane.xlu0 %6031
    %v6033 = vsub.f32 %v6027, %v6032
    %v6034 = vmul.f32 %v6033, 1.442695
    %v6035 = vpow.pop %v6034
    %v6036 = vsel %vm4236, %v6035, 0.0
    %6037 = vadd.xlane.f32.xlu0 %v6036
    %v6038 = vpop.xlane.xlu0 %6037
    %v6039 = vrcp.pop %v6038
    %v6040 = vmul.f32 %v6038, %v6039
    %v6041 = vsub.f32 1.0, %v6040
    %v6042 = vmul.f32 %v6039, %v6041
    %v6043 = vadd.f32 %v6039, %v6042
    %vm6044 = vweird.f32 %v6038
    %vm6045 = vweird.f32 %v6039
    %vm6046 = vmor %vm6044, %vm6045
    %v6047 = vsel %vm6046, %v6039, %v6043
    %v6048 = vand.u32 2147483647, %v6038
    %vm6049 = vcmp.eq.f32.partialorder %v6048, 8.507059e+37
    %v6050 = vand.u32 %v6038, 2147483648
    %v6051 = vor.u32 1.1754944e-38, %v6050
    %v6052 = vsel %vm6049, %v6051, %v6047
    %v6053 = vmul.f32 %v6035, %v6052
    %v6054 = vadd.f32 %v4261, %v6053
    %v6055 = vld [vmem:[%s55] sm:$0xf]
    %v6056 = vld [vmem:[%s55 + $0x4] sm:$0xf]
    %v6057 = vld [vmem:[%s55 + $0x8] sm:$0xf]
    %v6058 = vld [vmem:[%s55 + $0xc] sm:$0x7]
    %v6063 = vunpack.c.l.b16 %v6055
    %v6064 = vunpack.c.l.b16 %v6056
    %v6065 = vunpack.c.l.b16 %v6057
    %v6066 = vunpack.c.l.b16 %v6058
    %v6067 = vpack.c.b16 %v6064, %v6063
    %v6068 = vpack.c.b16 %v6066, %v6065
    %v6070 = vsel %vm477, %v6067, 0
    %v6073 = vsel %vm477, %v6068, 0
    %6075 = vmatpush.bf16.msra.mxu0 %v504
    %6076 = vmatpush.bf16.msra.mxu0 %v422
    %6077 = vmatpush.bf16.msra.mxu0 %v421
    %6078 = vmatpush.bf16.msra.mxu0 %v420
    %6079 = vmatpush.bf16.msra.mxu0 %v419
    %6080 = vmatpush.bf16.msra.mxu0 %v418
    %6081 = vmatpush.bf16.msra.mxu0 %v417
    %6082 = vmatpush.bf16.msra.mxu0 %v416
    %6083 = vmatmul.bf16.gmra.mxu0 %v6070
    %v6084 = vpop.f32.mrf.mxu0
    %v6085 = vadd.f32 0.0, %v6084
    %v6086 = vpop.f32.mrf.mxu0
    %v6087 = vadd.f32 0.0, %v6086
    %6088 = vmatmul.bf16.gmra.mxu0 %v6073
    %v6089 = vpop.f32.mrf.mxu0
    %v6090 = vadd.f32 0.0, %v6089
    %v6091 = vpop.f32.mrf.mxu0
    %v6092 = vadd.f32 0.0, %v6091
    %6093 = vdwg.mxu0
    %v6094 = vpack.c.bf16 %v6087, %v6085
    %v6095 = vpack.c.bf16 %v6092, %v6090
    %v6096 = vld [vmem:[%s57] sm:$0xf]
    %v6097 = vld [vmem:[%s57 + $0x4] sm:$0xf]
    %v6098 = vld [vmem:[%s57 + $0x8] sm:$0xf]
    %v6099 = vld [vmem:[%s57 + $0xc] sm:$0xf]
    %v6100 = vld [vmem:[%s57 + $0x10] sm:$0xf]
    %v6101 = vld [vmem:[%s57 + $0x14] sm:$0xf]
    %v6102 = vld [vmem:[%s57 + $0x18] sm:$0xf]
    %v6103 = vld [vmem:[%s57 + $0x1c] sm:$0xf]
    %s6104 = scalar_lea.vmem %s55, 16
    %v6105 = vld [vmem:[%s6104] sm:$0xf]
    %v6106 = vld [vmem:[%s6104 + $0x4] sm:$0xf]
    %v6107 = vld [vmem:[%s6104 + $0x8] sm:$0xf]
    %v6108 = vld [vmem:[%s6104 + $0xc] sm:$0x7]
    %v6113 = vunpack.c.l.b16 %v6105
    %v6114 = vunpack.c.l.b16 %v6106
    %v6115 = vunpack.c.l.b16 %v6107
    %v6116 = vunpack.c.l.b16 %v6108
    %v6117 = vpack.c.b16 %v6114, %v6113
    %v6118 = vpack.c.b16 %v6116, %v6115
    %v6120 = vsel %vm477, %v6117, 0
    %v6123 = vsel %vm477, %v6118, 0
    %6125 = vmatpush.bf16.msra.mxu0 %v504
    %6126 = vmatpush.bf16.msra.mxu0 %v422
    %6127 = vmatpush.bf16.msra.mxu0 %v421
    %6128 = vmatpush.bf16.msra.mxu0 %v420
    %6129 = vmatpush.bf16.msra.mxu0 %v419
    %6130 = vmatpush.bf16.msra.mxu0 %v418
    %6131 = vmatpush.bf16.msra.mxu0 %v417
    %6132 = vmatpush.bf16.msra.mxu0 %v416
    %6133 = vmatmul.bf16.gmra.mxu0 %v6120
    %v6134 = vpop.f32.mrf.mxu0
    %v6135 = vadd.f32 0.0, %v6134
    %v6136 = vpop.f32.mrf.mxu0
    %v6137 = vadd.f32 0.0, %v6136
    %6138 = vmatmul.bf16.gmra.mxu0 %v6123
    %v6139 = vpop.f32.mrf.mxu0
    %v6140 = vadd.f32 0.0, %v6139
    %v6141 = vpop.f32.mrf.mxu0
    %v6142 = vadd.f32 0.0, %v6141
    %6143 = vdwg.mxu0
    %v6144 = vpack.c.bf16 %v6137, %v6135
    %v6145 = vpack.c.bf16 %v6142, %v6140
    %s6146 = scalar_lea.vmem %s57, 32
    %v6147 = vld [vmem:[%s6146] sm:$0xf]
    %v6148 = vld [vmem:[%s6146 + $0x4] sm:$0xf]
    %v6149 = vld [vmem:[%s6146 + $0x8] sm:$0xf]
    %v6150 = vld [vmem:[%s6146 + $0xc] sm:$0xf]
    %v6151 = vld [vmem:[%s6146 + $0x10] sm:$0xf]
    %v6152 = vld [vmem:[%s6146 + $0x14] sm:$0xf]
    %v6153 = vld [vmem:[%s6146 + $0x18] sm:$0xf]
    %v6154 = vld [vmem:[%s6146 + $0x1c] sm:$0xf]
    %v6163 = vunpack.c.l.b16 %v6147
    %v6164 = vunpack.c.l.b16 %v6148
    %v6165 = vunpack.c.l.b16 %v6149
    %v6166 = vunpack.c.l.b16 %v6150
    %v6167 = vunpack.c.l.b16 %v6151
    %v6168 = vunpack.c.l.b16 %v6152
    %v6169 = vunpack.c.l.b16 %v6153
    %v6170 = vunpack.c.l.b16 %v6154
    %v6171 = vpack.c.b16 %v6164, %v6163
    %v6172 = vpack.c.b16 %v6166, %v6165
    %v6173 = vpack.c.b16 %v6168, %v6167
    %v6174 = vpack.c.b16 %v6170, %v6169
    %v6180 = vsel %vm598, %v6144, 0
    %v6183 = vsel %vm598, %v6145, 0
    %6185 = vmatpush.bf16.msra.mxu0 0
    %6186 = vmatpush.bf16.msra.mxu0 0
    %6187 = vmatpush.bf16.msra.mxu0 0
    %6188 = vmatpush.bf16.msra.mxu0 0
    %6189 = vmatpush.bf16.msra.mxu0 %v6174
    %6190 = vmatpush.bf16.msra.mxu0 %v6173
    %6191 = vmatpush.bf16.msra.mxu0 %v6172
    %6192 = vmatpush.bf16.msra.mxu0 %v6171
    %6193 = vmatmul.bf16.gmra.mxu0 %v6180
    %v6194 = vpop.f32.mrf.mxu0
    %v6195 = vadd.f32 0.0, %v6194
    %v6196 = vpop.f32.mrf.mxu0
    %v6197 = vadd.f32 0.0, %v6196
    %6198 = vmatmul.bf16.gmra.mxu0 %v6183
    %v6199 = vpop.f32.mrf.mxu0
    %v6200 = vadd.f32 0.0, %v6199
    %v6201 = vpop.f32.mrf.mxu0
    %v6202 = vadd.f32 0.0, %v6201
    %6203 = vdwg.mxu0
    %v6212 = vunpack.c.l.b16 %v6096
    %v6213 = vunpack.c.l.b16 %v6097
    %v6214 = vunpack.c.l.b16 %v6098
    %v6215 = vunpack.c.l.b16 %v6099
    %v6216 = vunpack.c.l.b16 %v6100
    %v6217 = vunpack.c.l.b16 %v6101
    %v6218 = vunpack.c.l.b16 %v6102
    %v6219 = vunpack.c.l.b16 %v6103
    %v6220 = vpack.c.b16 %v6213, %v6212
    %v6221 = vpack.c.b16 %v6215, %v6214
    %v6222 = vpack.c.b16 %v6217, %v6216
    %v6223 = vpack.c.b16 %v6219, %v6218
    %v6229 = vsel %vm598, %v6094, 0
    %v6232 = vsel %vm598, %v6095, 0
    %6234 = vmatpush.bf16.msra.mxu0 0
    %6235 = vmatpush.bf16.msra.mxu0 0
    %6236 = vmatpush.bf16.msra.mxu0 0
    %6237 = vmatpush.bf16.msra.mxu0 0
    %6238 = vmatpush.bf16.msra.mxu0 %v6223
    %6239 = vmatpush.bf16.msra.mxu0 %v6222
    %6240 = vmatpush.bf16.msra.mxu0 %v6221
    %6241 = vmatpush.bf16.msra.mxu0 %v6220
    %6242 = vmatmul.bf16.gmra.mxu0 %v6229
    %v6243 = vpop.f32.mrf.mxu0
    %v6244 = vadd.f32 %v6195, %v6243
    %v6245 = vpop.f32.mrf.mxu0
    %v6246 = vadd.f32 %v6197, %v6245
    %6247 = vmatmul.bf16.gmra.mxu0 %v6232
    %v6248 = vpop.f32.mrf.mxu0
    %v6249 = vadd.f32 %v6200, %v6248
    %v6250 = vpop.f32.mrf.mxu0
    %v6251 = vadd.f32 %v6202, %v6250
    %6252 = vdwg.mxu0
    %s6253 = scalar_lea.vmem %s55, 32
    %v6254 = vld [vmem:[%s6253] sm:$0xf]
    %v6255 = vld [vmem:[%s6253 + $0x4] sm:$0xf]
    %v6256 = vld [vmem:[%s6253 + $0x8] sm:$0xf]
    %v6257 = vld [vmem:[%s6253 + $0xc] sm:$0x7]
    %v6262 = vunpack.c.l.b16 %v6254
    %v6263 = vunpack.c.l.b16 %v6255
    %v6264 = vunpack.c.l.b16 %v6256
    %v6265 = vunpack.c.l.b16 %v6257
    %v6266 = vpack.c.b16 %v6263, %v6262
    %v6267 = vpack.c.b16 %v6265, %v6264
    %v6269 = vsel %vm477, %v6266, 0
    %v6272 = vsel %vm477, %v6267, 0
    %6274 = vmatpush.bf16.msra.mxu0 %v504
    %6275 = vmatpush.bf16.msra.mxu0 %v422
    %6276 = vmatpush.bf16.msra.mxu0 %v421
    %6277 = vmatpush.bf16.msra.mxu0 %v420
    %6278 = vmatpush.bf16.msra.mxu0 %v419
    %6279 = vmatpush.bf16.msra.mxu0 %v418
    %6280 = vmatpush.bf16.msra.mxu0 %v417
    %6281 = vmatpush.bf16.msra.mxu0 %v416
    %6282 = vmatmul.bf16.gmra.mxu0 %v6269
    %v6283 = vpop.f32.mrf.mxu0
    %v6284 = vadd.f32 0.0, %v6283
    %v6285 = vpop.f32.mrf.mxu0
    %v6286 = vadd.f32 0.0, %v6285
    %6287 = vmatmul.bf16.gmra.mxu0 %v6272
    %v6288 = vpop.f32.mrf.mxu0
    %v6289 = vadd.f32 0.0, %v6288
    %v6290 = vpop.f32.mrf.mxu0
    %v6291 = vadd.f32 0.0, %v6290
    %6292 = vdwg.mxu0
    %v6293 = vpack.c.bf16 %v6286, %v6284
    %v6294 = vpack.c.bf16 %v6291, %v6289
    %s6295 = scalar_lea.vmem %s57, 64
    %v6296 = vld [vmem:[%s6295] sm:$0xf]
    %v6297 = vld [vmem:[%s6295 + $0x4] sm:$0xf]
    %v6298 = vld [vmem:[%s6295 + $0x8] sm:$0xf]
    %v6299 = vld [vmem:[%s6295 + $0xc] sm:$0xf]
    %v6300 = vld [vmem:[%s6295 + $0x10] sm:$0xf]
    %v6301 = vld [vmem:[%s6295 + $0x14] sm:$0xf]
    %v6302 = vld [vmem:[%s6295 + $0x18] sm:$0xf]
    %v6303 = vld [vmem:[%s6295 + $0x1c] sm:$0xf]
    %v6312 = vunpack.c.l.b16 %v6296
    %v6313 = vunpack.c.l.b16 %v6297
    %v6314 = vunpack.c.l.b16 %v6298
    %v6315 = vunpack.c.l.b16 %v6299
    %v6316 = vunpack.c.l.b16 %v6300
    %v6317 = vunpack.c.l.b16 %v6301
    %v6318 = vunpack.c.l.b16 %v6302
    %v6319 = vunpack.c.l.b16 %v6303
    %v6320 = vpack.c.b16 %v6313, %v6312
    %v6321 = vpack.c.b16 %v6315, %v6314
    %v6322 = vpack.c.b16 %v6317, %v6316
    %v6323 = vpack.c.b16 %v6319, %v6318
    %v6329 = vsel %vm598, %v6293, 0
    %v6332 = vsel %vm598, %v6294, 0
    %6334 = vmatpush.bf16.msra.mxu0 0
    %6335 = vmatpush.bf16.msra.mxu0 0
    %6336 = vmatpush.bf16.msra.mxu0 0
    %6337 = vmatpush.bf16.msra.mxu0 0
    %6338 = vmatpush.bf16.msra.mxu0 %v6323
    %6339 = vmatpush.bf16.msra.mxu0 %v6322
    %6340 = vmatpush.bf16.msra.mxu0 %v6321
    %6341 = vmatpush.bf16.msra.mxu0 %v6320
    %6342 = vmatmul.bf16.gmra.mxu0 %v6329
    %v6343 = vpop.f32.mrf.mxu0
    %v6344 = vadd.f32 0.0, %v6343
    %v6345 = vpop.f32.mrf.mxu0
    %v6346 = vadd.f32 0.0, %v6345
    %6347 = vmatmul.bf16.gmra.mxu0 %v6332
    %v6348 = vpop.f32.mrf.mxu0
    %v6349 = vadd.f32 0.0, %v6348
    %v6350 = vpop.f32.mrf.mxu0
    %v6351 = vadd.f32 0.0, %v6350
    %6352 = vdwg.mxu0
    %v6353 = vadd.f32 %v6244, %v6344
    %v6354 = vadd.f32 %v6246, %v6346
    %v6355 = vadd.f32 %v6249, %v6349
    %v6356 = vadd.f32 %v6251, %v6351
    %s6357 = scalar_lea.vmem %s55, 48
    %v6358 = vld [vmem:[%s6357] sm:$0xf]
    %v6359 = vld [vmem:[%s6357 + $0x4] sm:$0xf]
    %v6360 = vld [vmem:[%s6357 + $0x8] sm:$0xf]
    %v6361 = vld [vmem:[%s6357 + $0xc] sm:$0x7]
    %v6366 = vunpack.c.l.b16 %v6358
    %v6367 = vunpack.c.l.b16 %v6359
    %v6368 = vunpack.c.l.b16 %v6360
    %v6369 = vunpack.c.l.b16 %v6361
    %v6370 = vpack.c.b16 %v6367, %v6366
    %v6371 = vpack.c.b16 %v6369, %v6368
    %v6373 = vsel %vm477, %v6370, 0
    %v6376 = vsel %vm477, %v6371, 0
    %6378 = vmatpush.bf16.msra.mxu0 %v504
    %6379 = vmatpush.bf16.msra.mxu0 %v422
    %6380 = vmatpush.bf16.msra.mxu0 %v421
    %6381 = vmatpush.bf16.msra.mxu0 %v420
    %6382 = vmatpush.bf16.msra.mxu0 %v419
    %6383 = vmatpush.bf16.msra.mxu0 %v418
    %6384 = vmatpush.bf16.msra.mxu0 %v417
    %6385 = vmatpush.bf16.msra.mxu0 %v416
    %6386 = vmatmul.bf16.gmra.mxu0 %v6373
    %v6387 = vpop.f32.mrf.mxu0
    %v6388 = vadd.f32 0.0, %v6387
    %v6389 = vpop.f32.mrf.mxu0
    %v6390 = vadd.f32 0.0, %v6389
    %6391 = vmatmul.bf16.gmra.mxu0 %v6376
    %v6392 = vpop.f32.mrf.mxu0
    %v6393 = vadd.f32 0.0, %v6392
    %v6394 = vpop.f32.mrf.mxu0
    %v6395 = vadd.f32 0.0, %v6394
    %6396 = vdwg.mxu0
    %v6397 = vpack.c.bf16 %v6390, %v6388
    %v6398 = vpack.c.bf16 %v6395, %v6393
    %s6399 = scalar_lea.vmem %s57, 96
    %v6400 = vld [vmem:[%s6399] sm:$0xf]
    %v6401 = vld [vmem:[%s6399 + $0x4] sm:$0xf]
    %v6402 = vld [vmem:[%s6399 + $0x8] sm:$0xf]
    %v6403 = vld [vmem:[%s6399 + $0xc] sm:$0xf]
    %v6404 = vld [vmem:[%s6399 + $0x10] sm:$0xf]
    %v6405 = vld [vmem:[%s6399 + $0x14] sm:$0xf]
    %v6406 = vld [vmem:[%s6399 + $0x18] sm:$0xf]
    %v6407 = vld [vmem:[%s6399 + $0x1c] sm:$0xf]
    %v6416 = vunpack.c.l.b16 %v6400
    %v6417 = vunpack.c.l.b16 %v6401
    %v6418 = vunpack.c.l.b16 %v6402
    %v6419 = vunpack.c.l.b16 %v6403
    %v6420 = vunpack.c.l.b16 %v6404
    %v6421 = vunpack.c.l.b16 %v6405
    %v6422 = vunpack.c.l.b16 %v6406
    %v6423 = vunpack.c.l.b16 %v6407
    %v6424 = vpack.c.b16 %v6417, %v6416
    %v6425 = vpack.c.b16 %v6419, %v6418
    %v6426 = vpack.c.b16 %v6421, %v6420
    %v6427 = vpack.c.b16 %v6423, %v6422
    %v6433 = vsel %vm598, %v6397, 0
    %v6436 = vsel %vm598, %v6398, 0
    %6438 = vmatpush.bf16.msra.mxu0 0
    %6439 = vmatpush.bf16.msra.mxu0 0
    %6440 = vmatpush.bf16.msra.mxu0 0
    %6441 = vmatpush.bf16.msra.mxu0 0
    %6442 = vmatpush.bf16.msra.mxu0 %v6427
    %6443 = vmatpush.bf16.msra.mxu0 %v6426
    %6444 = vmatpush.bf16.msra.mxu0 %v6425
    %6445 = vmatpush.bf16.msra.mxu0 %v6424
    %6446 = vmatmul.bf16.gmra.mxu0 %v6433
    %v6447 = vpop.f32.mrf.mxu0
    %v6448 = vadd.f32 0.0, %v6447
    %v6449 = vpop.f32.mrf.mxu0
    %v6450 = vadd.f32 0.0, %v6449
    %6451 = vmatmul.bf16.gmra.mxu0 %v6436
    %v6452 = vpop.f32.mrf.mxu0
    %v6453 = vadd.f32 0.0, %v6452
    %v6454 = vpop.f32.mrf.mxu0
    %v6455 = vadd.f32 0.0, %v6454
    %6456 = vdwg.mxu0
    %v6457 = vadd.f32 %v6353, %v6448
    %v6458 = vadd.f32 %v6354, %v6450
    %v6459 = vadd.f32 %v6355, %v6453
    %v6460 = vadd.f32 %v6356, %v6455
    %s6461 = scalar_lea.vmem %s55, 64
    %v6462 = vld [vmem:[%s6461] sm:$0xf]
    %v6463 = vld [vmem:[%s6461 + $0x4] sm:$0xf]
    %v6464 = vld [vmem:[%s6461 + $0x8] sm:$0xf]
    %v6465 = vld [vmem:[%s6461 + $0xc] sm:$0x7]
    %v6470 = vunpack.c.l.b16 %v6462
    %v6471 = vunpack.c.l.b16 %v6463
    %v6472 = vunpack.c.l.b16 %v6464
    %v6473 = vunpack.c.l.b16 %v6465
    %v6474 = vpack.c.b16 %v6471, %v6470
    %v6475 = vpack.c.b16 %v6473, %v6472
    %v6477 = vsel %vm477, %v6474, 0
    %v6480 = vsel %vm477, %v6475, 0
    %6482 = vmatpush.bf16.msra.mxu0 %v504
    %6483 = vmatpush.bf16.msra.mxu0 %v422
    %6484 = vmatpush.bf16.msra.mxu0 %v421
    %6485 = vmatpush.bf16.msra.mxu0 %v420
    %6486 = vmatpush.bf16.msra.mxu0 %v419
    %6487 = vmatpush.bf16.msra.mxu0 %v418
    %6488 = vmatpush.bf16.msra.mxu0 %v417
    %6489 = vmatpush.bf16.msra.mxu0 %v416
    %6490 = vmatmul.bf16.gmra.mxu0 %v6477
    %v6491 = vpop.f32.mrf.mxu0
    %v6492 = vadd.f32 0.0, %v6491
    %v6493 = vpop.f32.mrf.mxu0
    %v6494 = vadd.f32 0.0, %v6493
    %6495 = vmatmul.bf16.gmra.mxu0 %v6480
    %v6496 = vpop.f32.mrf.mxu0
    %v6497 = vadd.f32 0.0, %v6496
    %v6498 = vpop.f32.mrf.mxu0
    %v6499 = vadd.f32 0.0, %v6498
    %6500 = vdwg.mxu0
    %v6501 = vpack.c.bf16 %v6494, %v6492
    %v6502 = vpack.c.bf16 %v6499, %v6497
    %s6503 = scalar_lea.vmem %s57, 128
    %v6504 = vld [vmem:[%s6503] sm:$0xf]
    %v6505 = vld [vmem:[%s6503 + $0x4] sm:$0xf]
    %v6506 = vld [vmem:[%s6503 + $0x8] sm:$0xf]
    %v6507 = vld [vmem:[%s6503 + $0xc] sm:$0xf]
    %v6508 = vld [vmem:[%s6503 + $0x10] sm:$0xf]
    %v6509 = vld [vmem:[%s6503 + $0x14] sm:$0xf]
    %v6510 = vld [vmem:[%s6503 + $0x18] sm:$0xf]
    %v6511 = vld [vmem:[%s6503 + $0x1c] sm:$0xf]
    %v6520 = vunpack.c.l.b16 %v6504
    %v6521 = vunpack.c.l.b16 %v6505
    %v6522 = vunpack.c.l.b16 %v6506
    %v6523 = vunpack.c.l.b16 %v6507
    %v6524 = vunpack.c.l.b16 %v6508
    %v6525 = vunpack.c.l.b16 %v6509
    %v6526 = vunpack.c.l.b16 %v6510
    %v6527 = vunpack.c.l.b16 %v6511
    %v6528 = vpack.c.b16 %v6521, %v6520
    %v6529 = vpack.c.b16 %v6523, %v6522
    %v6530 = vpack.c.b16 %v6525, %v6524
    %v6531 = vpack.c.b16 %v6527, %v6526
    %v6537 = vsel %vm598, %v6501, 0
    %v6540 = vsel %vm598, %v6502, 0
    %6542 = vmatpush.bf16.msra.mxu0 0
    %6543 = vmatpush.bf16.msra.mxu0 0
    %6544 = vmatpush.bf16.msra.mxu0 0
    %6545 = vmatpush.bf16.msra.mxu0 0
    %6546 = vmatpush.bf16.msra.mxu0 %v6531
    %6547 = vmatpush.bf16.msra.mxu0 %v6530
    %6548 = vmatpush.bf16.msra.mxu0 %v6529
    %6549 = vmatpush.bf16.msra.mxu0 %v6528
    %6550 = vmatmul.bf16.gmra.mxu0 %v6537
    %v6551 = vpop.f32.mrf.mxu0
    %v6552 = vadd.f32 0.0, %v6551
    %v6553 = vpop.f32.mrf.mxu0
    %v6554 = vadd.f32 0.0, %v6553
    %6555 = vmatmul.bf16.gmra.mxu0 %v6540
    %v6556 = vpop.f32.mrf.mxu0
    %v6557 = vadd.f32 0.0, %v6556
    %v6558 = vpop.f32.mrf.mxu0
    %v6559 = vadd.f32 0.0, %v6558
    %6560 = vdwg.mxu0
    %v6561 = vadd.f32 %v6457, %v6552
    %v6562 = vadd.f32 %v6458, %v6554
    %v6563 = vadd.f32 %v6459, %v6557
    %v6564 = vadd.f32 %v6460, %v6559
    %v6565 = vld [vmem:[%s59] sm:$0x1]
    %v6567 = vperm.slane %v6565, 0
    %v6569 = vadd.f32 %v6561, %v6567
    %v6570 = vadd.f32 %v6562, %v6567
    %v6571 = vadd.f32 %v6563, %v6567
    %v6572 = vadd.f32 %v6564, %v6567
    %vm6573 = vcmp.gt.f32.partialorder %v6569, 0.0
    %vm6574 = vcmp.gt.f32.partialorder %v6570, 0.0
    %vm6575 = vcmp.gt.f32.partialorder %v6571, 0.0
    %vm6576 = vcmp.gt.f32.partialorder %v6572, 0.0
    %v6577 = vmul.f32 %v6569, 1.442695
    %v6578 = vpow.pop %v6577
    %v6579 = vmul.f32 %v6570, 1.442695
    %v6580 = vpow.pop %v6579
    %v6581 = vmul.f32 %v6571, 1.442695
    %v6582 = vpow.pop %v6581
    %v6583 = vmul.f32 %v6572, 1.442695
    %v6584 = vpow.pop %v6583
    %v6585 = vsub.f32 %v6578, 1.0
    %v6586 = vsub.f32 %v6580, 1.0
    %v6587 = vsub.f32 %v6582, 1.0
    %v6588 = vsub.f32 %v6584, 1.0
    %v6589 = vsel %vm6573, %v6569, %v6585
    %v6590 = vsel %vm6574, %v6570, %v6586
    %v6591 = vsel %vm6575, %v6571, %v6587
    %v6592 = vsel %vm6576, %v6572, %v6588
    %v6593 = vpack.c.bf16 %v6590, %v6589
    %v6594 = vpack.c.bf16 %v6592, %v6591
    %v6595 = vld [vmem:[%s61] sm:$0xf]
    %vm6596 = vcmask 244736
    %v6598 = vsel %vm6596, %v6595, 0
    %vm6600 = vcmask 1046528
    %v6602 = vsel %vm6600, %v6594, 0
    %6604 = vmatpush.bf16.msra.mxu0 0
    %6605 = vmatpush.bf16.msra.mxu0 0
    %6606 = vmatpush.bf16.msra.mxu0 0
    %6607 = vmatpush.bf16.msra.mxu0 0
    %6608 = vmatpush.bf16.msra.mxu0 0
    %6609 = vmatpush.bf16.msra.mxu0 0
    %6610 = vmatpush.bf16.msra.mxu0 %v6602
    %6611 = vmatpush.bf16.msra.mxu0 %v6593
    %6612 = vmatmul.bf16.gmra.mxu0 %v6598
    %v6613 = vpop.f32.mrf.mxu0
    %v6614 = vadd.f32 0.0, %v6613
    %v6615 = vpop.f32.mrf.mxu0
    %6616 = vdwg.mxu0
    %v6617 = vpack.c.bf16 %v6614, %v6614
    %v6618 = vld [vmem:[%s63] sm:$0xf]
    %v6619 = vld [vmem:[%s63 + $0x4] sm:$0xf]
    %v6620 = vld [vmem:[%s63 + $0x8] sm:$0xf]
    %v6621 = vld [vmem:[%s63 + $0xc] sm:$0xf]
    %v6622 = vld [vmem:[%s63 + $0x10] sm:$0xf]
    %v6623 = vld [vmem:[%s63 + $0x14] sm:$0xf]
    %v6624 = vld [vmem:[%s63 + $0x18] sm:$0xf]
    %v6625 = vld [vmem:[%s63 + $0x1c] sm:$0xf]
    %v6626 = vld [vmem:[%s63 + $0x20] sm:$0xf]
    %v6627 = vld [vmem:[%s63 + $0x24] sm:$0xf]
    %v6628 = vld [vmem:[%s63 + $0x28] sm:$0xf]
    %v6629 = vld [vmem:[%s63 + $0x2c] sm:$0xf]
    %v6630 = vld [vmem:[%s63 + $0x30] sm:$0xf]
    %v6631 = vld [vmem:[%s63 + $0x34] sm:$0xf]
    %v6632 = vld [vmem:[%s63 + $0x38] sm:$0xf]
    %v6633 = vld [vmem:[%s63 + $0x3c] sm:$0xf]
    %s6634 = scalar_lea.vmem %s61, 4
    %v6635 = vld [vmem:[%s6634] sm:$0xf]
    %v6637 = vsel %vm6596, %v6635, 0
    %6639 = vmatpush.bf16.msra.mxu0 0
    %6640 = vmatpush.bf16.msra.mxu0 0
    %6641 = vmatpush.bf16.msra.mxu0 0
    %6642 = vmatpush.bf16.msra.mxu0 0
    %6643 = vmatpush.bf16.msra.mxu0 0
    %6644 = vmatpush.bf16.msra.mxu0 0
    %6645 = vmatpush.bf16.msra.mxu0 %v6602
    %6646 = vmatpush.bf16.msra.mxu0 %v6593
    %6647 = vmatmul.bf16.gmra.mxu0 %v6637
    %v6648 = vpop.f32.mrf.mxu0
    %v6649 = vadd.f32 0.0, %v6648
    %v6650 = vpop.f32.mrf.mxu0
    %6651 = vdwg.mxu0
    %v6652 = vpack.c.bf16 %v6649, %v6649
    %s6653 = scalar_lea.vmem %s63, 64
    %v6654 = vld [vmem:[%s6653] sm:$0xf]
    %v6655 = vld [vmem:[%s6653 + $0x4] sm:$0xf]
    %v6656 = vld [vmem:[%s6653 + $0x8] sm:$0xf]
    %v6657 = vld [vmem:[%s6653 + $0xc] sm:$0xf]
    %v6658 = vld [vmem:[%s6653 + $0x10] sm:$0xf]
    %v6659 = vld [vmem:[%s6653 + $0x14] sm:$0xf]
    %v6660 = vld [vmem:[%s6653 + $0x18] sm:$0xf]
    %v6661 = vld [vmem:[%s6653 + $0x1c] sm:$0xf]
    %v6662 = vld [vmem:[%s6653 + $0x20] sm:$0xf]
    %v6663 = vld [vmem:[%s6653 + $0x24] sm:$0xf]
    %v6664 = vld [vmem:[%s6653 + $0x28] sm:$0xf]
    %v6665 = vld [vmem:[%s6653 + $0x2c] sm:$0xf]
    %v6666 = vld [vmem:[%s6653 + $0x30] sm:$0xf]
    %v6667 = vld [vmem:[%s6653 + $0x34] sm:$0xf]
    %v6668 = vld [vmem:[%s6653 + $0x38] sm:$0xf]
    %v6669 = vld [vmem:[%s6653 + $0x3c] sm:$0xf]
    %v6686 = vunpack.c.l.b16 %v6654
    %v6687 = vunpack.c.l.b16 %v6655
    %v6688 = vunpack.c.l.b16 %v6656
    %v6689 = vunpack.c.l.b16 %v6657
    %v6690 = vunpack.c.l.b16 %v6658
    %v6691 = vunpack.c.l.b16 %v6659
    %v6692 = vunpack.c.l.b16 %v6660
    %v6693 = vunpack.c.l.b16 %v6661
    %v6694 = vunpack.c.l.b16 %v6662
    %v6695 = vunpack.c.l.b16 %v6663
    %v6696 = vunpack.c.l.b16 %v6664
    %v6697 = vunpack.c.l.b16 %v6665
    %v6698 = vunpack.c.l.b16 %v6666
    %v6699 = vunpack.c.l.b16 %v6667
    %v6700 = vunpack.c.l.b16 %v6668
    %v6701 = vunpack.c.l.b16 %v6669
    %v6702 = vpack.c.b16 %v6687, %v6686
    %v6703 = vpack.c.b16 %v6689, %v6688
    %v6704 = vpack.c.b16 %v6691, %v6690
    %v6705 = vpack.c.b16 %v6693, %v6692
    %v6706 = vpack.c.b16 %v6695, %v6694
    %v6707 = vpack.c.b16 %v6697, %v6696
    %v6708 = vpack.c.b16 %v6699, %v6698
    %v6709 = vpack.c.b16 %v6701, %v6700
    %6718 = vmatpush.bf16.msra.mxu0 %v6709
    %6719 = vmatpush.bf16.msra.mxu0 %v6708
    %6720 = vmatpush.bf16.msra.mxu0 %v6707
    %6721 = vmatpush.bf16.msra.mxu0 %v6706
    %6722 = vmatpush.bf16.msra.mxu0 %v6705
    %6723 = vmatpush.bf16.msra.mxu0 %v6704
    %6724 = vmatpush.bf16.msra.mxu0 %v6703
    %6725 = vmatpush.bf16.msra.mxu0 %v6702
    %6726 = vmatmul.bf16.gmra.mxu0 %v6652
    %v6727 = vpop.f32.mrf.mxu0
    %v6728 = vadd.f32 0.0, %v6727
    %v6729 = vpop.f32.mrf.mxu0
    %6730 = vdwg.mxu0
    %v6747 = vunpack.c.l.b16 %v6618
    %v6748 = vunpack.c.l.b16 %v6619
    %v6749 = vunpack.c.l.b16 %v6620
    %v6750 = vunpack.c.l.b16 %v6621
    %v6751 = vunpack.c.l.b16 %v6622
    %v6752 = vunpack.c.l.b16 %v6623
    %v6753 = vunpack.c.l.b16 %v6624
    %v6754 = vunpack.c.l.b16 %v6625
    %v6755 = vunpack.c.l.b16 %v6626
    %v6756 = vunpack.c.l.b16 %v6627
    %v6757 = vunpack.c.l.b16 %v6628
    %v6758 = vunpack.c.l.b16 %v6629
    %v6759 = vunpack.c.l.b16 %v6630
    %v6760 = vunpack.c.l.b16 %v6631
    %v6761 = vunpack.c.l.b16 %v6632
    %v6762 = vunpack.c.l.b16 %v6633
    %v6763 = vpack.c.b16 %v6748, %v6747
    %v6764 = vpack.c.b16 %v6750, %v6749
    %v6765 = vpack.c.b16 %v6752, %v6751
    %v6766 = vpack.c.b16 %v6754, %v6753
    %v6767 = vpack.c.b16 %v6756, %v6755
    %v6768 = vpack.c.b16 %v6758, %v6757
    %v6769 = vpack.c.b16 %v6760, %v6759
    %v6770 = vpack.c.b16 %v6762, %v6761
    %6779 = vmatpush.bf16.msra.mxu0 %v6770
    %6780 = vmatpush.bf16.msra.mxu0 %v6769
    %6781 = vmatpush.bf16.msra.mxu0 %v6768
    %6782 = vmatpush.bf16.msra.mxu0 %v6767
    %6783 = vmatpush.bf16.msra.mxu0 %v6766
    %6784 = vmatpush.bf16.msra.mxu0 %v6765
    %6785 = vmatpush.bf16.msra.mxu0 %v6764
    %6786 = vmatpush.bf16.msra.mxu0 %v6763
    %6787 = vmatmul.bf16.gmra.mxu0 %v6617
    %v6788 = vpop.f32.mrf.mxu0
    %v6789 = vadd.f32 %v6728, %v6788
    %v6790 = vpop.f32.mrf.mxu0
    %6791 = vdwg.mxu0
    %s6792 = scalar_lea.vmem %s61, 8
    %v6793 = vld [vmem:[%s6792] sm:$0xf]
    %v6795 = vsel %vm6596, %v6793, 0
    %6797 = vmatpush.bf16.msra.mxu0 0
    %6798 = vmatpush.bf16.msra.mxu0 0
    %6799 = vmatpush.bf16.msra.mxu0 0
    %6800 = vmatpush.bf16.msra.mxu0 0
    %6801 = vmatpush.bf16.msra.mxu0 0
    %6802 = vmatpush.bf16.msra.mxu0 0
    %6803 = vmatpush.bf16.msra.mxu0 %v6602
    %6804 = vmatpush.bf16.msra.mxu0 %v6593
    %6805 = vmatmul.bf16.gmra.mxu0 %v6795
    %v6806 = vpop.f32.mrf.mxu0
    %v6807 = vadd.f32 0.0, %v6806
    %v6808 = vpop.f32.mrf.mxu0
    %6809 = vdwg.mxu0
    %v6810 = vpack.c.bf16 %v6807, %v6807
    %s6811 = scalar_lea.vmem %s63, 128
    %v6812 = vld [vmem:[%s6811] sm:$0xf]
    %v6813 = vld [vmem:[%s6811 + $0x4] sm:$0xf]
    %v6814 = vld [vmem:[%s6811 + $0x8] sm:$0xf]
    %v6815 = vld [vmem:[%s6811 + $0xc] sm:$0xf]
    %v6816 = vld [vmem:[%s6811 + $0x10] sm:$0xf]
    %v6817 = vld [vmem:[%s6811 + $0x14] sm:$0xf]
    %v6818 = vld [vmem:[%s6811 + $0x18] sm:$0xf]
    %v6819 = vld [vmem:[%s6811 + $0x1c] sm:$0xf]
    %v6820 = vld [vmem:[%s6811 + $0x20] sm:$0xf]
    %v6821 = vld [vmem:[%s6811 + $0x24] sm:$0xf]
    %v6822 = vld [vmem:[%s6811 + $0x28] sm:$0xf]
    %v6823 = vld [vmem:[%s6811 + $0x2c] sm:$0xf]
    %v6824 = vld [vmem:[%s6811 + $0x30] sm:$0xf]
    %v6825 = vld [vmem:[%s6811 + $0x34] sm:$0xf]
    %v6826 = vld [vmem:[%s6811 + $0x38] sm:$0xf]
    %v6827 = vld [vmem:[%s6811 + $0x3c] sm:$0xf]
    %v6844 = vunpack.c.l.b16 %v6812
    %v6845 = vunpack.c.l.b16 %v6813
    %v6846 = vunpack.c.l.b16 %v6814
    %v6847 = vunpack.c.l.b16 %v6815
    %v6848 = vunpack.c.l.b16 %v6816
    %v6849 = vunpack.c.l.b16 %v6817
    %v6850 = vunpack.c.l.b16 %v6818
    %v6851 = vunpack.c.l.b16 %v6819
    %v6852 = vunpack.c.l.b16 %v6820
    %v6853 = vunpack.c.l.b16 %v6821
    %v6854 = vunpack.c.l.b16 %v6822
    %v6855 = vunpack.c.l.b16 %v6823
    %v6856 = vunpack.c.l.b16 %v6824
    %v6857 = vunpack.c.l.b16 %v6825
    %v6858 = vunpack.c.l.b16 %v6826
    %v6859 = vunpack.c.l.b16 %v6827
    %v6860 = vpack.c.b16 %v6845, %v6844
    %v6861 = vpack.c.b16 %v6847, %v6846
    %v6862 = vpack.c.b16 %v6849, %v6848
    %v6863 = vpack.c.b16 %v6851, %v6850
    %v6864 = vpack.c.b16 %v6853, %v6852
    %v6865 = vpack.c.b16 %v6855, %v6854
    %v6866 = vpack.c.b16 %v6857, %v6856
    %v6867 = vpack.c.b16 %v6859, %v6858
    %6876 = vmatpush.bf16.msra.mxu0 %v6867
    %6877 = vmatpush.bf16.msra.mxu0 %v6866
    %6878 = vmatpush.bf16.msra.mxu0 %v6865
    %6879 = vmatpush.bf16.msra.mxu0 %v6864
    %6880 = vmatpush.bf16.msra.mxu0 %v6863
    %6881 = vmatpush.bf16.msra.mxu0 %v6862
    %6882 = vmatpush.bf16.msra.mxu0 %v6861
    %6883 = vmatpush.bf16.msra.mxu0 %v6860
    %6884 = vmatmul.bf16.gmra.mxu0 %v6810
    %v6885 = vpop.f32.mrf.mxu0
    %v6886 = vadd.f32 0.0, %v6885
    %v6887 = vpop.f32.mrf.mxu0
    %6888 = vdwg.mxu0
    %v6889 = vadd.f32 %v6789, %v6886
    %s6890 = scalar_lea.vmem %s61, 12
    %v6891 = vld [vmem:[%s6890] sm:$0xf]
    %v6893 = vsel %vm6596, %v6891, 0
    %6895 = vmatpush.bf16.msra.mxu0 0
    %6896 = vmatpush.bf16.msra.mxu0 0
    %6897 = vmatpush.bf16.msra.mxu0 0
    %6898 = vmatpush.bf16.msra.mxu0 0
    %6899 = vmatpush.bf16.msra.mxu0 0
    %6900 = vmatpush.bf16.msra.mxu0 0
    %6901 = vmatpush.bf16.msra.mxu0 %v6602
    %6902 = vmatpush.bf16.msra.mxu0 %v6593
    %6903 = vmatmul.bf16.gmra.mxu0 %v6893
    %v6904 = vpop.f32.mrf.mxu0
    %v6905 = vadd.f32 0.0, %v6904
    %v6906 = vpop.f32.mrf.mxu0
    %6907 = vdwg.mxu0
    %v6908 = vpack.c.bf16 %v6905, %v6905
    %s6909 = scalar_lea.vmem %s63, 192
    %v6910 = vld [vmem:[%s6909] sm:$0xf]
    %v6911 = vld [vmem:[%s6909 + $0x4] sm:$0xf]
    %v6912 = vld [vmem:[%s6909 + $0x8] sm:$0xf]
    %v6913 = vld [vmem:[%s6909 + $0xc] sm:$0xf]
    %v6914 = vld [vmem:[%s6909 + $0x10] sm:$0xf]
    %v6915 = vld [vmem:[%s6909 + $0x14] sm:$0xf]
    %v6916 = vld [vmem:[%s6909 + $0x18] sm:$0xf]
    %v6917 = vld [vmem:[%s6909 + $0x1c] sm:$0xf]
    %v6918 = vld [vmem:[%s6909 + $0x20] sm:$0xf]
    %v6919 = vld [vmem:[%s6909 + $0x24] sm:$0xf]
    %v6920 = vld [vmem:[%s6909 + $0x28] sm:$0xf]
    %v6921 = vld [vmem:[%s6909 + $0x2c] sm:$0xf]
    %v6922 = vld [vmem:[%s6909 + $0x30] sm:$0xf]
    %v6923 = vld [vmem:[%s6909 + $0x34] sm:$0xf]
    %v6924 = vld [vmem:[%s6909 + $0x38] sm:$0xf]
    %v6925 = vld [vmem:[%s6909 + $0x3c] sm:$0xf]
    %v6942 = vunpack.c.l.b16 %v6910
    %v6943 = vunpack.c.l.b16 %v6911
    %v6944 = vunpack.c.l.b16 %v6912
    %v6945 = vunpack.c.l.b16 %v6913
    %v6946 = vunpack.c.l.b16 %v6914
    %v6947 = vunpack.c.l.b16 %v6915
    %v6948 = vunpack.c.l.b16 %v6916
    %v6949 = vunpack.c.l.b16 %v6917
    %v6950 = vunpack.c.l.b16 %v6918
    %v6951 = vunpack.c.l.b16 %v6919
    %v6952 = vunpack.c.l.b16 %v6920
    %v6953 = vunpack.c.l.b16 %v6921
    %v6954 = vunpack.c.l.b16 %v6922
    %v6955 = vunpack.c.l.b16 %v6923
    %v6956 = vunpack.c.l.b16 %v6924
    %v6957 = vunpack.c.l.b16 %v6925
    %v6958 = vpack.c.b16 %v6943, %v6942
    %v6959 = vpack.c.b16 %v6945, %v6944
    %v6960 = vpack.c.b16 %v6947, %v6946
    %v6961 = vpack.c.b16 %v6949, %v6948
    %v6962 = vpack.c.b16 %v6951, %v6950
    %v6963 = vpack.c.b16 %v6953, %v6952
    %v6964 = vpack.c.b16 %v6955, %v6954
    %v6965 = vpack.c.b16 %v6957, %v6956
    %6974 = vmatpush.bf16.msra.mxu0 %v6965
    %6975 = vmatpush.bf16.msra.mxu0 %v6964
    %6976 = vmatpush.bf16.msra.mxu0 %v6963
    %6977 = vmatpush.bf16.msra.mxu0 %v6962
    %6978 = vmatpush.bf16.msra.mxu0 %v6961
    %6979 = vmatpush.bf16.msra.mxu0 %v6960
    %6980 = vmatpush.bf16.msra.mxu0 %v6959
    %6981 = vmatpush.bf16.msra.mxu0 %v6958
    %6982 = vmatmul.bf16.gmra.mxu0 %v6908
    %v6983 = vpop.f32.mrf.mxu0
    %v6984 = vadd.f32 0.0, %v6983
    %v6985 = vpop.f32.mrf.mxu0
    %6986 = vdwg.mxu0
    %v6987 = vadd.f32 %v6889, %v6984
    %s6988 = scalar_lea.vmem %s61, 16
    %v6989 = vld [vmem:[%s6988] sm:$0xf]
    %v6991 = vsel %vm6596, %v6989, 0
    %6993 = vmatpush.bf16.msra.mxu0 0
    %6994 = vmatpush.bf16.msra.mxu0 0
    %6995 = vmatpush.bf16.msra.mxu0 0
    %6996 = vmatpush.bf16.msra.mxu0 0
    %6997 = vmatpush.bf16.msra.mxu0 0
    %6998 = vmatpush.bf16.msra.mxu0 0
    %6999 = vmatpush.bf16.msra.mxu0 %v6602
    %7000 = vmatpush.bf16.msra.mxu0 %v6593
    %7001 = vmatmul.bf16.gmra.mxu0 %v6991
    %v7002 = vpop.f32.mrf.mxu0
    %v7003 = vadd.f32 0.0, %v7002
    %v7004 = vpop.f32.mrf.mxu0
    %7005 = vdwg.mxu0
    %v7006 = vpack.c.bf16 %v7003, %v7003
    %s7007 = scalar_lea.vmem %s63, 256
    %v7008 = vld [vmem:[%s7007] sm:$0xf]
    %v7009 = vld [vmem:[%s7007 + $0x4] sm:$0xf]
    %v7010 = vld [vmem:[%s7007 + $0x8] sm:$0xf]
    %v7011 = vld [vmem:[%s7007 + $0xc] sm:$0xf]
    %v7012 = vld [vmem:[%s7007 + $0x10] sm:$0xf]
    %v7013 = vld [vmem:[%s7007 + $0x14] sm:$0xf]
    %v7014 = vld [vmem:[%s7007 + $0x18] sm:$0xf]
    %v7015 = vld [vmem:[%s7007 + $0x1c] sm:$0xf]
    %v7016 = vld [vmem:[%s7007 + $0x20] sm:$0xf]
    %v7017 = vld [vmem:[%s7007 + $0x24] sm:$0xf]
    %v7018 = vld [vmem:[%s7007 + $0x28] sm:$0xf]
    %v7019 = vld [vmem:[%s7007 + $0x2c] sm:$0xf]
    %v7020 = vld [vmem:[%s7007 + $0x30] sm:$0xf]
    %v7021 = vld [vmem:[%s7007 + $0x34] sm:$0xf]
    %v7022 = vld [vmem:[%s7007 + $0x38] sm:$0xf]
    %v7023 = vld [vmem:[%s7007 + $0x3c] sm:$0xf]
    %v7040 = vunpack.c.l.b16 %v7008
    %v7041 = vunpack.c.l.b16 %v7009
    %v7042 = vunpack.c.l.b16 %v7010
    %v7043 = vunpack.c.l.b16 %v7011
    %v7044 = vunpack.c.l.b16 %v7012
    %v7045 = vunpack.c.l.b16 %v7013
    %v7046 = vunpack.c.l.b16 %v7014
    %v7047 = vunpack.c.l.b16 %v7015
    %v7048 = vunpack.c.l.b16 %v7016
    %v7049 = vunpack.c.l.b16 %v7017
    %v7050 = vunpack.c.l.b16 %v7018
    %v7051 = vunpack.c.l.b16 %v7019
    %v7052 = vunpack.c.l.b16 %v7020
    %v7053 = vunpack.c.l.b16 %v7021
    %v7054 = vunpack.c.l.b16 %v7022
    %v7055 = vunpack.c.l.b16 %v7023
    %v7056 = vpack.c.b16 %v7041, %v7040
    %v7057 = vpack.c.b16 %v7043, %v7042
    %v7058 = vpack.c.b16 %v7045, %v7044
    %v7059 = vpack.c.b16 %v7047, %v7046
    %v7060 = vpack.c.b16 %v7049, %v7048
    %v7061 = vpack.c.b16 %v7051, %v7050
    %v7062 = vpack.c.b16 %v7053, %v7052
    %v7063 = vpack.c.b16 %v7055, %v7054
    %7072 = vmatpush.bf16.msra.mxu0 %v7063
    %7073 = vmatpush.bf16.msra.mxu0 %v7062
    %7074 = vmatpush.bf16.msra.mxu0 %v7061
    %7075 = vmatpush.bf16.msra.mxu0 %v7060
    %7076 = vmatpush.bf16.msra.mxu0 %v7059
    %7077 = vmatpush.bf16.msra.mxu0 %v7058
    %7078 = vmatpush.bf16.msra.mxu0 %v7057
    %7079 = vmatpush.bf16.msra.mxu0 %v7056
    %7080 = vmatmul.bf16.gmra.mxu0 %v7006
    %v7081 = vpop.f32.mrf.mxu0
    %v7082 = vadd.f32 0.0, %v7081
    %v7083 = vpop.f32.mrf.mxu0
    %7084 = vdwg.mxu0
    %v7085 = vadd.f32 %v6987, %v7082
    %v7086 = vld [vmem:[%s65] sm:$0x1]
    %v7088 = vperm.slane %v7086, 0
    %v7090 = vadd.f32 %v7085, %v7088
    %vm7091 = vcmp.gt.f32.partialorder %v7090, 0.0
    %v7092 = vmul.f32 %v7090, 1.442695
    %v7093 = vpow.pop %v7092
    %v7094 = vsub.f32 %v7093, 1.0
    %v7095 = vsel %vm7091, %v7090, %v7094
    %7096 = vst.msk [vmem:[#allocation4] sm:$0xff] %vm598, %v7095
    %v7097 = vld [vmem:[#allocation4] sm:$0x3]
    %v7098 = vpack.c.bf16 %v7097, %v7097
    %v7099 = vld [vmem:[%s67] sm:$0xf]
    %v7100 = vld [vmem:[%s67 + $0x4] sm:$0xf]
    %v7101 = vld [vmem:[%s67 + $0x8] sm:$0xf]
    %v7102 = vld [vmem:[%s67 + $0xc] sm:$0xf]
    %v7103 = vld [vmem:[%s67 + $0x10] sm:$0xf]
    %v7104 = vld [vmem:[%s67 + $0x14] sm:$0xf]
    %v7105 = vld [vmem:[%s67 + $0x18] sm:$0xf]
    %v7106 = vld [vmem:[%s67 + $0x1c] sm:$0xf]
    %v7107 = vld [vmem:[#allocation4 + $0x2] sm:$0x3]
    %v7108 = vpack.c.bf16 %v7107, %v7107
    %v7109 = vld [vmem:[%s67 + $0x20] sm:$0xf]
    %v7110 = vld [vmem:[%s67 + $0x24] sm:$0xf]
    %v7111 = vld [vmem:[%s67 + $0x28] sm:$0xf]
    %v7112 = vld [vmem:[%s67 + $0x2c] sm:$0xf]
    %v7113 = vld [vmem:[%s67 + $0x30] sm:$0xf]
    %v7114 = vld [vmem:[%s67 + $0x34] sm:$0xf]
    %v7115 = vld [vmem:[%s67 + $0x38] sm:$0xf]
    %v7116 = vld [vmem:[%s67 + $0x3c] sm:$0xf]
    %v7125 = vunpack.c.l.b16 %v7109
    %v7126 = vunpack.c.l.b16 %v7110
    %v7127 = vunpack.c.l.b16 %v7111
    %v7128 = vunpack.c.l.b16 %v7112
    %v7129 = vunpack.c.l.b16 %v7113
    %v7130 = vunpack.c.l.b16 %v7114
    %v7131 = vunpack.c.l.b16 %v7115
    %v7132 = vunpack.c.l.b16 %v7116
    %v7133 = vpack.c.b16 %v7126, %v7125
    %v7134 = vpack.c.b16 %v7128, %v7127
    %v7135 = vpack.c.b16 %v7130, %v7129
    %v7136 = vpack.c.b16 %v7132, %v7131
    %v7142 = vsel %vm598, %v7108, 0
    %7144 = vmatpush.bf16.msra.mxu0 0
    %7145 = vmatpush.bf16.msra.mxu0 0
    %7146 = vmatpush.bf16.msra.mxu0 0
    %7147 = vmatpush.bf16.msra.mxu0 0
    %7148 = vmatpush.bf16.msra.mxu0 %v7136
    %7149 = vmatpush.bf16.msra.mxu0 %v7135
    %7150 = vmatpush.bf16.msra.mxu0 %v7134
    %7151 = vmatpush.bf16.msra.mxu0 %v7133
    %7152 = vmatmul.bf16.gmra.mxu0 %v7142
    %v7153 = vpop.f32.mrf.mxu0
    %v7154 = vadd.f32 0.0, %v7153
    %v7155 = vpop.f32.mrf.mxu0
    %7156 = vdwg.mxu0
    %v7165 = vunpack.c.l.b16 %v7099
    %v7166 = vunpack.c.l.b16 %v7100
    %v7167 = vunpack.c.l.b16 %v7101
    %v7168 = vunpack.c.l.b16 %v7102
    %v7169 = vunpack.c.l.b16 %v7103
    %v7170 = vunpack.c.l.b16 %v7104
    %v7171 = vunpack.c.l.b16 %v7105
    %v7172 = vunpack.c.l.b16 %v7106
    %v7173 = vpack.c.b16 %v7166, %v7165
    %v7174 = vpack.c.b16 %v7168, %v7167
    %v7175 = vpack.c.b16 %v7170, %v7169
    %v7176 = vpack.c.b16 %v7172, %v7171
    %v7182 = vsel %vm598, %v7098, 0
    %7184 = vmatpush.bf16.msra.mxu0 0
    %7185 = vmatpush.bf16.msra.mxu0 0
    %7186 = vmatpush.bf16.msra.mxu0 0
    %7187 = vmatpush.bf16.msra.mxu0 0
    %7188 = vmatpush.bf16.msra.mxu0 %v7176
    %7189 = vmatpush.bf16.msra.mxu0 %v7175
    %7190 = vmatpush.bf16.msra.mxu0 %v7174
    %7191 = vmatpush.bf16.msra.mxu0 %v7173
    %7192 = vmatmul.bf16.gmra.mxu0 %v7182
    %v7193 = vpop.f32.mrf.mxu0
    %v7194 = vadd.f32 %v7154, %v7193
    %v7195 = vpop.f32.mrf.mxu0
    %7196 = vdwg.mxu0
    %v7197 = vld [vmem:[#allocation4 + $0x4] sm:$0x3]
    %v7198 = vpack.c.bf16 %v7197, %v7197
    %v7199 = vld [vmem:[%s67 + $0x40] sm:$0xf]
    %v7200 = vld [vmem:[%s67 + $0x44] sm:$0xf]
    %v7201 = vld [vmem:[%s67 + $0x48] sm:$0xf]
    %v7202 = vld [vmem:[%s67 + $0x4c] sm:$0xf]
    %v7203 = vld [vmem:[%s67 + $0x50] sm:$0xf]
    %v7204 = vld [vmem:[%s67 + $0x54] sm:$0xf]
    %v7205 = vld [vmem:[%s67 + $0x58] sm:$0xf]
    %v7206 = vld [vmem:[%s67 + $0x5c] sm:$0xf]
    %v7215 = vunpack.c.l.b16 %v7199
    %v7216 = vunpack.c.l.b16 %v7200
    %v7217 = vunpack.c.l.b16 %v7201
    %v7218 = vunpack.c.l.b16 %v7202
    %v7219 = vunpack.c.l.b16 %v7203
    %v7220 = vunpack.c.l.b16 %v7204
    %v7221 = vunpack.c.l.b16 %v7205
    %v7222 = vunpack.c.l.b16 %v7206
    %v7223 = vpack.c.b16 %v7216, %v7215
    %v7224 = vpack.c.b16 %v7218, %v7217
    %v7225 = vpack.c.b16 %v7220, %v7219
    %v7226 = vpack.c.b16 %v7222, %v7221
    %v7232 = vsel %vm598, %v7198, 0
    %7234 = vmatpush.bf16.msra.mxu0 0
    %7235 = vmatpush.bf16.msra.mxu0 0
    %7236 = vmatpush.bf16.msra.mxu0 0
    %7237 = vmatpush.bf16.msra.mxu0 0
    %7238 = vmatpush.bf16.msra.mxu0 %v7226
    %7239 = vmatpush.bf16.msra.mxu0 %v7225
    %7240 = vmatpush.bf16.msra.mxu0 %v7224
    %7241 = vmatpush.bf16.msra.mxu0 %v7223
    %7242 = vmatmul.bf16.gmra.mxu0 %v7232
    %v7243 = vpop.f32.mrf.mxu0
    %v7244 = vadd.f32 0.0, %v7243
    %v7245 = vpop.f32.mrf.mxu0
    %7246 = vdwg.mxu0
    %v7247 = vadd.f32 %v7194, %v7244
    %v7248 = vld [vmem:[#allocation4 + $0x6] sm:$0x3]
    %v7249 = vpack.c.bf16 %v7248, %v7248
    %v7250 = vld [vmem:[%s67 + $0x60] sm:$0xf]
    %v7251 = vld [vmem:[%s67 + $0x64] sm:$0xf]
    %v7252 = vld [vmem:[%s67 + $0x68] sm:$0xf]
    %v7253 = vld [vmem:[%s67 + $0x6c] sm:$0xf]
    %v7254 = vld [vmem:[%s67 + $0x70] sm:$0xf]
    %v7255 = vld [vmem:[%s67 + $0x74] sm:$0xf]
    %v7256 = vld [vmem:[%s67 + $0x78] sm:$0xf]
    %v7257 = vld [vmem:[%s67 + $0x7c] sm:$0xf]
    %v7266 = vunpack.c.l.b16 %v7250
    %v7267 = vunpack.c.l.b16 %v7251
    %v7268 = vunpack.c.l.b16 %v7252
    %v7269 = vunpack.c.l.b16 %v7253
    %v7270 = vunpack.c.l.b16 %v7254
    %v7271 = vunpack.c.l.b16 %v7255
    %v7272 = vunpack.c.l.b16 %v7256
    %v7273 = vunpack.c.l.b16 %v7257
    %v7274 = vpack.c.b16 %v7267, %v7266
    %v7275 = vpack.c.b16 %v7269, %v7268
    %v7276 = vpack.c.b16 %v7271, %v7270
    %v7277 = vpack.c.b16 %v7273, %v7272
    %v7283 = vsel %vm598, %v7249, 0
    %7285 = vmatpush.bf16.msra.mxu0 0
    %7286 = vmatpush.bf16.msra.mxu0 0
    %7287 = vmatpush.bf16.msra.mxu0 0
    %7288 = vmatpush.bf16.msra.mxu0 0
    %7289 = vmatpush.bf16.msra.mxu0 %v7277
    %7290 = vmatpush.bf16.msra.mxu0 %v7276
    %7291 = vmatpush.bf16.msra.mxu0 %v7275
    %7292 = vmatpush.bf16.msra.mxu0 %v7274
    %7293 = vmatmul.bf16.gmra.mxu0 %v7283
    %v7294 = vpop.f32.mrf.mxu0
    %v7295 = vadd.f32 0.0, %v7294
    %v7296 = vpop.f32.mrf.mxu0
    %7297 = vdwg.mxu0
    %v7298 = vadd.f32 %v7247, %v7295
    %v7299 = vld [vmem:[%s69] sm:$0x1]
    %v7301 = vperm.slane %v7299, 0
    %v7303 = vadd.f32 %v7298, %v7301
    %v7304 = vmax.f32 %v7303, 0.0
    %v7305 = vpack.c.bf16 %v7304, %v7304
    %v7306 = vld [vmem:[%s71] sm:$0xf]
    %v7307 = vld [vmem:[%s71 + $0x4] sm:$0xf]
    %v7308 = vld [vmem:[%s71 + $0x8] sm:$0xf]
    %v7309 = vld [vmem:[%s71 + $0xc] sm:$0xf]
    %v7310 = vld [vmem:[%s73] sm:$0x1]
    %v7312 = vperm.slane %v7310, 0
    %v7318 = vunpack.c.l.b16 %v7306
    %v7319 = vunpack.c.l.b16 %v7307
    %v7320 = vunpack.c.l.b16 %v7308
    %v7321 = vunpack.c.l.b16 %v7309
    %v7322 = vpack.c.b16 %v7319, %v7318
    %v7323 = vpack.c.b16 %v7321, %v7320
    %v7327 = vsel %vm4181, %v7305, 0
    %7329 = vmatpush.bf16.msra.mxu0 0
    %7330 = vmatpush.bf16.msra.mxu0 0
    %7331 = vmatpush.bf16.msra.mxu0 0
    %7332 = vmatpush.bf16.msra.mxu0 0
    %7333 = vmatpush.bf16.msra.mxu0 0
    %7334 = vmatpush.bf16.msra.mxu0 0
    %7335 = vmatpush.bf16.msra.mxu0 %v7323
    %7336 = vmatpush.bf16.msra.mxu0 %v7322
    %7337 = vmatmul.bf16.gmra.mxu0 %v7327
    %v7338 = vpop.f32.mrf.mxu0
    %v7339 = vadd.f32 %v7312, %v7338
    %v7340 = vpop.f32.mrf.mxu0
    %7341 = vdwg.mxu0
    %v7342 = vmax.f32 %v7339, 0.0
    %v7343 = vpack.c.bf16 %v7342, %v7342
    %v7344 = vld [vmem:[%s75] sm:$0xf]
    %v7345 = vld [vmem:[%s75 + $0x4] sm:$0xf]
    %v7346 = vld [vmem:[%s75 + $0x8] sm:$0xf]
    %v7347 = vld [vmem:[%s75 + $0xc] sm:$0xf]
    %v7348 = vld [vmem:[%s77] sm:$0x1]
    %v7350 = vperm.slane %v7348, 0
    %v7356 = vunpack.c.l.b16 %v7344
    %v7357 = vunpack.c.l.b16 %v7345
    %v7358 = vunpack.c.l.b16 %v7346
    %v7359 = vunpack.c.l.b16 %v7347
    %v7360 = vpack.c.b16 %v7357, %v7356
    %v7361 = vpack.c.b16 %v7359, %v7358
    %v7365 = vsel %vm4181, %v7343, 0
    %7367 = vmatpush.bf16.msra.mxu0 0
    %7368 = vmatpush.bf16.msra.mxu0 0
    %7369 = vmatpush.bf16.msra.mxu0 0
    %7370 = vmatpush.bf16.msra.mxu0 0
    %7371 = vmatpush.bf16.msra.mxu0 0
    %7372 = vmatpush.bf16.msra.mxu0 0
    %7373 = vmatpush.bf16.msra.mxu0 %v7361
    %7374 = vmatpush.bf16.msra.mxu0 %v7360
    %7375 = vmatmul.bf16.gmra.mxu0 %v7365
    %v7376 = vpop.f32.mrf.mxu0
    %v7377 = vadd.f32 %v7350, %v7376
    %v7378 = vpop.f32.mrf.mxu0
    %7379 = vdwg.mxu0
    %v7380 = vsel %vm4236, %v7377, -inf
    %7381 = vmax.xlane.f32.xlu0 %v7380
    %v7382 = vpop.xlane.xlu0 %7381
    %v7383 = vsub.f32 %v7377, %v7382
    %v7384 = vmul.f32 %v7383, 1.442695
    %v7385 = vpow.pop %v7384
    %v7386 = vsel %vm4236, %v7385, 0.0
    %7387 = vadd.xlane.f32.xlu0 %v7386
    %v7388 = vpop.xlane.xlu0 %7387
    %v7389 = vrcp.pop %v7388
    %v7390 = vmul.f32 %v7388, %v7389
    %v7391 = vsub.f32 1.0, %v7390
    %v7392 = vmul.f32 %v7389, %v7391
    %v7393 = vadd.f32 %v7389, %v7392
    %vm7394 = vweird.f32 %v7388
    %vm7395 = vweird.f32 %v7389
    %vm7396 = vmor %vm7394, %vm7395
    %v7397 = vsel %vm7396, %v7389, %v7393
    %v7398 = vand.u32 2147483647, %v7388
    %vm7399 = vcmp.eq.f32.partialorder %v7398, 8.507059e+37
    %v7400 = vand.u32 %v7388, 2147483648
    %v7401 = vor.u32 1.1754944e-38, %v7400
    %v7402 = vsel %vm7399, %v7401, %v7397
    %v7403 = vmul.f32 %v7385, %v7402
    %v7404 = vadd.f32 %v6054, %v7403
    %7405 = vst.msk [vmem:[#allocation5] sm:$0x3] %vm4236, %v7404
    // Predicated region
    $region158: #{multibranch_forward.1} parent=1 // pred_check
      _
    $region159: #{multibranch_forward.1} parent=1 // pred_check_branch
      %7407 = sbr.rel (0) target = $region161
    $region160: #{multibranch_forward.1} parent=1 // pred_region
      %7409 = vsyncadd [#allocation6], 0
      %s7411 = sshll.u32 [#allocation5], 4
      %s7412 = int_to_ptr.vmem [resolvable:$true] %s7411
      %s7413 = sshll.u32 %s79, 4
      %s7414 = int_to_ptr.hbm [resolvable:$true] %s7413
      %7416 = dma.vmem_to_hbm [thread:$0]  %s7412, 32, %s7414, [#allocation6]
    $region161: #{multibranch_forward.1} parent=1 // pred_fallthru
      _
    // Predicated region
    $region162: #{multibranch_forward.1} parent=1 // pred_check
      _
    $region163: #{multibranch_forward.1} parent=1 // pred_check_branch
      %7418 = sbr.rel (0) target = $region165
    $region164: #{multibranch_forward.1} parent=1 // pred_region
      %7420 = dma.done [#allocation6], 32
    $region165: #{multibranch_forward.1} parent=1 // pred_fallthru
      _
    %7421 = vsyncpa [#allocation6], 1

</llo_original>
